<compile_context>
chip_gen: v7x
topology: tpu7x:2x2x1
jax: 0.10.0
libtpu: 0.0.40
codegen_flags: <defaults>
</compile_context>

<pallas_src>
import functools
import math

import numpy as np
import jax
import jax.numpy as jnp
from jax import lax
from jax.experimental import pallas as pl
from jax.experimental.pallas import tpu as pltpu

# ----------------- module-consistent configuration (small) -----------------
C = 16                 # initial conv output channels
IN_CHANNELS = 1
OUT_CHANNELS = 1
C_GROWTH = 1
C_MAX = 1024
N_FFT = 64
HOP_LENGTH = 16
WIN_LENGTH = 64        # == N_FFT, as in the module defaults (1024/1024)
KERNEL_SIZE = (3, 9)
STRIDE = (1, 2)
DILATIONS = [1, 2, 4]
NEG_SLOPE = 0.2
N_FREQ = N_FFT // 2 + 1

LANE = 128
SUBLANE = 8


def _rup(x, m):
    return ((x + m - 1) // m) * m


def get_2d_padding(kernel_size, dilation=(1, 1)):
    return ((kernel_size[0] - 1) * dilation[0] // 2,
            (kernel_size[1] - 1) * dilation[1] // 2)


# ------------------------- parameter construction ---------------------------
def build_params(key):
    """Deterministic init, same layer structure as STFTDiscriminator_EnCodec."""
    spec_channels = 2 * IN_CHANNELS
    specs = []
    specs.append(dict(cin=spec_channels, cout=C, k=KERNEL_SIZE, stride=(1, 1),
                      dil=(1, 1), pad=get_2d_padding(KERNEL_SIZE)))
    in_chs = min(C_GROWTH * C, C_MAX)
    for i, d in enumerate(DILATIONS):
        out_chs = min(C_GROWTH ** (i + 1) * C, C_MAX)
        specs.append(dict(cin=in_chs, cout=out_chs, k=KERNEL_SIZE, stride=STRIDE,
                          dil=(d, 1), pad=get_2d_padding(KERNEL_SIZE, (d, 1))))
        in_chs = out_chs
    out_chs = min(C_GROWTH ** (len(DILATIONS) + 1) * C, C_MAX)
    k33 = (KERNEL_SIZE[0], KERNEL_SIZE[0])
    specs.append(dict(cin=in_chs, cout=out_chs, k=k33, stride=(1, 1),
                      dil=(1, 1), pad=get_2d_padding(k33)))
    # conv_post
    specs.append(dict(cin=out_chs, cout=OUT_CHANNELS, k=k33, stride=(1, 1),
                      dil=(1, 1), pad=get_2d_padding(k33)))

    params = []
    for s in specs:
        key, k1, k2 = jax.random.split(key, 3)
        fan_in = s['cin'] * s['k'][0] * s['k'][1]
        bound = 1.0 / math.sqrt(fan_in)
        w = jax.random.uniform(k1, (s['cout'], s['cin'], s['k'][0], s['k'][1]),
                               jnp.float32, -bound, bound)
        b = jax.random.uniform(k2, (s['cout'],), jnp.float32, -bound, bound)
        params.append((w, b, s))
    return params


# ------------------- one-time packing into kernel operands -------------------
def _build_dft_matrix(pad_cols):
    """Windowed DFT, 'window' normalized, periodic Hann; real/imag interleaved per
    freq (channel fastest) and lane-padded with zero columns to `pad_cols`."""
    n = np.arange(N_FFT, dtype=np.float64)
    win = 0.5 * (1.0 - np.cos(2.0 * np.pi * n / N_FFT))
    norm = np.sqrt(np.sum(win ** 2))
    k = np.arange(N_FREQ, dtype=np.float64)
    ang = 2.0 * np.pi * np.outer(n, k) / N_FFT                  # (n_fft, n_freq)
    dft = np.zeros((N_FFT, pad_cols), np.float32)
    dft[:, 0:2 * N_FREQ:2] = win[:, None] * np.cos(ang) / norm   # channel 0 = real
    dft[:, 1:2 * N_FREQ:2] = -win[:, None] * np.sin(ang) / norm  # channel 1 = imag
    return dft


def prepare_kernel_params(params, n_frames, use_bf16=True):
    """Fold each conv into a tap-fused, lane-padded block-Toeplitz matrix.

    Per layer returns T_cat (3*K_pad, N_pad) and b_row (1, N_pad); the time-axis
    dilation/padding is handled in-kernel by sublane shifts (shifts in meta)."""
    H = n_frames
    max_shift = max(s['pad'][0] for (_, _, s) in params)
    Hp = _rup(H + max_shift, SUBLANE)          # >= H + max shift: no cross-batch leak

    K_in_pad = _rup(2 * N_FREQ, LANE)          # STFT output lane width (padded)
    dft = _build_dft_matrix(K_in_pad)

    W_in = N_FREQ
    layer_arrays = []
    meta = []
    for (w, b, s) in params:
        # TODO(synk): weight_norm is folded as the identity (g = ||v||, true at init);
        # loading trained weights requires scaling w by g/||v|| here.
        w_np = np.asarray(w, np.float32)
        b_np = np.asarray(b, np.float32)
        C_out, C_in, KH, KW = w_np.shape
        SH, SW = s['stride']
        DH, DW = s['dil']
        PH, PW = s['pad']
        assert SH == 1, "time stride != 1 not supported by the fused shift path"
        H_out = (H + 2 * PH - DH * (KH - 1) - 1) // SH + 1
        assert H_out == H

        W_out = (W_in + 2 * PW - DW * (KW - 1) - 1) // SW + 1
        N_real = W_out * C_out
        N_pad = _rup(N_real, LANE)

        # Block-Toeplitz per time tap over the (freq, channel) lane axis; freq stride
        # and padding baked in.  K rows use the PADDED input width so the layer chains
        # directly onto the previous layer's lane-padded output (extra rows are zero).
        T = np.zeros((KH, K_in_pad, N_pad), np.float32)
        for kh in range(KH):
            for kw in range(KW):
                blk = w_np[:, :, kh, kw].T                      # (C_in, C_out)
                for wo in range(W_out):
                    wi = wo * SW + kw * DW - PW
                    if 0 <= wi < W_in:
                        T[kh, wi * C_in:(wi + 1) * C_in,
                          wo * C_out:(wo + 1) * C_out] += blk
        # Fuse the KH time taps along K -> a single (M, KH*K) @ (KH*K, N) matmul.
        T_cat = T.reshape(KH * K_in_pad, N_pad)

        b_row = np.zeros((1, N_pad), np.float32)
        b_row[0, :N_real] = np.tile(b_np, W_out)

        w_dtype = jnp.bfloat16 if use_bf16 else jnp.float32
        layer_arrays.append((jnp.asarray(T_cat, dtype=w_dtype), jnp.asarray(b_row)))
        meta.append(dict(N_real=N_real, N_pad=N_pad, W_out=W_out, C_out=C_out,
                         shifts=tuple(kh * DH - PH for kh in range(KH))))
        W_in = W_out
        K_in_pad = N_pad
    return layer_arrays, meta, Hp, jnp.asarray(dft)


# ------------------------------ fused kernel --------------------------------
def _shift_rows(x, s):
    """out[i] = x[i + s] along the sublane (time) axis, zero fill (static shift)."""
    if s == 0:
        return x
    d = abs(s)
    pad = jnp.zeros((d, x.shape[1]), x.dtype)
    if s > 0:
        return jnp.concatenate([x[d:], pad], axis=0)
    return jnp.concatenate([pad, x[:-d]], axis=0)


def _fused_forward_kernel(*refs, n_layers, shifts, neg_slope, use_bf16,
                          emit_features):
    frames_ref, dft_ref, mask_ref = refs[0], refs[1], refs[2]
    layer_refs = refs[3:3 + 2 * n_layers]
    out_refs = refs[3 + 2 * n_layers:]

    mask = mask_ref[...]                                   # (M, 1) 1/0 time-row mask

    # STFT: one lane-dense matmul; columns already interleaved [re0, im0, re1, ...]
    # == the flattened (freq, channel) layout expected by the first conv.
    x = jnp.dot(frames_ref[...], dft_ref[...], preferred_element_type=jnp.float32)

    for li in range(n_layers):
        T_ref = layer_refs[2 * li]
        b_ref = layer_refs[2 * li + 1]
        # Time taps -> static sublane shifts (XLU/VPU, off the MXU), fused along the
        # lane/K axis; every piece is a multiple of 128 lanes so the concat is cheap.
        x_cat = jnp.concatenate([_shift_rows(x, s) for s in shifts[li]], axis=1)
        if use_bf16:
            x_cat = x_cat.astype(jnp.bfloat16)
        acc = jnp.dot(x_cat, T_ref[...], preferred_element_type=jnp.float32)
        acc = acc + b_ref[...]
        if li < n_layers - 1:                               # conv_post: no activation
            acc = jnp.where(acc >= 0.0, acc, neg_slope * acc)
        acc = acc * mask                                    # re-zero time-pad rows
        if li < n_layers - 1:
            if emit_features:
                out_refs[li][...] = acc
            x = acc
        else:
            out_refs[-1][...] = acc                         # conv_post score


# ------------------------------- forward ------------------------------------
def make_forward(params, n_frames, batch_tile=2, use_bf16=True):
    """Build a jitted forward(audio, return_features) for fixed params/shapes."""
    layer_arrays, meta, Hp, dft = prepare_kernel_params(params, n_frames,
                                                        use_bf16=use_bf16)
    n_layers = len(layer_arrays)
    shifts = tuple(m['shifts'] for m in meta)
    Bt = int(batch_tile)
    M_t = Bt * Hp                                           # MXU M rows per grid step

    mask = jnp.asarray(((np.arange(M_t) % Hp) < n_frames)
                       .astype(np.float32).reshape(M_t, 1))

    # Grid-invariant operands (DFT, Toeplitz weights, biases, row mask).
    # NOTE: they are double-buffered by default (~2x their ~3 MB); acceptable here.
    const_inputs = [dft, mask]
    const_specs = [pl.BlockSpec(dft.shape, lambda g: (0, 0)),
                   pl.BlockSpec(mask.shape, lambda g: (0, 0))]
    for (T_cat, b_row) in layer_arrays:
        const_inputs += [T_cat, b_row]
        const_specs += [pl.BlockSpec(T_cat.shape, lambda g: (0, 0)),
                        pl.BlockSpec(b_row.shape, lambda g: (0, 0))]

    compiler_params = pltpu.CompilerParams(
        dimension_semantics=("parallel",),
        vmem_limit_bytes=32 * 1024 * 1024)

    kernels = {
        True: functools.partial(_fused_forward_kernel, n_layers=n_layers,
                                shifts=shifts, neg_slope=NEG_SLOPE,
                                use_bf16=use_bf16, emit_features=True),
        False: functools.partial(_fused_forward_kernel, n_layers=n_layers,
                                 shifts=shifts, neg_slope=NEG_SLOPE,
                                 use_bf16=use_bf16, emit_features=False),
    }

    @functools.partial(jax.jit, static_argnames=("return_features",))
    def forward(audio, return_features=False):
        B, T = audio.shape
        assert 1 + (T - N_FFT) // HOP_LENGTH == n_frames
        B_pad = _rup(B, Bt)
        audio_p = jnp.pad(audio, ((0, B_pad - B), (0, 0))) if B_pad != B else audio

        # Frame extraction (center=False): one gather; pad the time axis to Hp so each
        # batch element owns an 8-aligned block of sublane rows (zero frames -> zero x).
        idx = (jnp.arange(n_frames)[:, None] * HOP_LENGTH
               + jnp.arange(N_FFT)[None, :])
        frames = audio_p[:, idx]                            # (B_pad, H, n_fft)
        frames = jnp.pad(frames, ((0, 0), (0, Hp - n_frames), (0, 0)))
        frames_flat = frames.reshape(B_pad * Hp, N_FFT)

        frames_spec = pl.BlockSpec((M_t, N_FFT), lambda g: (g, 0))
        out_meta = meta if return_features else meta[-1:]
        out_shape = tuple(jax.ShapeDtypeStruct((B_pad * Hp, m['N_pad']), jnp.float32)
                          for m in out_meta)
        out_specs = tuple(pl.BlockSpec((M_t, m['N_pad']), lambda g: (g, 0))
                          for m in out_meta)

        outs = pl.pallas_call(
            kernels[bool(return_features)],
            out_shape=out_shape,
            grid=(B_pad // Bt,),
            in_specs=[frames_spec] + const_specs,
            out_specs=out_specs,
            compiler_params=compiler_params,
        )(frames_flat, *const_inputs)

        def unpack(z, m):
            z = z.reshape(B_pad, Hp, m['N_pad'])[:B, :n_frames, :m['N_real']]
            z = z.reshape(B, n_frames, m['W_out'], m['C_out'])
            return jnp.transpose(z, (0, 3, 1, 2))           # NCHW (b, c, t, w)

        feats = None
        if return_features:
            feats = [unpack(z, m) for z, m in zip(outs[:-1], meta[:-1])]
        score = unpack(outs[-1], meta[-1])
        return score, feats

    return forward


# --------------------- pure-XLA reference (for validation) -------------------
def reference_forward(params, audio):
    """f32 reference of the module forward (score only), via lax.conv."""
    H = 1 + (audio.shape[1] - N_FFT) // HOP_LENGTH
    n = np.arange(N_FFT, dtype=np.float64)
    win = 0.5 * (1.0 - np.cos(2.0 * np.pi * n / N_FFT))
    norm = np.sqrt(np.sum(win ** 2))
    k = np.arange(N_FREQ, dtype=np.float64)
    ang = 2.0 * np.pi * np.outer(n, k) / N_FFT
    cos_m = jnp.asarray(win[:, None] * np.cos(ang) / norm, jnp.float32)
    sin_m = jnp.asarray(-win[:, None] * np.sin(ang) / norm, jnp.float32)
    idx = (np.arange(H)[:, None] * HOP_LENGTH + np.arange(N_FFT)[None, :])
    frames = audio[:, idx]                                   # (B, H, n_fft)
    re = jnp.matmul(frames, cos_m, precision=lax.Precision.HIGHEST)
    im = jnp.matmul(frames, sin_m, precision=lax.Precision.HIGHEST)
    z = jnp.stack([re, im], axis=1)                          # (B, 2, t, w)
    for li, (w, b, s) in enumerate(params):
        z = lax.conv_general_dilated(
            z, w, window_strides=s['stride'],
            padding=[(s['pad'][0], s['pad'][0]), (s['pad'][1], s['pad'][1])],
            rhs_dilation=s['dil'],
            dimension_numbers=('NCHW', 'OIHW', 'NCHW'),
            precision=lax.Precision.HIGHEST)
        z = z + b.reshape(1, -1, 1, 1)
        if li < len(params) - 1:                             # conv_post: no activation
            z = jnp.where(z >= 0.0, z, NEG_SLOPE * z)
    return z


if __name__ == "__main__":
    key = jax.random.PRNGKey(0)
    pkey, xkey = jax.random.split(key)
    params = build_params(pkey)

    B, T = 4, 256                                   # small audio batch
    audio = jax.random.normal(xkey, (B, T), jnp.float32)
    n_frames = 1 + (T - N_FFT) // HOP_LENGTH        # 13

    # Production path: bf16 weights, batch_tile=2 -> grid=(2,) "parallel".
    fwd = make_forward(params, n_frames, batch_tile=2, use_bf16=True)
    score, feats = fwd(audio, return_features=True)
    jax.block_until_ready(score)
    score_only, _ = fwd(audio, return_features=False)     # score-only kernel variant
    jax.block_until_ready(score_only)

    assert score.shape[0] == B and score.shape[1] == OUT_CHANNELS
    assert score.shape[2] == n_frames
    assert len(feats) == len(params) - 1
    assert feats[0].shape == (B, C, n_frames, N_FREQ)
    assert bool(jnp.allclose(score, score_only, rtol=1e-3, atol=1e-3))

    # Correctness check: f32-weight kernel variant vs a pure-XLA conv reference.
    fwd_f32 = make_forward(params, n_frames, batch_tile=2, use_bf16=False)
    score_f32, _ = fwd_f32(audio, return_features=False)
    ref = reference_forward(params, audio)
    err = float(jnp.max(jnp.abs(score_f32 - ref)))
    assert err < 1e-2, f"mismatch vs XLA reference: {err}"

    print("KERNEL_OK")
</pallas_src>

<mosaic_0001>
module attributes {stable_mosaic.version = 11 : i64} {
  func.func @_fused_forward_kernel(%arg0: i32, %arg1: memref<48x64xf32, #tpu.memory_space<vmem>>, %arg2: memref<64x128xf32, #tpu.memory_space<vmem>>, %arg3: memref<48x1xf32, #tpu.memory_space<vmem>>, %arg4: memref<384x640xbf16, #tpu.memory_space<vmem>>, %arg5: memref<1x640xf32, #tpu.memory_space<vmem>>, %arg6: memref<1920x384xbf16, #tpu.memory_space<vmem>>, %arg7: memref<1x384xf32, #tpu.memory_space<vmem>>, %arg8: memref<1152x256xbf16, #tpu.memory_space<vmem>>, %arg9: memref<1x256xf32, #tpu.memory_space<vmem>>, %arg10: memref<768x128xbf16, #tpu.memory_space<vmem>>, %arg11: memref<1x128xf32, #tpu.memory_space<vmem>>, %arg12: memref<384x128xbf16, #tpu.memory_space<vmem>>, %arg13: memref<1x128xf32, #tpu.memory_space<vmem>>, %arg14: memref<384x128xbf16, #tpu.memory_space<vmem>>, %arg15: memref<1x128xf32, #tpu.memory_space<vmem>>, %arg16: memref<48x640xf32, #tpu.memory_space<vmem>>, %arg17: memref<48x384xf32, #tpu.memory_space<vmem>>, %arg18: memref<48x256xf32, #tpu.memory_space<vmem>>, %arg19: memref<48x128xf32, #tpu.memory_space<vmem>>, %arg20: memref<48x128xf32, #tpu.memory_space<vmem>>, %arg21: memref<48x128xf32, #tpu.memory_space<vmem>>) attributes {dimension_semantics = [#tpu.dimension_semantics<parallel>], iteration_bounds = array<i64: 2>, scalar_prefetch = 0 : i64, scratch_operands = 0 : i64, tpu.core_type = #tpu.core_type<tc>, window_params = [{transform_indices = @transform_0, window_bounds = array<i64: 48, 64>}, {pipeline_mode = #tpu.pipeline_mode<synchronous>, transform_indices = @transform_1, window_bounds = array<i64: 64, 128>}, {pipeline_mode = #tpu.pipeline_mode<synchronous>, transform_indices = @transform_2, window_bounds = array<i64: 48, 1>}, {pipeline_mode = #tpu.pipeline_mode<synchronous>, transform_indices = @transform_3, window_bounds = array<i64: 384, 640>}, {pipeline_mode = #tpu.pipeline_mode<synchronous>, transform_indices = @transform_4, window_bounds = array<i64: 1, 640>}, {pipeline_mode = #tpu.pipeline_mode<synchronous>, transform_indices = @transform_5, window_bounds = array<i64: 1920, 384>}, {pipeline_mode = #tpu.pipeline_mode<synchronous>, transform_indices = @transform_6, window_bounds = array<i64: 1, 384>}, {pipeline_mode = #tpu.pipeline_mode<synchronous>, transform_indices = @transform_7, window_bounds = array<i64: 1152, 256>}, {pipeline_mode = #tpu.pipeline_mode<synchronous>, transform_indices = @transform_8, window_bounds = array<i64: 1, 256>}, {pipeline_mode = #tpu.pipeline_mode<synchronous>, transform_indices = @transform_9, window_bounds = array<i64: 768, 128>}, {pipeline_mode = #tpu.pipeline_mode<synchronous>, transform_indices = @transform_10, window_bounds = array<i64: 1, 128>}, {pipeline_mode = #tpu.pipeline_mode<synchronous>, transform_indices = @transform_11, window_bounds = array<i64: 384, 128>}, {pipeline_mode = #tpu.pipeline_mode<synchronous>, transform_indices = @transform_12, window_bounds = array<i64: 1, 128>}, {pipeline_mode = #tpu.pipeline_mode<synchronous>, transform_indices = @transform_13, window_bounds = array<i64: 384, 128>}, {pipeline_mode = #tpu.pipeline_mode<synchronous>, transform_indices = @transform_14, window_bounds = array<i64: 1, 128>}, {transform_indices = @transform_15, window_bounds = array<i64: 48, 640>}, {transform_indices = @transform_16, window_bounds = array<i64: 48, 384>}, {transform_indices = @transform_17, window_bounds = array<i64: 48, 256>}, {transform_indices = @transform_18, window_bounds = array<i64: 48, 128>}, {transform_indices = @transform_19, window_bounds = array<i64: 48, 128>}, {transform_indices = @transform_20, window_bounds = array<i64: 48, 128>}]} {
    %c0 = arith.constant 0 : index
    %c0_0 = arith.constant 0 : index
    %0 = vector.load %arg3[%c0, %c0_0] : memref<48x1xf32, #tpu.memory_space<vmem>>, vector<48x1xf32>
    %c0_1 = arith.constant 0 : index
    %c0_2 = arith.constant 0 : index
    %1 = vector.load %arg1[%c0_1, %c0_2] : memref<48x64xf32, #tpu.memory_space<vmem>>, vector<48x64xf32>
    %c0_3 = arith.constant 0 : index
    %c0_4 = arith.constant 0 : index
    %2 = vector.load %arg2[%c0_3, %c0_4] : memref<64x128xf32, #tpu.memory_space<vmem>>, vector<64x128xf32>
    %cst = arith.constant dense<0.000000e+00> : vector<48x128xf32>
    %3 = tpu.matmul %1, %2, %cst {dimension_numbers = #tpu.dot_dimension_numbers<[1], [0], [0], [1], [0, 0, 1, 1], [], []>} : vector<48x64xf32>, vector<64x128xf32>, vector<48x128xf32> -> vector<48x128xf32>
    %cst_5 = arith.constant 0.000000e+00 : f32
    %4 = vector.broadcast %cst_5 : f32 to vector<1x128xf32>
    %5 = vector.extract_strided_slice %3 {offsets = [0, 0], sizes = [47, 128], strides = [1, 1]} : vector<48x128xf32> to vector<47x128xf32>
    %6 = tpu.concatenate %4, %5 in 0 : vector<1x128xf32>, vector<47x128xf32> -> vector<48x128xf32>
    %cst_6 = arith.constant 0.000000e+00 : f32
    %7 = vector.broadcast %cst_6 : f32 to vector<1x128xf32>
    %8 = vector.extract_strided_slice %3 {offsets = [1, 0], sizes = [47, 128], strides = [1, 1]} : vector<48x128xf32> to vector<47x128xf32>
    %9 = tpu.concatenate %8, %7 in 0 : vector<47x128xf32>, vector<1x128xf32> -> vector<48x128xf32>
    %10 = tpu.concatenate %6, %3, %9 in 1 : vector<48x128xf32>, vector<48x128xf32>, vector<48x128xf32> -> vector<48x384xf32>
    %11 = arith.truncf %10 : vector<48x384xf32> to vector<48x384xbf16>
    %c0_7 = arith.constant 0 : index
    %c0_8 = arith.constant 0 : index
    %12 = vector.load %arg4[%c0_7, %c0_8] : memref<384x640xbf16, #tpu.memory_space<vmem>>, vector<384x640xbf16>
    %cst_9 = arith.constant dense<0.000000e+00> : vector<48x640xf32>
    %13 = tpu.matmul %11, %12, %cst_9 {dimension_numbers = #tpu.dot_dimension_numbers<[1], [0], [0], [1], [0, 0, 1, 1], [], []>} : vector<48x384xbf16>, vector<384x640xbf16>, vector<48x640xf32> -> vector<48x640xf32>
    %c0_10 = arith.constant 0 : index
    %c0_11 = arith.constant 0 : index
    %14 = vector.load %arg5[%c0_10, %c0_11] : memref<1x640xf32, #tpu.memory_space<vmem>>, vector<1x640xf32>
    %15 = vector.broadcast %14 : vector<1x640xf32> to vector<48x640xf32>
    %16 = arith.addf %13, %15 : vector<48x640xf32>
    %cst_12 = arith.constant 0.000000e+00 : f32
    %17 = vector.broadcast %cst_12 : f32 to vector<48x640xf32>
    %18 = arith.cmpf oge, %16, %17 : vector<48x640xf32>
    %cst_13 = arith.constant 2.000000e-01 : f32
    %19 = vector.broadcast %cst_13 : f32 to vector<48x640xf32>
    %20 = arith.mulf %19, %16 : vector<48x640xf32>
    %21 = arith.select %18, %16, %20 : vector<48x640xi1>, vector<48x640xf32>
    %22 = vector.broadcast %0 : vector<48x1xf32> to vector<48x640xf32>
    %23 = arith.mulf %21, %22 : vector<48x640xf32>
    %c0_14 = arith.constant 0 : index
    %c0_15 = arith.constant 0 : index
    %24 = vector.load %arg16[%c0_14, %c0_15] : memref<48x640xf32, #tpu.memory_space<vmem>>, vector<48x640xf32>
    tpu.vector_store %arg16[%c0_14, %c0_15], %23 {strides = array<i32>} : memref<48x640xf32, #tpu.memory_space<vmem>>, vector<48x640xf32>,
    %cst_16 = arith.constant 0.000000e+00 : f32
    %25 = vector.broadcast %cst_16 : f32 to vector<1x640xf32>
    %26 = vector.extract_strided_slice %23 {offsets = [0, 0], sizes = [47, 640], strides = [1, 1]} : vector<48x640xf32> to vector<47x640xf32>
    %27 = tpu.concatenate %25, %26 in 0 : vector<1x640xf32>, vector<47x640xf32> -> vector<48x640xf32>
    %cst_17 = arith.constant 0.000000e+00 : f32
    %28 = vector.broadcast %cst_17 : f32 to vector<1x640xf32>
    %29 = vector.extract_strided_slice %23 {offsets = [1, 0], sizes = [47, 640], strides = [1, 1]} : vector<48x640xf32> to vector<47x640xf32>
    %30 = tpu.concatenate %29, %28 in 0 : vector<47x640xf32>, vector<1x640xf32> -> vector<48x640xf32>
    %31 = tpu.concatenate %27, %23, %30 in 1 : vector<48x640xf32>, vector<48x640xf32>, vector<48x640xf32> -> vector<48x1920xf32>
    %32 = arith.truncf %31 : vector<48x1920xf32> to vector<48x1920xbf16>
    %c0_18 = arith.constant 0 : index
    %c0_19 = arith.constant 0 : index
    %33 = vector.load %arg6[%c0_18, %c0_19] : memref<1920x384xbf16, #tpu.memory_space<vmem>>, vector<1920x384xbf16>
    %cst_20 = arith.constant dense<0.000000e+00> : vector<48x384xf32>
    %34 = tpu.matmul %32, %33, %cst_20 {dimension_numbers = #tpu.dot_dimension_numbers<[1], [0], [0], [1], [0, 0, 1, 1], [], []>} : vector<48x1920xbf16>, vector<1920x384xbf16>, vector<48x384xf32> -> vector<48x384xf32>
    %c0_21 = arith.constant 0 : index
    %c0_22 = arith.constant 0 : index
    %35 = vector.load %arg7[%c0_21, %c0_22] : memref<1x384xf32, #tpu.memory_space<vmem>>, vector<1x384xf32>
    %36 = vector.broadcast %35 : vector<1x384xf32> to vector<48x384xf32>
    %37 = arith.addf %34, %36 : vector<48x384xf32>
    %cst_23 = arith.constant 0.000000e+00 : f32
    %38 = vector.broadcast %cst_23 : f32 to vector<48x384xf32>
    %39 = arith.cmpf oge, %37, %38 : vector<48x384xf32>
    %cst_24 = arith.constant 2.000000e-01 : f32
    %40 = vector.broadcast %cst_24 : f32 to vector<48x384xf32>
    %41 = arith.mulf %40, %37 : vector<48x384xf32>
    %42 = arith.select %39, %37, %41 : vector<48x384xi1>, vector<48x384xf32>
    %43 = vector.broadcast %0 : vector<48x1xf32> to vector<48x384xf32>
    %44 = arith.mulf %42, %43 : vector<48x384xf32>
    %c0_25 = arith.constant 0 : index
    %c0_26 = arith.constant 0 : index
    %45 = vector.load %arg17[%c0_25, %c0_26] : memref<48x384xf32, #tpu.memory_space<vmem>>, vector<48x384xf32>
    tpu.vector_store %arg17[%c0_25, %c0_26], %44 {strides = array<i32>} : memref<48x384xf32, #tpu.memory_space<vmem>>, vector<48x384xf32>,
    %cst_27 = arith.constant 0.000000e+00 : f32
    %46 = vector.broadcast %cst_27 : f32 to vector<2x384xf32>
    %47 = vector.extract_strided_slice %44 {offsets = [0, 0], sizes = [46, 384], strides = [1, 1]} : vector<48x384xf32> to vector<46x384xf32>
    %48 = tpu.concatenate %46, %47 in 0 : vector<2x384xf32>, vector<46x384xf32> -> vector<48x384xf32>
    %cst_28 = arith.constant 0.000000e+00 : f32
    %49 = vector.broadcast %cst_28 : f32 to vector<2x384xf32>
    %50 = vector.extract_strided_slice %44 {offsets = [2, 0], sizes = [46, 384], strides = [1, 1]} : vector<48x384xf32> to vector<46x384xf32>
    %51 = tpu.concatenate %50, %49 in 0 : vector<46x384xf32>, vector<2x384xf32> -> vector<48x384xf32>
    %52 = tpu.concatenate %48, %44, %51 in 1 : vector<48x384xf32>, vector<48x384xf32>, vector<48x384xf32> -> vector<48x1152xf32>
    %53 = arith.truncf %52 : vector<48x1152xf32> to vector<48x1152xbf16>
    %c0_29 = arith.constant 0 : index
    %c0_30 = arith.constant 0 : index
    %54 = vector.load %arg8[%c0_29, %c0_30] : memref<1152x256xbf16, #tpu.memory_space<vmem>>, vector<1152x256xbf16>
    %cst_31 = arith.constant dense<0.000000e+00> : vector<48x256xf32>
    %55 = tpu.matmul %53, %54, %cst_31 {dimension_numbers = #tpu.dot_dimension_numbers<[1], [0], [0], [1], [0, 0, 1, 1], [], []>} : vector<48x1152xbf16>, vector<1152x256xbf16>, vector<48x256xf32> -> vector<48x256xf32>
    %c0_32 = arith.constant 0 : index
    %c0_33 = arith.constant 0 : index
    %56 = vector.load %arg9[%c0_32, %c0_33] : memref<1x256xf32, #tpu.memory_space<vmem>>, vector<1x256xf32>
    %57 = vector.broadcast %56 : vector<1x256xf32> to vector<48x256xf32>
    %58 = arith.addf %55, %57 : vector<48x256xf32>
    %cst_34 = arith.constant 0.000000e+00 : f32
    %59 = vector.broadcast %cst_34 : f32 to vector<48x256xf32>
    %60 = arith.cmpf oge, %58, %59 : vector<48x256xf32>
    %cst_35 = arith.constant 2.000000e-01 : f32
    %61 = vector.broadcast %cst_35 : f32 to vector<48x256xf32>
    %62 = arith.mulf %61, %58 : vector<48x256xf32>
    %63 = arith.select %60, %58, %62 : vector<48x256xi1>, vector<48x256xf32>
    %64 = vector.broadcast %0 : vector<48x1xf32> to vector<48x256xf32>
    %65 = arith.mulf %63, %64 : vector<48x256xf32>
    %c0_36 = arith.constant 0 : index
    %c0_37 = arith.constant 0 : index
    %66 = vector.load %arg18[%c0_36, %c0_37] : memref<48x256xf32, #tpu.memory_space<vmem>>, vector<48x256xf32>
    tpu.vector_store %arg18[%c0_36, %c0_37], %65 {strides = array<i32>} : memref<48x256xf32, #tpu.memory_space<vmem>>, vector<48x256xf32>,
    %cst_38 = arith.constant 0.000000e+00 : f32
    %67 = vector.broadcast %cst_38 : f32 to vector<4x256xf32>
    %68 = vector.extract_strided_slice %65 {offsets = [0, 0], sizes = [44, 256], strides = [1, 1]} : vector<48x256xf32> to vector<44x256xf32>
    %69 = tpu.concatenate %67, %68 in 0 : vector<4x256xf32>, vector<44x256xf32> -> vector<48x256xf32>
    %cst_39 = arith.constant 0.000000e+00 : f32
    %70 = vector.broadcast %cst_39 : f32 to vector<4x256xf32>
    %71 = vector.extract_strided_slice %65 {offsets = [4, 0], sizes = [44, 256], strides = [1, 1]} : vector<48x256xf32> to vector<44x256xf32>
    %72 = tpu.concatenate %71, %70 in 0 : vector<44x256xf32>, vector<4x256xf32> -> vector<48x256xf32>
    %73 = tpu.concatenate %69, %65, %72 in 1 : vector<48x256xf32>, vector<48x256xf32>, vector<48x256xf32> -> vector<48x768xf32>
    %74 = arith.truncf %73 : vector<48x768xf32> to vector<48x768xbf16>
    %c0_40 = arith.constant 0 : index
    %c0_41 = arith.constant 0 : index
    %75 = vector.load %arg10[%c0_40, %c0_41] : memref<768x128xbf16, #tpu.memory_space<vmem>>, vector<768x128xbf16>
    %cst_42 = arith.constant dense<0.000000e+00> : vector<48x128xf32>
    %76 = tpu.matmul %74, %75, %cst_42 {dimension_numbers = #tpu.dot_dimension_numbers<[1], [0], [0], [1], [0, 0, 1, 1], [], []>} : vector<48x768xbf16>, vector<768x128xbf16>, vector<48x128xf32> -> vector<48x128xf32>
    %c0_43 = arith.constant 0 : index
    %c0_44 = arith.constant 0 : index
    %77 = vector.load %arg11[%c0_43, %c0_44] : memref<1x128xf32, #tpu.memory_space<vmem>>, vector<1x128xf32>
    %78 = vector.broadcast %77 : vector<1x128xf32> to vector<48x128xf32>
    %79 = arith.addf %76, %78 : vector<48x128xf32>
    %cst_45 = arith.constant 0.000000e+00 : f32
    %80 = vector.broadcast %cst_45 : f32 to vector<48x128xf32>
    %81 = arith.cmpf oge, %79, %80 : vector<48x128xf32>
    %cst_46 = arith.constant 2.000000e-01 : f32
    %82 = vector.broadcast %cst_46 : f32 to vector<48x128xf32>
    %83 = arith.mulf %82, %79 : vector<48x128xf32>
    %84 = arith.select %81, %79, %83 : vector<48x128xi1>, vector<48x128xf32>
    %85 = vector.broadcast %0 : vector<48x1xf32> to vector<48x128xf32>
    %86 = arith.mulf %84, %85 : vector<48x128xf32>
    %c0_47 = arith.constant 0 : index
    %c0_48 = arith.constant 0 : index
    %87 = vector.load %arg19[%c0_47, %c0_48] : memref<48x128xf32, #tpu.memory_space<vmem>>, vector<48x128xf32>
    tpu.vector_store %arg19[%c0_47, %c0_48], %86 {strides = array<i32>} : memref<48x128xf32, #tpu.memory_space<vmem>>, vector<48x128xf32>,
    %cst_49 = arith.constant 0.000000e+00 : f32
    %88 = vector.broadcast %cst_49 : f32 to vector<1x128xf32>
    %89 = vector.extract_strided_slice %86 {offsets = [0, 0], sizes = [47, 128], strides = [1, 1]} : vector<48x128xf32> to vector<47x128xf32>
    %90 = tpu.concatenate %88, %89 in 0 : vector<1x128xf32>, vector<47x128xf32> -> vector<48x128xf32>
    %cst_50 = arith.constant 0.000000e+00 : f32
    %91 = vector.broadcast %cst_50 : f32 to vector<1x128xf32>
    %92 = vector.extract_strided_slice %86 {offsets = [1, 0], sizes = [47, 128], strides = [1, 1]} : vector<48x128xf32> to vector<47x128xf32>
    %93 = tpu.concatenate %92, %91 in 0 : vector<47x128xf32>, vector<1x128xf32> -> vector<48x128xf32>
    %94 = tpu.concatenate %90, %86, %93 in 1 : vector<48x128xf32>, vector<48x128xf32>, vector<48x128xf32> -> vector<48x384xf32>
    %95 = arith.truncf %94 : vector<48x384xf32> to vector<48x384xbf16>
    %c0_51 = arith.constant 0 : index
    %c0_52 = arith.constant 0 : index
    %96 = vector.load %arg12[%c0_51, %c0_52] : memref<384x128xbf16, #tpu.memory_space<vmem>>, vector<384x128xbf16>
    %cst_53 = arith.constant dense<0.000000e+00> : vector<48x128xf32>
    %97 = tpu.matmul %95, %96, %cst_53 {dimension_numbers = #tpu.dot_dimension_numbers<[1], [0], [0], [1], [0, 0, 1, 1], [], []>} : vector<48x384xbf16>, vector<384x128xbf16>, vector<48x128xf32> -> vector<48x128xf32>
    %c0_54 = arith.constant 0 : index
    %c0_55 = arith.constant 0 : index
    %98 = vector.load %arg13[%c0_54, %c0_55] : memref<1x128xf32, #tpu.memory_space<vmem>>, vector<1x128xf32>
    %99 = vector.broadcast %98 : vector<1x128xf32> to vector<48x128xf32>
    %100 = arith.addf %97, %99 : vector<48x128xf32>
    %cst_56 = arith.constant 0.000000e+00 : f32
    %101 = vector.broadcast %cst_56 : f32 to vector<48x128xf32>
    %102 = arith.cmpf oge, %100, %101 : vector<48x128xf32>
    %cst_57 = arith.constant 2.000000e-01 : f32
    %103 = vector.broadcast %cst_57 : f32 to vector<48x128xf32>
    %104 = arith.mulf %103, %100 : vector<48x128xf32>
    %105 = arith.select %102, %100, %104 : vector<48x128xi1>, vector<48x128xf32>
    %106 = vector.broadcast %0 : vector<48x1xf32> to vector<48x128xf32>
    %107 = arith.mulf %105, %106 : vector<48x128xf32>
    %c0_58 = arith.constant 0 : index
    %c0_59 = arith.constant 0 : index
    %108 = vector.load %arg20[%c0_58, %c0_59] : memref<48x128xf32, #tpu.memory_space<vmem>>, vector<48x128xf32>
    tpu.vector_store %arg20[%c0_58, %c0_59], %107 {strides = array<i32>} : memref<48x128xf32, #tpu.memory_space<vmem>>, vector<48x128xf32>,
    %cst_60 = arith.constant 0.000000e+00 : f32
    %109 = vector.broadcast %cst_60 : f32 to vector<1x128xf32>
    %110 = vector.extract_strided_slice %107 {offsets = [0, 0], sizes = [47, 128], strides = [1, 1]} : vector<48x128xf32> to vector<47x128xf32>
    %111 = tpu.concatenate %109, %110 in 0 : vector<1x128xf32>, vector<47x128xf32> -> vector<48x128xf32>
    %cst_61 = arith.constant 0.000000e+00 : f32
    %112 = vector.broadcast %cst_61 : f32 to vector<1x128xf32>
    %113 = vector.extract_strided_slice %107 {offsets = [1, 0], sizes = [47, 128], strides = [1, 1]} : vector<48x128xf32> to vector<47x128xf32>
    %114 = tpu.concatenate %113, %112 in 0 : vector<47x128xf32>, vector<1x128xf32> -> vector<48x128xf32>
    %115 = tpu.concatenate %111, %107, %114 in 1 : vector<48x128xf32>, vector<48x128xf32>, vector<48x128xf32> -> vector<48x384xf32>
    %116 = arith.truncf %115 : vector<48x384xf32> to vector<48x384xbf16>
    %c0_62 = arith.constant 0 : index
    %c0_63 = arith.constant 0 : index
    %117 = vector.load %arg14[%c0_62, %c0_63] : memref<384x128xbf16, #tpu.memory_space<vmem>>, vector<384x128xbf16>
    %cst_64 = arith.constant dense<0.000000e+00> : vector<48x128xf32>
    %118 = tpu.matmul %116, %117, %cst_64 {dimension_numbers = #tpu.dot_dimension_numbers<[1], [0], [0], [1], [0, 0, 1, 1], [], []>} : vector<48x384xbf16>, vector<384x128xbf16>, vector<48x128xf32> -> vector<48x128xf32>
    %c0_65 = arith.constant 0 : index
    %c0_66 = arith.constant 0 : index
    %119 = vector.load %arg15[%c0_65, %c0_66] : memref<1x128xf32, #tpu.memory_space<vmem>>, vector<1x128xf32>
    %120 = vector.broadcast %119 : vector<1x128xf32> to vector<48x128xf32>
    %121 = arith.addf %118, %120 : vector<48x128xf32>
    %122 = vector.broadcast %0 : vector<48x1xf32> to vector<48x128xf32>
    %123 = arith.mulf %121, %122 : vector<48x128xf32>
    %c0_67 = arith.constant 0 : index
    %c0_68 = arith.constant 0 : index
    %124 = vector.load %arg21[%c0_67, %c0_68] : memref<48x128xf32, #tpu.memory_space<vmem>>, vector<48x128xf32>
    tpu.vector_store %arg21[%c0_67, %c0_68], %123 {strides = array<i32>} : memref<48x128xf32, #tpu.memory_space<vmem>>, vector<48x128xf32>,
    return
  }
  func.func @transform_0(%arg0: i32) -> (i32, i32) {
    %c0_i32 = arith.constant 0 : i32
    %c0_i32_0 = arith.constant 0 : i32
    return %arg0, %c0_i32 : i32, i32
  }
  func.func @transform_1(%arg0: i32) -> (i32, i32) {
    %c0_i32 = arith.constant 0 : i32
    %c0_i32_0 = arith.constant 0 : i32
    %c0_i32_1 = arith.constant 0 : i32
    return %c0_i32, %c0_i32_0 : i32, i32
  }
  func.func @transform_2(%arg0: i32) -> (i32, i32) {
    %c0_i32 = arith.constant 0 : i32
    %c0_i32_0 = arith.constant 0 : i32
    %c0_i32_1 = arith.constant 0 : i32
    return %c0_i32, %c0_i32_0 : i32, i32
  }
  func.func @transform_3(%arg0: i32) -> (i32, i32) {
    %c0_i32 = arith.constant 0 : i32
    %c0_i32_0 = arith.constant 0 : i32
    %c0_i32_1 = arith.constant 0 : i32
    return %c0_i32, %c0_i32_0 : i32, i32
  }
  func.func @transform_4(%arg0: i32) -> (i32, i32) {
    %c0_i32 = arith.constant 0 : i32
    %c0_i32_0 = arith.constant 0 : i32
    %c0_i32_1 = arith.constant 0 : i32
    return %c0_i32, %c0_i32_0 : i32, i32
  }
  func.func @transform_5(%arg0: i32) -> (i32, i32) {
    %c0_i32 = arith.constant 0 : i32
    %c0_i32_0 = arith.constant 0 : i32
    %c0_i32_1 = arith.constant 0 : i32
    return %c0_i32, %c0_i32_0 : i32, i32
  }
  func.func @transform_6(%arg0: i32) -> (i32, i32) {
    %c0_i32 = arith.constant 0 : i32
    %c0_i32_0 = arith.constant 0 : i32
    %c0_i32_1 = arith.constant 0 : i32
    return %c0_i32, %c0_i32_0 : i32, i32
  }
  func.func @transform_7(%arg0: i32) -> (i32, i32) {
    %c0_i32 = arith.constant 0 : i32
    %c0_i32_0 = arith.constant 0 : i32
    %c0_i32_1 = arith.constant 0 : i32
    return %c0_i32, %c0_i32_0 : i32, i32
  }
  func.func @transform_8(%arg0: i32) -> (i32, i32) {
    %c0_i32 = arith.constant 0 : i32
    %c0_i32_0 = arith.constant 0 : i32
    %c0_i32_1 = arith.constant 0 : i32
    return %c0_i32, %c0_i32_0 : i32, i32
  }
  func.func @transform_9(%arg0: i32) -> (i32, i32) {
    %c0_i32 = arith.constant 0 : i32
    %c0_i32_0 = arith.constant 0 : i32
    %c0_i32_1 = arith.constant 0 : i32
    return %c0_i32, %c0_i32_0 : i32, i32
  }
  func.func @transform_10(%arg0: i32) -> (i32, i32) {
    %c0_i32 = arith.constant 0 : i32
    %c0_i32_0 = arith.constant 0 : i32
    %c0_i32_1 = arith.constant 0 : i32
    return %c0_i32, %c0_i32_0 : i32, i32
  }
  func.func @transform_11(%arg0: i32) -> (i32, i32) {
    %c0_i32 = arith.constant 0 : i32
    %c0_i32_0 = arith.constant 0 : i32
    %c0_i32_1 = arith.constant 0 : i32
    return %c0_i32, %c0_i32_0 : i32, i32
  }
  func.func @transform_12(%arg0: i32) -> (i32, i32) {
    %c0_i32 = arith.constant 0 : i32
    %c0_i32_0 = arith.constant 0 : i32
    %c0_i32_1 = arith.constant 0 : i32
    return %c0_i32, %c0_i32_0 : i32, i32
  }
  func.func @transform_13(%arg0: i32) -> (i32, i32) {
    %c0_i32 = arith.constant 0 : i32
    %c0_i32_0 = arith.constant 0 : i32
    %c0_i32_1 = arith.constant 0 : i32
    return %c0_i32, %c0_i32_0 : i32, i32
  }
  func.func @transform_14(%arg0: i32) -> (i32, i32) {
    %c0_i32 = arith.constant 0 : i32
    %c0_i32_0 = arith.constant 0 : i32
    %c0_i32_1 = arith.constant 0 : i32
    return %c0_i32, %c0_i32_0 : i32, i32
  }
  func.func @transform_15(%arg0: i32) -> (i32, i32) {
    %c0_i32 = arith.constant 0 : i32
    %c0_i32_0 = arith.constant 0 : i32
    return %arg0, %c0_i32 : i32, i32
  }
  func.func @transform_16(%arg0: i32) -> (i32, i32) {
    %c0_i32 = arith.constant 0 : i32
    %c0_i32_0 = arith.constant 0 : i32
    return %arg0, %c0_i32 : i32, i32
  }
  func.func @transform_17(%arg0: i32) -> (i32, i32) {
    %c0_i32 = arith.constant 0 : i32
    %c0_i32_0 = arith.constant 0 : i32
    return %arg0, %c0_i32 : i32, i32
  }
  func.func @transform_18(%arg0: i32) -> (i32, i32) {
    %c0_i32 = arith.constant 0 : i32
    %c0_i32_0 = arith.constant 0 : i32
    return %arg0, %c0_i32 : i32, i32
  }
  func.func @transform_19(%arg0: i32) -> (i32, i32) {
    %c0_i32 = arith.constant 0 : i32
    %c0_i32_0 = arith.constant 0 : i32
    return %arg0, %c0_i32 : i32, i32
  }
  func.func @transform_20(%arg0: i32) -> (i32, i32) {
    %c0_i32 = arith.constant 0 : i32
    %c0_i32_0 = arith.constant 0 : i32
    return %arg0, %c0_i32 : i32, i32
  }
}

</mosaic_0001>

<llo_original>
// kernel: forward.1
$region0: #{forward.1}
  #allocation0 [shape = 'u32[]', space=smem, size = 0x4, offset = 0x4, fixed_abs, tag = 'smem constant byte address 0x4 - core index']
  #allocation1 [shape = 'u32[144,128]{1,0:T(1,128)}', space=vmem, size = 0x12000, scoped, tag = 'internal scratch']
  %s0 = inlined_call_operand.vmem [shape: f32[96,64], index: 0, kind: input, shape index: {}]
  %s1 = inlined_call_operand.vmem [shape: f32[64,128], index: 1, kind: input, shape index: {}]
  %s2 = inlined_call_operand.vmem [shape: f32[48,1], index: 2, kind: input, shape index: {}]
  %s3 = inlined_call_operand.vmem [shape: bf16[384,640], index: 3, kind: input, shape index: {}]
  %s4 = inlined_call_operand.vmem [shape: f32[1,640], index: 4, kind: input, shape index: {}]
  %s5 = inlined_call_operand.vmem [shape: bf16[1920,384], index: 5, kind: input, shape index: {}]
  %s6 = inlined_call_operand.vmem [shape: f32[1,384], index: 6, kind: input, shape index: {}]
  %s7 = inlined_call_operand.vmem [shape: bf16[1152,256], index: 7, kind: input, shape index: {}]
  %s8 = inlined_call_operand.vmem [shape: f32[1,256], index: 8, kind: input, shape index: {}]
  %s9 = inlined_call_operand.vmem [shape: bf16[768,128], index: 9, kind: input, shape index: {}]
  %s10 = inlined_call_operand.vmem [shape: f32[1,128], index: 10, kind: input, shape index: {}]
  %s11 = inlined_call_operand.vmem [shape: bf16[384,128], index: 11, kind: input, shape index: {}]
  %s12 = inlined_call_operand.vmem [shape: f32[1,128], index: 12, kind: input, shape index: {}]
  %s13 = inlined_call_operand.vmem [shape: bf16[384,128], index: 13, kind: input, shape index: {}]
  %s14 = inlined_call_operand.vmem [shape: f32[1,128], index: 14, kind: input, shape index: {}]
  %s15 = inlined_call_operand.vmem [shape: f32[96,640], index: 15, kind: output, shape index: {0}]
  %s16 = inlined_call_operand.vmem [shape: f32[96,384], index: 16, kind: output, shape index: {1}]
  %s17 = inlined_call_operand.vmem [shape: f32[96,256], index: 17, kind: output, shape index: {2}]
  %s18 = inlined_call_operand.vmem [shape: f32[96,128], index: 18, kind: output, shape index: {3}]
  %s19 = inlined_call_operand.vmem [shape: f32[96,128], index: 19, kind: output, shape index: {4}]
  %s20 = inlined_call_operand.vmem [shape: f32[96,128], index: 20, kind: output, shape index: {5}]
  %21 = xla_tuple %s15, %s16, %s17, %s18, %s19, %s20
  %s22 = sld [smem:[#allocation0]]
  $region133: #{forward.1} parent=0
    _
  %s24 = ssub.s32 1, %s22
  %s25 = scalar_select 0, %s24, %s22
  loop: start=0, step=1, limit=4
  $region2: #{forward.1} parent=0 // loop_pre_header
    _
  $region3: #{forward.1} parent=0 // loop_header
    %s27 = sphi 0, %s31
    %p28 = scmp.ge.s32.totalorder %s27, 4
    %s37 = sphi 0, %s39
    %s40 = sphi 0, %s37
    %s41 = sphi 0, %s40
    %s57 = sphi 0, %s41
    %s61 = sphi 0, %s61
    %s63 = sphi 0, %s61
    %s64 = sphi 0, %s63
    %s78 = sphi 0, %s64
    %s82 = sphi 0, %s82
    %s84 = sphi 0, %s82
    %s85 = sphi 0, %s84
    %s99 = sphi 0, %s85
    %s103 = sphi 0, %s103
    %s105 = sphi 0, %s103
    %s106 = sphi 0, %s105
    %s120 = sphi 0, %s106
    %s124 = sphi 0, %s124
    %s126 = sphi 0, %s124
    %s127 = sphi 0, %s126
    %s141 = sphi 0, %s127
    %s145 = sphi 0, %s145
    %s147 = sphi 0, %s145
    %s148 = sphi 0, %s147
    %s162 = sphi 0, %s148
    %s166 = sphi 0, %s166
    %s168 = sphi 0, %s166
    %s169 = sphi 0, %s168
    %s183 = sphi 0, %s169
    %s187 = sphi 0, %s187
    %s189 = sphi 0, %s187
    %s190 = sphi 0, %s189
    %s204 = sphi 0, %s190
    %s208 = sphi 0, %s208
    %s210 = sphi 0, %s208
    %s211 = sphi 0, %s210
    %s225 = sphi 0, %s211
    %s229 = sphi 0, %s229
    %s231 = sphi 0, %s229
    %s232 = sphi 0, %s231
    %s246 = sphi 0, %s232
    %s250 = sphi 0, %s250
    %s252 = sphi 0, %s250
    %s253 = sphi 0, %s252
    %s267 = sphi 0, %s253
    %s271 = sphi 0, %s271
    %s273 = sphi 0, %s271
    %s274 = sphi 0, %s273
    %s288 = sphi 0, %s274
    %s292 = sphi 0, %s292
    %s294 = sphi 0, %s292
    %s295 = sphi 0, %s294
    %s309 = sphi 0, %s295
    %s313 = sphi 0, %s313
    %s315 = sphi 0, %s313
    %s316 = sphi 0, %s315
    %s330 = sphi 0, %s316
    %s334 = sphi 0, %s334
    %s336 = sphi 0, %s334
    %s337 = sphi 0, %s336
    %s351 = sphi 0, %s337
    %s357 = sphi 0, %s359
    %s360 = sphi 0, %s357
    %s361 = sphi 0, %s360
    %s377 = sphi 0, %s361
    %s383 = sphi 0, %s385
    %s386 = sphi 0, %s383
    %s387 = sphi 0, %s386
    %s403 = sphi 0, %s387
    %s409 = sphi 0, %s411
    %s412 = sphi 0, %s409
    %s413 = sphi 0, %s412
    %s429 = sphi 0, %s413
    %s435 = sphi 0, %s437
    %s438 = sphi 0, %s435
    %s439 = sphi 0, %s438
    %s455 = sphi 0, %s439
    %s461 = sphi 0, %s463
    %s464 = sphi 0, %s461
    %s465 = sphi 0, %s464
    %s481 = sphi 0, %s465
    %s487 = sphi 0, %s489
    %s490 = sphi 0, %s487
    %s491 = sphi 0, %s490
    %s507 = sphi 0, %s491
  $region4: #{forward.1} parent=0 // loop_header_branch
    %30 = sbr.rel (%p28) target = $region8
  $region5: #{forward.1} parent=0 // loop_body
    %s32 = ssub.s32 %s27, 1
    %s33 = ssub.s32 %s27, 2
    %s34 = sadd.s32 %s27, 1
    %s35 = ssub.s32 %s27, %s34
    %p36 = scmp.eq.s32.totalorder %s35, 0
    %s38 = sadd.s32 %s37, 1
    %s39 = scalar_select %p36, %s37, %s38
    %p42 = pneg %p36
    %p43 = scmp.eq.s32.totalorder %s27, 1
    %p44 = por %p42, %p43
    %p45 = scmp.ne.s32.totalorder %s37, %s40
    %p46 = scmp.eq.s32.totalorder %s27, 0
    %p47 = por %p45, %p46
    %p48 = scmp.ne.s32.totalorder %s37, %s40
    %p49 = scmp.eq.s32.totalorder %s32, 1
    %p50 = por %p48, %p49
    %p51 = scmp.ne.s32.totalorder %s40, %s41
    %p52 = scmp.eq.s32.totalorder %s32, 0
    %p53 = por %p51, %p52
    %p54 = scmp.ne.s32.totalorder %s40, %s41
    %p55 = scmp.eq.s32.totalorder %s33, 1
    %p56 = por %p54, %p55
    %p58 = scmp.ne.s32.totalorder %s41, %s57
    %p59 = scmp.eq.s32.totalorder %s33, 0
    %p60 = por %p58, %p59
    %s62 = sadd.s32 %s61, 1
    %p65 = scmp.eq.s32.totalorder %s27, 1
    %p66 = scmp.ne.s32.totalorder %s61, %s63
    %p67 = scmp.eq.s32.totalorder %s27, 0
    %p68 = por %p66, %p67
    %p69 = scmp.ne.s32.totalorder %s61, %s63
    %p70 = scmp.eq.s32.totalorder %s32, 1
    %p71 = por %p69, %p70
    %p72 = scmp.ne.s32.totalorder %s63, %s64
    %p73 = scmp.eq.s32.totalorder %s32, 0
    %p74 = por %p72, %p73
    %p75 = scmp.ne.s32.totalorder %s63, %s64
    %p76 = scmp.eq.s32.totalorder %s33, 1
    %p77 = por %p75, %p76
    %p79 = scmp.ne.s32.totalorder %s64, %s78
    %p80 = scmp.eq.s32.totalorder %s33, 0
    %p81 = por %p79, %p80
    %s83 = sadd.s32 %s82, 1
    %p86 = scmp.eq.s32.totalorder %s27, 1
    %p87 = scmp.ne.s32.totalorder %s82, %s84
    %p88 = scmp.eq.s32.totalorder %s27, 0
    %p89 = por %p87, %p88
    %p90 = scmp.ne.s32.totalorder %s82, %s84
    %p91 = scmp.eq.s32.totalorder %s32, 1
    %p92 = por %p90, %p91
    %p93 = scmp.ne.s32.totalorder %s84, %s85
    %p94 = scmp.eq.s32.totalorder %s32, 0
    %p95 = por %p93, %p94
    %p96 = scmp.ne.s32.totalorder %s84, %s85
    %p97 = scmp.eq.s32.totalorder %s33, 1
    %p98 = por %p96, %p97
    %p100 = scmp.ne.s32.totalorder %s85, %s99
    %p101 = scmp.eq.s32.totalorder %s33, 0
    %p102 = por %p100, %p101
    %s104 = sadd.s32 %s103, 1
    %p107 = scmp.eq.s32.totalorder %s27, 1
    %p108 = scmp.ne.s32.totalorder %s103, %s105
    %p109 = scmp.eq.s32.totalorder %s27, 0
    %p110 = por %p108, %p109
    %p111 = scmp.ne.s32.totalorder %s103, %s105
    %p112 = scmp.eq.s32.totalorder %s32, 1
    %p113 = por %p111, %p112
    %p114 = scmp.ne.s32.totalorder %s105, %s106
    %p115 = scmp.eq.s32.totalorder %s32, 0
    %p116 = por %p114, %p115
    %p117 = scmp.ne.s32.totalorder %s105, %s106
    %p118 = scmp.eq.s32.totalorder %s33, 1
    %p119 = por %p117, %p118
    %p121 = scmp.ne.s32.totalorder %s106, %s120
    %p122 = scmp.eq.s32.totalorder %s33, 0
    %p123 = por %p121, %p122
    %s125 = sadd.s32 %s124, 1
    %p128 = scmp.eq.s32.totalorder %s27, 1
    %p129 = scmp.ne.s32.totalorder %s124, %s126
    %p130 = scmp.eq.s32.totalorder %s27, 0
    %p131 = por %p129, %p130
    %p132 = scmp.ne.s32.totalorder %s124, %s126
    %p133 = scmp.eq.s32.totalorder %s32, 1
    %p134 = por %p132, %p133
    %p135 = scmp.ne.s32.totalorder %s126, %s127
    %p136 = scmp.eq.s32.totalorder %s32, 0
    %p137 = por %p135, %p136
    %p138 = scmp.ne.s32.totalorder %s126, %s127
    %p139 = scmp.eq.s32.totalorder %s33, 1
    %p140 = por %p138, %p139
    %p142 = scmp.ne.s32.totalorder %s127, %s141
    %p143 = scmp.eq.s32.totalorder %s33, 0
    %p144 = por %p142, %p143
    %s146 = sadd.s32 %s145, 1
    %p149 = scmp.eq.s32.totalorder %s27, 1
    %p150 = scmp.ne.s32.totalorder %s145, %s147
    %p151 = scmp.eq.s32.totalorder %s27, 0
    %p152 = por %p150, %p151
    %p153 = scmp.ne.s32.totalorder %s145, %s147
    %p154 = scmp.eq.s32.totalorder %s32, 1
    %p155 = por %p153, %p154
    %p156 = scmp.ne.s32.totalorder %s147, %s148
    %p157 = scmp.eq.s32.totalorder %s32, 0
    %p158 = por %p156, %p157
    %p159 = scmp.ne.s32.totalorder %s147, %s148
    %p160 = scmp.eq.s32.totalorder %s33, 1
    %p161 = por %p159, %p160
    %p163 = scmp.ne.s32.totalorder %s148, %s162
    %p164 = scmp.eq.s32.totalorder %s33, 0
    %p165 = por %p163, %p164
    %s167 = sadd.s32 %s166, 1
    %p170 = scmp.eq.s32.totalorder %s27, 1
    %p171 = scmp.ne.s32.totalorder %s166, %s168
    %p172 = scmp.eq.s32.totalorder %s27, 0
    %p173 = por %p171, %p172
    %p174 = scmp.ne.s32.totalorder %s166, %s168
    %p175 = scmp.eq.s32.totalorder %s32, 1
    %p176 = por %p174, %p175
    %p177 = scmp.ne.s32.totalorder %s168, %s169
    %p178 = scmp.eq.s32.totalorder %s32, 0
    %p179 = por %p177, %p178
    %p180 = scmp.ne.s32.totalorder %s168, %s169
    %p181 = scmp.eq.s32.totalorder %s33, 1
    %p182 = por %p180, %p181
    %p184 = scmp.ne.s32.totalorder %s169, %s183
    %p185 = scmp.eq.s32.totalorder %s33, 0
    %p186 = por %p184, %p185
    %s188 = sadd.s32 %s187, 1
    %p191 = scmp.eq.s32.totalorder %s27, 1
    %p192 = scmp.ne.s32.totalorder %s187, %s189
    %p193 = scmp.eq.s32.totalorder %s27, 0
    %p194 = por %p192, %p193
    %p195 = scmp.ne.s32.totalorder %s187, %s189
    %p196 = scmp.eq.s32.totalorder %s32, 1
    %p197 = por %p195, %p196
    %p198 = scmp.ne.s32.totalorder %s189, %s190
    %p199 = scmp.eq.s32.totalorder %s32, 0
    %p200 = por %p198, %p199
    %p201 = scmp.ne.s32.totalorder %s189, %s190
    %p202 = scmp.eq.s32.totalorder %s33, 1
    %p203 = por %p201, %p202
    %p205 = scmp.ne.s32.totalorder %s190, %s204
    %p206 = scmp.eq.s32.totalorder %s33, 0
    %p207 = por %p205, %p206
    %s209 = sadd.s32 %s208, 1
    %p212 = scmp.eq.s32.totalorder %s27, 1
    %p213 = scmp.ne.s32.totalorder %s208, %s210
    %p214 = scmp.eq.s32.totalorder %s27, 0
    %p215 = por %p213, %p214
    %p216 = scmp.ne.s32.totalorder %s208, %s210
    %p217 = scmp.eq.s32.totalorder %s32, 1
    %p218 = por %p216, %p217
    %p219 = scmp.ne.s32.totalorder %s210, %s211
    %p220 = scmp.eq.s32.totalorder %s32, 0
    %p221 = por %p219, %p220
    %p222 = scmp.ne.s32.totalorder %s210, %s211
    %p223 = scmp.eq.s32.totalorder %s33, 1
    %p224 = por %p222, %p223
    %p226 = scmp.ne.s32.totalorder %s211, %s225
    %p227 = scmp.eq.s32.totalorder %s33, 0
    %p228 = por %p226, %p227
    %s230 = sadd.s32 %s229, 1
    %p233 = scmp.eq.s32.totalorder %s27, 1
    %p234 = scmp.ne.s32.totalorder %s229, %s231
    %p235 = scmp.eq.s32.totalorder %s27, 0
    %p236 = por %p234, %p235
    %p237 = scmp.ne.s32.totalorder %s229, %s231
    %p238 = scmp.eq.s32.totalorder %s32, 1
    %p239 = por %p237, %p238
    %p240 = scmp.ne.s32.totalorder %s231, %s232
    %p241 = scmp.eq.s32.totalorder %s32, 0
    %p242 = por %p240, %p241
    %p243 = scmp.ne.s32.totalorder %s231, %s232
    %p244 = scmp.eq.s32.totalorder %s33, 1
    %p245 = por %p243, %p244
    %p247 = scmp.ne.s32.totalorder %s232, %s246
    %p248 = scmp.eq.s32.totalorder %s33, 0
    %p249 = por %p247, %p248
    %s251 = sadd.s32 %s250, 1
    %p254 = scmp.eq.s32.totalorder %s27, 1
    %p255 = scmp.ne.s32.totalorder %s250, %s252
    %p256 = scmp.eq.s32.totalorder %s27, 0
    %p257 = por %p255, %p256
    %p258 = scmp.ne.s32.totalorder %s250, %s252
    %p259 = scmp.eq.s32.totalorder %s32, 1
    %p260 = por %p258, %p259
    %p261 = scmp.ne.s32.totalorder %s252, %s253
    %p262 = scmp.eq.s32.totalorder %s32, 0
    %p263 = por %p261, %p262
    %p264 = scmp.ne.s32.totalorder %s252, %s253
    %p265 = scmp.eq.s32.totalorder %s33, 1
    %p266 = por %p264, %p265
    %p268 = scmp.ne.s32.totalorder %s253, %s267
    %p269 = scmp.eq.s32.totalorder %s33, 0
    %p270 = por %p268, %p269
    %s272 = sadd.s32 %s271, 1
    %p275 = scmp.eq.s32.totalorder %s27, 1
    %p276 = scmp.ne.s32.totalorder %s271, %s273
    %p277 = scmp.eq.s32.totalorder %s27, 0
    %p278 = por %p276, %p277
    %p279 = scmp.ne.s32.totalorder %s271, %s273
    %p280 = scmp.eq.s32.totalorder %s32, 1
    %p281 = por %p279, %p280
    %p282 = scmp.ne.s32.totalorder %s273, %s274
    %p283 = scmp.eq.s32.totalorder %s32, 0
    %p284 = por %p282, %p283
    %p285 = scmp.ne.s32.totalorder %s273, %s274
    %p286 = scmp.eq.s32.totalorder %s33, 1
    %p287 = por %p285, %p286
    %p289 = scmp.ne.s32.totalorder %s274, %s288
    %p290 = scmp.eq.s32.totalorder %s33, 0
    %p291 = por %p289, %p290
    %s293 = sadd.s32 %s292, 1
    %p296 = scmp.eq.s32.totalorder %s27, 1
    %p297 = scmp.ne.s32.totalorder %s292, %s294
    %p298 = scmp.eq.s32.totalorder %s27, 0
    %p299 = por %p297, %p298
    %p300 = scmp.ne.s32.totalorder %s292, %s294
    %p301 = scmp.eq.s32.totalorder %s32, 1
    %p302 = por %p300, %p301
    %p303 = scmp.ne.s32.totalorder %s294, %s295
    %p304 = scmp.eq.s32.totalorder %s32, 0
    %p305 = por %p303, %p304
    %p306 = scmp.ne.s32.totalorder %s294, %s295
    %p307 = scmp.eq.s32.totalorder %s33, 1
    %p308 = por %p306, %p307
    %p310 = scmp.ne.s32.totalorder %s295, %s309
    %p311 = scmp.eq.s32.totalorder %s33, 0
    %p312 = por %p310, %p311
    %s314 = sadd.s32 %s313, 1
    %p317 = scmp.eq.s32.totalorder %s27, 1
    %p318 = scmp.ne.s32.totalorder %s313, %s315
    %p319 = scmp.eq.s32.totalorder %s27, 0
    %p320 = por %p318, %p319
    %p321 = scmp.ne.s32.totalorder %s313, %s315
    %p322 = scmp.eq.s32.totalorder %s32, 1
    %p323 = por %p321, %p322
    %p324 = scmp.ne.s32.totalorder %s315, %s316
    %p325 = scmp.eq.s32.totalorder %s32, 0
    %p326 = por %p324, %p325
    %p327 = scmp.ne.s32.totalorder %s315, %s316
    %p328 = scmp.eq.s32.totalorder %s33, 1
    %p329 = por %p327, %p328
    %p331 = scmp.ne.s32.totalorder %s316, %s330
    %p332 = scmp.eq.s32.totalorder %s33, 0
    %p333 = por %p331, %p332
    %s335 = sadd.s32 %s334, 1
    %p338 = scmp.eq.s32.totalorder %s27, 1
    %p339 = scmp.ne.s32.totalorder %s334, %s336
    %p340 = scmp.eq.s32.totalorder %s27, 0
    %p341 = por %p339, %p340
    %p342 = scmp.ne.s32.totalorder %s334, %s336
    %p343 = scmp.eq.s32.totalorder %s32, 1
    %p344 = por %p342, %p343
    %p345 = scmp.ne.s32.totalorder %s336, %s337
    %p346 = scmp.eq.s32.totalorder %s32, 0
    %p347 = por %p345, %p346
    %p348 = scmp.ne.s32.totalorder %s336, %s337
    %p349 = scmp.eq.s32.totalorder %s33, 1
    %p350 = por %p348, %p349
    %p352 = scmp.ne.s32.totalorder %s337, %s351
    %p353 = scmp.eq.s32.totalorder %s33, 0
    %p354 = por %p352, %p353
    %s355 = ssub.s32 %s27, %s34
    %p356 = scmp.eq.s32.totalorder %s355, 0
    %s358 = sadd.s32 %s357, 1
    %s359 = scalar_select %p356, %s357, %s358
    %p362 = pneg %p356
    %p363 = scmp.eq.s32.totalorder %s27, 1
    %p364 = por %p362, %p363
    %p365 = scmp.ne.s32.totalorder %s357, %s360
    %p366 = scmp.eq.s32.totalorder %s27, 0
    %p367 = por %p365, %p366
    %p368 = scmp.ne.s32.totalorder %s357, %s360
    %p369 = scmp.eq.s32.totalorder %s32, 1
    %p370 = por %p368, %p369
    %p371 = scmp.ne.s32.totalorder %s360, %s361
    %p372 = scmp.eq.s32.totalorder %s32, 0
    %p373 = por %p371, %p372
    %p374 = scmp.ne.s32.totalorder %s360, %s361
    %p375 = scmp.eq.s32.totalorder %s33, 1
    %p376 = por %p374, %p375
    %p378 = scmp.ne.s32.totalorder %s361, %s377
    %p379 = scmp.eq.s32.totalorder %s33, 0
    %p380 = por %p378, %p379
    %s381 = ssub.s32 %s27, %s34
    %p382 = scmp.eq.s32.totalorder %s381, 0
    %s384 = sadd.s32 %s383, 1
    %s385 = scalar_select %p382, %s383, %s384
    %p388 = pneg %p382
    %p389 = scmp.eq.s32.totalorder %s27, 1
    %p390 = por %p388, %p389
    %p391 = scmp.ne.s32.totalorder %s383, %s386
    %p392 = scmp.eq.s32.totalorder %s27, 0
    %p393 = por %p391, %p392
    %p394 = scmp.ne.s32.totalorder %s383, %s386
    %p395 = scmp.eq.s32.totalorder %s32, 1
    %p396 = por %p394, %p395
    %p397 = scmp.ne.s32.totalorder %s386, %s387
    %p398 = scmp.eq.s32.totalorder %s32, 0
    %p399 = por %p397, %p398
    %p400 = scmp.ne.s32.totalorder %s386, %s387
    %p401 = scmp.eq.s32.totalorder %s33, 1
    %p402 = por %p400, %p401
    %p404 = scmp.ne.s32.totalorder %s387, %s403
    %p405 = scmp.eq.s32.totalorder %s33, 0
    %p406 = por %p404, %p405
    %s407 = ssub.s32 %s27, %s34
    %p408 = scmp.eq.s32.totalorder %s407, 0
    %s410 = sadd.s32 %s409, 1
    %s411 = scalar_select %p408, %s409, %s410
    %p414 = pneg %p408
    %p415 = scmp.eq.s32.totalorder %s27, 1
    %p416 = por %p414, %p415
    %p417 = scmp.ne.s32.totalorder %s409, %s412
    %p418 = scmp.eq.s32.totalorder %s27, 0
    %p419 = por %p417, %p418
    %p420 = scmp.ne.s32.totalorder %s409, %s412
    %p421 = scmp.eq.s32.totalorder %s32, 1
    %p422 = por %p420, %p421
    %p423 = scmp.ne.s32.totalorder %s412, %s413
    %p424 = scmp.eq.s32.totalorder %s32, 0
    %p425 = por %p423, %p424
    %p426 = scmp.ne.s32.totalorder %s412, %s413
    %p427 = scmp.eq.s32.totalorder %s33, 1
    %p428 = por %p426, %p427
    %p430 = scmp.ne.s32.totalorder %s413, %s429
    %p431 = scmp.eq.s32.totalorder %s33, 0
    %p432 = por %p430, %p431
    %s433 = ssub.s32 %s27, %s34
    %p434 = scmp.eq.s32.totalorder %s433, 0
    %s436 = sadd.s32 %s435, 1
    %s437 = scalar_select %p434, %s435, %s436
    %p440 = pneg %p434
    %p441 = scmp.eq.s32.totalorder %s27, 1
    %p442 = por %p440, %p441
    %p443 = scmp.ne.s32.totalorder %s435, %s438
    %p444 = scmp.eq.s32.totalorder %s27, 0
    %p445 = por %p443, %p444
    %p446 = scmp.ne.s32.totalorder %s435, %s438
    %p447 = scmp.eq.s32.totalorder %s32, 1
    %p448 = por %p446, %p447
    %p449 = scmp.ne.s32.totalorder %s438, %s439
    %p450 = scmp.eq.s32.totalorder %s32, 0
    %p451 = por %p449, %p450
    %p452 = scmp.ne.s32.totalorder %s438, %s439
    %p453 = scmp.eq.s32.totalorder %s33, 1
    %p454 = por %p452, %p453
    %p456 = scmp.ne.s32.totalorder %s439, %s455
    %p457 = scmp.eq.s32.totalorder %s33, 0
    %p458 = por %p456, %p457
    %s459 = ssub.s32 %s27, %s34
    %p460 = scmp.eq.s32.totalorder %s459, 0
    %s462 = sadd.s32 %s461, 1
    %s463 = scalar_select %p460, %s461, %s462
    %p466 = pneg %p460
    %p467 = scmp.eq.s32.totalorder %s27, 1
    %p468 = por %p466, %p467
    %p469 = scmp.ne.s32.totalorder %s461, %s464
    %p470 = scmp.eq.s32.totalorder %s27, 0
    %p471 = por %p469, %p470
    %p472 = scmp.ne.s32.totalorder %s461, %s464
    %p473 = scmp.eq.s32.totalorder %s32, 1
    %p474 = por %p472, %p473
    %p475 = scmp.ne.s32.totalorder %s464, %s465
    %p476 = scmp.eq.s32.totalorder %s32, 0
    %p477 = por %p475, %p476
    %p478 = scmp.ne.s32.totalorder %s464, %s465
    %p479 = scmp.eq.s32.totalorder %s33, 1
    %p480 = por %p478, %p479
    %p482 = scmp.ne.s32.totalorder %s465, %s481
    %p483 = scmp.eq.s32.totalorder %s33, 0
    %p484 = por %p482, %p483
    %s485 = ssub.s32 %s27, %s34
    %p486 = scmp.eq.s32.totalorder %s485, 0
    %s488 = sadd.s32 %s487, 1
    %s489 = scalar_select %p486, %s487, %s488
    %p492 = pneg %p486
    %p493 = scmp.eq.s32.totalorder %s27, 1
    %p494 = por %p492, %p493
    %p495 = scmp.ne.s32.totalorder %s487, %s490
    %p496 = scmp.eq.s32.totalorder %s27, 0
    %p497 = por %p495, %p496
    %p498 = scmp.ne.s32.totalorder %s487, %s490
    %p499 = scmp.eq.s32.totalorder %s32, 1
    %p500 = por %p498, %p499
    %p501 = scmp.ne.s32.totalorder %s490, %s491
    %p502 = scmp.eq.s32.totalorder %s32, 0
    %p503 = por %p501, %p502
    %p504 = scmp.ne.s32.totalorder %s490, %s491
    %p505 = scmp.eq.s32.totalorder %s33, 1
    %p506 = por %p504, %p505
    %p508 = scmp.ne.s32.totalorder %s491, %s507
    %p509 = scmp.eq.s32.totalorder %s33, 0
    %p510 = por %p508, %p509
    %p511 = scmp.le.s32.totalorder 1, %s27
    %p512 = scmp.lt.s32.totalorder %s27, 3
    %p513 = pnand %p511, %p512
    %p514 = pneg %p513
    // Predicated region
    $region9: #{forward.1} parent=5 // pred_check
      _
    $region10: #{forward.1} parent=5 // pred_check_branch
      %516 = sbr.rel (%p513) target = $region12
    $region11: #{forward.1} parent=5 // pred_region
      %s517 = ssub.s32 %s27, 1
      // Predicated region
      $region13: #{forward.1} parent=11 // pred_check
        %p518 = pneg %p74
      $region14: #{forward.1} parent=11 // pred_check_branch
        %520 = sbr.rel (%p518) target = $region16
      $region15: #{forward.1} parent=11 // pred_region
        _
      $region16: #{forward.1} parent=11 // pred_fallthru
        _
      // Predicated region
      $region17: #{forward.1} parent=11 // pred_check
        %p521 = pneg %p95
      $region18: #{forward.1} parent=11 // pred_check_branch
        %523 = sbr.rel (%p521) target = $region20
      $region19: #{forward.1} parent=11 // pred_region
        _
      $region20: #{forward.1} parent=11 // pred_fallthru
        _
      // Predicated region
      $region21: #{forward.1} parent=11 // pred_check
        %p524 = pneg %p116
      $region22: #{forward.1} parent=11 // pred_check_branch
        %526 = sbr.rel (%p524) target = $region24
      $region23: #{forward.1} parent=11 // pred_region
        _
      $region24: #{forward.1} parent=11 // pred_fallthru
        _
      // Predicated region
      $region25: #{forward.1} parent=11 // pred_check
        %p527 = pneg %p137
      $region26: #{forward.1} parent=11 // pred_check_branch
        %529 = sbr.rel (%p527) target = $region28
      $region27: #{forward.1} parent=11 // pred_region
        _
      $region28: #{forward.1} parent=11 // pred_fallthru
        _
      // Predicated region
      $region29: #{forward.1} parent=11 // pred_check
        %p530 = pneg %p158
      $region30: #{forward.1} parent=11 // pred_check_branch
        %532 = sbr.rel (%p530) target = $region32
      $region31: #{forward.1} parent=11 // pred_region
        _
      $region32: #{forward.1} parent=11 // pred_fallthru
        _
      // Predicated region
      $region33: #{forward.1} parent=11 // pred_check
        %p533 = pneg %p179
      $region34: #{forward.1} parent=11 // pred_check_branch
        %535 = sbr.rel (%p533) target = $region36
      $region35: #{forward.1} parent=11 // pred_region
        _
      $region36: #{forward.1} parent=11 // pred_fallthru
        _
      // Predicated region
      $region37: #{forward.1} parent=11 // pred_check
        %p536 = pneg %p200
      $region38: #{forward.1} parent=11 // pred_check_branch
        %538 = sbr.rel (%p536) target = $region40
      $region39: #{forward.1} parent=11 // pred_region
        _
      $region40: #{forward.1} parent=11 // pred_fallthru
        _
      // Predicated region
      $region41: #{forward.1} parent=11 // pred_check
        %p539 = pneg %p221
      $region42: #{forward.1} parent=11 // pred_check_branch
        %541 = sbr.rel (%p539) target = $region44
      $region43: #{forward.1} parent=11 // pred_region
        _
      $region44: #{forward.1} parent=11 // pred_fallthru
        _
      // Predicated region
      $region45: #{forward.1} parent=11 // pred_check
        %p542 = pneg %p242
      $region46: #{forward.1} parent=11 // pred_check_branch
        %544 = sbr.rel (%p542) target = $region48
      $region47: #{forward.1} parent=11 // pred_region
        _
      $region48: #{forward.1} parent=11 // pred_fallthru
        _
      // Predicated region
      $region49: #{forward.1} parent=11 // pred_check
        %p545 = pneg %p263
      $region50: #{forward.1} parent=11 // pred_check_branch
        %547 = sbr.rel (%p545) target = $region52
      $region51: #{forward.1} parent=11 // pred_region
        _
      $region52: #{forward.1} parent=11 // pred_fallthru
        _
      // Predicated region
      $region53: #{forward.1} parent=11 // pred_check
        %p548 = pneg %p284
      $region54: #{forward.1} parent=11 // pred_check_branch
        %550 = sbr.rel (%p548) target = $region56
      $region55: #{forward.1} parent=11 // pred_region
        _
      $region56: #{forward.1} parent=11 // pred_fallthru
        _
      // Predicated region
      $region57: #{forward.1} parent=11 // pred_check
        %p551 = pneg %p305
      $region58: #{forward.1} parent=11 // pred_check_branch
        %553 = sbr.rel (%p551) target = $region60
      $region59: #{forward.1} parent=11 // pred_region
        _
      $region60: #{forward.1} parent=11 // pred_fallthru
        _
      // Predicated region
      $region61: #{forward.1} parent=11 // pred_check
        %p554 = pneg %p326
      $region62: #{forward.1} parent=11 // pred_check_branch
        %556 = sbr.rel (%p554) target = $region64
      $region63: #{forward.1} parent=11 // pred_region
        _
      $region64: #{forward.1} parent=11 // pred_fallthru
        _
      // Predicated region
      $region65: #{forward.1} parent=11 // pred_check
        %p557 = pneg %p347
      $region66: #{forward.1} parent=11 // pred_check_branch
        %559 = sbr.rel (%p557) target = $region68
      $region67: #{forward.1} parent=11 // pred_region
        _
      $region68: #{forward.1} parent=11 // pred_fallthru
        _
    $region12: #{forward.1} parent=5 // pred_fallthru
      _
    %p560 = scmp.lt.s32.totalorder %s27, 2
    // Predicated region
    $region69: #{forward.1} parent=5 // pred_check
      %p561 = pneg %p560
    $region70: #{forward.1} parent=5 // pred_check_branch
      %563 = sbr.rel (%p561) target = $region72
    $region71: #{forward.1} parent=5 // pred_region
      // Predicated region
      $region73: #{forward.1} parent=71 // pred_check
        %p564 = pneg %p47
      $region74: #{forward.1} parent=71 // pred_check_branch
        %566 = sbr.rel (%p564) target = $region76
      $region75: #{forward.1} parent=71 // pred_region
        %s567 = smul.u32 6, %s27
        %p568 = scmp.lt.s32.totalorder %s567, 11
        %s569 = scalar_select %p568, %s567, 11
        %s570 = smul.addr %s569, 8
        %s571 = scalar_lea.vmem %s0, %s570
        %s572 = smul.u32 6, %s27
      $region76: #{forward.1} parent=71 // pred_fallthru
        _
    $region72: #{forward.1} parent=5 // pred_fallthru
      _
    %p573 = scmp.le.s32.totalorder 1, %s27
    %p574 = scmp.lt.s32.totalorder %s27, 3
    %p575 = pnand %p573, %p574
    %p576 = pneg %p575
    // Predicated region
    $region77: #{forward.1} parent=5 // pred_check
      _
    $region78: #{forward.1} parent=5 // pred_check_branch
      %578 = sbr.rel (%p575) target = $region80
    $region79: #{forward.1} parent=5 // pred_region
      %s579 = ssub.s32 %s27, 1
      %s580 = smul.u32 6, %s32
      %p581 = scmp.lt.s32.totalorder %s580, 11
      %s582 = scalar_select %p581, %s580, 11
      %s583 = smul.addr %s582, 8
      %s584 = scalar_lea.vmem %s0, %s583
      %p585 = pneg %p53
      %p586 = pneg %p50
      %p587 = pneg %p74
      %p588 = pneg %p71
      %p589 = pneg %p95
      %p590 = pneg %p92
      %p591 = pneg %p116
      %p592 = pneg %p113
      %p593 = pneg %p137
      %p594 = pneg %p134
      %p595 = pneg %p158
      %p596 = pneg %p155
      %p597 = pneg %p179
      %p598 = pneg %p176
      %p599 = pneg %p200
      %p600 = pneg %p197
      %p601 = pneg %p221
      %p602 = pneg %p218
      %p603 = pneg %p242
      %p604 = pneg %p239
      %p605 = pneg %p263
      %p606 = pneg %p260
      %p607 = pneg %p284
      %p608 = pneg %p281
      %p609 = pneg %p305
      %p610 = pneg %p302
      %p611 = pneg %p326
      %p612 = pneg %p323
      %p613 = pneg %p347
      %p614 = pneg %p344
      %p615 = pneg %p373
      %p616 = pneg %p370
      %s617 = smul.u32 6, %s32
      %p618 = scmp.lt.s32.totalorder %s617, 11
      %s619 = scalar_select %p618, %s617, 11
      %s620 = smul.addr %s619, 5
      %s621 = smul.addr %s620, 8
      %s622 = scalar_lea.vmem %s15, %s621
      %p623 = pneg %p399
      %p624 = pneg %p396
      %s625 = smul.u32 6, %s32
      %p626 = scmp.lt.s32.totalorder %s625, 11
      %s627 = scalar_select %p626, %s625, 11
      %s628 = smul.addr %s627, 3
      %s629 = smul.addr %s628, 8
      %s630 = scalar_lea.vmem %s16, %s629
      %p631 = pneg %p425
      %p632 = pneg %p422
      %s633 = smul.u32 6, %s32
      %p634 = scmp.lt.s32.totalorder %s633, 11
      %s635 = scalar_select %p634, %s633, 11
      %s636 = smul.addr %s635, 2
      %s637 = smul.addr %s636, 8
      %s638 = scalar_lea.vmem %s17, %s637
      %p639 = pneg %p451
      %p640 = pneg %p448
      %s641 = smul.u32 6, %s32
      %p642 = scmp.lt.s32.totalorder %s641, 11
      %s643 = scalar_select %p642, %s641, 11
      %s644 = smul.addr %s643, 8
      %s645 = scalar_lea.vmem %s18, %s644
      %p646 = pneg %p477
      %p647 = pneg %p474
      %s648 = smul.u32 6, %s32
      %p649 = scmp.lt.s32.totalorder %s648, 11
      %s650 = scalar_select %p649, %s648, 11
      %s651 = smul.addr %s650, 8
      %s652 = scalar_lea.vmem %s19, %s651
      %p653 = pneg %p503
      %p654 = pneg %p500
      %s655 = smul.u32 6, %s32
      %p656 = scmp.lt.s32.totalorder %s655, 11
      %s657 = scalar_select %p656, %s655, 11
      %s658 = smul.addr %s657, 8
      %s659 = scalar_lea.vmem %s20, %s658
      %s660 = smul.u32 6, %s32
      %p661 = scmp.lt.s32.totalorder %s660, 11
      %s662 = scalar_select %p661, %s660, 11
      %s663 = smul.addr %s662, 8
      %s664 = scalar_lea.vmem %s0, %s663
      %s665 = smul.u32 6, %s32
      %s666 = smul.u32 6, %s32
      %p667 = scmp.lt.s32.totalorder %s666, 11
      %s668 = scalar_select %p667, %s666, 11
      %s669 = smul.addr %s668, 5
      %s670 = smul.addr %s669, 8
      %s671 = scalar_lea.vmem %s15, %s670
      %s672 = smul.u32 6, %s32
      %s673 = smul.u32 6, %s32
      %p674 = scmp.lt.s32.totalorder %s673, 11
      %s675 = scalar_select %p674, %s673, 11
      %s676 = smul.addr %s675, 3
      %s677 = smul.addr %s676, 8
      %s678 = scalar_lea.vmem %s16, %s677
      %s679 = smul.u32 6, %s32
      %s680 = smul.u32 6, %s32
      %p681 = scmp.lt.s32.totalorder %s680, 11
      %s682 = scalar_select %p681, %s680, 11
      %s683 = smul.addr %s682, 2
      %s684 = smul.addr %s683, 8
      %s685 = scalar_lea.vmem %s17, %s684
      %s686 = smul.u32 6, %s32
      %s687 = smul.u32 6, %s32
      %p688 = scmp.lt.s32.totalorder %s687, 11
      %s689 = scalar_select %p688, %s687, 11
      %s690 = smul.addr %s689, 8
      %s691 = scalar_lea.vmem %s18, %s690
      %s692 = smul.u32 6, %s32
      %s693 = smul.u32 6, %s32
      %p694 = scmp.lt.s32.totalorder %s693, 11
      %s695 = scalar_select %p694, %s693, 11
      %s696 = smul.addr %s695, 8
      %s697 = scalar_lea.vmem %s19, %s696
      %s698 = smul.u32 6, %s32
      %s699 = smul.u32 6, %s32
      %p700 = scmp.lt.s32.totalorder %s699, 11
      %s701 = scalar_select %p700, %s699, 11
      %s702 = smul.addr %s701, 8
      %s703 = scalar_lea.vmem %s20, %s702
      %s704 = smul.u32 6, %s32
      %v706 = vld [vmem:[%s2] sm:$0xff]
      %v707 = vld [vmem:[%s2 + $0x8] sm:$0xff]
      %v708 = vld [vmem:[%s2 + $0x10] sm:$0xff]
      %v709 = vld [vmem:[%s2 + $0x18] sm:$0xff]
      %v710 = vld [vmem:[%s2 + $0x20] sm:$0xff]
      %v711 = vld [vmem:[%s2 + $0x28] sm:$0xff]
      %v712 = vld [vmem:[%s664] sm:$0xff]
      %v713 = vld [vmem:[%s664 + $0x8] sm:$0xff]
      %v714 = vld [vmem:[%s664 + $0x10] sm:$0xff]
      %v715 = vld [vmem:[%s664 + $0x18] sm:$0xff]
      %v716 = vld [vmem:[%s664 + $0x20] sm:$0xff]
      %v717 = vld [vmem:[%s664 + $0x28] sm:$0xff]
      %v718 = vld [vmem:[%s1] sm:$0xff]
      %v719 = vld [vmem:[%s1 + $0x8] sm:$0xff]
      %v720 = vld [vmem:[%s1 + $0x10] sm:$0xff]
      %v721 = vld [vmem:[%s1 + $0x18] sm:$0xff]
      %v722 = vld [vmem:[%s1 + $0x20] sm:$0xff]
      %v723 = vld [vmem:[%s1 + $0x28] sm:$0xff]
      %v724 = vld [vmem:[%s1 + $0x30] sm:$0xff]
      %v725 = vld [vmem:[%s1 + $0x38] sm:$0xff]
      %vm726 = vcmask 523264
      %v728 = vsel %vm726, %v712, 0
      %v731 = vsel %vm726, %v713, 0
      %v734 = vsel %vm726, %v714, 0
      %v737 = vsel %vm726, %v715, 0
      %v740 = vsel %vm726, %v716, 0
      %v743 = vsel %vm726, %v717, 0
      %745 = vmatprep.subr.mxu0 0.0
      %746 = vmatpush1.msra.mxu0 %v718
      %747 = vmatprep.subr.mxu0 0.0
      %748 = vmatpush1.msra.mxu0 %v719
      %749 = vmatprep.subr.mxu0 0.0
      %750 = vmatpush1.msra.mxu0 %v720
      %751 = vmatprep.subr.mxu0 0.0
      %752 = vmatpush1.msra.mxu0 %v721
      %753 = vmatprep.subr.mxu0 0.0
      %754 = vmatpush1.msra.mxu0 %v722
      %755 = vmatprep.subr.mxu0 0.0
      %756 = vmatpush1.msra.mxu0 %v723
      %757 = vmatprep.subr.mxu0 0.0
      %758 = vmatpush1.msra.mxu0 %v724
      %759 = vmatprep.subr.mxu0 0.0
      %760 = vmatpush1.msra.mxu0 %v725
      %761 = vmatprep.subr.mxu0 0.0
      %762 = vmatpush1.msra.mxu0 0.0
      %763 = vmatprep.subr.mxu0 0.0
      %764 = vmatpush1.msra.mxu0 0.0
      %765 = vmatprep.subr.mxu0 0.0
      %766 = vmatpush1.msra.mxu0 0.0
      %767 = vmatprep.subr.mxu0 0.0
      %768 = vmatpush1.msra.mxu0 0.0
      %769 = vmatprep.subr.mxu0 0.0
      %770 = vmatpush1.msra.mxu0 0.0
      %771 = vmatprep.subr.mxu0 0.0
      %772 = vmatpush1.msra.mxu0 0.0
      %773 = vmatprep.subr.mxu0 0.0
      %774 = vmatpush1.msra.mxu0 0.0
      %775 = vmatprep.subr.mxu0 0.0
      %776 = vmatpush1.msra.mxu0 0.0
      %777 = vmatprep.subr.mxu0 0.0
      %778 = vmatpush1.msra.mxu0 0.0
      %779 = vmatprep.subr.mxu0 0.0
      %780 = vmatpush1.msra.mxu0 0.0
      %781 = vmatprep.subr.mxu0 0.0
      %782 = vmatpush1.msra.mxu0 0.0
      %783 = vmatprep.subr.mxu0 0.0
      %784 = vmatpush1.msra.mxu0 0.0
      %785 = vmatprep.subr.mxu0 0.0
      %786 = vmatpush1.msra.mxu0 0.0
      %787 = vmatprep.subr.mxu0 0.0
      %788 = vmatpush1.msra.mxu0 0.0
      %789 = vmatprep.subr.mxu0 0.0
      %790 = vmatpush1.msra.mxu0 0.0
      %791 = vmatprep.subr.mxu0 0.0
      %792 = vmatpush1.msra.mxu0 0.0
      %793 = vmatprep.subr.mxu0 0.0
      %794 = vmatpush1.msra.mxu0 0.0
      %795 = vmatprep.subr.mxu0 0.0
      %796 = vmatpush1.msra.mxu0 0.0
      %797 = vmatprep.subr.mxu0 0.0
      %798 = vmatpush1.msra.mxu0 0.0
      %799 = vmatprep.subr.mxu0 0.0
      %800 = vmatpush1.msra.mxu0 0.0
      %801 = vmatprep.subr.mxu0 0.0
      %802 = vmatpush1.msra.mxu0 0.0
      %803 = vmatprep.subr.mxu0 0.0
      %804 = vmatpush1.msra.mxu0 0.0
      %805 = vmatprep.subr.mxu0 0.0
      %806 = vmatpush1.msra.mxu0 0.0
      %807 = vmatprep.subr.mxu0 0.0
      %808 = vmatpush1.msra.mxu0 0.0
      %809 = vmatprep.mubr.f32.mxu0 0.0
      %810 = vmatmul.mubr.f32.gmra.mrb[0].mxu0 %v728
      %v811 = vpop.f32.mrb[0].mxu0
      %v812 = vadd.f32 0.0, %v811
      %v813 = vpop.f32.mrb[0].mxu0
      %814 = vmatprep.mubr.f32.mxu0 0.0
      %815 = vmatmul.mubr.f32.gmra.mrb[0].mxu0 %v731
      %v816 = vpop.f32.mrb[0].mxu0
      %v817 = vadd.f32 0.0, %v816
      %v818 = vpop.f32.mrb[0].mxu0
      %819 = vmatprep.mubr.f32.mxu0 0.0
      %820 = vmatmul.mubr.f32.gmra.mrb[0].mxu0 %v734
      %v821 = vpop.f32.mrb[0].mxu0
      %v822 = vadd.f32 0.0, %v821
      %v823 = vpop.f32.mrb[0].mxu0
      %824 = vmatprep.mubr.f32.mxu0 0.0
      %825 = vmatmul.mubr.f32.gmra.mrb[0].mxu0 %v737
      %v826 = vpop.f32.mrb[0].mxu0
      %v827 = vadd.f32 0.0, %v826
      %v828 = vpop.f32.mrb[0].mxu0
      %829 = vmatprep.mubr.f32.mxu0 0.0
      %830 = vmatmul.mubr.f32.gmra.mrb[0].mxu0 %v740
      %v831 = vpop.f32.mrb[0].mxu0
      %v832 = vadd.f32 0.0, %v831
      %v833 = vpop.f32.mrb[0].mxu0
      %834 = vmatprep.mubr.f32.mxu0 0.0
      %835 = vmatmul.mubr.f32.gmra.mrb[0].mxu0 %v743
      %v836 = vpop.f32.mrb[0].mxu0
      %v837 = vadd.f32 0.0, %v836
      %v838 = vpop.f32.mrb[0].mxu0
      %839 = vdwg.mxu0
      %vm846 = vcmask 1040384
      %v847 = vrot.slane %v812, 7
      %v848 = vrot.slane %v817, 7
      %v849 = vsel %vm846, %v847, %v848
      %v850 = vrot.slane %v822, 7
      %v851 = vsel %vm846, %v848, %v850
      %v852 = vrot.slane %v827, 7
      %v853 = vsel %vm846, %v850, %v852
      %v854 = vrot.slane %v832, 7
      %v855 = vsel %vm846, %v852, %v854
      %v856 = vrot.slane %v837, 7
      %v857 = vsel %vm846, %v854, %v856
      %v864 = vsel %vm846, 0.0, %v847
      %vm865 = vcmask 1046528
      %v866 = vrot.slane %v812, 1
      %v867 = vrot.slane %v817, 1
      %v868 = vsel %vm865, %v866, %v867
      %v869 = vrot.slane %v822, 1
      %v870 = vsel %vm865, %v867, %v869
      %v871 = vrot.slane %v827, 1
      %v872 = vsel %vm865, %v869, %v871
      %v873 = vrot.slane %v832, 1
      %v874 = vsel %vm865, %v871, %v873
      %v875 = vrot.slane %v837, 1
      %v876 = vsel %vm865, %v873, %v875
      %v883 = vsel %vm865, %v875, 0.0
      %v884 = vpack.c.bf16 %v849, %v864
      %v885 = vpack.c.bf16 %v817, %v812
      %v886 = vpack.c.bf16 %v870, %v868
      %v887 = vpack.c.bf16 %v853, %v851
      %v888 = vpack.c.bf16 %v827, %v822
      %v889 = vpack.c.bf16 %v874, %v872
      %v890 = vpack.c.bf16 %v857, %v855
      %v891 = vpack.c.bf16 %v837, %v832
      %v892 = vpack.c.bf16 %v883, %v876
      %v893 = vld [vmem:[%s3] sm:$0xff]
      %v894 = vld [vmem:[%s3 + $0x8] sm:$0xff]
      %v895 = vld [vmem:[%s3 + $0x10] sm:$0xf]
      %v896 = vld [vmem:[%s3 + $0x14] sm:$0xff]
      %v897 = vld [vmem:[%s3 + $0x1c] sm:$0xff]
      %v898 = vld [vmem:[%s3 + $0x24] sm:$0xf]
      %v899 = vld [vmem:[%s3 + $0x28] sm:$0xff]
      %v900 = vld [vmem:[%s3 + $0x30] sm:$0xff]
      %v901 = vld [vmem:[%s3 + $0x38] sm:$0xf]
      %v902 = vld [vmem:[%s3 + $0x3c] sm:$0xff]
      %v903 = vld [vmem:[%s3 + $0x44] sm:$0xff]
      %v904 = vld [vmem:[%s3 + $0x4c] sm:$0xf]
      %v905 = vld [vmem:[%s3 + $0x50] sm:$0xff]
      %v906 = vld [vmem:[%s3 + $0x58] sm:$0xff]
      %v907 = vld [vmem:[%s3 + $0x60] sm:$0xf]
      %v908 = vld [vmem:[%s3 + $0x64] sm:$0xff]
      %v909 = vld [vmem:[%s3 + $0x6c] sm:$0xff]
      %v910 = vld [vmem:[%s3 + $0x74] sm:$0xf]
      %v911 = vld [vmem:[%s3 + $0x78] sm:$0xff]
      %v912 = vld [vmem:[%s3 + $0x80] sm:$0xff]
      %v913 = vld [vmem:[%s3 + $0x88] sm:$0xf]
      %v914 = vld [vmem:[%s3 + $0x8c] sm:$0xff]
      %v915 = vld [vmem:[%s3 + $0x94] sm:$0xff]
      %v916 = vld [vmem:[%s3 + $0x9c] sm:$0xf]
      %v917 = vld [vmem:[%s3 + $0xa0] sm:$0xff]
      %v918 = vld [vmem:[%s3 + $0xa8] sm:$0xff]
      %v919 = vld [vmem:[%s3 + $0xb0] sm:$0xf]
      %v920 = vld [vmem:[%s3 + $0xb4] sm:$0xff]
      %v921 = vld [vmem:[%s3 + $0xbc] sm:$0xff]
      %v922 = vld [vmem:[%s3 + $0xc4] sm:$0xf]
      %v923 = vld [vmem:[%s3 + $0xc8] sm:$0xff]
      %v924 = vld [vmem:[%s3 + $0xd0] sm:$0xff]
      %v925 = vld [vmem:[%s3 + $0xd8] sm:$0xf]
      %v926 = vld [vmem:[%s3 + $0xdc] sm:$0xff]
      %v927 = vld [vmem:[%s3 + $0xe4] sm:$0xff]
      %v928 = vld [vmem:[%s3 + $0xec] sm:$0xf]
      %v929 = vld [vmem:[%s3 + $0xf0] sm:$0xff]
      %v930 = vld [vmem:[%s3 + $0xf8] sm:$0xff]
      %v931 = vld [vmem:[%s3 + $0x100] sm:$0xf]
      %v932 = vld [vmem:[%s3 + $0x104] sm:$0xff]
      %v933 = vld [vmem:[%s3 + $0x10c] sm:$0xff]
      %v934 = vld [vmem:[%s3 + $0x114] sm:$0xf]
      %v935 = vld [vmem:[%s3 + $0x118] sm:$0xff]
      %v936 = vld [vmem:[%s3 + $0x120] sm:$0xff]
      %v937 = vld [vmem:[%s3 + $0x128] sm:$0xf]
      %v938 = vld [vmem:[%s3 + $0x12c] sm:$0xff]
      %v939 = vld [vmem:[%s3 + $0x134] sm:$0xff]
      %v940 = vld [vmem:[%s3 + $0x13c] sm:$0xf]
      %v941 = vld [vmem:[%s3 + $0x140] sm:$0xff]
      %v942 = vld [vmem:[%s3 + $0x148] sm:$0xff]
      %v943 = vld [vmem:[%s3 + $0x150] sm:$0xf]
      %v944 = vld [vmem:[%s3 + $0x154] sm:$0xff]
      %v945 = vld [vmem:[%s3 + $0x15c] sm:$0xff]
      %v946 = vld [vmem:[%s3 + $0x164] sm:$0xf]
      %v947 = vld [vmem:[%s3 + $0x168] sm:$0xff]
      %v948 = vld [vmem:[%s3 + $0x170] sm:$0xff]
      %v949 = vld [vmem:[%s3 + $0x178] sm:$0xf]
      %v950 = vld [vmem:[%s3 + $0x17c] sm:$0xff]
      %v951 = vld [vmem:[%s3 + $0x184] sm:$0xff]
      %v952 = vld [vmem:[%s3 + $0x18c] sm:$0xf]
      %v953 = vld [vmem:[%s3 + $0x190] sm:$0xff]
      %v954 = vld [vmem:[%s3 + $0x198] sm:$0xff]
      %v955 = vld [vmem:[%s3 + $0x1a0] sm:$0xf]
      %v956 = vld [vmem:[%s3 + $0x1a4] sm:$0xff]
      %v957 = vld [vmem:[%s3 + $0x1ac] sm:$0xff]
      %v958 = vld [vmem:[%s3 + $0x1b4] sm:$0xf]
      %v959 = vld [vmem:[%s3 + $0x1b8] sm:$0xff]
      %v960 = vld [vmem:[%s3 + $0x1c0] sm:$0xff]
      %v961 = vld [vmem:[%s3 + $0x1c8] sm:$0xf]
      %v962 = vld [vmem:[%s3 + $0x1cc] sm:$0xff]
      %v963 = vld [vmem:[%s3 + $0x1d4] sm:$0xff]
      %v964 = vld [vmem:[%s3 + $0x1dc] sm:$0xf]
      %v965 = vld [vmem:[%s3 + $0x1e0] sm:$0xff]
      %v966 = vld [vmem:[%s3 + $0x1e8] sm:$0xff]
      %v967 = vld [vmem:[%s3 + $0x1f0] sm:$0xf]
      %v968 = vld [vmem:[%s3 + $0x1f4] sm:$0xff]
      %v969 = vld [vmem:[%s3 + $0x1fc] sm:$0xff]
      %v970 = vld [vmem:[%s3 + $0x204] sm:$0xf]
      %v971 = vld [vmem:[%s3 + $0x208] sm:$0xff]
      %v972 = vld [vmem:[%s3 + $0x210] sm:$0xff]
      %v973 = vld [vmem:[%s3 + $0x218] sm:$0xf]
      %v974 = vld [vmem:[%s3 + $0x21c] sm:$0xff]
      %v975 = vld [vmem:[%s3 + $0x224] sm:$0xff]
      %v976 = vld [vmem:[%s3 + $0x22c] sm:$0xf]
      %v977 = vld [vmem:[%s3 + $0x230] sm:$0xff]
      %v978 = vld [vmem:[%s3 + $0x238] sm:$0xff]
      %v979 = vld [vmem:[%s3 + $0x240] sm:$0xf]
      %v980 = vld [vmem:[%s3 + $0x244] sm:$0xff]
      %v981 = vld [vmem:[%s3 + $0x24c] sm:$0xff]
      %v982 = vld [vmem:[%s3 + $0x254] sm:$0xf]
      %v983 = vld [vmem:[%s3 + $0x258] sm:$0xff]
      %v984 = vld [vmem:[%s3 + $0x260] sm:$0xff]
      %v985 = vld [vmem:[%s3 + $0x268] sm:$0xf]
      %v986 = vld [vmem:[%s3 + $0x26c] sm:$0xff]
      %v987 = vld [vmem:[%s3 + $0x274] sm:$0xff]
      %v988 = vld [vmem:[%s3 + $0x27c] sm:$0xf]
      %v989 = vld [vmem:[%s3 + $0x280] sm:$0xff]
      %v990 = vld [vmem:[%s3 + $0x288] sm:$0xff]
      %v991 = vld [vmem:[%s3 + $0x290] sm:$0xf]
      %v992 = vld [vmem:[%s3 + $0x294] sm:$0xff]
      %v993 = vld [vmem:[%s3 + $0x29c] sm:$0xff]
      %v994 = vld [vmem:[%s3 + $0x2a4] sm:$0xf]
      %v995 = vld [vmem:[%s3 + $0x2a8] sm:$0xff]
      %v996 = vld [vmem:[%s3 + $0x2b0] sm:$0xff]
      %v997 = vld [vmem:[%s3 + $0x2b8] sm:$0xf]
      %v998 = vld [vmem:[%s3 + $0x2bc] sm:$0xff]
      %v999 = vld [vmem:[%s3 + $0x2c4] sm:$0xff]
      %v1000 = vld [vmem:[%s3 + $0x2cc] sm:$0xf]
      %v1001 = vld [vmem:[%s3 + $0x2d0] sm:$0xff]
      %v1002 = vld [vmem:[%s3 + $0x2d8] sm:$0xff]
      %v1003 = vld [vmem:[%s3 + $0x2e0] sm:$0xf]
      %v1004 = vld [vmem:[%s3 + $0x2e4] sm:$0xff]
      %v1005 = vld [vmem:[%s3 + $0x2ec] sm:$0xff]
      %v1006 = vld [vmem:[%s3 + $0x2f4] sm:$0xf]
      %v1007 = vld [vmem:[%s3 + $0x2f8] sm:$0xff]
      %v1008 = vld [vmem:[%s3 + $0x300] sm:$0xff]
      %v1009 = vld [vmem:[%s3 + $0x308] sm:$0xf]
      %v1010 = vld [vmem:[%s3 + $0x30c] sm:$0xff]
      %v1011 = vld [vmem:[%s3 + $0x314] sm:$0xff]
      %v1012 = vld [vmem:[%s3 + $0x31c] sm:$0xf]
      %v1013 = vld [vmem:[%s3 + $0x320] sm:$0xff]
      %v1014 = vld [vmem:[%s3 + $0x328] sm:$0xff]
      %v1015 = vld [vmem:[%s3 + $0x330] sm:$0xf]
      %v1016 = vld [vmem:[%s3 + $0x334] sm:$0xff]
      %v1017 = vld [vmem:[%s3 + $0x33c] sm:$0xff]
      %v1018 = vld [vmem:[%s3 + $0x344] sm:$0xf]
      %v1019 = vld [vmem:[%s3 + $0x348] sm:$0xff]
      %v1020 = vld [vmem:[%s3 + $0x350] sm:$0xff]
      %v1021 = vld [vmem:[%s3 + $0x358] sm:$0xf]
      %v1022 = vld [vmem:[%s3 + $0x35c] sm:$0xff]
      %v1023 = vld [vmem:[%s3 + $0x364] sm:$0xff]
      %v1024 = vld [vmem:[%s3 + $0x36c] sm:$0xf]
      %v1025 = vld [vmem:[%s3 + $0x370] sm:$0xff]
      %v1026 = vld [vmem:[%s3 + $0x378] sm:$0xff]
      %v1027 = vld [vmem:[%s3 + $0x380] sm:$0xf]
      %v1028 = vld [vmem:[%s3 + $0x384] sm:$0xff]
      %v1029 = vld [vmem:[%s3 + $0x38c] sm:$0xff]
      %v1030 = vld [vmem:[%s3 + $0x394] sm:$0xf]
      %v1031 = vld [vmem:[%s3 + $0x398] sm:$0xff]
      %v1032 = vld [vmem:[%s3 + $0x3a0] sm:$0xff]
      %v1033 = vld [vmem:[%s3 + $0x3a8] sm:$0xf]
      %v1034 = vld [vmem:[%s3 + $0x3ac] sm:$0xff]
      %v1035 = vld [vmem:[%s3 + $0x3b4] sm:$0xff]
      %v1036 = vld [vmem:[%s3 + $0x3bc] sm:$0xf]
      %v1037 = vld [vmem:[%s4] sm:$0x1f]
      %v1039 = vlaneseq
      %v1040 = vshrl.u32 %v1039, 7
      %v1041 = vsub.s32 0, %v1040
      %v1042 = vrot.slane %v1037, %v1041
      %v1043 = vlaneseq
      %v1044 = vshrl.u32 %v1043, 7
      %v1045 = vsub.s32 1, %v1044
      %v1046 = vrot.slane %v1037, %v1045
      %v1047 = vlaneseq
      %v1048 = vshrl.u32 %v1047, 7
      %v1049 = vsub.s32 2, %v1048
      %v1050 = vrot.slane %v1037, %v1049
      %v1051 = vlaneseq
      %v1052 = vshrl.u32 %v1051, 7
      %v1053 = vsub.s32 3, %v1052
      %v1054 = vrot.slane %v1037, %v1053
      %v1055 = vlaneseq
      %v1056 = vshrl.u32 %v1055, 7
      %v1057 = vsub.s32 4, %v1056
      %v1058 = vrot.slane %v1037, %v1057
      %v1208 = vunpack.c.l.b16 %v893
      %v1209 = vunpack.c.h.b16 %v893
      %v1210 = vunpack.c.l.b16 %v894
      %v1211 = vunpack.c.h.b16 %v894
      %v1212 = vunpack.c.l.b16 %v895
      %v1213 = vunpack.c.l.b16 %v896
      %v1214 = vunpack.c.h.b16 %v896
      %v1215 = vunpack.c.l.b16 %v897
      %v1216 = vunpack.c.h.b16 %v897
      %v1217 = vunpack.c.l.b16 %v898
      %v1218 = vunpack.c.l.b16 %v899
      %v1219 = vunpack.c.h.b16 %v899
      %v1220 = vunpack.c.l.b16 %v900
      %v1221 = vunpack.c.h.b16 %v900
      %v1222 = vunpack.c.l.b16 %v901
      %v1223 = vunpack.c.l.b16 %v902
      %v1224 = vunpack.c.h.b16 %v902
      %v1225 = vunpack.c.l.b16 %v903
      %v1226 = vunpack.c.h.b16 %v903
      %v1227 = vunpack.c.l.b16 %v904
      %v1228 = vunpack.c.l.b16 %v905
      %v1229 = vunpack.c.h.b16 %v905
      %v1230 = vunpack.c.l.b16 %v906
      %v1231 = vunpack.c.h.b16 %v906
      %v1232 = vunpack.c.l.b16 %v907
      %v1233 = vunpack.c.l.b16 %v908
      %v1234 = vunpack.c.h.b16 %v908
      %v1235 = vunpack.c.l.b16 %v909
      %v1236 = vunpack.c.h.b16 %v909
      %v1237 = vunpack.c.l.b16 %v910
      %v1238 = vunpack.c.l.b16 %v911
      %v1239 = vunpack.c.h.b16 %v911
      %v1240 = vunpack.c.l.b16 %v912
      %v1241 = vunpack.c.h.b16 %v912
      %v1242 = vunpack.c.l.b16 %v913
      %v1243 = vunpack.c.l.b16 %v914
      %v1244 = vunpack.c.h.b16 %v914
      %v1245 = vunpack.c.l.b16 %v915
      %v1246 = vunpack.c.h.b16 %v915
      %v1247 = vunpack.c.l.b16 %v916
      %v1248 = vunpack.c.l.b16 %v917
      %v1249 = vunpack.c.h.b16 %v917
      %v1250 = vunpack.c.l.b16 %v918
      %v1251 = vunpack.c.h.b16 %v918
      %v1252 = vunpack.c.l.b16 %v919
      %v1253 = vunpack.c.l.b16 %v920
      %v1254 = vunpack.c.h.b16 %v920
      %v1255 = vunpack.c.l.b16 %v921
      %v1256 = vunpack.c.h.b16 %v921
      %v1257 = vunpack.c.l.b16 %v922
      %v1258 = vunpack.c.l.b16 %v923
      %v1259 = vunpack.c.h.b16 %v923
      %v1260 = vunpack.c.l.b16 %v924
      %v1261 = vunpack.c.h.b16 %v924
      %v1262 = vunpack.c.l.b16 %v925
      %v1263 = vunpack.c.l.b16 %v926
      %v1264 = vunpack.c.h.b16 %v926
      %v1265 = vunpack.c.l.b16 %v927
      %v1266 = vunpack.c.h.b16 %v927
      %v1267 = vunpack.c.l.b16 %v928
      %v1268 = vunpack.c.l.b16 %v929
      %v1269 = vunpack.c.h.b16 %v929
      %v1270 = vunpack.c.l.b16 %v930
      %v1271 = vunpack.c.h.b16 %v930
      %v1272 = vunpack.c.l.b16 %v931
      %v1273 = vunpack.c.l.b16 %v932
      %v1274 = vunpack.c.h.b16 %v932
      %v1275 = vunpack.c.l.b16 %v933
      %v1276 = vunpack.c.h.b16 %v933
      %v1277 = vunpack.c.l.b16 %v934
      %v1278 = vunpack.c.l.b16 %v935
      %v1279 = vunpack.c.h.b16 %v935
      %v1280 = vunpack.c.l.b16 %v936
      %v1281 = vunpack.c.h.b16 %v936
      %v1282 = vunpack.c.l.b16 %v937
      %v1283 = vunpack.c.l.b16 %v938
      %v1284 = vunpack.c.h.b16 %v938
      %v1285 = vunpack.c.l.b16 %v939
      %v1286 = vunpack.c.h.b16 %v939
      %v1287 = vunpack.c.l.b16 %v940
      %v1288 = vunpack.c.l.b16 %v941
      %v1289 = vunpack.c.h.b16 %v941
      %v1290 = vunpack.c.l.b16 %v942
      %v1291 = vunpack.c.h.b16 %v942
      %v1292 = vunpack.c.l.b16 %v943
      %v1293 = vunpack.c.l.b16 %v944
      %v1294 = vunpack.c.h.b16 %v944
      %v1295 = vunpack.c.l.b16 %v945
      %v1296 = vunpack.c.h.b16 %v945
      %v1297 = vunpack.c.l.b16 %v946
      %v1298 = vunpack.c.l.b16 %v947
      %v1299 = vunpack.c.h.b16 %v947
      %v1300 = vunpack.c.l.b16 %v948
      %v1301 = vunpack.c.h.b16 %v948
      %v1302 = vunpack.c.l.b16 %v949
      %v1303 = vunpack.c.l.b16 %v950
      %v1304 = vunpack.c.h.b16 %v950
      %v1305 = vunpack.c.l.b16 %v951
      %v1306 = vunpack.c.h.b16 %v951
      %v1307 = vunpack.c.l.b16 %v952
      %v1308 = vunpack.c.l.b16 %v953
      %v1309 = vunpack.c.h.b16 %v953
      %v1310 = vunpack.c.l.b16 %v954
      %v1311 = vunpack.c.h.b16 %v954
      %v1312 = vunpack.c.l.b16 %v955
      %v1313 = vunpack.c.l.b16 %v956
      %v1314 = vunpack.c.h.b16 %v956
      %v1315 = vunpack.c.l.b16 %v957
      %v1316 = vunpack.c.h.b16 %v957
      %v1317 = vunpack.c.l.b16 %v958
      %v1318 = vunpack.c.l.b16 %v959
      %v1319 = vunpack.c.h.b16 %v959
      %v1320 = vunpack.c.l.b16 %v960
      %v1321 = vunpack.c.h.b16 %v960
      %v1322 = vunpack.c.l.b16 %v961
      %v1323 = vunpack.c.l.b16 %v962
      %v1324 = vunpack.c.h.b16 %v962
      %v1325 = vunpack.c.l.b16 %v963
      %v1326 = vunpack.c.h.b16 %v963
      %v1327 = vunpack.c.l.b16 %v964
      %v1328 = vunpack.c.l.b16 %v965
      %v1329 = vunpack.c.h.b16 %v965
      %v1330 = vunpack.c.l.b16 %v966
      %v1331 = vunpack.c.h.b16 %v966
      %v1332 = vunpack.c.l.b16 %v967
      %v1333 = vunpack.c.l.b16 %v968
      %v1334 = vunpack.c.h.b16 %v968
      %v1335 = vunpack.c.l.b16 %v969
      %v1336 = vunpack.c.h.b16 %v969
      %v1337 = vunpack.c.l.b16 %v970
      %v1338 = vunpack.c.l.b16 %v971
      %v1339 = vunpack.c.h.b16 %v971
      %v1340 = vunpack.c.l.b16 %v972
      %v1341 = vunpack.c.h.b16 %v972
      %v1342 = vunpack.c.l.b16 %v973
      %v1343 = vunpack.c.l.b16 %v974
      %v1344 = vunpack.c.h.b16 %v974
      %v1345 = vunpack.c.l.b16 %v975
      %v1346 = vunpack.c.h.b16 %v975
      %v1347 = vunpack.c.l.b16 %v976
      %v1348 = vunpack.c.l.b16 %v977
      %v1349 = vunpack.c.h.b16 %v977
      %v1350 = vunpack.c.l.b16 %v978
      %v1351 = vunpack.c.h.b16 %v978
      %v1352 = vunpack.c.l.b16 %v979
      %v1353 = vunpack.c.l.b16 %v980
      %v1354 = vunpack.c.h.b16 %v980
      %v1355 = vunpack.c.l.b16 %v981
      %v1356 = vunpack.c.h.b16 %v981
      %v1357 = vunpack.c.l.b16 %v982
      %v1358 = vunpack.c.l.b16 %v983
      %v1359 = vunpack.c.h.b16 %v983
      %v1360 = vunpack.c.l.b16 %v984
      %v1361 = vunpack.c.h.b16 %v984
      %v1362 = vunpack.c.l.b16 %v985
      %v1363 = vunpack.c.l.b16 %v986
      %v1364 = vunpack.c.h.b16 %v986
      %v1365 = vunpack.c.l.b16 %v987
      %v1366 = vunpack.c.h.b16 %v987
      %v1367 = vunpack.c.l.b16 %v988
      %v1368 = vunpack.c.l.b16 %v989
      %v1369 = vunpack.c.h.b16 %v989
      %v1370 = vunpack.c.l.b16 %v990
      %v1371 = vunpack.c.h.b16 %v990
      %v1372 = vunpack.c.l.b16 %v991
      %v1373 = vunpack.c.l.b16 %v992
      %v1374 = vunpack.c.h.b16 %v992
      %v1375 = vunpack.c.l.b16 %v993
      %v1376 = vunpack.c.h.b16 %v993
      %v1377 = vunpack.c.l.b16 %v994
      %v1378 = vunpack.c.l.b16 %v995
      %v1379 = vunpack.c.h.b16 %v995
      %v1380 = vunpack.c.l.b16 %v996
      %v1381 = vunpack.c.h.b16 %v996
      %v1382 = vunpack.c.l.b16 %v997
      %v1383 = vunpack.c.l.b16 %v998
      %v1384 = vunpack.c.h.b16 %v998
      %v1385 = vunpack.c.l.b16 %v999
      %v1386 = vunpack.c.h.b16 %v999
      %v1387 = vunpack.c.l.b16 %v1000
      %v1388 = vunpack.c.l.b16 %v1001
      %v1389 = vunpack.c.h.b16 %v1001
      %v1390 = vunpack.c.l.b16 %v1002
      %v1391 = vunpack.c.h.b16 %v1002
      %v1392 = vunpack.c.l.b16 %v1003
      %v1393 = vunpack.c.l.b16 %v1004
      %v1394 = vunpack.c.h.b16 %v1004
      %v1395 = vunpack.c.l.b16 %v1005
      %v1396 = vunpack.c.h.b16 %v1005
      %v1397 = vunpack.c.l.b16 %v1006
      %v1398 = vunpack.c.l.b16 %v1007
      %v1399 = vunpack.c.h.b16 %v1007
      %v1400 = vunpack.c.l.b16 %v1008
      %v1401 = vunpack.c.h.b16 %v1008
      %v1402 = vunpack.c.l.b16 %v1009
      %v1403 = vunpack.c.l.b16 %v1010
      %v1404 = vunpack.c.h.b16 %v1010
      %v1405 = vunpack.c.l.b16 %v1011
      %v1406 = vunpack.c.h.b16 %v1011
      %v1407 = vunpack.c.l.b16 %v1012
      %v1408 = vunpack.c.l.b16 %v1013
      %v1409 = vunpack.c.h.b16 %v1013
      %v1410 = vunpack.c.l.b16 %v1014
      %v1411 = vunpack.c.h.b16 %v1014
      %v1412 = vunpack.c.l.b16 %v1015
      %v1413 = vunpack.c.l.b16 %v1016
      %v1414 = vunpack.c.h.b16 %v1016
      %v1415 = vunpack.c.l.b16 %v1017
      %v1416 = vunpack.c.h.b16 %v1017
      %v1417 = vunpack.c.l.b16 %v1018
      %v1418 = vunpack.c.l.b16 %v1019
      %v1419 = vunpack.c.h.b16 %v1019
      %v1420 = vunpack.c.l.b16 %v1020
      %v1421 = vunpack.c.h.b16 %v1020
      %v1422 = vunpack.c.l.b16 %v1021
      %v1423 = vunpack.c.l.b16 %v1022
      %v1424 = vunpack.c.h.b16 %v1022
      %v1425 = vunpack.c.l.b16 %v1023
      %v1426 = vunpack.c.h.b16 %v1023
      %v1427 = vunpack.c.l.b16 %v1024
      %v1428 = vunpack.c.l.b16 %v1025
      %v1429 = vunpack.c.h.b16 %v1025
      %v1430 = vunpack.c.l.b16 %v1026
      %v1431 = vunpack.c.h.b16 %v1026
      %v1432 = vunpack.c.l.b16 %v1027
      %v1433 = vunpack.c.l.b16 %v1028
      %v1434 = vunpack.c.h.b16 %v1028
      %v1435 = vunpack.c.l.b16 %v1029
      %v1436 = vunpack.c.h.b16 %v1029
      %v1437 = vunpack.c.l.b16 %v1030
      %v1438 = vunpack.c.l.b16 %v1031
      %v1439 = vunpack.c.h.b16 %v1031
      %v1440 = vunpack.c.l.b16 %v1032
      %v1441 = vunpack.c.h.b16 %v1032
      %v1442 = vunpack.c.l.b16 %v1033
      %v1443 = vunpack.c.l.b16 %v1034
      %v1444 = vunpack.c.h.b16 %v1034
      %v1445 = vunpack.c.l.b16 %v1035
      %v1446 = vunpack.c.h.b16 %v1035
      %v1447 = vunpack.c.l.b16 %v1036
      %v1448 = vpack.c.b16 %v1213, %v1208
      %v1449 = vpack.c.b16 %v1214, %v1209
      %v1450 = vpack.c.b16 %v1215, %v1210
      %v1451 = vpack.c.b16 %v1216, %v1211
      %v1452 = vpack.c.b16 %v1217, %v1212
      %v1453 = vpack.c.b16 %v1223, %v1218
      %v1454 = vpack.c.b16 %v1224, %v1219
      %v1455 = vpack.c.b16 %v1225, %v1220
      %v1456 = vpack.c.b16 %v1226, %v1221
      %v1457 = vpack.c.b16 %v1227, %v1222
      %v1458 = vpack.c.b16 %v1233, %v1228
      %v1459 = vpack.c.b16 %v1234, %v1229
      %v1460 = vpack.c.b16 %v1235, %v1230
      %v1461 = vpack.c.b16 %v1236, %v1231
      %v1462 = vpack.c.b16 %v1237, %v1232
      %v1463 = vpack.c.b16 %v1243, %v1238
      %v1464 = vpack.c.b16 %v1244, %v1239
      %v1465 = vpack.c.b16 %v1245, %v1240
      %v1466 = vpack.c.b16 %v1246, %v1241
      %v1467 = vpack.c.b16 %v1247, %v1242
      %v1468 = vpack.c.b16 %v1253, %v1248
      %v1469 = vpack.c.b16 %v1254, %v1249
      %v1470 = vpack.c.b16 %v1255, %v1250
      %v1471 = vpack.c.b16 %v1256, %v1251
      %v1472 = vpack.c.b16 %v1257, %v1252
      %v1473 = vpack.c.b16 %v1263, %v1258
      %v1474 = vpack.c.b16 %v1264, %v1259
      %v1475 = vpack.c.b16 %v1265, %v1260
      %v1476 = vpack.c.b16 %v1266, %v1261
      %v1477 = vpack.c.b16 %v1267, %v1262
      %v1478 = vpack.c.b16 %v1273, %v1268
      %v1479 = vpack.c.b16 %v1274, %v1269
      %v1480 = vpack.c.b16 %v1275, %v1270
      %v1481 = vpack.c.b16 %v1276, %v1271
      %v1482 = vpack.c.b16 %v1277, %v1272
      %v1483 = vpack.c.b16 %v1283, %v1278
      %v1484 = vpack.c.b16 %v1284, %v1279
      %v1485 = vpack.c.b16 %v1285, %v1280
      %v1486 = vpack.c.b16 %v1286, %v1281
      %v1487 = vpack.c.b16 %v1287, %v1282
      %v1488 = vpack.c.b16 %v1293, %v1288
      %v1489 = vpack.c.b16 %v1294, %v1289
      %v1490 = vpack.c.b16 %v1295, %v1290
      %v1491 = vpack.c.b16 %v1296, %v1291
      %v1492 = vpack.c.b16 %v1297, %v1292
      %v1493 = vpack.c.b16 %v1303, %v1298
      %v1494 = vpack.c.b16 %v1304, %v1299
      %v1495 = vpack.c.b16 %v1305, %v1300
      %v1496 = vpack.c.b16 %v1306, %v1301
      %v1497 = vpack.c.b16 %v1307, %v1302
      %v1498 = vpack.c.b16 %v1313, %v1308
      %v1499 = vpack.c.b16 %v1314, %v1309
      %v1500 = vpack.c.b16 %v1315, %v1310
      %v1501 = vpack.c.b16 %v1316, %v1311
      %v1502 = vpack.c.b16 %v1317, %v1312
      %v1503 = vpack.c.b16 %v1323, %v1318
      %v1504 = vpack.c.b16 %v1324, %v1319
      %v1505 = vpack.c.b16 %v1325, %v1320
      %v1506 = vpack.c.b16 %v1326, %v1321
      %v1507 = vpack.c.b16 %v1327, %v1322
      %v1508 = vpack.c.b16 %v1333, %v1328
      %v1509 = vpack.c.b16 %v1334, %v1329
      %v1510 = vpack.c.b16 %v1335, %v1330
      %v1511 = vpack.c.b16 %v1336, %v1331
      %v1512 = vpack.c.b16 %v1337, %v1332
      %v1513 = vpack.c.b16 %v1343, %v1338
      %v1514 = vpack.c.b16 %v1344, %v1339
      %v1515 = vpack.c.b16 %v1345, %v1340
      %v1516 = vpack.c.b16 %v1346, %v1341
      %v1517 = vpack.c.b16 %v1347, %v1342
      %v1518 = vpack.c.b16 %v1353, %v1348
      %v1519 = vpack.c.b16 %v1354, %v1349
      %v1520 = vpack.c.b16 %v1355, %v1350
      %v1521 = vpack.c.b16 %v1356, %v1351
      %v1522 = vpack.c.b16 %v1357, %v1352
      %v1523 = vpack.c.b16 %v1363, %v1358
      %v1524 = vpack.c.b16 %v1364, %v1359
      %v1525 = vpack.c.b16 %v1365, %v1360
      %v1526 = vpack.c.b16 %v1366, %v1361
      %v1527 = vpack.c.b16 %v1367, %v1362
      %v1528 = vpack.c.b16 %v1373, %v1368
      %v1529 = vpack.c.b16 %v1374, %v1369
      %v1530 = vpack.c.b16 %v1375, %v1370
      %v1531 = vpack.c.b16 %v1376, %v1371
      %v1532 = vpack.c.b16 %v1377, %v1372
      %v1533 = vpack.c.b16 %v1383, %v1378
      %v1534 = vpack.c.b16 %v1384, %v1379
      %v1535 = vpack.c.b16 %v1385, %v1380
      %v1536 = vpack.c.b16 %v1386, %v1381
      %v1537 = vpack.c.b16 %v1387, %v1382
      %v1538 = vpack.c.b16 %v1393, %v1388
      %v1539 = vpack.c.b16 %v1394, %v1389
      %v1540 = vpack.c.b16 %v1395, %v1390
      %v1541 = vpack.c.b16 %v1396, %v1391
      %v1542 = vpack.c.b16 %v1397, %v1392
      %v1543 = vpack.c.b16 %v1403, %v1398
      %v1544 = vpack.c.b16 %v1404, %v1399
      %v1545 = vpack.c.b16 %v1405, %v1400
      %v1546 = vpack.c.b16 %v1406, %v1401
      %v1547 = vpack.c.b16 %v1407, %v1402
      %v1548 = vpack.c.b16 %v1413, %v1408
      %v1549 = vpack.c.b16 %v1414, %v1409
      %v1550 = vpack.c.b16 %v1415, %v1410
      %v1551 = vpack.c.b16 %v1416, %v1411
      %v1552 = vpack.c.b16 %v1417, %v1412
      %v1553 = vpack.c.b16 %v1423, %v1418
      %v1554 = vpack.c.b16 %v1424, %v1419
      %v1555 = vpack.c.b16 %v1425, %v1420
      %v1556 = vpack.c.b16 %v1426, %v1421
      %v1557 = vpack.c.b16 %v1427, %v1422
      %v1558 = vpack.c.b16 %v1433, %v1428
      %v1559 = vpack.c.b16 %v1434, %v1429
      %v1560 = vpack.c.b16 %v1435, %v1430
      %v1561 = vpack.c.b16 %v1436, %v1431
      %v1562 = vpack.c.b16 %v1437, %v1432
      %v1563 = vpack.c.b16 %v1443, %v1438
      %v1564 = vpack.c.b16 %v1444, %v1439
      %v1565 = vpack.c.b16 %v1445, %v1440
      %v1566 = vpack.c.b16 %v1446, %v1441
      %v1567 = vpack.c.b16 %v1447, %v1442
      %1688 = vmatprep.subr.bf16.mxu0 %v1449
      %1689 = vmatpush1.bf16.msra.mxu0 %v1448
      %1690 = vmatprep.subr.bf16.mxu0 %v1454
      %1691 = vmatpush1.bf16.msra.mxu0 %v1453
      %1692 = vmatprep.subr.bf16.mxu0 %v1459
      %1693 = vmatpush1.bf16.msra.mxu0 %v1458
      %1694 = vmatprep.subr.bf16.mxu0 %v1464
      %1695 = vmatpush1.bf16.msra.mxu0 %v1463
      %1696 = vmatprep.subr.bf16.mxu0 %v1469
      %1697 = vmatpush1.bf16.msra.mxu0 %v1468
      %1698 = vmatprep.subr.bf16.mxu0 %v1474
      %1699 = vmatpush1.bf16.msra.mxu0 %v1473
      %1700 = vmatprep.subr.bf16.mxu0 %v1479
      %1701 = vmatpush1.bf16.msra.mxu0 %v1478
      %1702 = vmatprep.subr.bf16.mxu0 %v1484
      %1703 = vmatpush1.bf16.msra.mxu0 %v1483
      %1704 = vmatprep.subr.bf16.mxu0 %v1489
      %1705 = vmatpush1.bf16.msra.mxu0 %v1488
      %1706 = vmatprep.subr.bf16.mxu0 %v1494
      %1707 = vmatpush1.bf16.msra.mxu0 %v1493
      %1708 = vmatprep.subr.bf16.mxu0 %v1499
      %1709 = vmatpush1.bf16.msra.mxu0 %v1498
      %1710 = vmatprep.subr.bf16.mxu0 %v1504
      %1711 = vmatpush1.bf16.msra.mxu0 %v1503
      %1712 = vmatprep.subr.bf16.mxu0 %v1509
      %1713 = vmatpush1.bf16.msra.mxu0 %v1508
      %1714 = vmatprep.subr.bf16.mxu0 %v1514
      %1715 = vmatpush1.bf16.msra.mxu0 %v1513
      %1716 = vmatprep.subr.bf16.mxu0 %v1519
      %1717 = vmatpush1.bf16.msra.mxu0 %v1518
      %1718 = vmatprep.subr.bf16.mxu0 %v1524
      %1719 = vmatpush1.bf16.msra.mxu0 %v1523
      %1720 = vmatprep.mubr.bf16.mxu0 %v885
      %1721 = vmatmul.mubr.bf16.gmra.mrb[0].mxu0 %v884
      %v1722 = vpop.f32.mrb[0].mxu0
      %v1723 = vadd.f32 %v1042, %v1722
      %v1724 = vpop.f32.mrb[0].mxu0
      %v1725 = vadd.f32 %v1046, %v1724
      %v1726 = vpop.f32.mrb[0].mxu0
      %v1727 = vadd.f32 %v1042, %v1726
      %v1728 = vpop.f32.mrb[0].mxu0
      %v1729 = vadd.f32 %v1046, %v1728
      %1730 = vmatprep.mubr.bf16.mxu0 %v888
      %1731 = vmatmul.mubr.bf16.gmra.mrb[0].mxu0 %v887
      %v1732 = vpop.f32.mrb[0].mxu0
      %v1733 = vadd.f32 %v1042, %v1732
      %v1734 = vpop.f32.mrb[0].mxu0
      %v1735 = vadd.f32 %v1046, %v1734
      %v1736 = vpop.f32.mrb[0].mxu0
      %v1737 = vadd.f32 %v1042, %v1736
      %v1738 = vpop.f32.mrb[0].mxu0
      %v1739 = vadd.f32 %v1046, %v1738
      %1740 = vmatprep.mubr.bf16.mxu0 %v891
      %1741 = vmatmul.mubr.bf16.gmra.mrb[0].mxu0 %v890
      %v1742 = vpop.f32.mrb[0].mxu0
      %v1743 = vadd.f32 %v1042, %v1742
      %v1744 = vpop.f32.mrb[0].mxu0
      %v1745 = vadd.f32 %v1046, %v1744
      %v1746 = vpop.f32.mrb[0].mxu0
      %v1747 = vadd.f32 %v1042, %v1746
      %v1748 = vpop.f32.mrb[0].mxu0
      %v1749 = vadd.f32 %v1046, %v1748
      %1750 = vdwg.mxu0
      %1751 = vmatprep.subr.bf16.mxu0 %v1529
      %1752 = vmatpush1.bf16.msra.mxu0 %v1528
      %1753 = vmatprep.subr.bf16.mxu0 %v1534
      %1754 = vmatpush1.bf16.msra.mxu0 %v1533
      %1755 = vmatprep.subr.bf16.mxu0 %v1539
      %1756 = vmatpush1.bf16.msra.mxu0 %v1538
      %1757 = vmatprep.subr.bf16.mxu0 %v1544
      %1758 = vmatpush1.bf16.msra.mxu0 %v1543
      %1759 = vmatprep.subr.bf16.mxu0 %v1549
      %1760 = vmatpush1.bf16.msra.mxu0 %v1548
      %1761 = vmatprep.subr.bf16.mxu0 %v1554
      %1762 = vmatpush1.bf16.msra.mxu0 %v1553
      %1763 = vmatprep.subr.bf16.mxu0 %v1559
      %1764 = vmatpush1.bf16.msra.mxu0 %v1558
      %1765 = vmatprep.subr.bf16.mxu0 %v1564
      %1766 = vmatpush1.bf16.msra.mxu0 %v1563
      %1767 = vmatprep.subr.bf16.mxu0 0
      %1768 = vmatpush1.bf16.msra.mxu0 0
      %1769 = vmatprep.subr.bf16.mxu0 0
      %1770 = vmatpush1.bf16.msra.mxu0 0
      %1771 = vmatprep.subr.bf16.mxu0 0
      %1772 = vmatpush1.bf16.msra.mxu0 0
      %1773 = vmatprep.subr.bf16.mxu0 0
      %1774 = vmatpush1.bf16.msra.mxu0 0
      %1775 = vmatprep.subr.bf16.mxu0 0
      %1776 = vmatpush1.bf16.msra.mxu0 0
      %1777 = vmatprep.subr.bf16.mxu0 0
      %1778 = vmatpush1.bf16.msra.mxu0 0
      %1779 = vmatprep.subr.bf16.mxu0 0
      %1780 = vmatpush1.bf16.msra.mxu0 0
      %1781 = vmatprep.subr.bf16.mxu0 0
      %1782 = vmatpush1.bf16.msra.mxu0 0
      %1783 = vmatprep.mubr.bf16.mxu0 0
      %1784 = vmatmul.mubr.bf16.gmra.mrb[0].mxu0 %v886
      %v1785 = vpop.f32.mrb[0].mxu0
      %v1786 = vadd.f32 %v1723, %v1785
      %v1787 = vpop.f32.mrb[0].mxu0
      %v1788 = vadd.f32 %v1725, %v1787
      %v1789 = vpop.f32.mrb[0].mxu0
      %v1790 = vadd.f32 %v1727, %v1789
      %v1791 = vpop.f32.mrb[0].mxu0
      %v1792 = vadd.f32 %v1729, %v1791
      %1793 = vmatprep.mubr.bf16.mxu0 0
      %1794 = vmatmul.mubr.bf16.gmra.mrb[0].mxu0 %v889
      %v1795 = vpop.f32.mrb[0].mxu0
      %v1796 = vadd.f32 %v1733, %v1795
      %v1797 = vpop.f32.mrb[0].mxu0
      %v1798 = vadd.f32 %v1735, %v1797
      %v1799 = vpop.f32.mrb[0].mxu0
      %v1800 = vadd.f32 %v1737, %v1799
      %v1801 = vpop.f32.mrb[0].mxu0
      %v1802 = vadd.f32 %v1739, %v1801
      %1803 = vmatprep.mubr.bf16.mxu0 0
      %1804 = vmatmul.mubr.bf16.gmra.mrb[0].mxu0 %v892
      %v1805 = vpop.f32.mrb[0].mxu0
      %v1806 = vadd.f32 %v1743, %v1805
      %v1807 = vpop.f32.mrb[0].mxu0
      %v1808 = vadd.f32 %v1745, %v1807
      %v1809 = vpop.f32.mrb[0].mxu0
      %v1810 = vadd.f32 %v1747, %v1809
      %v1811 = vpop.f32.mrb[0].mxu0
      %v1812 = vadd.f32 %v1749, %v1811
      %1813 = vdwg.mxu0
      %1814 = vmatprep.subr.bf16.mxu0 %v1451
      %1815 = vmatpush1.bf16.msra.mxu0 %v1450
      %1816 = vmatprep.subr.bf16.mxu0 %v1456
      %1817 = vmatpush1.bf16.msra.mxu0 %v1455
      %1818 = vmatprep.subr.bf16.mxu0 %v1461
      %1819 = vmatpush1.bf16.msra.mxu0 %v1460
      %1820 = vmatprep.subr.bf16.mxu0 %v1466
      %1821 = vmatpush1.bf16.msra.mxu0 %v1465
      %1822 = vmatprep.subr.bf16.mxu0 %v1471
      %1823 = vmatpush1.bf16.msra.mxu0 %v1470
      %1824 = vmatprep.subr.bf16.mxu0 %v1476
      %1825 = vmatpush1.bf16.msra.mxu0 %v1475
      %1826 = vmatprep.subr.bf16.mxu0 %v1481
      %1827 = vmatpush1.bf16.msra.mxu0 %v1480
      %1828 = vmatprep.subr.bf16.mxu0 %v1486
      %1829 = vmatpush1.bf16.msra.mxu0 %v1485
      %1830 = vmatprep.subr.bf16.mxu0 %v1491
      %1831 = vmatpush1.bf16.msra.mxu0 %v1490
      %1832 = vmatprep.subr.bf16.mxu0 %v1496
      %1833 = vmatpush1.bf16.msra.mxu0 %v1495
      %1834 = vmatprep.subr.bf16.mxu0 %v1501
      %1835 = vmatpush1.bf16.msra.mxu0 %v1500
      %1836 = vmatprep.subr.bf16.mxu0 %v1506
      %1837 = vmatpush1.bf16.msra.mxu0 %v1505
      %1838 = vmatprep.subr.bf16.mxu0 %v1511
      %1839 = vmatpush1.bf16.msra.mxu0 %v1510
      %1840 = vmatprep.subr.bf16.mxu0 %v1516
      %1841 = vmatpush1.bf16.msra.mxu0 %v1515
      %1842 = vmatprep.subr.bf16.mxu0 %v1521
      %1843 = vmatpush1.bf16.msra.mxu0 %v1520
      %1844 = vmatprep.subr.bf16.mxu0 %v1526
      %1845 = vmatpush1.bf16.msra.mxu0 %v1525
      %1846 = vmatprep.mubr.bf16.mxu0 %v885
      %1847 = vmatmul.mubr.bf16.gmra.mrb[0].mxu0 %v884
      %v1848 = vpop.f32.mrb[0].mxu0
      %v1849 = vadd.f32 %v1050, %v1848
      %v1850 = vpop.f32.mrb[0].mxu0
      %v1851 = vadd.f32 %v1054, %v1850
      %v1852 = vpop.f32.mrb[0].mxu0
      %v1853 = vadd.f32 %v1050, %v1852
      %v1854 = vpop.f32.mrb[0].mxu0
      %v1855 = vadd.f32 %v1054, %v1854
      %1856 = vmatprep.mubr.bf16.mxu0 %v888
      %1857 = vmatmul.mubr.bf16.gmra.mrb[0].mxu0 %v887
      %v1858 = vpop.f32.mrb[0].mxu0
      %v1859 = vadd.f32 %v1050, %v1858
      %v1860 = vpop.f32.mrb[0].mxu0
      %v1861 = vadd.f32 %v1054, %v1860
      %v1862 = vpop.f32.mrb[0].mxu0
      %v1863 = vadd.f32 %v1050, %v1862
      %v1864 = vpop.f32.mrb[0].mxu0
      %v1865 = vadd.f32 %v1054, %v1864
      %1866 = vmatprep.mubr.bf16.mxu0 %v891
      %1867 = vmatmul.mubr.bf16.gmra.mrb[0].mxu0 %v890
      %v1868 = vpop.f32.mrb[0].mxu0
      %v1869 = vadd.f32 %v1050, %v1868
      %v1870 = vpop.f32.mrb[0].mxu0
      %v1871 = vadd.f32 %v1054, %v1870
      %v1872 = vpop.f32.mrb[0].mxu0
      %v1873 = vadd.f32 %v1050, %v1872
      %v1874 = vpop.f32.mrb[0].mxu0
      %v1875 = vadd.f32 %v1054, %v1874
      %1876 = vdwg.mxu0
      %1877 = vmatprep.subr.bf16.mxu0 %v1531
      %1878 = vmatpush1.bf16.msra.mxu0 %v1530
      %1879 = vmatprep.subr.bf16.mxu0 %v1536
      %1880 = vmatpush1.bf16.msra.mxu0 %v1535
      %1881 = vmatprep.subr.bf16.mxu0 %v1541
      %1882 = vmatpush1.bf16.msra.mxu0 %v1540
      %1883 = vmatprep.subr.bf16.mxu0 %v1546
      %1884 = vmatpush1.bf16.msra.mxu0 %v1545
      %1885 = vmatprep.subr.bf16.mxu0 %v1551
      %1886 = vmatpush1.bf16.msra.mxu0 %v1550
      %1887 = vmatprep.subr.bf16.mxu0 %v1556
      %1888 = vmatpush1.bf16.msra.mxu0 %v1555
      %1889 = vmatprep.subr.bf16.mxu0 %v1561
      %1890 = vmatpush1.bf16.msra.mxu0 %v1560
      %1891 = vmatprep.subr.bf16.mxu0 %v1566
      %1892 = vmatpush1.bf16.msra.mxu0 %v1565
      %1893 = vmatprep.subr.bf16.mxu0 0
      %1894 = vmatpush1.bf16.msra.mxu0 0
      %1895 = vmatprep.subr.bf16.mxu0 0
      %1896 = vmatpush1.bf16.msra.mxu0 0
      %1897 = vmatprep.subr.bf16.mxu0 0
      %1898 = vmatpush1.bf16.msra.mxu0 0
      %1899 = vmatprep.subr.bf16.mxu0 0
      %1900 = vmatpush1.bf16.msra.mxu0 0
      %1901 = vmatprep.subr.bf16.mxu0 0
      %1902 = vmatpush1.bf16.msra.mxu0 0
      %1903 = vmatprep.subr.bf16.mxu0 0
      %1904 = vmatpush1.bf16.msra.mxu0 0
      %1905 = vmatprep.subr.bf16.mxu0 0
      %1906 = vmatpush1.bf16.msra.mxu0 0
      %1907 = vmatprep.subr.bf16.mxu0 0
      %1908 = vmatpush1.bf16.msra.mxu0 0
      %1909 = vmatprep.mubr.bf16.mxu0 0
      %1910 = vmatmul.mubr.bf16.gmra.mrb[0].mxu0 %v886
      %v1911 = vpop.f32.mrb[0].mxu0
      %v1912 = vadd.f32 %v1849, %v1911
      %v1913 = vpop.f32.mrb[0].mxu0
      %v1914 = vadd.f32 %v1851, %v1913
      %v1915 = vpop.f32.mrb[0].mxu0
      %v1916 = vadd.f32 %v1853, %v1915
      %v1917 = vpop.f32.mrb[0].mxu0
      %v1918 = vadd.f32 %v1855, %v1917
      %1919 = vmatprep.mubr.bf16.mxu0 0
      %1920 = vmatmul.mubr.bf16.gmra.mrb[0].mxu0 %v889
      %v1921 = vpop.f32.mrb[0].mxu0
      %v1922 = vadd.f32 %v1859, %v1921
      %v1923 = vpop.f32.mrb[0].mxu0
      %v1924 = vadd.f32 %v1861, %v1923
      %v1925 = vpop.f32.mrb[0].mxu0
      %v1926 = vadd.f32 %v1863, %v1925
      %v1927 = vpop.f32.mrb[0].mxu0
      %v1928 = vadd.f32 %v1865, %v1927
      %1929 = vmatprep.mubr.bf16.mxu0 0
      %1930 = vmatmul.mubr.bf16.gmra.mrb[0].mxu0 %v892
      %v1931 = vpop.f32.mrb[0].mxu0
      %v1932 = vadd.f32 %v1869, %v1931
      %v1933 = vpop.f32.mrb[0].mxu0
      %v1934 = vadd.f32 %v1871, %v1933
      %v1935 = vpop.f32.mrb[0].mxu0
      %v1936 = vadd.f32 %v1873, %v1935
      %v1937 = vpop.f32.mrb[0].mxu0
      %v1938 = vadd.f32 %v1875, %v1937
      %1939 = vdwg.mxu0
      %1940 = vmatprep.subr.bf16.mxu0 0
      %1941 = vmatpush1.bf16.msra.mxu0 %v1452
      %1942 = vmatprep.subr.bf16.mxu0 0
      %1943 = vmatpush1.bf16.msra.mxu0 %v1457
      %1944 = vmatprep.subr.bf16.mxu0 0
      %1945 = vmatpush1.bf16.msra.mxu0 %v1462
      %1946 = vmatprep.subr.bf16.mxu0 0
      %1947 = vmatpush1.bf16.msra.mxu0 %v1467
      %1948 = vmatprep.subr.bf16.mxu0 0
      %1949 = vmatpush1.bf16.msra.mxu0 %v1472
      %1950 = vmatprep.subr.bf16.mxu0 0
      %1951 = vmatpush1.bf16.msra.mxu0 %v1477
      %1952 = vmatprep.subr.bf16.mxu0 0
      %1953 = vmatpush1.bf16.msra.mxu0 %v1482
      %1954 = vmatprep.subr.bf16.mxu0 0
      %1955 = vmatpush1.bf16.msra.mxu0 %v1487
      %1956 = vmatprep.subr.bf16.mxu0 0
      %1957 = vmatpush1.bf16.msra.mxu0 %v1492
      %1958 = vmatprep.subr.bf16.mxu0 0
      %1959 = vmatpush1.bf16.msra.mxu0 %v1497
      %1960 = vmatprep.subr.bf16.mxu0 0
      %1961 = vmatpush1.bf16.msra.mxu0 %v1502
      %1962 = vmatprep.subr.bf16.mxu0 0
      %1963 = vmatpush1.bf16.msra.mxu0 %v1507
      %1964 = vmatprep.subr.bf16.mxu0 0
      %1965 = vmatpush1.bf16.msra.mxu0 %v1512
      %1966 = vmatprep.subr.bf16.mxu0 0
      %1967 = vmatpush1.bf16.msra.mxu0 %v1517
      %1968 = vmatprep.subr.bf16.mxu0 0
      %1969 = vmatpush1.bf16.msra.mxu0 %v1522
      %1970 = vmatprep.subr.bf16.mxu0 0
      %1971 = vmatpush1.bf16.msra.mxu0 %v1527
      %1972 = vmatprep.mubr.bf16.mxu0 %v885
      %1973 = vmatmul.mubr.bf16.gmra.mrb[0].mxu0 %v884
      %v1974 = vpop.f32.mrb[0].mxu0
      %v1975 = vadd.f32 %v1058, %v1974
      %v1976 = vpop.f32.mrb[0].mxu0
      %v1977 = vpop.f32.mrb[0].mxu0
      %v1978 = vadd.f32 %v1058, %v1977
      %v1979 = vpop.f32.mrb[0].mxu0
      %1980 = vmatprep.mubr.bf16.mxu0 %v888
      %1981 = vmatmul.mubr.bf16.gmra.mrb[0].mxu0 %v887
      %v1982 = vpop.f32.mrb[0].mxu0
      %v1983 = vadd.f32 %v1058, %v1982
      %v1984 = vpop.f32.mrb[0].mxu0
      %v1985 = vpop.f32.mrb[0].mxu0
      %v1986 = vadd.f32 %v1058, %v1985
      %v1987 = vpop.f32.mrb[0].mxu0
      %1988 = vmatprep.mubr.bf16.mxu0 %v891
      %1989 = vmatmul.mubr.bf16.gmra.mrb[0].mxu0 %v890
      %v1990 = vpop.f32.mrb[0].mxu0
      %v1991 = vadd.f32 %v1058, %v1990
      %v1992 = vpop.f32.mrb[0].mxu0
      %v1993 = vpop.f32.mrb[0].mxu0
      %v1994 = vadd.f32 %v1058, %v1993
      %v1995 = vpop.f32.mrb[0].mxu0
      %1996 = vdwg.mxu0
      %1997 = vmatprep.subr.bf16.mxu0 0
      %1998 = vmatpush1.bf16.msra.mxu0 %v1532
      %1999 = vmatprep.subr.bf16.mxu0 0
      %2000 = vmatpush1.bf16.msra.mxu0 %v1537
      %2001 = vmatprep.subr.bf16.mxu0 0
      %2002 = vmatpush1.bf16.msra.mxu0 %v1542
      %2003 = vmatprep.subr.bf16.mxu0 0
      %2004 = vmatpush1.bf16.msra.mxu0 %v1547
      %2005 = vmatprep.subr.bf16.mxu0 0
      %2006 = vmatpush1.bf16.msra.mxu0 %v1552
      %2007 = vmatprep.subr.bf16.mxu0 0
      %2008 = vmatpush1.bf16.msra.mxu0 %v1557
      %2009 = vmatprep.subr.bf16.mxu0 0
      %2010 = vmatpush1.bf16.msra.mxu0 %v1562
      %2011 = vmatprep.subr.bf16.mxu0 0
      %2012 = vmatpush1.bf16.msra.mxu0 %v1567
      %2013 = vmatprep.subr.bf16.mxu0 0
      %2014 = vmatpush1.bf16.msra.mxu0 0
      %2015 = vmatprep.subr.bf16.mxu0 0
      %2016 = vmatpush1.bf16.msra.mxu0 0
      %2017 = vmatprep.subr.bf16.mxu0 0
      %2018 = vmatpush1.bf16.msra.mxu0 0
      %2019 = vmatprep.subr.bf16.mxu0 0
      %2020 = vmatpush1.bf16.msra.mxu0 0
      %2021 = vmatprep.subr.bf16.mxu0 0
      %2022 = vmatpush1.bf16.msra.mxu0 0
      %2023 = vmatprep.subr.bf16.mxu0 0
      %2024 = vmatpush1.bf16.msra.mxu0 0
      %2025 = vmatprep.subr.bf16.mxu0 0
      %2026 = vmatpush1.bf16.msra.mxu0 0
      %2027 = vmatprep.subr.bf16.mxu0 0
      %2028 = vmatpush1.bf16.msra.mxu0 0
      %2029 = vmatprep.mubr.bf16.mxu0 0
      %2030 = vmatmul.mubr.bf16.gmra.mrb[0].mxu0 %v886
      %v2031 = vpop.f32.mrb[0].mxu0
      %v2032 = vadd.f32 %v1975, %v2031
      %v2033 = vpop.f32.mrb[0].mxu0
      %v2034 = vpop.f32.mrb[0].mxu0
      %v2035 = vadd.f32 %v1978, %v2034
      %v2036 = vpop.f32.mrb[0].mxu0
      %2037 = vmatprep.mubr.bf16.mxu0 0
      %2038 = vmatmul.mubr.bf16.gmra.mrb[0].mxu0 %v889
      %v2039 = vpop.f32.mrb[0].mxu0
      %v2040 = vadd.f32 %v1983, %v2039
      %v2041 = vpop.f32.mrb[0].mxu0
      %v2042 = vpop.f32.mrb[0].mxu0
      %v2043 = vadd.f32 %v1986, %v2042
      %v2044 = vpop.f32.mrb[0].mxu0
      %2045 = vmatprep.mubr.bf16.mxu0 0
      %2046 = vmatmul.mubr.bf16.gmra.mrb[0].mxu0 %v892
      %v2047 = vpop.f32.mrb[0].mxu0
      %v2048 = vadd.f32 %v1991, %v2047
      %v2049 = vpop.f32.mrb[0].mxu0
      %v2050 = vpop.f32.mrb[0].mxu0
      %v2051 = vadd.f32 %v1994, %v2050
      %v2052 = vpop.f32.mrb[0].mxu0
      %2053 = vdwg.mxu0
      %vm2054 = vcmp.ge.f32.partialorder %v1786, 0.0
      %vm2055 = vcmp.ge.f32.partialorder %v1788, 0.0
      %vm2056 = vcmp.ge.f32.partialorder %v1912, 0.0
      %vm2057 = vcmp.ge.f32.partialorder %v1914, 0.0
      %vm2058 = vcmp.ge.f32.partialorder %v2032, 0.0
      %vm2059 = vcmp.ge.f32.partialorder %v1790, 0.0
      %vm2060 = vcmp.ge.f32.partialorder %v1792, 0.0
      %vm2061 = vcmp.ge.f32.partialorder %v1916, 0.0
      %vm2062 = vcmp.ge.f32.partialorder %v1918, 0.0
      %vm2063 = vcmp.ge.f32.partialorder %v2035, 0.0
      %vm2064 = vcmp.ge.f32.partialorder %v1796, 0.0
      %vm2065 = vcmp.ge.f32.partialorder %v1798, 0.0
      %vm2066 = vcmp.ge.f32.partialorder %v1922, 0.0
      %vm2067 = vcmp.ge.f32.partialorder %v1924, 0.0
      %vm2068 = vcmp.ge.f32.partialorder %v2040, 0.0
      %vm2069 = vcmp.ge.f32.partialorder %v1800, 0.0
      %vm2070 = vcmp.ge.f32.partialorder %v1802, 0.0
      %vm2071 = vcmp.ge.f32.partialorder %v1926, 0.0
      %vm2072 = vcmp.ge.f32.partialorder %v1928, 0.0
      %vm2073 = vcmp.ge.f32.partialorder %v2043, 0.0
      %vm2074 = vcmp.ge.f32.partialorder %v1806, 0.0
      %vm2075 = vcmp.ge.f32.partialorder %v1808, 0.0
      %vm2076 = vcmp.ge.f32.partialorder %v1932, 0.0
      %vm2077 = vcmp.ge.f32.partialorder %v1934, 0.0
      %vm2078 = vcmp.ge.f32.partialorder %v2048, 0.0
      %vm2079 = vcmp.ge.f32.partialorder %v1810, 0.0
      %vm2080 = vcmp.ge.f32.partialorder %v1812, 0.0
      %vm2081 = vcmp.ge.f32.partialorder %v1936, 0.0
      %vm2082 = vcmp.ge.f32.partialorder %v1938, 0.0
      %vm2083 = vcmp.ge.f32.partialorder %v2051, 0.0
      %v2084 = vmul.f32 %v1786, 0.2
      %v2085 = vmul.f32 %v1788, 0.2
      %v2086 = vmul.f32 %v1912, 0.2
      %v2087 = vmul.f32 %v1914, 0.2
      %v2088 = vmul.f32 %v2032, 0.2
      %v2089 = vmul.f32 %v1790, 0.2
      %v2090 = vmul.f32 %v1792, 0.2
      %v2091 = vmul.f32 %v1916, 0.2
      %v2092 = vmul.f32 %v1918, 0.2
      %v2093 = vmul.f32 %v2035, 0.2
      %v2094 = vmul.f32 %v1796, 0.2
      %v2095 = vmul.f32 %v1798, 0.2
      %v2096 = vmul.f32 %v1922, 0.2
      %v2097 = vmul.f32 %v1924, 0.2
      %v2098 = vmul.f32 %v2040, 0.2
      %v2099 = vmul.f32 %v1800, 0.2
      %v2100 = vmul.f32 %v1802, 0.2
      %v2101 = vmul.f32 %v1926, 0.2
      %v2102 = vmul.f32 %v1928, 0.2
      %v2103 = vmul.f32 %v2043, 0.2
      %v2104 = vmul.f32 %v1806, 0.2
      %v2105 = vmul.f32 %v1808, 0.2
      %v2106 = vmul.f32 %v1932, 0.2
      %v2107 = vmul.f32 %v1934, 0.2
      %v2108 = vmul.f32 %v2048, 0.2
      %v2109 = vmul.f32 %v1810, 0.2
      %v2110 = vmul.f32 %v1812, 0.2
      %v2111 = vmul.f32 %v1936, 0.2
      %v2112 = vmul.f32 %v1938, 0.2
      %v2113 = vmul.f32 %v2051, 0.2
      %v2114 = vsel %vm2054, %v1786, %v2084
      %v2115 = vsel %vm2055, %v1788, %v2085
      %v2116 = vsel %vm2056, %v1912, %v2086
      %v2117 = vsel %vm2057, %v1914, %v2087
      %v2118 = vsel %vm2058, %v2032, %v2088
      %v2119 = vsel %vm2059, %v1790, %v2089
      %v2120 = vsel %vm2060, %v1792, %v2090
      %v2121 = vsel %vm2061, %v1916, %v2091
      %v2122 = vsel %vm2062, %v1918, %v2092
      %v2123 = vsel %vm2063, %v2035, %v2093
      %v2124 = vsel %vm2064, %v1796, %v2094
      %v2125 = vsel %vm2065, %v1798, %v2095
      %v2126 = vsel %vm2066, %v1922, %v2096
      %v2127 = vsel %vm2067, %v1924, %v2097
      %v2128 = vsel %vm2068, %v2040, %v2098
      %v2129 = vsel %vm2069, %v1800, %v2099
      %v2130 = vsel %vm2070, %v1802, %v2100
      %v2131 = vsel %vm2071, %v1926, %v2101
      %v2132 = vsel %vm2072, %v1928, %v2102
      %v2133 = vsel %vm2073, %v2043, %v2103
      %v2134 = vsel %vm2074, %v1806, %v2104
      %v2135 = vsel %vm2075, %v1808, %v2105
      %v2136 = vsel %vm2076, %v1932, %v2106
      %v2137 = vsel %vm2077, %v1934, %v2107
      %v2138 = vsel %vm2078, %v2048, %v2108
      %v2139 = vsel %vm2079, %v1810, %v2109
      %v2140 = vsel %vm2080, %v1812, %v2110
      %v2141 = vsel %vm2081, %v1936, %v2111
      %v2142 = vsel %vm2082, %v1938, %v2112
      %v2143 = vsel %vm2083, %v2051, %v2113
      %2145 = vset.pattern.permute.xlu0 0
      %2146 = vperm.xlu0 %2145, %v706
      %v2147 = vpop.permute.xlu0 %2146
      %2150 = vset.pattern.permute.xlu0 0
      %2151 = vperm.xlu0 %2150, %v707
      %v2152 = vpop.permute.xlu0 %2151
      %2155 = vset.pattern.permute.xlu0 0
      %2156 = vperm.xlu0 %2155, %v708
      %v2157 = vpop.permute.xlu0 %2156
      %2160 = vset.pattern.permute.xlu0 0
      %2161 = vperm.xlu0 %2160, %v709
      %v2162 = vpop.permute.xlu0 %2161
      %2165 = vset.pattern.permute.xlu0 0
      %2166 = vperm.xlu0 %2165, %v710
      %v2167 = vpop.permute.xlu0 %2166
      %2170 = vset.pattern.permute.xlu0 0
      %2171 = vperm.xlu0 %2170, %v711
      %v2172 = vpop.permute.xlu0 %2171
      %v2174 = vmul.f32 %v2114, %v2147
      %v2175 = vmul.f32 %v2115, %v2147
      %v2176 = vmul.f32 %v2116, %v2147
      %v2177 = vmul.f32 %v2117, %v2147
      %v2178 = vmul.f32 %v2118, %v2147
      %v2179 = vmul.f32 %v2119, %v2152
      %v2180 = vmul.f32 %v2120, %v2152
      %v2181 = vmul.f32 %v2121, %v2152
      %v2182 = vmul.f32 %v2122, %v2152
      %v2183 = vmul.f32 %v2123, %v2152
      %v2184 = vmul.f32 %v2124, %v2157
      %v2185 = vmul.f32 %v2125, %v2157
      %v2186 = vmul.f32 %v2126, %v2157
      %v2187 = vmul.f32 %v2127, %v2157
      %v2188 = vmul.f32 %v2128, %v2157
      %v2189 = vmul.f32 %v2129, %v2162
      %v2190 = vmul.f32 %v2130, %v2162
      %v2191 = vmul.f32 %v2131, %v2162
      %v2192 = vmul.f32 %v2132, %v2162
      %v2193 = vmul.f32 %v2133, %v2162
      %v2194 = vmul.f32 %v2134, %v2167
      %v2195 = vmul.f32 %v2135, %v2167
      %v2196 = vmul.f32 %v2136, %v2167
      %v2197 = vmul.f32 %v2137, %v2167
      %v2198 = vmul.f32 %v2138, %v2167
      %v2199 = vmul.f32 %v2139, %v2172
      %v2200 = vmul.f32 %v2140, %v2172
      %v2201 = vmul.f32 %v2141, %v2172
      %v2202 = vmul.f32 %v2142, %v2172
      %v2203 = vmul.f32 %v2143, %v2172
      %2204 = vst [vmem:[%s671] sm:$0xff] %v2174
      %2205 = vst [vmem:[%s671 + $0x8] sm:$0xff] %v2175
      %2206 = vst [vmem:[%s671 + $0x10] sm:$0xff] %v2176
      %2207 = vst [vmem:[%s671 + $0x18] sm:$0xff] %v2177
      %2208 = vst [vmem:[%s671 + $0x20] sm:$0xff] %v2178
      %2209 = vst [vmem:[%s671 + $0x28] sm:$0xff] %v2179
      %2210 = vst [vmem:[%s671 + $0x30] sm:$0xff] %v2180
      %2211 = vst [vmem:[%s671 + $0x38] sm:$0xff] %v2181
      %2212 = vst [vmem:[%s671 + $0x40] sm:$0xff] %v2182
      %2213 = vst [vmem:[%s671 + $0x48] sm:$0xff] %v2183
      %2214 = vst [vmem:[%s671 + $0x50] sm:$0xff] %v2184
      %2215 = vst [vmem:[%s671 + $0x58] sm:$0xff] %v2185
      %2216 = vst [vmem:[%s671 + $0x60] sm:$0xff] %v2186
      %2217 = vst [vmem:[%s671 + $0x68] sm:$0xff] %v2187
      %2218 = vst [vmem:[%s671 + $0x70] sm:$0xff] %v2188
      %2219 = vst [vmem:[%s671 + $0x78] sm:$0xff] %v2189
      %2220 = vst [vmem:[%s671 + $0x80] sm:$0xff] %v2190
      %2221 = vst [vmem:[%s671 + $0x88] sm:$0xff] %v2191
      %2222 = vst [vmem:[%s671 + $0x90] sm:$0xff] %v2192
      %2223 = vst [vmem:[%s671 + $0x98] sm:$0xff] %v2193
      %2224 = vst [vmem:[%s671 + $0xa0] sm:$0xff] %v2194
      %2225 = vst [vmem:[%s671 + $0xa8] sm:$0xff] %v2195
      %2226 = vst [vmem:[%s671 + $0xb0] sm:$0xff] %v2196
      %2227 = vst [vmem:[%s671 + $0xb8] sm:$0xff] %v2197
      %2228 = vst [vmem:[%s671 + $0xc0] sm:$0xff] %v2198
      %2229 = vst [vmem:[%s671 + $0xc8] sm:$0xff] %v2199
      %2230 = vst [vmem:[%s671 + $0xd0] sm:$0xff] %v2200
      %2231 = vst [vmem:[%s671 + $0xd8] sm:$0xff] %v2201
      %2232 = vst [vmem:[%s671 + $0xe0] sm:$0xff] %v2202
      %2233 = vst [vmem:[%s671 + $0xe8] sm:$0xff] %v2203
      %v2264 = vrot.slane %v2174, 7
      %v2265 = vrot.slane %v2175, 7
      %v2266 = vrot.slane %v2176, 7
      %v2267 = vrot.slane %v2177, 7
      %v2268 = vrot.slane %v2178, 7
      %v2269 = vrot.slane %v2179, 7
      %v2270 = vsel %vm846, %v2264, %v2269
      %v2271 = vrot.slane %v2180, 7
      %v2272 = vsel %vm846, %v2265, %v2271
      %v2273 = vrot.slane %v2181, 7
      %v2274 = vsel %vm846, %v2266, %v2273
      %v2275 = vrot.slane %v2182, 7
      %v2276 = vsel %vm846, %v2267, %v2275
      %v2277 = vrot.slane %v2183, 7
      %v2278 = vsel %vm846, %v2268, %v2277
      %v2279 = vrot.slane %v2184, 7
      %v2280 = vsel %vm846, %v2269, %v2279
      %v2281 = vrot.slane %v2185, 7
      %v2282 = vsel %vm846, %v2271, %v2281
      %v2283 = vrot.slane %v2186, 7
      %v2284 = vsel %vm846, %v2273, %v2283
      %v2285 = vrot.slane %v2187, 7
      %v2286 = vsel %vm846, %v2275, %v2285
      %v2287 = vrot.slane %v2188, 7
      %v2288 = vsel %vm846, %v2277, %v2287
      %v2289 = vrot.slane %v2189, 7
      %v2290 = vsel %vm846, %v2279, %v2289
      %v2291 = vrot.slane %v2190, 7
      %v2292 = vsel %vm846, %v2281, %v2291
      %v2293 = vrot.slane %v2191, 7
      %v2294 = vsel %vm846, %v2283, %v2293
      %v2295 = vrot.slane %v2192, 7
      %v2296 = vsel %vm846, %v2285, %v2295
      %v2297 = vrot.slane %v2193, 7
      %v2298 = vsel %vm846, %v2287, %v2297
      %v2299 = vrot.slane %v2194, 7
      %v2300 = vsel %vm846, %v2289, %v2299
      %v2301 = vrot.slane %v2195, 7
      %v2302 = vsel %vm846, %v2291, %v2301
      %v2303 = vrot.slane %v2196, 7
      %v2304 = vsel %vm846, %v2293, %v2303
      %v2305 = vrot.slane %v2197, 7
      %v2306 = vsel %vm846, %v2295, %v2305
      %v2307 = vrot.slane %v2198, 7
      %v2308 = vsel %vm846, %v2297, %v2307
      %v2309 = vrot.slane %v2199, 7
      %v2310 = vsel %vm846, %v2299, %v2309
      %v2311 = vrot.slane %v2200, 7
      %v2312 = vsel %vm846, %v2301, %v2311
      %v2313 = vrot.slane %v2201, 7
      %v2314 = vsel %vm846, %v2303, %v2313
      %v2315 = vrot.slane %v2202, 7
      %v2316 = vsel %vm846, %v2305, %v2315
      %v2317 = vrot.slane %v2203, 7
      %v2318 = vsel %vm846, %v2307, %v2317
      %v2349 = vsel %vm846, 0.0, %v2264
      %v2350 = vsel %vm846, 0.0, %v2265
      %v2351 = vsel %vm846, 0.0, %v2266
      %v2352 = vsel %vm846, 0.0, %v2267
      %v2353 = vsel %vm846, 0.0, %v2268
      %v2354 = vrot.slane %v2174, 1
      %v2355 = vrot.slane %v2179, 1
      %v2356 = vsel %vm865, %v2354, %v2355
      %v2357 = vrot.slane %v2175, 1
      %v2358 = vrot.slane %v2180, 1
      %v2359 = vsel %vm865, %v2357, %v2358
      %v2360 = vrot.slane %v2176, 1
      %v2361 = vrot.slane %v2181, 1
      %v2362 = vsel %vm865, %v2360, %v2361
      %v2363 = vrot.slane %v2177, 1
      %v2364 = vrot.slane %v2182, 1
      %v2365 = vsel %vm865, %v2363, %v2364
      %v2366 = vrot.slane %v2178, 1
      %v2367 = vrot.slane %v2183, 1
      %v2368 = vsel %vm865, %v2366, %v2367
      %v2369 = vrot.slane %v2184, 1
      %v2370 = vsel %vm865, %v2355, %v2369
      %v2371 = vrot.slane %v2185, 1
      %v2372 = vsel %vm865, %v2358, %v2371
      %v2373 = vrot.slane %v2186, 1
      %v2374 = vsel %vm865, %v2361, %v2373
      %v2375 = vrot.slane %v2187, 1
      %v2376 = vsel %vm865, %v2364, %v2375
      %v2377 = vrot.slane %v2188, 1
      %v2378 = vsel %vm865, %v2367, %v2377
      %v2379 = vrot.slane %v2189, 1
      %v2380 = vsel %vm865, %v2369, %v2379
      %v2381 = vrot.slane %v2190, 1
      %v2382 = vsel %vm865, %v2371, %v2381
      %v2383 = vrot.slane %v2191, 1
      %v2384 = vsel %vm865, %v2373, %v2383
      %v2385 = vrot.slane %v2192, 1
      %v2386 = vsel %vm865, %v2375, %v2385
      %v2387 = vrot.slane %v2193, 1
      %v2388 = vsel %vm865, %v2377, %v2387
      %v2389 = vrot.slane %v2194, 1
      %v2390 = vsel %vm865, %v2379, %v2389
      %v2391 = vrot.slane %v2195, 1
      %v2392 = vsel %vm865, %v2381, %v2391
      %v2393 = vrot.slane %v2196, 1
      %v2394 = vsel %vm865, %v2383, %v2393
      %v2395 = vrot.slane %v2197, 1
      %v2396 = vsel %vm865, %v2385, %v2395
      %v2397 = vrot.slane %v2198, 1
      %v2398 = vsel %vm865, %v2387, %v2397
      %v2399 = vrot.slane %v2199, 1
      %v2400 = vsel %vm865, %v2389, %v2399
      %v2401 = vrot.slane %v2200, 1
      %v2402 = vsel %vm865, %v2391, %v2401
      %v2403 = vrot.slane %v2201, 1
      %v2404 = vsel %vm865, %v2393, %v2403
      %v2405 = vrot.slane %v2202, 1
      %v2406 = vsel %vm865, %v2395, %v2405
      %v2407 = vrot.slane %v2203, 1
      %v2408 = vsel %vm865, %v2397, %v2407
      %v2439 = vsel %vm865, %v2399, 0.0
      %v2440 = vsel %vm865, %v2401, 0.0
      %v2441 = vsel %vm865, %v2403, 0.0
      %v2442 = vsel %vm865, %v2405, 0.0
      %v2443 = vsel %vm865, %v2407, 0.0
      %v2444 = vpack.c.bf16 %v2270, %v2349
      %v2445 = vpack.c.bf16 %v2272, %v2350
      %v2446 = vpack.c.bf16 %v2274, %v2351
      %v2447 = vpack.c.bf16 %v2276, %v2352
      %v2448 = vpack.c.bf16 %v2278, %v2353
      %v2449 = vpack.c.bf16 %v2179, %v2174
      %v2450 = vpack.c.bf16 %v2180, %v2175
      %v2451 = vpack.c.bf16 %v2181, %v2176
      %v2452 = vpack.c.bf16 %v2182, %v2177
      %v2453 = vpack.c.bf16 %v2183, %v2178
      %v2454 = vpack.c.bf16 %v2370, %v2356
      %v2455 = vpack.c.bf16 %v2372, %v2359
      %v2456 = vpack.c.bf16 %v2374, %v2362
      %v2457 = vpack.c.bf16 %v2376, %v2365
      %v2458 = vpack.c.bf16 %v2378, %v2368
      %v2459 = vpack.c.bf16 %v2290, %v2280
      %v2460 = vpack.c.bf16 %v2292, %v2282
      %v2461 = vpack.c.bf16 %v2294, %v2284
      %v2462 = vpack.c.bf16 %v2296, %v2286
      %v2463 = vpack.c.bf16 %v2298, %v2288
      %v2464 = vpack.c.bf16 %v2189, %v2184
      %v2465 = vpack.c.bf16 %v2190, %v2185
      %v2466 = vpack.c.bf16 %v2191, %v2186
      %v2467 = vpack.c.bf16 %v2192, %v2187
      %v2468 = vpack.c.bf16 %v2193, %v2188
      %v2469 = vpack.c.bf16 %v2390, %v2380
      %v2470 = vpack.c.bf16 %v2392, %v2382
      %v2471 = vpack.c.bf16 %v2394, %v2384
      %v2472 = vpack.c.bf16 %v2396, %v2386
      %v2473 = vpack.c.bf16 %v2398, %v2388
      %v2474 = vpack.c.bf16 %v2310, %v2300
      %v2475 = vpack.c.bf16 %v2312, %v2302
      %v2476 = vpack.c.bf16 %v2314, %v2304
      %v2477 = vpack.c.bf16 %v2316, %v2306
      %v2478 = vpack.c.bf16 %v2318, %v2308
      %v2479 = vpack.c.bf16 %v2199, %v2194
      %v2480 = vpack.c.bf16 %v2200, %v2195
      %v2481 = vpack.c.bf16 %v2201, %v2196
      %v2482 = vpack.c.bf16 %v2202, %v2197
      %v2483 = vpack.c.bf16 %v2203, %v2198
      %v2484 = vpack.c.bf16 %v2439, %v2400
      %v2485 = vpack.c.bf16 %v2440, %v2402
      %v2486 = vpack.c.bf16 %v2441, %v2404
      %v2487 = vpack.c.bf16 %v2442, %v2406
      %v2488 = vpack.c.bf16 %v2443, %v2408
      %v2489 = vld [vmem:[%s5] sm:$0xff]
      %v2490 = vld [vmem:[%s5 + $0x8] sm:$0xf]
      %v2491 = vld [vmem:[%s5 + $0xc] sm:$0xff]
      %v2492 = vld [vmem:[%s5 + $0x14] sm:$0xf]
      %v2493 = vld [vmem:[%s5 + $0x18] sm:$0xff]
      %v2494 = vld [vmem:[%s5 + $0x20] sm:$0xf]
      %v2495 = vld [vmem:[%s5 + $0x24] sm:$0xff]
      %v2496 = vld [vmem:[%s5 + $0x2c] sm:$0xf]
      %v2497 = vld [vmem:[%s5 + $0x30] sm:$0xff]
      %v2498 = vld [vmem:[%s5 + $0x38] sm:$0xf]
      %v2499 = vld [vmem:[%s5 + $0x3c] sm:$0xff]
      %v2500 = vld [vmem:[%s5 + $0x44] sm:$0xf]
      %v2501 = vld [vmem:[%s5 + $0x48] sm:$0xff]
      %v2502 = vld [vmem:[%s5 + $0x50] sm:$0xf]
      %v2503 = vld [vmem:[%s5 + $0x54] sm:$0xff]
      %v2504 = vld [vmem:[%s5 + $0x5c] sm:$0xf]
      %v2505 = vld [vmem:[%s5 + $0x60] sm:$0xff]
      %v2506 = vld [vmem:[%s5 + $0x68] sm:$0xf]
      %v2507 = vld [vmem:[%s5 + $0x6c] sm:$0xff]
      %v2508 = vld [vmem:[%s5 + $0x74] sm:$0xf]
      %v2509 = vld [vmem:[%s5 + $0x78] sm:$0xff]
      %v2510 = vld [vmem:[%s5 + $0x80] sm:$0xf]
      %v2511 = vld [vmem:[%s5 + $0x84] sm:$0xff]
      %v2512 = vld [vmem:[%s5 + $0x8c] sm:$0xf]
      %v2513 = vld [vmem:[%s5 + $0x90] sm:$0xff]
      %v2514 = vld [vmem:[%s5 + $0x98] sm:$0xf]
      %v2515 = vld [vmem:[%s5 + $0x9c] sm:$0xff]
      %v2516 = vld [vmem:[%s5 + $0xa4] sm:$0xf]
      %v2517 = vld [vmem:[%s5 + $0xa8] sm:$0xff]
      %v2518 = vld [vmem:[%s5 + $0xb0] sm:$0xf]
      %v2519 = vld [vmem:[%s5 + $0xb4] sm:$0xff]
      %v2520 = vld [vmem:[%s5 + $0xbc] sm:$0xf]
      %v2521 = vld [vmem:[%s5 + $0xc0] sm:$0xff]
      %v2522 = vld [vmem:[%s5 + $0xc8] sm:$0xf]
      %v2523 = vld [vmem:[%s5 + $0xcc] sm:$0xff]
      %v2524 = vld [vmem:[%s5 + $0xd4] sm:$0xf]
      %v2525 = vld [vmem:[%s5 + $0xd8] sm:$0xff]
      %v2526 = vld [vmem:[%s5 + $0xe0] sm:$0xf]
      %v2527 = vld [vmem:[%s5 + $0xe4] sm:$0xff]
      %v2528 = vld [vmem:[%s5 + $0xec] sm:$0xf]
      %v2529 = vld [vmem:[%s5 + $0xf0] sm:$0xff]
      %v2530 = vld [vmem:[%s5 + $0xf8] sm:$0xf]
      %v2531 = vld [vmem:[%s5 + $0xfc] sm:$0xff]
      %v2532 = vld [vmem:[%s5 + $0x104] sm:$0xf]
      %v2533 = vld [vmem:[%s5 + $0x108] sm:$0xff]
      %v2534 = vld [vmem:[%s5 + $0x110] sm:$0xf]
      %v2535 = vld [vmem:[%s5 + $0x114] sm:$0xff]
      %v2536 = vld [vmem:[%s5 + $0x11c] sm:$0xf]
      %v2537 = vld [vmem:[%s5 + $0x120] sm:$0xff]
      %v2538 = vld [vmem:[%s5 + $0x128] sm:$0xf]
      %v2539 = vld [vmem:[%s5 + $0x12c] sm:$0xff]
      %v2540 = vld [vmem:[%s5 + $0x134] sm:$0xf]
      %v2541 = vld [vmem:[%s5 + $0x138] sm:$0xff]
      %v2542 = vld [vmem:[%s5 + $0x140] sm:$0xf]
      %v2543 = vld [vmem:[%s5 + $0x144] sm:$0xff]
      %v2544 = vld [vmem:[%s5 + $0x14c] sm:$0xf]
      %v2545 = vld [vmem:[%s5 + $0x150] sm:$0xff]
      %v2546 = vld [vmem:[%s5 + $0x158] sm:$0xf]
      %v2547 = vld [vmem:[%s5 + $0x15c] sm:$0xff]
      %v2548 = vld [vmem:[%s5 + $0x164] sm:$0xf]
      %v2549 = vld [vmem:[%s5 + $0x168] sm:$0xff]
      %v2550 = vld [vmem:[%s5 + $0x170] sm:$0xf]
      %v2551 = vld [vmem:[%s5 + $0x174] sm:$0xff]
      %v2552 = vld [vmem:[%s5 + $0x17c] sm:$0xf]
      %v2553 = vld [vmem:[%s5 + $0x180] sm:$0xff]
      %v2554 = vld [vmem:[%s5 + $0x188] sm:$0xf]
      %v2555 = vld [vmem:[%s5 + $0x18c] sm:$0xff]
      %v2556 = vld [vmem:[%s5 + $0x194] sm:$0xf]
      %v2557 = vld [vmem:[%s5 + $0x198] sm:$0xff]
      %v2558 = vld [vmem:[%s5 + $0x1a0] sm:$0xf]
      %v2559 = vld [vmem:[%s5 + $0x1a4] sm:$0xff]
      %v2560 = vld [vmem:[%s5 + $0x1ac] sm:$0xf]
      %v2561 = vld [vmem:[%s5 + $0x1b0] sm:$0xff]
      %v2562 = vld [vmem:[%s5 + $0x1b8] sm:$0xf]
      %v2563 = vld [vmem:[%s5 + $0x1bc] sm:$0xff]
      %v2564 = vld [vmem:[%s5 + $0x1c4] sm:$0xf]
      %v2565 = vld [vmem:[%s5 + $0x1c8] sm:$0xff]
      %v2566 = vld [vmem:[%s5 + $0x1d0] sm:$0xf]
      %v2567 = vld [vmem:[%s5 + $0x1d4] sm:$0xff]
      %v2568 = vld [vmem:[%s5 + $0x1dc] sm:$0xf]
      %v2569 = vld [vmem:[%s5 + $0x1e0] sm:$0xff]
      %v2570 = vld [vmem:[%s5 + $0x1e8] sm:$0xf]
      %v2571 = vld [vmem:[%s5 + $0x1ec] sm:$0xff]
      %v2572 = vld [vmem:[%s5 + $0x1f4] sm:$0xf]
      %v2573 = vld [vmem:[%s5 + $0x1f8] sm:$0xff]
      %v2574 = vld [vmem:[%s5 + $0x200] sm:$0xf]
      %v2575 = vld [vmem:[%s5 + $0x204] sm:$0xff]
      %v2576 = vld [vmem:[%s5 + $0x20c] sm:$0xf]
      %v2577 = vld [vmem:[%s5 + $0x210] sm:$0xff]
      %v2578 = vld [vmem:[%s5 + $0x218] sm:$0xf]
      %v2579 = vld [vmem:[%s5 + $0x21c] sm:$0xff]
      %v2580 = vld [vmem:[%s5 + $0x224] sm:$0xf]
      %v2581 = vld [vmem:[%s5 + $0x228] sm:$0xff]
      %v2582 = vld [vmem:[%s5 + $0x230] sm:$0xf]
      %v2583 = vld [vmem:[%s5 + $0x234] sm:$0xff]
      %v2584 = vld [vmem:[%s5 + $0x23c] sm:$0xf]
      %v2585 = vld [vmem:[%s5 + $0x240] sm:$0xff]
      %v2586 = vld [vmem:[%s5 + $0x248] sm:$0xf]
      %v2587 = vld [vmem:[%s5 + $0x24c] sm:$0xff]
      %v2588 = vld [vmem:[%s5 + $0x254] sm:$0xf]
      %v2589 = vld [vmem:[%s5 + $0x258] sm:$0xff]
      %v2590 = vld [vmem:[%s5 + $0x260] sm:$0xf]
      %v2591 = vld [vmem:[%s5 + $0x264] sm:$0xff]
      %v2592 = vld [vmem:[%s5 + $0x26c] sm:$0xf]
      %v2593 = vld [vmem:[%s5 + $0x270] sm:$0xff]
      %v2594 = vld [vmem:[%s5 + $0x278] sm:$0xf]
      %v2595 = vld [vmem:[%s5 + $0x27c] sm:$0xff]
      %v2596 = vld [vmem:[%s5 + $0x284] sm:$0xf]
      %v2597 = vld [vmem:[%s5 + $0x288] sm:$0xff]
      %v2598 = vld [vmem:[%s5 + $0x290] sm:$0xf]
      %v2599 = vld [vmem:[%s5 + $0x294] sm:$0xff]
      %v2600 = vld [vmem:[%s5 + $0x29c] sm:$0xf]
      %v2601 = vld [vmem:[%s5 + $0x2a0] sm:$0xff]
      %v2602 = vld [vmem:[%s5 + $0x2a8] sm:$0xf]
      %v2603 = vld [vmem:[%s5 + $0x2ac] sm:$0xff]
      %v2604 = vld [vmem:[%s5 + $0x2b4] sm:$0xf]
      %v2605 = vld [vmem:[%s5 + $0x2b8] sm:$0xff]
      %v2606 = vld [vmem:[%s5 + $0x2c0] sm:$0xf]
      %v2607 = vld [vmem:[%s5 + $0x2c4] sm:$0xff]
      %v2608 = vld [vmem:[%s5 + $0x2cc] sm:$0xf]
      %v2609 = vld [vmem:[%s5 + $0x2d0] sm:$0xff]
      %v2610 = vld [vmem:[%s5 + $0x2d8] sm:$0xf]
      %v2611 = vld [vmem:[%s5 + $0x2dc] sm:$0xff]
      %v2612 = vld [vmem:[%s5 + $0x2e4] sm:$0xf]
      %v2613 = vld [vmem:[%s5 + $0x2e8] sm:$0xff]
      %v2614 = vld [vmem:[%s5 + $0x2f0] sm:$0xf]
      %v2615 = vld [vmem:[%s5 + $0x2f4] sm:$0xff]
      %v2616 = vld [vmem:[%s5 + $0x2fc] sm:$0xf]
      %v2617 = vld [vmem:[%s5 + $0x300] sm:$0xff]
      %v2618 = vld [vmem:[%s5 + $0x308] sm:$0xf]
      %v2619 = vld [vmem:[%s5 + $0x30c] sm:$0xff]
      %v2620 = vld [vmem:[%s5 + $0x314] sm:$0xf]
      %v2621 = vld [vmem:[%s5 + $0x318] sm:$0xff]
      %v2622 = vld [vmem:[%s5 + $0x320] sm:$0xf]
      %v2623 = vld [vmem:[%s5 + $0x324] sm:$0xff]
      %v2624 = vld [vmem:[%s5 + $0x32c] sm:$0xf]
      %v2625 = vld [vmem:[%s5 + $0x330] sm:$0xff]
      %v2626 = vld [vmem:[%s5 + $0x338] sm:$0xf]
      %v2627 = vld [vmem:[%s5 + $0x33c] sm:$0xff]
      %v2628 = vld [vmem:[%s5 + $0x344] sm:$0xf]
      %v2629 = vld [vmem:[%s5 + $0x348] sm:$0xff]
      %v2630 = vld [vmem:[%s5 + $0x350] sm:$0xf]
      %v2631 = vld [vmem:[%s5 + $0x354] sm:$0xff]
      %v2632 = vld [vmem:[%s5 + $0x35c] sm:$0xf]
      %v2633 = vld [vmem:[%s5 + $0x360] sm:$0xff]
      %v2634 = vld [vmem:[%s5 + $0x368] sm:$0xf]
      %v2635 = vld [vmem:[%s5 + $0x36c] sm:$0xff]
      %v2636 = vld [vmem:[%s5 + $0x374] sm:$0xf]
      %v2637 = vld [vmem:[%s5 + $0x378] sm:$0xff]
      %v2638 = vld [vmem:[%s5 + $0x380] sm:$0xf]
      %v2639 = vld [vmem:[%s5 + $0x384] sm:$0xff]
      %v2640 = vld [vmem:[%s5 + $0x38c] sm:$0xf]
      %v2641 = vld [vmem:[%s5 + $0x390] sm:$0xff]
      %v2642 = vld [vmem:[%s5 + $0x398] sm:$0xf]
      %v2643 = vld [vmem:[%s5 + $0x39c] sm:$0xff]
      %v2644 = vld [vmem:[%s5 + $0x3a4] sm:$0xf]
      %v2645 = vld [vmem:[%s5 + $0x3a8] sm:$0xff]
      %v2646 = vld [vmem:[%s5 + $0x3b0] sm:$0xf]
      %v2647 = vld [vmem:[%s5 + $0x3b4] sm:$0xff]
      %v2648 = vld [vmem:[%s5 + $0x3bc] sm:$0xf]
      %v2649 = vld [vmem:[%s5 + $0x3c0] sm:$0xff]
      %v2650 = vld [vmem:[%s5 + $0x3c8] sm:$0xf]
      %v2651 = vld [vmem:[%s5 + $0x3cc] sm:$0xff]
      %v2652 = vld [vmem:[%s5 + $0x3d4] sm:$0xf]
      %v2653 = vld [vmem:[%s5 + $0x3d8] sm:$0xff]
      %v2654 = vld [vmem:[%s5 + $0x3e0] sm:$0xf]
      %v2655 = vld [vmem:[%s5 + $0x3e4] sm:$0xff]
      %v2656 = vld [vmem:[%s5 + $0x3ec] sm:$0xf]
      %v2657 = vld [vmem:[%s5 + $0x3f0] sm:$0xff]
      %v2658 = vld [vmem:[%s5 + $0x3f8] sm:$0xf]
      %v2659 = vld [vmem:[%s5 + $0x3fc] sm:$0xff]
      %v2660 = vld [vmem:[%s5 + $0x404] sm:$0xf]
      %v2661 = vld [vmem:[%s5 + $0x408] sm:$0xff]
      %v2662 = vld [vmem:[%s5 + $0x410] sm:$0xf]
      %v2663 = vld [vmem:[%s5 + $0x414] sm:$0xff]
      %v2664 = vld [vmem:[%s5 + $0x41c] sm:$0xf]
      %v2665 = vld [vmem:[%s5 + $0x420] sm:$0xff]
      %v2666 = vld [vmem:[%s5 + $0x428] sm:$0xf]
      %v2667 = vld [vmem:[%s5 + $0x42c] sm:$0xff]
      %v2668 = vld [vmem:[%s5 + $0x434] sm:$0xf]
      %v2669 = vld [vmem:[%s5 + $0x438] sm:$0xff]
      %v2670 = vld [vmem:[%s5 + $0x440] sm:$0xf]
      %v2671 = vld [vmem:[%s5 + $0x444] sm:$0xff]
      %v2672 = vld [vmem:[%s5 + $0x44c] sm:$0xf]
      %v2673 = vld [vmem:[%s5 + $0x450] sm:$0xff]
      %v2674 = vld [vmem:[%s5 + $0x458] sm:$0xf]
      %v2675 = vld [vmem:[%s5 + $0x45c] sm:$0xff]
      %v2676 = vld [vmem:[%s5 + $0x464] sm:$0xf]
      %v2677 = vld [vmem:[%s5 + $0x468] sm:$0xff]
      %v2678 = vld [vmem:[%s5 + $0x470] sm:$0xf]
      %v2679 = vld [vmem:[%s5 + $0x474] sm:$0xff]
      %v2680 = vld [vmem:[%s5 + $0x47c] sm:$0xf]
      %v2681 = vld [vmem:[%s5 + $0x480] sm:$0xff]
      %v2682 = vld [vmem:[%s5 + $0x488] sm:$0xf]
      %v2683 = vld [vmem:[%s5 + $0x48c] sm:$0xff]
      %v2684 = vld [vmem:[%s5 + $0x494] sm:$0xf]
      %v2685 = vld [vmem:[%s5 + $0x498] sm:$0xff]
      %v2686 = vld [vmem:[%s5 + $0x4a0] sm:$0xf]
      %v2687 = vld [vmem:[%s5 + $0x4a4] sm:$0xff]
      %v2688 = vld [vmem:[%s5 + $0x4ac] sm:$0xf]
      %v2689 = vld [vmem:[%s5 + $0x4b0] sm:$0xff]
      %v2690 = vld [vmem:[%s5 + $0x4b8] sm:$0xf]
      %v2691 = vld [vmem:[%s5 + $0x4bc] sm:$0xff]
      %v2692 = vld [vmem:[%s5 + $0x4c4] sm:$0xf]
      %v2693 = vld [vmem:[%s5 + $0x4c8] sm:$0xff]
      %v2694 = vld [vmem:[%s5 + $0x4d0] sm:$0xf]
      %v2695 = vld [vmem:[%s5 + $0x4d4] sm:$0xff]
      %v2696 = vld [vmem:[%s5 + $0x4dc] sm:$0xf]
      %v2697 = vld [vmem:[%s5 + $0x4e0] sm:$0xff]
      %v2698 = vld [vmem:[%s5 + $0x4e8] sm:$0xf]
      %v2699 = vld [vmem:[%s5 + $0x4ec] sm:$0xff]
      %v2700 = vld [vmem:[%s5 + $0x4f4] sm:$0xf]
      %v2701 = vld [vmem:[%s5 + $0x4f8] sm:$0xff]
      %v2702 = vld [vmem:[%s5 + $0x500] sm:$0xf]
      %v2703 = vld [vmem:[%s5 + $0x504] sm:$0xff]
      %v2704 = vld [vmem:[%s5 + $0x50c] sm:$0xf]
      %v2705 = vld [vmem:[%s5 + $0x510] sm:$0xff]
      %v2706 = vld [vmem:[%s5 + $0x518] sm:$0xf]
      %v2707 = vld [vmem:[%s5 + $0x51c] sm:$0xff]
      %v2708 = vld [vmem:[%s5 + $0x524] sm:$0xf]
      %v2709 = vld [vmem:[%s5 + $0x528] sm:$0xff]
      %v2710 = vld [vmem:[%s5 + $0x530] sm:$0xf]
      %v2711 = vld [vmem:[%s5 + $0x534] sm:$0xff]
      %v2712 = vld [vmem:[%s5 + $0x53c] sm:$0xf]
      %v2713 = vld [vmem:[%s5 + $0x540] sm:$0xff]
      %v2714 = vld [vmem:[%s5 + $0x548] sm:$0xf]
      %v2715 = vld [vmem:[%s5 + $0x54c] sm:$0xff]
      %v2716 = vld [vmem:[%s5 + $0x554] sm:$0xf]
      %v2717 = vld [vmem:[%s5 + $0x558] sm:$0xff]
      %v2718 = vld [vmem:[%s5 + $0x560] sm:$0xf]
      %v2719 = vld [vmem:[%s5 + $0x564] sm:$0xff]
      %v2720 = vld [vmem:[%s5 + $0x56c] sm:$0xf]
      %v2721 = vld [vmem:[%s5 + $0x570] sm:$0xff]
      %v2722 = vld [vmem:[%s5 + $0x578] sm:$0xf]
      %v2723 = vld [vmem:[%s5 + $0x57c] sm:$0xff]
      %v2724 = vld [vmem:[%s5 + $0x584] sm:$0xf]
      %v2725 = vld [vmem:[%s5 + $0x588] sm:$0xff]
      %v2726 = vld [vmem:[%s5 + $0x590] sm:$0xf]
      %v2727 = vld [vmem:[%s5 + $0x594] sm:$0xff]
      %v2728 = vld [vmem:[%s5 + $0x59c] sm:$0xf]
      %v2729 = vld [vmem:[%s5 + $0x5a0] sm:$0xff]
      %v2730 = vld [vmem:[%s5 + $0x5a8] sm:$0xf]
      %v2731 = vld [vmem:[%s5 + $0x5ac] sm:$0xff]
      %v2732 = vld [vmem:[%s5 + $0x5b4] sm:$0xf]
      %v2733 = vld [vmem:[%s5 + $0x5b8] sm:$0xff]
      %v2734 = vld [vmem:[%s5 + $0x5c0] sm:$0xf]
      %v2735 = vld [vmem:[%s5 + $0x5c4] sm:$0xff]
      %v2736 = vld [vmem:[%s5 + $0x5cc] sm:$0xf]
      %v2737 = vld [vmem:[%s5 + $0x5d0] sm:$0xff]
      %v2738 = vld [vmem:[%s5 + $0x5d8] sm:$0xf]
      %v2739 = vld [vmem:[%s5 + $0x5dc] sm:$0xff]
      %v2740 = vld [vmem:[%s5 + $0x5e4] sm:$0xf]
      %v2741 = vld [vmem:[%s5 + $0x5e8] sm:$0xff]
      %v2742 = vld [vmem:[%s5 + $0x5f0] sm:$0xf]
      %v2743 = vld [vmem:[%s5 + $0x5f4] sm:$0xff]
      %v2744 = vld [vmem:[%s5 + $0x5fc] sm:$0xf]
      %v2745 = vld [vmem:[%s5 + $0x600] sm:$0xff]
      %v2746 = vld [vmem:[%s5 + $0x608] sm:$0xf]
      %v2747 = vld [vmem:[%s5 + $0x60c] sm:$0xff]
      %v2748 = vld [vmem:[%s5 + $0x614] sm:$0xf]
      %v2749 = vld [vmem:[%s5 + $0x618] sm:$0xff]
      %v2750 = vld [vmem:[%s5 + $0x620] sm:$0xf]
      %v2751 = vld [vmem:[%s5 + $0x624] sm:$0xff]
      %v2752 = vld [vmem:[%s5 + $0x62c] sm:$0xf]
      %v2753 = vld [vmem:[%s5 + $0x630] sm:$0xff]
      %v2754 = vld [vmem:[%s5 + $0x638] sm:$0xf]
      %v2755 = vld [vmem:[%s5 + $0x63c] sm:$0xff]
      %v2756 = vld [vmem:[%s5 + $0x644] sm:$0xf]
      %v2757 = vld [vmem:[%s5 + $0x648] sm:$0xff]
      %v2758 = vld [vmem:[%s5 + $0x650] sm:$0xf]
      %v2759 = vld [vmem:[%s5 + $0x654] sm:$0xff]
      %v2760 = vld [vmem:[%s5 + $0x65c] sm:$0xf]
      %v2761 = vld [vmem:[%s5 + $0x660] sm:$0xff]
      %v2762 = vld [vmem:[%s5 + $0x668] sm:$0xf]
      %v2763 = vld [vmem:[%s5 + $0x66c] sm:$0xff]
      %v2764 = vld [vmem:[%s5 + $0x674] sm:$0xf]
      %v2765 = vld [vmem:[%s5 + $0x678] sm:$0xff]
      %v2766 = vld [vmem:[%s5 + $0x680] sm:$0xf]
      %v2767 = vld [vmem:[%s5 + $0x684] sm:$0xff]
      %v2768 = vld [vmem:[%s5 + $0x68c] sm:$0xf]
      %v2769 = vld [vmem:[%s5 + $0x690] sm:$0xff]
      %v2770 = vld [vmem:[%s5 + $0x698] sm:$0xf]
      %v2771 = vld [vmem:[%s5 + $0x69c] sm:$0xff]
      %v2772 = vld [vmem:[%s5 + $0x6a4] sm:$0xf]
      %v2773 = vld [vmem:[%s5 + $0x6a8] sm:$0xff]
      %v2774 = vld [vmem:[%s5 + $0x6b0] sm:$0xf]
      %v2775 = vld [vmem:[%s5 + $0x6b4] sm:$0xff]
      %v2776 = vld [vmem:[%s5 + $0x6bc] sm:$0xf]
      %v2777 = vld [vmem:[%s5 + $0x6c0] sm:$0xff]
      %v2778 = vld [vmem:[%s5 + $0x6c8] sm:$0xf]
      %v2779 = vld [vmem:[%s5 + $0x6cc] sm:$0xff]
      %v2780 = vld [vmem:[%s5 + $0x6d4] sm:$0xf]
      %v2781 = vld [vmem:[%s5 + $0x6d8] sm:$0xff]
      %v2782 = vld [vmem:[%s5 + $0x6e0] sm:$0xf]
      %v2783 = vld [vmem:[%s5 + $0x6e4] sm:$0xff]
      %v2784 = vld [vmem:[%s5 + $0x6ec] sm:$0xf]
      %v2785 = vld [vmem:[%s5 + $0x6f0] sm:$0xff]
      %v2786 = vld [vmem:[%s5 + $0x6f8] sm:$0xf]
      %v2787 = vld [vmem:[%s5 + $0x6fc] sm:$0xff]
      %v2788 = vld [vmem:[%s5 + $0x704] sm:$0xf]
      %v2789 = vld [vmem:[%s5 + $0x708] sm:$0xff]
      %v2790 = vld [vmem:[%s5 + $0x710] sm:$0xf]
      %v2791 = vld [vmem:[%s5 + $0x714] sm:$0xff]
      %v2792 = vld [vmem:[%s5 + $0x71c] sm:$0xf]
      %v2793 = vld [vmem:[%s5 + $0x720] sm:$0xff]
      %v2794 = vld [vmem:[%s5 + $0x728] sm:$0xf]
      %v2795 = vld [vmem:[%s5 + $0x72c] sm:$0xff]
      %v2796 = vld [vmem:[%s5 + $0x734] sm:$0xf]
      %v2797 = vld [vmem:[%s5 + $0x738] sm:$0xff]
      %v2798 = vld [vmem:[%s5 + $0x740] sm:$0xf]
      %v2799 = vld [vmem:[%s5 + $0x744] sm:$0xff]
      %v2800 = vld [vmem:[%s5 + $0x74c] sm:$0xf]
      %v2801 = vld [vmem:[%s5 + $0x750] sm:$0xff]
      %v2802 = vld [vmem:[%s5 + $0x758] sm:$0xf]
      %v2803 = vld [vmem:[%s5 + $0x75c] sm:$0xff]
      %v2804 = vld [vmem:[%s5 + $0x764] sm:$0xf]
      %v2805 = vld [vmem:[%s5 + $0x768] sm:$0xff]
      %v2806 = vld [vmem:[%s5 + $0x770] sm:$0xf]
      %v2807 = vld [vmem:[%s5 + $0x774] sm:$0xff]
      %v2808 = vld [vmem:[%s5 + $0x77c] sm:$0xf]
      %v2809 = vld [vmem:[%s5 + $0x780] sm:$0xff]
      %v2810 = vld [vmem:[%s5 + $0x788] sm:$0xf]
      %v2811 = vld [vmem:[%s5 + $0x78c] sm:$0xff]
      %v2812 = vld [vmem:[%s5 + $0x794] sm:$0xf]
      %v2813 = vld [vmem:[%s5 + $0x798] sm:$0xff]
      %v2814 = vld [vmem:[%s5 + $0x7a0] sm:$0xf]
      %v2815 = vld [vmem:[%s5 + $0x7a4] sm:$0xff]
      %v2816 = vld [vmem:[%s5 + $0x7ac] sm:$0xf]
      %v2817 = vld [vmem:[%s5 + $0x7b0] sm:$0xff]
      %v2818 = vld [vmem:[%s5 + $0x7b8] sm:$0xf]
      %v2819 = vld [vmem:[%s5 + $0x7bc] sm:$0xff]
      %v2820 = vld [vmem:[%s5 + $0x7c4] sm:$0xf]
      %v2821 = vld [vmem:[%s5 + $0x7c8] sm:$0xff]
      %v2822 = vld [vmem:[%s5 + $0x7d0] sm:$0xf]
      %v2823 = vld [vmem:[%s5 + $0x7d4] sm:$0xff]
      %v2824 = vld [vmem:[%s5 + $0x7dc] sm:$0xf]
      %v2825 = vld [vmem:[%s5 + $0x7e0] sm:$0xff]
      %v2826 = vld [vmem:[%s5 + $0x7e8] sm:$0xf]
      %v2827 = vld [vmem:[%s5 + $0x7ec] sm:$0xff]
      %v2828 = vld [vmem:[%s5 + $0x7f4] sm:$0xf]
      %v2829 = vld [vmem:[%s5 + $0x7f8] sm:$0xff]
      %v2830 = vld [vmem:[%s5 + $0x800] sm:$0xf]
      %v2831 = vld [vmem:[%s5 + $0x804] sm:$0xff]
      %v2832 = vld [vmem:[%s5 + $0x80c] sm:$0xf]
      %v2833 = vld [vmem:[%s5 + $0x810] sm:$0xff]
      %v2834 = vld [vmem:[%s5 + $0x818] sm:$0xf]
      %v2835 = vld [vmem:[%s5 + $0x81c] sm:$0xff]
      %v2836 = vld [vmem:[%s5 + $0x824] sm:$0xf]
      %v2837 = vld [vmem:[%s5 + $0x828] sm:$0xff]
      %v2838 = vld [vmem:[%s5 + $0x830] sm:$0xf]
      %v2839 = vld [vmem:[%s5 + $0x834] sm:$0xff]
      %v2840 = vld [vmem:[%s5 + $0x83c] sm:$0xf]
      %v2841 = vld [vmem:[%s5 + $0x840] sm:$0xff]
      %v2842 = vld [vmem:[%s5 + $0x848] sm:$0xf]
      %v2843 = vld [vmem:[%s5 + $0x84c] sm:$0xff]
      %v2844 = vld [vmem:[%s5 + $0x854] sm:$0xf]
      %v2845 = vld [vmem:[%s5 + $0x858] sm:$0xff]
      %v2846 = vld [vmem:[%s5 + $0x860] sm:$0xf]
      %v2847 = vld [vmem:[%s5 + $0x864] sm:$0xff]
      %v2848 = vld [vmem:[%s5 + $0x86c] sm:$0xf]
      %v2849 = vld [vmem:[%s5 + $0x870] sm:$0xff]
      %v2850 = vld [vmem:[%s5 + $0x878] sm:$0xf]
      %v2851 = vld [vmem:[%s5 + $0x87c] sm:$0xff]
      %v2852 = vld [vmem:[%s5 + $0x884] sm:$0xf]
      %v2853 = vld [vmem:[%s5 + $0x888] sm:$0xff]
      %v2854 = vld [vmem:[%s5 + $0x890] sm:$0xf]
      %v2855 = vld [vmem:[%s5 + $0x894] sm:$0xff]
      %v2856 = vld [vmem:[%s5 + $0x89c] sm:$0xf]
      %v2857 = vld [vmem:[%s5 + $0x8a0] sm:$0xff]
      %v2858 = vld [vmem:[%s5 + $0x8a8] sm:$0xf]
      %v2859 = vld [vmem:[%s5 + $0x8ac] sm:$0xff]
      %v2860 = vld [vmem:[%s5 + $0x8b4] sm:$0xf]
      %v2861 = vld [vmem:[%s5 + $0x8b8] sm:$0xff]
      %v2862 = vld [vmem:[%s5 + $0x8c0] sm:$0xf]
      %v2863 = vld [vmem:[%s5 + $0x8c4] sm:$0xff]
      %v2864 = vld [vmem:[%s5 + $0x8cc] sm:$0xf]
      %v2865 = vld [vmem:[%s5 + $0x8d0] sm:$0xff]
      %v2866 = vld [vmem:[%s5 + $0x8d8] sm:$0xf]
      %v2867 = vld [vmem:[%s5 + $0x8dc] sm:$0xff]
      %v2868 = vld [vmem:[%s5 + $0x8e4] sm:$0xf]
      %v2869 = vld [vmem:[%s5 + $0x8e8] sm:$0xff]
      %v2870 = vld [vmem:[%s5 + $0x8f0] sm:$0xf]
      %v2871 = vld [vmem:[%s5 + $0x8f4] sm:$0xff]
      %v2872 = vld [vmem:[%s5 + $0x8fc] sm:$0xf]
      %v2873 = vld [vmem:[%s5 + $0x900] sm:$0xff]
      %v2874 = vld [vmem:[%s5 + $0x908] sm:$0xf]
      %v2875 = vld [vmem:[%s5 + $0x90c] sm:$0xff]
      %v2876 = vld [vmem:[%s5 + $0x914] sm:$0xf]
      %v2877 = vld [vmem:[%s5 + $0x918] sm:$0xff]
      %v2878 = vld [vmem:[%s5 + $0x920] sm:$0xf]
      %v2879 = vld [vmem:[%s5 + $0x924] sm:$0xff]
      %v2880 = vld [vmem:[%s5 + $0x92c] sm:$0xf]
      %v2881 = vld [vmem:[%s5 + $0x930] sm:$0xff]
      %v2882 = vld [vmem:[%s5 + $0x938] sm:$0xf]
      %v2883 = vld [vmem:[%s5 + $0x93c] sm:$0xff]
      %v2884 = vld [vmem:[%s5 + $0x944] sm:$0xf]
      %v2885 = vld [vmem:[%s5 + $0x948] sm:$0xff]
      %v2886 = vld [vmem:[%s5 + $0x950] sm:$0xf]
      %v2887 = vld [vmem:[%s5 + $0x954] sm:$0xff]
      %v2888 = vld [vmem:[%s5 + $0x95c] sm:$0xf]
      %v2889 = vld [vmem:[%s5 + $0x960] sm:$0xff]
      %v2890 = vld [vmem:[%s5 + $0x968] sm:$0xf]
      %v2891 = vld [vmem:[%s5 + $0x96c] sm:$0xff]
      %v2892 = vld [vmem:[%s5 + $0x974] sm:$0xf]
      %v2893 = vld [vmem:[%s5 + $0x978] sm:$0xff]
      %v2894 = vld [vmem:[%s5 + $0x980] sm:$0xf]
      %v2895 = vld [vmem:[%s5 + $0x984] sm:$0xff]
      %v2896 = vld [vmem:[%s5 + $0x98c] sm:$0xf]
      %v2897 = vld [vmem:[%s5 + $0x990] sm:$0xff]
      %v2898 = vld [vmem:[%s5 + $0x998] sm:$0xf]
      %v2899 = vld [vmem:[%s5 + $0x99c] sm:$0xff]
      %v2900 = vld [vmem:[%s5 + $0x9a4] sm:$0xf]
      %v2901 = vld [vmem:[%s5 + $0x9a8] sm:$0xff]
      %v2902 = vld [vmem:[%s5 + $0x9b0] sm:$0xf]
      %v2903 = vld [vmem:[%s5 + $0x9b4] sm:$0xff]
      %v2904 = vld [vmem:[%s5 + $0x9bc] sm:$0xf]
      %v2905 = vld [vmem:[%s5 + $0x9c0] sm:$0xff]
      %v2906 = vld [vmem:[%s5 + $0x9c8] sm:$0xf]
      %v2907 = vld [vmem:[%s5 + $0x9cc] sm:$0xff]
      %v2908 = vld [vmem:[%s5 + $0x9d4] sm:$0xf]
      %v2909 = vld [vmem:[%s5 + $0x9d8] sm:$0xff]
      %v2910 = vld [vmem:[%s5 + $0x9e0] sm:$0xf]
      %v2911 = vld [vmem:[%s5 + $0x9e4] sm:$0xff]
      %v2912 = vld [vmem:[%s5 + $0x9ec] sm:$0xf]
      %v2913 = vld [vmem:[%s5 + $0x9f0] sm:$0xff]
      %v2914 = vld [vmem:[%s5 + $0x9f8] sm:$0xf]
      %v2915 = vld [vmem:[%s5 + $0x9fc] sm:$0xff]
      %v2916 = vld [vmem:[%s5 + $0xa04] sm:$0xf]
      %v2917 = vld [vmem:[%s5 + $0xa08] sm:$0xff]
      %v2918 = vld [vmem:[%s5 + $0xa10] sm:$0xf]
      %v2919 = vld [vmem:[%s5 + $0xa14] sm:$0xff]
      %v2920 = vld [vmem:[%s5 + $0xa1c] sm:$0xf]
      %v2921 = vld [vmem:[%s5 + $0xa20] sm:$0xff]
      %v2922 = vld [vmem:[%s5 + $0xa28] sm:$0xf]
      %v2923 = vld [vmem:[%s5 + $0xa2c] sm:$0xff]
      %v2924 = vld [vmem:[%s5 + $0xa34] sm:$0xf]
      %v2925 = vld [vmem:[%s5 + $0xa38] sm:$0xff]
      %v2926 = vld [vmem:[%s5 + $0xa40] sm:$0xf]
      %v2927 = vld [vmem:[%s5 + $0xa44] sm:$0xff]
      %v2928 = vld [vmem:[%s5 + $0xa4c] sm:$0xf]
      %v2929 = vld [vmem:[%s5 + $0xa50] sm:$0xff]
      %v2930 = vld [vmem:[%s5 + $0xa58] sm:$0xf]
      %v2931 = vld [vmem:[%s5 + $0xa5c] sm:$0xff]
      %v2932 = vld [vmem:[%s5 + $0xa64] sm:$0xf]
      %v2933 = vld [vmem:[%s5 + $0xa68] sm:$0xff]
      %v2934 = vld [vmem:[%s5 + $0xa70] sm:$0xf]
      %v2935 = vld [vmem:[%s5 + $0xa74] sm:$0xff]
      %v2936 = vld [vmem:[%s5 + $0xa7c] sm:$0xf]
      %v2937 = vld [vmem:[%s5 + $0xa80] sm:$0xff]
      %v2938 = vld [vmem:[%s5 + $0xa88] sm:$0xf]
      %v2939 = vld [vmem:[%s5 + $0xa8c] sm:$0xff]
      %v2940 = vld [vmem:[%s5 + $0xa94] sm:$0xf]
      %v2941 = vld [vmem:[%s5 + $0xa98] sm:$0xff]
      %v2942 = vld [vmem:[%s5 + $0xaa0] sm:$0xf]
      %v2943 = vld [vmem:[%s5 + $0xaa4] sm:$0xff]
      %v2944 = vld [vmem:[%s5 + $0xaac] sm:$0xf]
      %v2945 = vld [vmem:[%s5 + $0xab0] sm:$0xff]
      %v2946 = vld [vmem:[%s5 + $0xab8] sm:$0xf]
      %v2947 = vld [vmem:[%s5 + $0xabc] sm:$0xff]
      %v2948 = vld [vmem:[%s5 + $0xac4] sm:$0xf]
      %v2949 = vld [vmem:[%s5 + $0xac8] sm:$0xff]
      %v2950 = vld [vmem:[%s5 + $0xad0] sm:$0xf]
      %v2951 = vld [vmem:[%s5 + $0xad4] sm:$0xff]
      %v2952 = vld [vmem:[%s5 + $0xadc] sm:$0xf]
      %v2953 = vld [vmem:[%s5 + $0xae0] sm:$0xff]
      %v2954 = vld [vmem:[%s5 + $0xae8] sm:$0xf]
      %v2955 = vld [vmem:[%s5 + $0xaec] sm:$0xff]
      %v2956 = vld [vmem:[%s5 + $0xaf4] sm:$0xf]
      %v2957 = vld [vmem:[%s5 + $0xaf8] sm:$0xff]
      %v2958 = vld [vmem:[%s5 + $0xb00] sm:$0xf]
      %v2959 = vld [vmem:[%s5 + $0xb04] sm:$0xff]
      %v2960 = vld [vmem:[%s5 + $0xb0c] sm:$0xf]
      %v2961 = vld [vmem:[%s5 + $0xb10] sm:$0xff]
      %v2962 = vld [vmem:[%s5 + $0xb18] sm:$0xf]
      %v2963 = vld [vmem:[%s5 + $0xb1c] sm:$0xff]
      %v2964 = vld [vmem:[%s5 + $0xb24] sm:$0xf]
      %v2965 = vld [vmem:[%s5 + $0xb28] sm:$0xff]
      %v2966 = vld [vmem:[%s5 + $0xb30] sm:$0xf]
      %v2967 = vld [vmem:[%s5 + $0xb34] sm:$0xff]
      %v2968 = vld [vmem:[%s5 + $0xb3c] sm:$0xf]
      %v2969 = vld [vmem:[%s6] sm:$0x7]
      %v2971 = vlaneseq
      %v2972 = vshrl.u32 %v2971, 7
      %v2973 = vsub.s32 0, %v2972
      %v2974 = vrot.slane %v2969, %v2973
      %v2975 = vlaneseq
      %v2976 = vshrl.u32 %v2975, 7
      %v2977 = vsub.s32 1, %v2976
      %v2978 = vrot.slane %v2969, %v2977
      %v2979 = vlaneseq
      %v2980 = vshrl.u32 %v2979, 7
      %v2981 = vsub.s32 2, %v2980
      %v2982 = vrot.slane %v2969, %v2981
      %v3466 = vunpack.c.l.b16 %v2489
      %v3467 = vunpack.c.h.b16 %v2489
      %v3468 = vunpack.c.l.b16 %v2490
      %v3469 = vunpack.c.l.b16 %v2491
      %v3470 = vunpack.c.h.b16 %v2491
      %v3471 = vunpack.c.l.b16 %v2492
      %v3472 = vunpack.c.l.b16 %v2493
      %v3473 = vunpack.c.h.b16 %v2493
      %v3474 = vunpack.c.l.b16 %v2494
      %v3475 = vunpack.c.l.b16 %v2495
      %v3476 = vunpack.c.h.b16 %v2495
      %v3477 = vunpack.c.l.b16 %v2496
      %v3478 = vunpack.c.l.b16 %v2497
      %v3479 = vunpack.c.h.b16 %v2497
      %v3480 = vunpack.c.l.b16 %v2498
      %v3481 = vunpack.c.l.b16 %v2499
      %v3482 = vunpack.c.h.b16 %v2499
      %v3483 = vunpack.c.l.b16 %v2500
      %v3484 = vunpack.c.l.b16 %v2501
      %v3485 = vunpack.c.h.b16 %v2501
      %v3486 = vunpack.c.l.b16 %v2502
      %v3487 = vunpack.c.l.b16 %v2503
      %v3488 = vunpack.c.h.b16 %v2503
      %v3489 = vunpack.c.l.b16 %v2504
      %v3490 = vunpack.c.l.b16 %v2505
      %v3491 = vunpack.c.h.b16 %v2505
      %v3492 = vunpack.c.l.b16 %v2506
      %v3493 = vunpack.c.l.b16 %v2507
      %v3494 = vunpack.c.h.b16 %v2507
      %v3495 = vunpack.c.l.b16 %v2508
      %v3496 = vunpack.c.l.b16 %v2509
      %v3497 = vunpack.c.h.b16 %v2509
      %v3498 = vunpack.c.l.b16 %v2510
      %v3499 = vunpack.c.l.b16 %v2511
      %v3500 = vunpack.c.h.b16 %v2511
      %v3501 = vunpack.c.l.b16 %v2512
      %v3502 = vunpack.c.l.b16 %v2513
      %v3503 = vunpack.c.h.b16 %v2513
      %v3504 = vunpack.c.l.b16 %v2514
      %v3505 = vunpack.c.l.b16 %v2515
      %v3506 = vunpack.c.h.b16 %v2515
      %v3507 = vunpack.c.l.b16 %v2516
      %v3508 = vunpack.c.l.b16 %v2517
      %v3509 = vunpack.c.h.b16 %v2517
      %v3510 = vunpack.c.l.b16 %v2518
      %v3511 = vunpack.c.l.b16 %v2519
      %v3512 = vunpack.c.h.b16 %v2519
      %v3513 = vunpack.c.l.b16 %v2520
      %v3514 = vunpack.c.l.b16 %v2521
      %v3515 = vunpack.c.h.b16 %v2521
      %v3516 = vunpack.c.l.b16 %v2522
      %v3517 = vunpack.c.l.b16 %v2523
      %v3518 = vunpack.c.h.b16 %v2523
      %v3519 = vunpack.c.l.b16 %v2524
      %v3520 = vunpack.c.l.b16 %v2525
      %v3521 = vunpack.c.h.b16 %v2525
      %v3522 = vunpack.c.l.b16 %v2526
      %v3523 = vunpack.c.l.b16 %v2527
      %v3524 = vunpack.c.h.b16 %v2527
      %v3525 = vunpack.c.l.b16 %v2528
      %v3526 = vunpack.c.l.b16 %v2529
      %v3527 = vunpack.c.h.b16 %v2529
      %v3528 = vunpack.c.l.b16 %v2530
      %v3529 = vunpack.c.l.b16 %v2531
      %v3530 = vunpack.c.h.b16 %v2531
      %v3531 = vunpack.c.l.b16 %v2532
      %v3532 = vunpack.c.l.b16 %v2533
      %v3533 = vunpack.c.h.b16 %v2533
      %v3534 = vunpack.c.l.b16 %v2534
      %v3535 = vunpack.c.l.b16 %v2535
      %v3536 = vunpack.c.h.b16 %v2535
      %v3537 = vunpack.c.l.b16 %v2536
      %v3538 = vunpack.c.l.b16 %v2537
      %v3539 = vunpack.c.h.b16 %v2537
      %v3540 = vunpack.c.l.b16 %v2538
      %v3541 = vunpack.c.l.b16 %v2539
      %v3542 = vunpack.c.h.b16 %v2539
      %v3543 = vunpack.c.l.b16 %v2540
      %v3544 = vunpack.c.l.b16 %v2541
      %v3545 = vunpack.c.h.b16 %v2541
      %v3546 = vunpack.c.l.b16 %v2542
      %v3547 = vunpack.c.l.b16 %v2543
      %v3548 = vunpack.c.h.b16 %v2543
      %v3549 = vunpack.c.l.b16 %v2544
      %v3550 = vunpack.c.l.b16 %v2545
      %v3551 = vunpack.c.h.b16 %v2545
      %v3552 = vunpack.c.l.b16 %v2546
      %v3553 = vunpack.c.l.b16 %v2547
      %v3554 = vunpack.c.h.b16 %v2547
      %v3555 = vunpack.c.l.b16 %v2548
      %v3556 = vunpack.c.l.b16 %v2549
      %v3557 = vunpack.c.h.b16 %v2549
      %v3558 = vunpack.c.l.b16 %v2550
      %v3559 = vunpack.c.l.b16 %v2551
      %v3560 = vunpack.c.h.b16 %v2551
      %v3561 = vunpack.c.l.b16 %v2552
      %v3562 = vunpack.c.l.b16 %v2553
      %v3563 = vunpack.c.h.b16 %v2553
      %v3564 = vunpack.c.l.b16 %v2554
      %v3565 = vunpack.c.l.b16 %v2555
      %v3566 = vunpack.c.h.b16 %v2555
      %v3567 = vunpack.c.l.b16 %v2556
      %v3568 = vunpack.c.l.b16 %v2557
      %v3569 = vunpack.c.h.b16 %v2557
      %v3570 = vunpack.c.l.b16 %v2558
      %v3571 = vunpack.c.l.b16 %v2559
      %v3572 = vunpack.c.h.b16 %v2559
      %v3573 = vunpack.c.l.b16 %v2560
      %v3574 = vunpack.c.l.b16 %v2561
      %v3575 = vunpack.c.h.b16 %v2561
      %v3576 = vunpack.c.l.b16 %v2562
      %v3577 = vunpack.c.l.b16 %v2563
      %v3578 = vunpack.c.h.b16 %v2563
      %v3579 = vunpack.c.l.b16 %v2564
      %v3580 = vunpack.c.l.b16 %v2565
      %v3581 = vunpack.c.h.b16 %v2565
      %v3582 = vunpack.c.l.b16 %v2566
      %v3583 = vunpack.c.l.b16 %v2567
      %v3584 = vunpack.c.h.b16 %v2567
      %v3585 = vunpack.c.l.b16 %v2568
      %v3586 = vunpack.c.l.b16 %v2569
      %v3587 = vunpack.c.h.b16 %v2569
      %v3588 = vunpack.c.l.b16 %v2570
      %v3589 = vunpack.c.l.b16 %v2571
      %v3590 = vunpack.c.h.b16 %v2571
      %v3591 = vunpack.c.l.b16 %v2572
      %v3592 = vunpack.c.l.b16 %v2573
      %v3593 = vunpack.c.h.b16 %v2573
      %v3594 = vunpack.c.l.b16 %v2574
      %v3595 = vunpack.c.l.b16 %v2575
      %v3596 = vunpack.c.h.b16 %v2575
      %v3597 = vunpack.c.l.b16 %v2576
      %v3598 = vunpack.c.l.b16 %v2577
      %v3599 = vunpack.c.h.b16 %v2577
      %v3600 = vunpack.c.l.b16 %v2578
      %v3601 = vunpack.c.l.b16 %v2579
      %v3602 = vunpack.c.h.b16 %v2579
      %v3603 = vunpack.c.l.b16 %v2580
      %v3604 = vunpack.c.l.b16 %v2581
      %v3605 = vunpack.c.h.b16 %v2581
      %v3606 = vunpack.c.l.b16 %v2582
      %v3607 = vunpack.c.l.b16 %v2583
      %v3608 = vunpack.c.h.b16 %v2583
      %v3609 = vunpack.c.l.b16 %v2584
      %v3610 = vunpack.c.l.b16 %v2585
      %v3611 = vunpack.c.h.b16 %v2585
      %v3612 = vunpack.c.l.b16 %v2586
      %v3613 = vunpack.c.l.b16 %v2587
      %v3614 = vunpack.c.h.b16 %v2587
      %v3615 = vunpack.c.l.b16 %v2588
      %v3616 = vunpack.c.l.b16 %v2589
      %v3617 = vunpack.c.h.b16 %v2589
      %v3618 = vunpack.c.l.b16 %v2590
      %v3619 = vunpack.c.l.b16 %v2591
      %v3620 = vunpack.c.h.b16 %v2591
      %v3621 = vunpack.c.l.b16 %v2592
      %v3622 = vunpack.c.l.b16 %v2593
      %v3623 = vunpack.c.h.b16 %v2593
      %v3624 = vunpack.c.l.b16 %v2594
      %v3625 = vunpack.c.l.b16 %v2595
      %v3626 = vunpack.c.h.b16 %v2595
      %v3627 = vunpack.c.l.b16 %v2596
      %v3628 = vunpack.c.l.b16 %v2597
      %v3629 = vunpack.c.h.b16 %v2597
      %v3630 = vunpack.c.l.b16 %v2598
      %v3631 = vunpack.c.l.b16 %v2599
      %v3632 = vunpack.c.h.b16 %v2599
      %v3633 = vunpack.c.l.b16 %v2600
      %v3634 = vunpack.c.l.b16 %v2601
      %v3635 = vunpack.c.h.b16 %v2601
      %v3636 = vunpack.c.l.b16 %v2602
      %v3637 = vunpack.c.l.b16 %v2603
      %v3638 = vunpack.c.h.b16 %v2603
      %v3639 = vunpack.c.l.b16 %v2604
      %v3640 = vunpack.c.l.b16 %v2605
      %v3641 = vunpack.c.h.b16 %v2605
      %v3642 = vunpack.c.l.b16 %v2606
      %v3643 = vunpack.c.l.b16 %v2607
      %v3644 = vunpack.c.h.b16 %v2607
      %v3645 = vunpack.c.l.b16 %v2608
      %v3646 = vunpack.c.l.b16 %v2609
      %v3647 = vunpack.c.h.b16 %v2609
      %v3648 = vunpack.c.l.b16 %v2610
      %v3649 = vunpack.c.l.b16 %v2611
      %v3650 = vunpack.c.h.b16 %v2611
      %v3651 = vunpack.c.l.b16 %v2612
      %v3652 = vunpack.c.l.b16 %v2613
      %v3653 = vunpack.c.h.b16 %v2613
      %v3654 = vunpack.c.l.b16 %v2614
      %v3655 = vunpack.c.l.b16 %v2615
      %v3656 = vunpack.c.h.b16 %v2615
      %v3657 = vunpack.c.l.b16 %v2616
      %v3658 = vunpack.c.l.b16 %v2617
      %v3659 = vunpack.c.h.b16 %v2617
      %v3660 = vunpack.c.l.b16 %v2618
      %v3661 = vunpack.c.l.b16 %v2619
      %v3662 = vunpack.c.h.b16 %v2619
      %v3663 = vunpack.c.l.b16 %v2620
      %v3664 = vunpack.c.l.b16 %v2621
      %v3665 = vunpack.c.h.b16 %v2621
      %v3666 = vunpack.c.l.b16 %v2622
      %v3667 = vunpack.c.l.b16 %v2623
      %v3668 = vunpack.c.h.b16 %v2623
      %v3669 = vunpack.c.l.b16 %v2624
      %v3670 = vunpack.c.l.b16 %v2625
      %v3671 = vunpack.c.h.b16 %v2625
      %v3672 = vunpack.c.l.b16 %v2626
      %v3673 = vunpack.c.l.b16 %v2627
      %v3674 = vunpack.c.h.b16 %v2627
      %v3675 = vunpack.c.l.b16 %v2628
      %v3676 = vunpack.c.l.b16 %v2629
      %v3677 = vunpack.c.h.b16 %v2629
      %v3678 = vunpack.c.l.b16 %v2630
      %v3679 = vunpack.c.l.b16 %v2631
      %v3680 = vunpack.c.h.b16 %v2631
      %v3681 = vunpack.c.l.b16 %v2632
      %v3682 = vunpack.c.l.b16 %v2633
      %v3683 = vunpack.c.h.b16 %v2633
      %v3684 = vunpack.c.l.b16 %v2634
      %v3685 = vunpack.c.l.b16 %v2635
      %v3686 = vunpack.c.h.b16 %v2635
      %v3687 = vunpack.c.l.b16 %v2636
      %v3688 = vunpack.c.l.b16 %v2637
      %v3689 = vunpack.c.h.b16 %v2637
      %v3690 = vunpack.c.l.b16 %v2638
      %v3691 = vunpack.c.l.b16 %v2639
      %v3692 = vunpack.c.h.b16 %v2639
      %v3693 = vunpack.c.l.b16 %v2640
      %v3694 = vunpack.c.l.b16 %v2641
      %v3695 = vunpack.c.h.b16 %v2641
      %v3696 = vunpack.c.l.b16 %v2642
      %v3697 = vunpack.c.l.b16 %v2643
      %v3698 = vunpack.c.h.b16 %v2643
      %v3699 = vunpack.c.l.b16 %v2644
      %v3700 = vunpack.c.l.b16 %v2645
      %v3701 = vunpack.c.h.b16 %v2645
      %v3702 = vunpack.c.l.b16 %v2646
      %v3703 = vunpack.c.l.b16 %v2647
      %v3704 = vunpack.c.h.b16 %v2647
      %v3705 = vunpack.c.l.b16 %v2648
      %v3706 = vunpack.c.l.b16 %v2649
      %v3707 = vunpack.c.h.b16 %v2649
      %v3708 = vunpack.c.l.b16 %v2650
      %v3709 = vunpack.c.l.b16 %v2651
      %v3710 = vunpack.c.h.b16 %v2651
      %v3711 = vunpack.c.l.b16 %v2652
      %v3712 = vunpack.c.l.b16 %v2653
      %v3713 = vunpack.c.h.b16 %v2653
      %v3714 = vunpack.c.l.b16 %v2654
      %v3715 = vunpack.c.l.b16 %v2655
      %v3716 = vunpack.c.h.b16 %v2655
      %v3717 = vunpack.c.l.b16 %v2656
      %v3718 = vunpack.c.l.b16 %v2657
      %v3719 = vunpack.c.h.b16 %v2657
      %v3720 = vunpack.c.l.b16 %v2658
      %v3721 = vunpack.c.l.b16 %v2659
      %v3722 = vunpack.c.h.b16 %v2659
      %v3723 = vunpack.c.l.b16 %v2660
      %v3724 = vunpack.c.l.b16 %v2661
      %v3725 = vunpack.c.h.b16 %v2661
      %v3726 = vunpack.c.l.b16 %v2662
      %v3727 = vunpack.c.l.b16 %v2663
      %v3728 = vunpack.c.h.b16 %v2663
      %v3729 = vunpack.c.l.b16 %v2664
      %v3730 = vunpack.c.l.b16 %v2665
      %v3731 = vunpack.c.h.b16 %v2665
      %v3732 = vunpack.c.l.b16 %v2666
      %v3733 = vunpack.c.l.b16 %v2667
      %v3734 = vunpack.c.h.b16 %v2667
      %v3735 = vunpack.c.l.b16 %v2668
      %v3736 = vunpack.c.l.b16 %v2669
      %v3737 = vunpack.c.h.b16 %v2669
      %v3738 = vunpack.c.l.b16 %v2670
      %v3739 = vunpack.c.l.b16 %v2671
      %v3740 = vunpack.c.h.b16 %v2671
      %v3741 = vunpack.c.l.b16 %v2672
      %v3742 = vunpack.c.l.b16 %v2673
      %v3743 = vunpack.c.h.b16 %v2673
      %v3744 = vunpack.c.l.b16 %v2674
      %v3745 = vunpack.c.l.b16 %v2675
      %v3746 = vunpack.c.h.b16 %v2675
      %v3747 = vunpack.c.l.b16 %v2676
      %v3748 = vunpack.c.l.b16 %v2677
      %v3749 = vunpack.c.h.b16 %v2677
      %v3750 = vunpack.c.l.b16 %v2678
      %v3751 = vunpack.c.l.b16 %v2679
      %v3752 = vunpack.c.h.b16 %v2679
      %v3753 = vunpack.c.l.b16 %v2680
      %v3754 = vunpack.c.l.b16 %v2681
      %v3755 = vunpack.c.h.b16 %v2681
      %v3756 = vunpack.c.l.b16 %v2682
      %v3757 = vunpack.c.l.b16 %v2683
      %v3758 = vunpack.c.h.b16 %v2683
      %v3759 = vunpack.c.l.b16 %v2684
      %v3760 = vunpack.c.l.b16 %v2685
      %v3761 = vunpack.c.h.b16 %v2685
      %v3762 = vunpack.c.l.b16 %v2686
      %v3763 = vunpack.c.l.b16 %v2687
      %v3764 = vunpack.c.h.b16 %v2687
      %v3765 = vunpack.c.l.b16 %v2688
      %v3766 = vunpack.c.l.b16 %v2689
      %v3767 = vunpack.c.h.b16 %v2689
      %v3768 = vunpack.c.l.b16 %v2690
      %v3769 = vunpack.c.l.b16 %v2691
      %v3770 = vunpack.c.h.b16 %v2691
      %v3771 = vunpack.c.l.b16 %v2692
      %v3772 = vunpack.c.l.b16 %v2693
      %v3773 = vunpack.c.h.b16 %v2693
      %v3774 = vunpack.c.l.b16 %v2694
      %v3775 = vunpack.c.l.b16 %v2695
      %v3776 = vunpack.c.h.b16 %v2695
      %v3777 = vunpack.c.l.b16 %v2696
      %v3778 = vunpack.c.l.b16 %v2697
      %v3779 = vunpack.c.h.b16 %v2697
      %v3780 = vunpack.c.l.b16 %v2698
      %v3781 = vunpack.c.l.b16 %v2699
      %v3782 = vunpack.c.h.b16 %v2699
      %v3783 = vunpack.c.l.b16 %v2700
      %v3784 = vunpack.c.l.b16 %v2701
      %v3785 = vunpack.c.h.b16 %v2701
      %v3786 = vunpack.c.l.b16 %v2702
      %v3787 = vunpack.c.l.b16 %v2703
      %v3788 = vunpack.c.h.b16 %v2703
      %v3789 = vunpack.c.l.b16 %v2704
      %v3790 = vunpack.c.l.b16 %v2705
      %v3791 = vunpack.c.h.b16 %v2705
      %v3792 = vunpack.c.l.b16 %v2706
      %v3793 = vunpack.c.l.b16 %v2707
      %v3794 = vunpack.c.h.b16 %v2707
      %v3795 = vunpack.c.l.b16 %v2708
      %v3796 = vunpack.c.l.b16 %v2709
      %v3797 = vunpack.c.h.b16 %v2709
      %v3798 = vunpack.c.l.b16 %v2710
      %v3799 = vunpack.c.l.b16 %v2711
      %v3800 = vunpack.c.h.b16 %v2711
      %v3801 = vunpack.c.l.b16 %v2712
      %v3802 = vunpack.c.l.b16 %v2713
      %v3803 = vunpack.c.h.b16 %v2713
      %v3804 = vunpack.c.l.b16 %v2714
      %v3805 = vunpack.c.l.b16 %v2715
      %v3806 = vunpack.c.h.b16 %v2715
      %v3807 = vunpack.c.l.b16 %v2716
      %v3808 = vunpack.c.l.b16 %v2717
      %v3809 = vunpack.c.h.b16 %v2717
      %v3810 = vunpack.c.l.b16 %v2718
      %v3811 = vunpack.c.l.b16 %v2719
      %v3812 = vunpack.c.h.b16 %v2719
      %v3813 = vunpack.c.l.b16 %v2720
      %v3814 = vunpack.c.l.b16 %v2721
      %v3815 = vunpack.c.h.b16 %v2721
      %v3816 = vunpack.c.l.b16 %v2722
      %v3817 = vunpack.c.l.b16 %v2723
      %v3818 = vunpack.c.h.b16 %v2723
      %v3819 = vunpack.c.l.b16 %v2724
      %v3820 = vunpack.c.l.b16 %v2725
      %v3821 = vunpack.c.h.b16 %v2725
      %v3822 = vunpack.c.l.b16 %v2726
      %v3823 = vunpack.c.l.b16 %v2727
      %v3824 = vunpack.c.h.b16 %v2727
      %v3825 = vunpack.c.l.b16 %v2728
      %v3826 = vunpack.c.l.b16 %v2729
      %v3827 = vunpack.c.h.b16 %v2729
      %v3828 = vunpack.c.l.b16 %v2730
      %v3829 = vunpack.c.l.b16 %v2731
      %v3830 = vunpack.c.h.b16 %v2731
      %v3831 = vunpack.c.l.b16 %v2732
      %v3832 = vunpack.c.l.b16 %v2733
      %v3833 = vunpack.c.h.b16 %v2733
      %v3834 = vunpack.c.l.b16 %v2734
      %v3835 = vunpack.c.l.b16 %v2735
      %v3836 = vunpack.c.h.b16 %v2735
      %v3837 = vunpack.c.l.b16 %v2736
      %v3838 = vunpack.c.l.b16 %v2737
      %v3839 = vunpack.c.h.b16 %v2737
      %v3840 = vunpack.c.l.b16 %v2738
      %v3841 = vunpack.c.l.b16 %v2739
      %v3842 = vunpack.c.h.b16 %v2739
      %v3843 = vunpack.c.l.b16 %v2740
      %v3844 = vunpack.c.l.b16 %v2741
      %v3845 = vunpack.c.h.b16 %v2741
      %v3846 = vunpack.c.l.b16 %v2742
      %v3847 = vunpack.c.l.b16 %v2743
      %v3848 = vunpack.c.h.b16 %v2743
      %v3849 = vunpack.c.l.b16 %v2744
      %v3850 = vunpack.c.l.b16 %v2745
      %v3851 = vunpack.c.h.b16 %v2745
      %v3852 = vunpack.c.l.b16 %v2746
      %v3853 = vunpack.c.l.b16 %v2747
      %v3854 = vunpack.c.h.b16 %v2747
      %v3855 = vunpack.c.l.b16 %v2748
      %v3856 = vunpack.c.l.b16 %v2749
      %v3857 = vunpack.c.h.b16 %v2749
      %v3858 = vunpack.c.l.b16 %v2750
      %v3859 = vunpack.c.l.b16 %v2751
      %v3860 = vunpack.c.h.b16 %v2751
      %v3861 = vunpack.c.l.b16 %v2752
      %v3862 = vunpack.c.l.b16 %v2753
      %v3863 = vunpack.c.h.b16 %v2753
      %v3864 = vunpack.c.l.b16 %v2754
      %v3865 = vunpack.c.l.b16 %v2755
      %v3866 = vunpack.c.h.b16 %v2755
      %v3867 = vunpack.c.l.b16 %v2756
      %v3868 = vunpack.c.l.b16 %v2757
      %v3869 = vunpack.c.h.b16 %v2757
      %v3870 = vunpack.c.l.b16 %v2758
      %v3871 = vunpack.c.l.b16 %v2759
      %v3872 = vunpack.c.h.b16 %v2759
      %v3873 = vunpack.c.l.b16 %v2760
      %v3874 = vunpack.c.l.b16 %v2761
      %v3875 = vunpack.c.h.b16 %v2761
      %v3876 = vunpack.c.l.b16 %v2762
      %v3877 = vunpack.c.l.b16 %v2763
      %v3878 = vunpack.c.h.b16 %v2763
      %v3879 = vunpack.c.l.b16 %v2764
      %v3880 = vunpack.c.l.b16 %v2765
      %v3881 = vunpack.c.h.b16 %v2765
      %v3882 = vunpack.c.l.b16 %v2766
      %v3883 = vunpack.c.l.b16 %v2767
      %v3884 = vunpack.c.h.b16 %v2767
      %v3885 = vunpack.c.l.b16 %v2768
      %v3886 = vunpack.c.l.b16 %v2769
      %v3887 = vunpack.c.h.b16 %v2769
      %v3888 = vunpack.c.l.b16 %v2770
      %v3889 = vunpack.c.l.b16 %v2771
      %v3890 = vunpack.c.h.b16 %v2771
      %v3891 = vunpack.c.l.b16 %v2772
      %v3892 = vunpack.c.l.b16 %v2773
      %v3893 = vunpack.c.h.b16 %v2773
      %v3894 = vunpack.c.l.b16 %v2774
      %v3895 = vunpack.c.l.b16 %v2775
      %v3896 = vunpack.c.h.b16 %v2775
      %v3897 = vunpack.c.l.b16 %v2776
      %v3898 = vunpack.c.l.b16 %v2777
      %v3899 = vunpack.c.h.b16 %v2777
      %v3900 = vunpack.c.l.b16 %v2778
      %v3901 = vunpack.c.l.b16 %v2779
      %v3902 = vunpack.c.h.b16 %v2779
      %v3903 = vunpack.c.l.b16 %v2780
      %v3904 = vunpack.c.l.b16 %v2781
      %v3905 = vunpack.c.h.b16 %v2781
      %v3906 = vunpack.c.l.b16 %v2782
      %v3907 = vunpack.c.l.b16 %v2783
      %v3908 = vunpack.c.h.b16 %v2783
      %v3909 = vunpack.c.l.b16 %v2784
      %v3910 = vunpack.c.l.b16 %v2785
      %v3911 = vunpack.c.h.b16 %v2785
      %v3912 = vunpack.c.l.b16 %v2786
      %v3913 = vunpack.c.l.b16 %v2787
      %v3914 = vunpack.c.h.b16 %v2787
      %v3915 = vunpack.c.l.b16 %v2788
      %v3916 = vunpack.c.l.b16 %v2789
      %v3917 = vunpack.c.h.b16 %v2789
      %v3918 = vunpack.c.l.b16 %v2790
      %v3919 = vunpack.c.l.b16 %v2791
      %v3920 = vunpack.c.h.b16 %v2791
      %v3921 = vunpack.c.l.b16 %v2792
      %v3922 = vunpack.c.l.b16 %v2793
      %v3923 = vunpack.c.h.b16 %v2793
      %v3924 = vunpack.c.l.b16 %v2794
      %v3925 = vunpack.c.l.b16 %v2795
      %v3926 = vunpack.c.h.b16 %v2795
      %v3927 = vunpack.c.l.b16 %v2796
      %v3928 = vunpack.c.l.b16 %v2797
      %v3929 = vunpack.c.h.b16 %v2797
      %v3930 = vunpack.c.l.b16 %v2798
      %v3931 = vunpack.c.l.b16 %v2799
      %v3932 = vunpack.c.h.b16 %v2799
      %v3933 = vunpack.c.l.b16 %v2800
      %v3934 = vunpack.c.l.b16 %v2801
      %v3935 = vunpack.c.h.b16 %v2801
      %v3936 = vunpack.c.l.b16 %v2802
      %v3937 = vunpack.c.l.b16 %v2803
      %v3938 = vunpack.c.h.b16 %v2803
      %v3939 = vunpack.c.l.b16 %v2804
      %v3940 = vunpack.c.l.b16 %v2805
      %v3941 = vunpack.c.h.b16 %v2805
      %v3942 = vunpack.c.l.b16 %v2806
      %v3943 = vunpack.c.l.b16 %v2807
      %v3944 = vunpack.c.h.b16 %v2807
      %v3945 = vunpack.c.l.b16 %v2808
      %v3946 = vunpack.c.l.b16 %v2809
      %v3947 = vunpack.c.h.b16 %v2809
      %v3948 = vunpack.c.l.b16 %v2810
      %v3949 = vunpack.c.l.b16 %v2811
      %v3950 = vunpack.c.h.b16 %v2811
      %v3951 = vunpack.c.l.b16 %v2812
      %v3952 = vunpack.c.l.b16 %v2813
      %v3953 = vunpack.c.h.b16 %v2813
      %v3954 = vunpack.c.l.b16 %v2814
      %v3955 = vunpack.c.l.b16 %v2815
      %v3956 = vunpack.c.h.b16 %v2815
      %v3957 = vunpack.c.l.b16 %v2816
      %v3958 = vunpack.c.l.b16 %v2817
      %v3959 = vunpack.c.h.b16 %v2817
      %v3960 = vunpack.c.l.b16 %v2818
      %v3961 = vunpack.c.l.b16 %v2819
      %v3962 = vunpack.c.h.b16 %v2819
      %v3963 = vunpack.c.l.b16 %v2820
      %v3964 = vunpack.c.l.b16 %v2821
      %v3965 = vunpack.c.h.b16 %v2821
      %v3966 = vunpack.c.l.b16 %v2822
      %v3967 = vunpack.c.l.b16 %v2823
      %v3968 = vunpack.c.h.b16 %v2823
      %v3969 = vunpack.c.l.b16 %v2824
      %v3970 = vunpack.c.l.b16 %v2825
      %v3971 = vunpack.c.h.b16 %v2825
      %v3972 = vunpack.c.l.b16 %v2826
      %v3973 = vunpack.c.l.b16 %v2827
      %v3974 = vunpack.c.h.b16 %v2827
      %v3975 = vunpack.c.l.b16 %v2828
      %v3976 = vunpack.c.l.b16 %v2829
      %v3977 = vunpack.c.h.b16 %v2829
      %v3978 = vunpack.c.l.b16 %v2830
      %v3979 = vunpack.c.l.b16 %v2831
      %v3980 = vunpack.c.h.b16 %v2831
      %v3981 = vunpack.c.l.b16 %v2832
      %v3982 = vunpack.c.l.b16 %v2833
      %v3983 = vunpack.c.h.b16 %v2833
      %v3984 = vunpack.c.l.b16 %v2834
      %v3985 = vunpack.c.l.b16 %v2835
      %v3986 = vunpack.c.h.b16 %v2835
      %v3987 = vunpack.c.l.b16 %v2836
      %v3988 = vunpack.c.l.b16 %v2837
      %v3989 = vunpack.c.h.b16 %v2837
      %v3990 = vunpack.c.l.b16 %v2838
      %v3991 = vunpack.c.l.b16 %v2839
      %v3992 = vunpack.c.h.b16 %v2839
      %v3993 = vunpack.c.l.b16 %v2840
      %v3994 = vunpack.c.l.b16 %v2841
      %v3995 = vunpack.c.h.b16 %v2841
      %v3996 = vunpack.c.l.b16 %v2842
      %v3997 = vunpack.c.l.b16 %v2843
      %v3998 = vunpack.c.h.b16 %v2843
      %v3999 = vunpack.c.l.b16 %v2844
      %v4000 = vunpack.c.l.b16 %v2845
      %v4001 = vunpack.c.h.b16 %v2845
      %v4002 = vunpack.c.l.b16 %v2846
      %v4003 = vunpack.c.l.b16 %v2847
      %v4004 = vunpack.c.h.b16 %v2847
      %v4005 = vunpack.c.l.b16 %v2848
      %v4006 = vunpack.c.l.b16 %v2849
      %v4007 = vunpack.c.h.b16 %v2849
      %v4008 = vunpack.c.l.b16 %v2850
      %v4009 = vunpack.c.l.b16 %v2851
      %v4010 = vunpack.c.h.b16 %v2851
      %v4011 = vunpack.c.l.b16 %v2852
      %v4012 = vunpack.c.l.b16 %v2853
      %v4013 = vunpack.c.h.b16 %v2853
      %v4014 = vunpack.c.l.b16 %v2854
      %v4015 = vunpack.c.l.b16 %v2855
      %v4016 = vunpack.c.h.b16 %v2855
      %v4017 = vunpack.c.l.b16 %v2856
      %v4018 = vunpack.c.l.b16 %v2857
      %v4019 = vunpack.c.h.b16 %v2857
      %v4020 = vunpack.c.l.b16 %v2858
      %v4021 = vunpack.c.l.b16 %v2859
      %v4022 = vunpack.c.h.b16 %v2859
      %v4023 = vunpack.c.l.b16 %v2860
      %v4024 = vunpack.c.l.b16 %v2861
      %v4025 = vunpack.c.h.b16 %v2861
      %v4026 = vunpack.c.l.b16 %v2862
      %v4027 = vunpack.c.l.b16 %v2863
      %v4028 = vunpack.c.h.b16 %v2863
      %v4029 = vunpack.c.l.b16 %v2864
      %v4030 = vunpack.c.l.b16 %v2865
      %v4031 = vunpack.c.h.b16 %v2865
      %v4032 = vunpack.c.l.b16 %v2866
      %v4033 = vunpack.c.l.b16 %v2867
      %v4034 = vunpack.c.h.b16 %v2867
      %v4035 = vunpack.c.l.b16 %v2868
      %v4036 = vunpack.c.l.b16 %v2869
      %v4037 = vunpack.c.h.b16 %v2869
      %v4038 = vunpack.c.l.b16 %v2870
      %v4039 = vunpack.c.l.b16 %v2871
      %v4040 = vunpack.c.h.b16 %v2871
      %v4041 = vunpack.c.l.b16 %v2872
      %v4042 = vunpack.c.l.b16 %v2873
      %v4043 = vunpack.c.h.b16 %v2873
      %v4044 = vunpack.c.l.b16 %v2874
      %v4045 = vunpack.c.l.b16 %v2875
      %v4046 = vunpack.c.h.b16 %v2875
      %v4047 = vunpack.c.l.b16 %v2876
      %v4048 = vunpack.c.l.b16 %v2877
      %v4049 = vunpack.c.h.b16 %v2877
      %v4050 = vunpack.c.l.b16 %v2878
      %v4051 = vunpack.c.l.b16 %v2879
      %v4052 = vunpack.c.h.b16 %v2879
      %v4053 = vunpack.c.l.b16 %v2880
      %v4054 = vunpack.c.l.b16 %v2881
      %v4055 = vunpack.c.h.b16 %v2881
      %v4056 = vunpack.c.l.b16 %v2882
      %v4057 = vunpack.c.l.b16 %v2883
      %v4058 = vunpack.c.h.b16 %v2883
      %v4059 = vunpack.c.l.b16 %v2884
      %v4060 = vunpack.c.l.b16 %v2885
      %v4061 = vunpack.c.h.b16 %v2885
      %v4062 = vunpack.c.l.b16 %v2886
      %v4063 = vunpack.c.l.b16 %v2887
      %v4064 = vunpack.c.h.b16 %v2887
      %v4065 = vunpack.c.l.b16 %v2888
      %v4066 = vunpack.c.l.b16 %v2889
      %v4067 = vunpack.c.h.b16 %v2889
      %v4068 = vunpack.c.l.b16 %v2890
      %v4069 = vunpack.c.l.b16 %v2891
      %v4070 = vunpack.c.h.b16 %v2891
      %v4071 = vunpack.c.l.b16 %v2892
      %v4072 = vunpack.c.l.b16 %v2893
      %v4073 = vunpack.c.h.b16 %v2893
      %v4074 = vunpack.c.l.b16 %v2894
      %v4075 = vunpack.c.l.b16 %v2895
      %v4076 = vunpack.c.h.b16 %v2895
      %v4077 = vunpack.c.l.b16 %v2896
      %v4078 = vunpack.c.l.b16 %v2897
      %v4079 = vunpack.c.h.b16 %v2897
      %v4080 = vunpack.c.l.b16 %v2898
      %v4081 = vunpack.c.l.b16 %v2899
      %v4082 = vunpack.c.h.b16 %v2899
      %v4083 = vunpack.c.l.b16 %v2900
      %v4084 = vunpack.c.l.b16 %v2901
      %v4085 = vunpack.c.h.b16 %v2901
      %v4086 = vunpack.c.l.b16 %v2902
      %v4087 = vunpack.c.l.b16 %v2903
      %v4088 = vunpack.c.h.b16 %v2903
      %v4089 = vunpack.c.l.b16 %v2904
      %v4090 = vunpack.c.l.b16 %v2905
      %v4091 = vunpack.c.h.b16 %v2905
      %v4092 = vunpack.c.l.b16 %v2906
      %v4093 = vunpack.c.l.b16 %v2907
      %v4094 = vunpack.c.h.b16 %v2907
      %v4095 = vunpack.c.l.b16 %v2908
      %v4096 = vunpack.c.l.b16 %v2909
      %v4097 = vunpack.c.h.b16 %v2909
      %v4098 = vunpack.c.l.b16 %v2910
      %v4099 = vunpack.c.l.b16 %v2911
      %v4100 = vunpack.c.h.b16 %v2911
      %v4101 = vunpack.c.l.b16 %v2912
      %v4102 = vunpack.c.l.b16 %v2913
      %v4103 = vunpack.c.h.b16 %v2913
      %v4104 = vunpack.c.l.b16 %v2914
      %v4105 = vunpack.c.l.b16 %v2915
      %v4106 = vunpack.c.h.b16 %v2915
      %v4107 = vunpack.c.l.b16 %v2916
      %v4108 = vunpack.c.l.b16 %v2917
      %v4109 = vunpack.c.h.b16 %v2917
      %v4110 = vunpack.c.l.b16 %v2918
      %v4111 = vunpack.c.l.b16 %v2919
      %v4112 = vunpack.c.h.b16 %v2919
      %v4113 = vunpack.c.l.b16 %v2920
      %v4114 = vunpack.c.l.b16 %v2921
      %v4115 = vunpack.c.h.b16 %v2921
      %v4116 = vunpack.c.l.b16 %v2922
      %v4117 = vunpack.c.l.b16 %v2923
      %v4118 = vunpack.c.h.b16 %v2923
      %v4119 = vunpack.c.l.b16 %v2924
      %v4120 = vunpack.c.l.b16 %v2925
      %v4121 = vunpack.c.h.b16 %v2925
      %v4122 = vunpack.c.l.b16 %v2926
      %v4123 = vunpack.c.l.b16 %v2927
      %v4124 = vunpack.c.h.b16 %v2927
      %v4125 = vunpack.c.l.b16 %v2928
      %v4126 = vunpack.c.l.b16 %v2929
      %v4127 = vunpack.c.h.b16 %v2929
      %v4128 = vunpack.c.l.b16 %v2930
      %v4129 = vunpack.c.l.b16 %v2931
      %v4130 = vunpack.c.h.b16 %v2931
      %v4131 = vunpack.c.l.b16 %v2932
      %v4132 = vunpack.c.l.b16 %v2933
      %v4133 = vunpack.c.h.b16 %v2933
      %v4134 = vunpack.c.l.b16 %v2934
      %v4135 = vunpack.c.l.b16 %v2935
      %v4136 = vunpack.c.h.b16 %v2935
      %v4137 = vunpack.c.l.b16 %v2936
      %v4138 = vunpack.c.l.b16 %v2937
      %v4139 = vunpack.c.h.b16 %v2937
      %v4140 = vunpack.c.l.b16 %v2938
      %v4141 = vunpack.c.l.b16 %v2939
      %v4142 = vunpack.c.h.b16 %v2939
      %v4143 = vunpack.c.l.b16 %v2940
      %v4144 = vunpack.c.l.b16 %v2941
      %v4145 = vunpack.c.h.b16 %v2941
      %v4146 = vunpack.c.l.b16 %v2942
      %v4147 = vunpack.c.l.b16 %v2943
      %v4148 = vunpack.c.h.b16 %v2943
      %v4149 = vunpack.c.l.b16 %v2944
      %v4150 = vunpack.c.l.b16 %v2945
      %v4151 = vunpack.c.h.b16 %v2945
      %v4152 = vunpack.c.l.b16 %v2946
      %v4153 = vunpack.c.l.b16 %v2947
      %v4154 = vunpack.c.h.b16 %v2947
      %v4155 = vunpack.c.l.b16 %v2948
      %v4156 = vunpack.c.l.b16 %v2949
      %v4157 = vunpack.c.h.b16 %v2949
      %v4158 = vunpack.c.l.b16 %v2950
      %v4159 = vunpack.c.l.b16 %v2951
      %v4160 = vunpack.c.h.b16 %v2951
      %v4161 = vunpack.c.l.b16 %v2952
      %v4162 = vunpack.c.l.b16 %v2953
      %v4163 = vunpack.c.h.b16 %v2953
      %v4164 = vunpack.c.l.b16 %v2954
      %v4165 = vunpack.c.l.b16 %v2955
      %v4166 = vunpack.c.h.b16 %v2955
      %v4167 = vunpack.c.l.b16 %v2956
      %v4168 = vunpack.c.l.b16 %v2957
      %v4169 = vunpack.c.h.b16 %v2957
      %v4170 = vunpack.c.l.b16 %v2958
      %v4171 = vunpack.c.l.b16 %v2959
      %v4172 = vunpack.c.h.b16 %v2959
      %v4173 = vunpack.c.l.b16 %v2960
      %v4174 = vunpack.c.l.b16 %v2961
      %v4175 = vunpack.c.h.b16 %v2961
      %v4176 = vunpack.c.l.b16 %v2962
      %v4177 = vunpack.c.l.b16 %v2963
      %v4178 = vunpack.c.h.b16 %v2963
      %v4179 = vunpack.c.l.b16 %v2964
      %v4180 = vunpack.c.l.b16 %v2965
      %v4181 = vunpack.c.h.b16 %v2965
      %v4182 = vunpack.c.l.b16 %v2966
      %v4183 = vunpack.c.l.b16 %v2967
      %v4184 = vunpack.c.h.b16 %v2967
      %v4185 = vunpack.c.l.b16 %v2968
      %v4186 = vpack.c.b16 %v3469, %v3466
      %v4187 = vpack.c.b16 %v3470, %v3467
      %v4188 = vpack.c.b16 %v3471, %v3468
      %v4189 = vpack.c.b16 %v3475, %v3472
      %v4190 = vpack.c.b16 %v3476, %v3473
      %v4191 = vpack.c.b16 %v3477, %v3474
      %v4192 = vpack.c.b16 %v3481, %v3478
      %v4193 = vpack.c.b16 %v3482, %v3479
      %v4194 = vpack.c.b16 %v3483, %v3480
      %v4195 = vpack.c.b16 %v3487, %v3484
      %v4196 = vpack.c.b16 %v3488, %v3485
      %v4197 = vpack.c.b16 %v3489, %v3486
      %v4198 = vpack.c.b16 %v3493, %v3490
      %v4199 = vpack.c.b16 %v3494, %v3491
      %v4200 = vpack.c.b16 %v3495, %v3492
      %v4201 = vpack.c.b16 %v3499, %v3496
      %v4202 = vpack.c.b16 %v3500, %v3497
      %v4203 = vpack.c.b16 %v3501, %v3498
      %v4204 = vpack.c.b16 %v3505, %v3502
      %v4205 = vpack.c.b16 %v3506, %v3503
      %v4206 = vpack.c.b16 %v3507, %v3504
      %v4207 = vpack.c.b16 %v3511, %v3508
      %v4208 = vpack.c.b16 %v3512, %v3509
      %v4209 = vpack.c.b16 %v3513, %v3510
      %v4210 = vpack.c.b16 %v3517, %v3514
      %v4211 = vpack.c.b16 %v3518, %v3515
      %v4212 = vpack.c.b16 %v3519, %v3516
      %v4213 = vpack.c.b16 %v3523, %v3520
      %v4214 = vpack.c.b16 %v3524, %v3521
      %v4215 = vpack.c.b16 %v3525, %v3522
      %v4216 = vpack.c.b16 %v3529, %v3526
      %v4217 = vpack.c.b16 %v3530, %v3527
      %v4218 = vpack.c.b16 %v3531, %v3528
      %v4219 = vpack.c.b16 %v3535, %v3532
      %v4220 = vpack.c.b16 %v3536, %v3533
      %v4221 = vpack.c.b16 %v3537, %v3534
      %v4222 = vpack.c.b16 %v3541, %v3538
      %v4223 = vpack.c.b16 %v3542, %v3539
      %v4224 = vpack.c.b16 %v3543, %v3540
      %v4225 = vpack.c.b16 %v3547, %v3544
      %v4226 = vpack.c.b16 %v3548, %v3545
      %v4227 = vpack.c.b16 %v3549, %v3546
      %v4228 = vpack.c.b16 %v3553, %v3550
      %v4229 = vpack.c.b16 %v3554, %v3551
      %v4230 = vpack.c.b16 %v3555, %v3552
      %v4231 = vpack.c.b16 %v3559, %v3556
      %v4232 = vpack.c.b16 %v3560, %v3557
      %v4233 = vpack.c.b16 %v3561, %v3558
      %v4234 = vpack.c.b16 %v3565, %v3562
      %v4235 = vpack.c.b16 %v3566, %v3563
      %v4236 = vpack.c.b16 %v3567, %v3564
      %v4237 = vpack.c.b16 %v3571, %v3568
      %v4238 = vpack.c.b16 %v3572, %v3569
      %v4239 = vpack.c.b16 %v3573, %v3570
      %v4240 = vpack.c.b16 %v3577, %v3574
      %v4241 = vpack.c.b16 %v3578, %v3575
      %v4242 = vpack.c.b16 %v3579, %v3576
      %v4243 = vpack.c.b16 %v3583, %v3580
      %v4244 = vpack.c.b16 %v3584, %v3581
      %v4245 = vpack.c.b16 %v3585, %v3582
      %v4246 = vpack.c.b16 %v3589, %v3586
      %v4247 = vpack.c.b16 %v3590, %v3587
      %v4248 = vpack.c.b16 %v3591, %v3588
      %v4249 = vpack.c.b16 %v3595, %v3592
      %v4250 = vpack.c.b16 %v3596, %v3593
      %v4251 = vpack.c.b16 %v3597, %v3594
      %v4252 = vpack.c.b16 %v3601, %v3598
      %v4253 = vpack.c.b16 %v3602, %v3599
      %v4254 = vpack.c.b16 %v3603, %v3600
      %v4255 = vpack.c.b16 %v3607, %v3604
      %v4256 = vpack.c.b16 %v3608, %v3605
      %v4257 = vpack.c.b16 %v3609, %v3606
      %v4258 = vpack.c.b16 %v3613, %v3610
      %v4259 = vpack.c.b16 %v3614, %v3611
      %v4260 = vpack.c.b16 %v3615, %v3612
      %v4261 = vpack.c.b16 %v3619, %v3616
      %v4262 = vpack.c.b16 %v3620, %v3617
      %v4263 = vpack.c.b16 %v3621, %v3618
      %v4264 = vpack.c.b16 %v3625, %v3622
      %v4265 = vpack.c.b16 %v3626, %v3623
      %v4266 = vpack.c.b16 %v3627, %v3624
      %v4267 = vpack.c.b16 %v3631, %v3628
      %v4268 = vpack.c.b16 %v3632, %v3629
      %v4269 = vpack.c.b16 %v3633, %v3630
      %v4270 = vpack.c.b16 %v3637, %v3634
      %v4271 = vpack.c.b16 %v3638, %v3635
      %v4272 = vpack.c.b16 %v3639, %v3636
      %v4273 = vpack.c.b16 %v3643, %v3640
      %v4274 = vpack.c.b16 %v3644, %v3641
      %v4275 = vpack.c.b16 %v3645, %v3642
      %v4276 = vpack.c.b16 %v3649, %v3646
      %v4277 = vpack.c.b16 %v3650, %v3647
      %v4278 = vpack.c.b16 %v3651, %v3648
      %v4279 = vpack.c.b16 %v3655, %v3652
      %v4280 = vpack.c.b16 %v3656, %v3653
      %v4281 = vpack.c.b16 %v3657, %v3654
      %v4282 = vpack.c.b16 %v3661, %v3658
      %v4283 = vpack.c.b16 %v3662, %v3659
      %v4284 = vpack.c.b16 %v3663, %v3660
      %v4285 = vpack.c.b16 %v3667, %v3664
      %v4286 = vpack.c.b16 %v3668, %v3665
      %v4287 = vpack.c.b16 %v3669, %v3666
      %v4288 = vpack.c.b16 %v3673, %v3670
      %v4289 = vpack.c.b16 %v3674, %v3671
      %v4290 = vpack.c.b16 %v3675, %v3672
      %v4291 = vpack.c.b16 %v3679, %v3676
      %v4292 = vpack.c.b16 %v3680, %v3677
      %v4293 = vpack.c.b16 %v3681, %v3678
      %v4294 = vpack.c.b16 %v3685, %v3682
      %v4295 = vpack.c.b16 %v3686, %v3683
      %v4296 = vpack.c.b16 %v3687, %v3684
      %v4297 = vpack.c.b16 %v3691, %v3688
      %v4298 = vpack.c.b16 %v3692, %v3689
      %v4299 = vpack.c.b16 %v3693, %v3690
      %v4300 = vpack.c.b16 %v3697, %v3694
      %v4301 = vpack.c.b16 %v3698, %v3695
      %v4302 = vpack.c.b16 %v3699, %v3696
      %v4303 = vpack.c.b16 %v3703, %v3700
      %v4304 = vpack.c.b16 %v3704, %v3701
      %v4305 = vpack.c.b16 %v3705, %v3702
      %v4306 = vpack.c.b16 %v3709, %v3706
      %v4307 = vpack.c.b16 %v3710, %v3707
      %v4308 = vpack.c.b16 %v3711, %v3708
      %v4309 = vpack.c.b16 %v3715, %v3712
      %v4310 = vpack.c.b16 %v3716, %v3713
      %v4311 = vpack.c.b16 %v3717, %v3714
      %v4312 = vpack.c.b16 %v3721, %v3718
      %v4313 = vpack.c.b16 %v3722, %v3719
      %v4314 = vpack.c.b16 %v3723, %v3720
      %v4315 = vpack.c.b16 %v3727, %v3724
      %v4316 = vpack.c.b16 %v3728, %v3725
      %v4317 = vpack.c.b16 %v3729, %v3726
      %v4318 = vpack.c.b16 %v3733, %v3730
      %v4319 = vpack.c.b16 %v3734, %v3731
      %v4320 = vpack.c.b16 %v3735, %v3732
      %v4321 = vpack.c.b16 %v3739, %v3736
      %v4322 = vpack.c.b16 %v3740, %v3737
      %v4323 = vpack.c.b16 %v3741, %v3738
      %v4324 = vpack.c.b16 %v3745, %v3742
      %v4325 = vpack.c.b16 %v3746, %v3743
      %v4326 = vpack.c.b16 %v3747, %v3744
      %v4327 = vpack.c.b16 %v3751, %v3748
      %v4328 = vpack.c.b16 %v3752, %v3749
      %v4329 = vpack.c.b16 %v3753, %v3750
      %v4330 = vpack.c.b16 %v3757, %v3754
      %v4331 = vpack.c.b16 %v3758, %v3755
      %v4332 = vpack.c.b16 %v3759, %v3756
      %v4333 = vpack.c.b16 %v3763, %v3760
      %v4334 = vpack.c.b16 %v3764, %v3761
      %v4335 = vpack.c.b16 %v3765, %v3762
      %v4336 = vpack.c.b16 %v3769, %v3766
      %v4337 = vpack.c.b16 %v3770, %v3767
      %v4338 = vpack.c.b16 %v3771, %v3768
      %v4339 = vpack.c.b16 %v3775, %v3772
      %v4340 = vpack.c.b16 %v3776, %v3773
      %v4341 = vpack.c.b16 %v3777, %v3774
      %v4342 = vpack.c.b16 %v3781, %v3778
      %v4343 = vpack.c.b16 %v3782, %v3779
      %v4344 = vpack.c.b16 %v3783, %v3780
      %v4345 = vpack.c.b16 %v3787, %v3784
      %v4346 = vpack.c.b16 %v3788, %v3785
      %v4347 = vpack.c.b16 %v3789, %v3786
      %v4348 = vpack.c.b16 %v3793, %v3790
      %v4349 = vpack.c.b16 %v3794, %v3791
      %v4350 = vpack.c.b16 %v3795, %v3792
      %v4351 = vpack.c.b16 %v3799, %v3796
      %v4352 = vpack.c.b16 %v3800, %v3797
      %v4353 = vpack.c.b16 %v3801, %v3798
      %v4354 = vpack.c.b16 %v3805, %v3802
      %v4355 = vpack.c.b16 %v3806, %v3803
      %v4356 = vpack.c.b16 %v3807, %v3804
      %v4357 = vpack.c.b16 %v3811, %v3808
      %v4358 = vpack.c.b16 %v3812, %v3809
      %v4359 = vpack.c.b16 %v3813, %v3810
      %v4360 = vpack.c.b16 %v3817, %v3814
      %v4361 = vpack.c.b16 %v3818, %v3815
      %v4362 = vpack.c.b16 %v3819, %v3816
      %v4363 = vpack.c.b16 %v3823, %v3820
      %v4364 = vpack.c.b16 %v3824, %v3821
      %v4365 = vpack.c.b16 %v3825, %v3822
      %v4366 = vpack.c.b16 %v3829, %v3826
      %v4367 = vpack.c.b16 %v3830, %v3827
      %v4368 = vpack.c.b16 %v3831, %v3828
      %v4369 = vpack.c.b16 %v3835, %v3832
      %v4370 = vpack.c.b16 %v3836, %v3833
      %v4371 = vpack.c.b16 %v3837, %v3834
      %v4372 = vpack.c.b16 %v3841, %v3838
      %v4373 = vpack.c.b16 %v3842, %v3839
      %v4374 = vpack.c.b16 %v3843, %v3840
      %v4375 = vpack.c.b16 %v3847, %v3844
      %v4376 = vpack.c.b16 %v3848, %v3845
      %v4377 = vpack.c.b16 %v3849, %v3846
      %v4378 = vpack.c.b16 %v3853, %v3850
      %v4379 = vpack.c.b16 %v3854, %v3851
      %v4380 = vpack.c.b16 %v3855, %v3852
      %v4381 = vpack.c.b16 %v3859, %v3856
      %v4382 = vpack.c.b16 %v3860, %v3857
      %v4383 = vpack.c.b16 %v3861, %v3858
      %v4384 = vpack.c.b16 %v3865, %v3862
      %v4385 = vpack.c.b16 %v3866, %v3863
      %v4386 = vpack.c.b16 %v3867, %v3864
      %v4387 = vpack.c.b16 %v3871, %v3868
      %v4388 = vpack.c.b16 %v3872, %v3869
      %v4389 = vpack.c.b16 %v3873, %v3870
      %v4390 = vpack.c.b16 %v3877, %v3874
      %v4391 = vpack.c.b16 %v3878, %v3875
      %v4392 = vpack.c.b16 %v3879, %v3876
      %v4393 = vpack.c.b16 %v3883, %v3880
      %v4394 = vpack.c.b16 %v3884, %v3881
      %v4395 = vpack.c.b16 %v3885, %v3882
      %v4396 = vpack.c.b16 %v3889, %v3886
      %v4397 = vpack.c.b16 %v3890, %v3887
      %v4398 = vpack.c.b16 %v3891, %v3888
      %v4399 = vpack.c.b16 %v3895, %v3892
      %v4400 = vpack.c.b16 %v3896, %v3893
      %v4401 = vpack.c.b16 %v3897, %v3894
      %v4402 = vpack.c.b16 %v3901, %v3898
      %v4403 = vpack.c.b16 %v3902, %v3899
      %v4404 = vpack.c.b16 %v3903, %v3900
      %v4405 = vpack.c.b16 %v3907, %v3904
      %v4406 = vpack.c.b16 %v3908, %v3905
      %v4407 = vpack.c.b16 %v3909, %v3906
      %v4408 = vpack.c.b16 %v3913, %v3910
      %v4409 = vpack.c.b16 %v3914, %v3911
      %v4410 = vpack.c.b16 %v3915, %v3912
      %v4411 = vpack.c.b16 %v3919, %v3916
      %v4412 = vpack.c.b16 %v3920, %v3917
      %v4413 = vpack.c.b16 %v3921, %v3918
      %v4414 = vpack.c.b16 %v3925, %v3922
      %v4415 = vpack.c.b16 %v3926, %v3923
      %v4416 = vpack.c.b16 %v3927, %v3924
      %v4417 = vpack.c.b16 %v3931, %v3928
      %v4418 = vpack.c.b16 %v3932, %v3929
      %v4419 = vpack.c.b16 %v3933, %v3930
      %v4420 = vpack.c.b16 %v3937, %v3934
      %v4421 = vpack.c.b16 %v3938, %v3935
      %v4422 = vpack.c.b16 %v3939, %v3936
      %v4423 = vpack.c.b16 %v3943, %v3940
      %v4424 = vpack.c.b16 %v3944, %v3941
      %v4425 = vpack.c.b16 %v3945, %v3942
      %v4426 = vpack.c.b16 %v3949, %v3946
      %v4427 = vpack.c.b16 %v3950, %v3947
      %v4428 = vpack.c.b16 %v3951, %v3948
      %v4429 = vpack.c.b16 %v3955, %v3952
      %v4430 = vpack.c.b16 %v3956, %v3953
      %v4431 = vpack.c.b16 %v3957, %v3954
      %v4432 = vpack.c.b16 %v3961, %v3958
      %v4433 = vpack.c.b16 %v3962, %v3959
      %v4434 = vpack.c.b16 %v3963, %v3960
      %v4435 = vpack.c.b16 %v3967, %v3964
      %v4436 = vpack.c.b16 %v3968, %v3965
      %v4437 = vpack.c.b16 %v3969, %v3966
      %v4438 = vpack.c.b16 %v3973, %v3970
      %v4439 = vpack.c.b16 %v3974, %v3971
      %v4440 = vpack.c.b16 %v3975, %v3972
      %v4441 = vpack.c.b16 %v3979, %v3976
      %v4442 = vpack.c.b16 %v3980, %v3977
      %v4443 = vpack.c.b16 %v3981, %v3978
      %v4444 = vpack.c.b16 %v3985, %v3982
      %v4445 = vpack.c.b16 %v3986, %v3983
      %v4446 = vpack.c.b16 %v3987, %v3984
      %v4447 = vpack.c.b16 %v3991, %v3988
      %v4448 = vpack.c.b16 %v3992, %v3989
      %v4449 = vpack.c.b16 %v3993, %v3990
      %v4450 = vpack.c.b16 %v3997, %v3994
      %v4451 = vpack.c.b16 %v3998, %v3995
      %v4452 = vpack.c.b16 %v3999, %v3996
      %v4453 = vpack.c.b16 %v4003, %v4000
      %v4454 = vpack.c.b16 %v4004, %v4001
      %v4455 = vpack.c.b16 %v4005, %v4002
      %v4456 = vpack.c.b16 %v4009, %v4006
      %v4457 = vpack.c.b16 %v4010, %v4007
      %v4458 = vpack.c.b16 %v4011, %v4008
      %v4459 = vpack.c.b16 %v4015, %v4012
      %v4460 = vpack.c.b16 %v4016, %v4013
      %v4461 = vpack.c.b16 %v4017, %v4014
      %v4462 = vpack.c.b16 %v4021, %v4018
      %v4463 = vpack.c.b16 %v4022, %v4019
      %v4464 = vpack.c.b16 %v4023, %v4020
      %v4465 = vpack.c.b16 %v4027, %v4024
      %v4466 = vpack.c.b16 %v4028, %v4025
      %v4467 = vpack.c.b16 %v4029, %v4026
      %v4468 = vpack.c.b16 %v4033, %v4030
      %v4469 = vpack.c.b16 %v4034, %v4031
      %v4470 = vpack.c.b16 %v4035, %v4032
      %v4471 = vpack.c.b16 %v4039, %v4036
      %v4472 = vpack.c.b16 %v4040, %v4037
      %v4473 = vpack.c.b16 %v4041, %v4038
      %v4474 = vpack.c.b16 %v4045, %v4042
      %v4475 = vpack.c.b16 %v4046, %v4043
      %v4476 = vpack.c.b16 %v4047, %v4044
      %v4477 = vpack.c.b16 %v4051, %v4048
      %v4478 = vpack.c.b16 %v4052, %v4049
      %v4479 = vpack.c.b16 %v4053, %v4050
      %v4480 = vpack.c.b16 %v4057, %v4054
      %v4481 = vpack.c.b16 %v4058, %v4055
      %v4482 = vpack.c.b16 %v4059, %v4056
      %v4483 = vpack.c.b16 %v4063, %v4060
      %v4484 = vpack.c.b16 %v4064, %v4061
      %v4485 = vpack.c.b16 %v4065, %v4062
      %v4486 = vpack.c.b16 %v4069, %v4066
      %v4487 = vpack.c.b16 %v4070, %v4067
      %v4488 = vpack.c.b16 %v4071, %v4068
      %v4489 = vpack.c.b16 %v4075, %v4072
      %v4490 = vpack.c.b16 %v4076, %v4073
      %v4491 = vpack.c.b16 %v4077, %v4074
      %v4492 = vpack.c.b16 %v4081, %v4078
      %v4493 = vpack.c.b16 %v4082, %v4079
      %v4494 = vpack.c.b16 %v4083, %v4080
      %v4495 = vpack.c.b16 %v4087, %v4084
      %v4496 = vpack.c.b16 %v4088, %v4085
      %v4497 = vpack.c.b16 %v4089, %v4086
      %v4498 = vpack.c.b16 %v4093, %v4090
      %v4499 = vpack.c.b16 %v4094, %v4091
      %v4500 = vpack.c.b16 %v4095, %v4092
      %v4501 = vpack.c.b16 %v4099, %v4096
      %v4502 = vpack.c.b16 %v4100, %v4097
      %v4503 = vpack.c.b16 %v4101, %v4098
      %v4504 = vpack.c.b16 %v4105, %v4102
      %v4505 = vpack.c.b16 %v4106, %v4103
      %v4506 = vpack.c.b16 %v4107, %v4104
      %v4507 = vpack.c.b16 %v4111, %v4108
      %v4508 = vpack.c.b16 %v4112, %v4109
      %v4509 = vpack.c.b16 %v4113, %v4110
      %v4510 = vpack.c.b16 %v4117, %v4114
      %v4511 = vpack.c.b16 %v4118, %v4115
      %v4512 = vpack.c.b16 %v4119, %v4116
      %v4513 = vpack.c.b16 %v4123, %v4120
      %v4514 = vpack.c.b16 %v4124, %v4121
      %v4515 = vpack.c.b16 %v4125, %v4122
      %v4516 = vpack.c.b16 %v4129, %v4126
      %v4517 = vpack.c.b16 %v4130, %v4127
      %v4518 = vpack.c.b16 %v4131, %v4128
      %v4519 = vpack.c.b16 %v4135, %v4132
      %v4520 = vpack.c.b16 %v4136, %v4133
      %v4521 = vpack.c.b16 %v4137, %v4134
      %v4522 = vpack.c.b16 %v4141, %v4138
      %v4523 = vpack.c.b16 %v4142, %v4139
      %v4524 = vpack.c.b16 %v4143, %v4140
      %v4525 = vpack.c.b16 %v4147, %v4144
      %v4526 = vpack.c.b16 %v4148, %v4145
      %v4527 = vpack.c.b16 %v4149, %v4146
      %v4528 = vpack.c.b16 %v4153, %v4150
      %v4529 = vpack.c.b16 %v4154, %v4151
      %v4530 = vpack.c.b16 %v4155, %v4152
      %v4531 = vpack.c.b16 %v4159, %v4156
      %v4532 = vpack.c.b16 %v4160, %v4157
      %v4533 = vpack.c.b16 %v4161, %v4158
      %v4534 = vpack.c.b16 %v4165, %v4162
      %v4535 = vpack.c.b16 %v4166, %v4163
      %v4536 = vpack.c.b16 %v4167, %v4164
      %v4537 = vpack.c.b16 %v4171, %v4168
      %v4538 = vpack.c.b16 %v4172, %v4169
      %v4539 = vpack.c.b16 %v4173, %v4170
      %v4540 = vpack.c.b16 %v4177, %v4174
      %v4541 = vpack.c.b16 %v4178, %v4175
      %v4542 = vpack.c.b16 %v4179, %v4176
      %v4543 = vpack.c.b16 %v4183, %v4180
      %v4544 = vpack.c.b16 %v4184, %v4181
      %v4545 = vpack.c.b16 %v4185, %v4182
      %4906 = vmatprep.subr.bf16.mxu0 %v4187
      %4907 = vmatpush1.bf16.msra.mxu0 %v4186
      %4908 = vmatprep.subr.bf16.mxu0 %v4190
      %4909 = vmatpush1.bf16.msra.mxu0 %v4189
      %4910 = vmatprep.subr.bf16.mxu0 %v4193
      %4911 = vmatpush1.bf16.msra.mxu0 %v4192
      %4912 = vmatprep.subr.bf16.mxu0 %v4196
      %4913 = vmatpush1.bf16.msra.mxu0 %v4195
      %4914 = vmatprep.subr.bf16.mxu0 %v4199
      %4915 = vmatpush1.bf16.msra.mxu0 %v4198
      %4916 = vmatprep.subr.bf16.mxu0 %v4202
      %4917 = vmatpush1.bf16.msra.mxu0 %v4201
      %4918 = vmatprep.subr.bf16.mxu0 %v4205
      %4919 = vmatpush1.bf16.msra.mxu0 %v4204
      %4920 = vmatprep.subr.bf16.mxu0 %v4208
      %4921 = vmatpush1.bf16.msra.mxu0 %v4207
      %4922 = vmatprep.subr.bf16.mxu0 %v4211
      %4923 = vmatpush1.bf16.msra.mxu0 %v4210
      %4924 = vmatprep.subr.bf16.mxu0 %v4214
      %4925 = vmatpush1.bf16.msra.mxu0 %v4213
      %4926 = vmatprep.subr.bf16.mxu0 %v4217
      %4927 = vmatpush1.bf16.msra.mxu0 %v4216
      %4928 = vmatprep.subr.bf16.mxu0 %v4220
      %4929 = vmatpush1.bf16.msra.mxu0 %v4219
      %4930 = vmatprep.subr.bf16.mxu0 %v4223
      %4931 = vmatpush1.bf16.msra.mxu0 %v4222
      %4932 = vmatprep.subr.bf16.mxu0 %v4226
      %4933 = vmatpush1.bf16.msra.mxu0 %v4225
      %4934 = vmatprep.subr.bf16.mxu0 %v4229
      %4935 = vmatpush1.bf16.msra.mxu0 %v4228
      %4936 = vmatprep.subr.bf16.mxu0 %v4232
      %4937 = vmatpush1.bf16.msra.mxu0 %v4231
      %4938 = vmatprep.mubr.bf16.mxu0 %v2445
      %4939 = vmatmul.mubr.bf16.gmra.mrb[0].mxu0 %v2444
      %v4940 = vpop.f32.mrb[0].mxu0
      %v4941 = vadd.f32 %v2974, %v4940
      %v4942 = vpop.f32.mrb[0].mxu0
      %v4943 = vadd.f32 %v2978, %v4942
      %v4944 = vpop.f32.mrb[0].mxu0
      %v4945 = vadd.f32 %v2974, %v4944
      %v4946 = vpop.f32.mrb[0].mxu0
      %v4947 = vadd.f32 %v2978, %v4946
      %4948 = vmatprep.mubr.bf16.mxu0 %v2460
      %4949 = vmatmul.mubr.bf16.gmra.mrb[0].mxu0 %v2459
      %v4950 = vpop.f32.mrb[0].mxu0
      %v4951 = vadd.f32 %v2974, %v4950
      %v4952 = vpop.f32.mrb[0].mxu0
      %v4953 = vadd.f32 %v2978, %v4952
      %v4954 = vpop.f32.mrb[0].mxu0
      %v4955 = vadd.f32 %v2974, %v4954
      %v4956 = vpop.f32.mrb[0].mxu0
      %v4957 = vadd.f32 %v2978, %v4956
      %4958 = vmatprep.mubr.bf16.mxu0 %v2475
      %4959 = vmatmul.mubr.bf16.gmra.mrb[0].mxu0 %v2474
      %v4960 = vpop.f32.mrb[0].mxu0
      %v4961 = vadd.f32 %v2974, %v4960
      %v4962 = vpop.f32.mrb[0].mxu0
      %v4963 = vadd.f32 %v2978, %v4962
      %v4964 = vpop.f32.mrb[0].mxu0
      %v4965 = vadd.f32 %v2974, %v4964
      %v4966 = vpop.f32.mrb[0].mxu0
      %v4967 = vadd.f32 %v2978, %v4966
      %4968 = vdwg.mxu0
      %4969 = vmatprep.subr.bf16.mxu0 %v4235
      %4970 = vmatpush1.bf16.msra.mxu0 %v4234
      %4971 = vmatprep.subr.bf16.mxu0 %v4238
      %4972 = vmatpush1.bf16.msra.mxu0 %v4237
      %4973 = vmatprep.subr.bf16.mxu0 %v4241
      %4974 = vmatpush1.bf16.msra.mxu0 %v4240
      %4975 = vmatprep.subr.bf16.mxu0 %v4244
      %4976 = vmatpush1.bf16.msra.mxu0 %v4243
      %4977 = vmatprep.subr.bf16.mxu0 %v4247
      %4978 = vmatpush1.bf16.msra.mxu0 %v4246
      %4979 = vmatprep.subr.bf16.mxu0 %v4250
      %4980 = vmatpush1.bf16.msra.mxu0 %v4249
      %4981 = vmatprep.subr.bf16.mxu0 %v4253
      %4982 = vmatpush1.bf16.msra.mxu0 %v4252
      %4983 = vmatprep.subr.bf16.mxu0 %v4256
      %4984 = vmatpush1.bf16.msra.mxu0 %v4255
      %4985 = vmatprep.subr.bf16.mxu0 %v4259
      %4986 = vmatpush1.bf16.msra.mxu0 %v4258
      %4987 = vmatprep.subr.bf16.mxu0 %v4262
      %4988 = vmatpush1.bf16.msra.mxu0 %v4261
      %4989 = vmatprep.subr.bf16.mxu0 %v4265
      %4990 = vmatpush1.bf16.msra.mxu0 %v4264
      %4991 = vmatprep.subr.bf16.mxu0 %v4268
      %4992 = vmatpush1.bf16.msra.mxu0 %v4267
      %4993 = vmatprep.subr.bf16.mxu0 %v4271
      %4994 = vmatpush1.bf16.msra.mxu0 %v4270
      %4995 = vmatprep.subr.bf16.mxu0 %v4274
      %4996 = vmatpush1.bf16.msra.mxu0 %v4273
      %4997 = vmatprep.subr.bf16.mxu0 %v4277
      %4998 = vmatpush1.bf16.msra.mxu0 %v4276
      %4999 = vmatprep.subr.bf16.mxu0 %v4280
      %5000 = vmatpush1.bf16.msra.mxu0 %v4279
      %5001 = vmatprep.mubr.bf16.mxu0 %v2447
      %5002 = vmatmul.mubr.bf16.gmra.mrb[0].mxu0 %v2446
      %v5003 = vpop.f32.mrb[0].mxu0
      %v5004 = vadd.f32 %v4941, %v5003
      %v5005 = vpop.f32.mrb[0].mxu0
      %v5006 = vadd.f32 %v4943, %v5005
      %v5007 = vpop.f32.mrb[0].mxu0
      %v5008 = vadd.f32 %v4945, %v5007
      %v5009 = vpop.f32.mrb[0].mxu0
      %v5010 = vadd.f32 %v4947, %v5009
      %5011 = vmatprep.mubr.bf16.mxu0 %v2462
      %5012 = vmatmul.mubr.bf16.gmra.mrb[0].mxu0 %v2461
      %v5013 = vpop.f32.mrb[0].mxu0
      %v5014 = vadd.f32 %v4951, %v5013
      %v5015 = vpop.f32.mrb[0].mxu0
      %v5016 = vadd.f32 %v4953, %v5015
      %v5017 = vpop.f32.mrb[0].mxu0
      %v5018 = vadd.f32 %v4955, %v5017
      %v5019 = vpop.f32.mrb[0].mxu0
      %v5020 = vadd.f32 %v4957, %v5019
      %5021 = vmatprep.mubr.bf16.mxu0 %v2477
      %5022 = vmatmul.mubr.bf16.gmra.mrb[0].mxu0 %v2476
      %v5023 = vpop.f32.mrb[0].mxu0
      %v5024 = vadd.f32 %v4961, %v5023
      %v5025 = vpop.f32.mrb[0].mxu0
      %v5026 = vadd.f32 %v4963, %v5025
      %v5027 = vpop.f32.mrb[0].mxu0
      %v5028 = vadd.f32 %v4965, %v5027
      %v5029 = vpop.f32.mrb[0].mxu0
      %v5030 = vadd.f32 %v4967, %v5029
      %5031 = vdwg.mxu0
      %5032 = vmatprep.subr.bf16.mxu0 %v4283
      %5033 = vmatpush1.bf16.msra.mxu0 %v4282
      %5034 = vmatprep.subr.bf16.mxu0 %v4286
      %5035 = vmatpush1.bf16.msra.mxu0 %v4285
      %5036 = vmatprep.subr.bf16.mxu0 %v4289
      %5037 = vmatpush1.bf16.msra.mxu0 %v4288
      %5038 = vmatprep.subr.bf16.mxu0 %v4292
      %5039 = vmatpush1.bf16.msra.mxu0 %v4291
      %5040 = vmatprep.subr.bf16.mxu0 %v4295
      %5041 = vmatpush1.bf16.msra.mxu0 %v4294
      %5042 = vmatprep.subr.bf16.mxu0 %v4298
      %5043 = vmatpush1.bf16.msra.mxu0 %v4297
      %5044 = vmatprep.subr.bf16.mxu0 %v4301
      %5045 = vmatpush1.bf16.msra.mxu0 %v4300
      %5046 = vmatprep.subr.bf16.mxu0 %v4304
      %5047 = vmatpush1.bf16.msra.mxu0 %v4303
      %5048 = vmatprep.subr.bf16.mxu0 %v4307
      %5049 = vmatpush1.bf16.msra.mxu0 %v4306
      %5050 = vmatprep.subr.bf16.mxu0 %v4310
      %5051 = vmatpush1.bf16.msra.mxu0 %v4309
      %5052 = vmatprep.subr.bf16.mxu0 %v4313
      %5053 = vmatpush1.bf16.msra.mxu0 %v4312
      %5054 = vmatprep.subr.bf16.mxu0 %v4316
      %5055 = vmatpush1.bf16.msra.mxu0 %v4315
      %5056 = vmatprep.subr.bf16.mxu0 %v4319
      %5057 = vmatpush1.bf16.msra.mxu0 %v4318
      %5058 = vmatprep.subr.bf16.mxu0 %v4322
      %5059 = vmatpush1.bf16.msra.mxu0 %v4321
      %5060 = vmatprep.subr.bf16.mxu0 %v4325
      %5061 = vmatpush1.bf16.msra.mxu0 %v4324
      %5062 = vmatprep.subr.bf16.mxu0 %v4328
      %5063 = vmatpush1.bf16.msra.mxu0 %v4327
      %5064 = vmatprep.mubr.bf16.mxu0 %v2449
      %5065 = vmatmul.mubr.bf16.gmra.mrb[0].mxu0 %v2448
      %v5066 = vpop.f32.mrb[0].mxu0
      %v5067 = vadd.f32 %v5004, %v5066
      %v5068 = vpop.f32.mrb[0].mxu0
      %v5069 = vadd.f32 %v5006, %v5068
      %v5070 = vpop.f32.mrb[0].mxu0
      %v5071 = vadd.f32 %v5008, %v5070
      %v5072 = vpop.f32.mrb[0].mxu0
      %v5073 = vadd.f32 %v5010, %v5072
      %5074 = vmatprep.mubr.bf16.mxu0 %v2464
      %5075 = vmatmul.mubr.bf16.gmra.mrb[0].mxu0 %v2463
      %v5076 = vpop.f32.mrb[0].mxu0
      %v5077 = vadd.f32 %v5014, %v5076
      %v5078 = vpop.f32.mrb[0].mxu0
      %v5079 = vadd.f32 %v5016, %v5078
      %v5080 = vpop.f32.mrb[0].mxu0
      %v5081 = vadd.f32 %v5018, %v5080
      %v5082 = vpop.f32.mrb[0].mxu0
      %v5083 = vadd.f32 %v5020, %v5082
      %5084 = vmatprep.mubr.bf16.mxu0 %v2479
      %5085 = vmatmul.mubr.bf16.gmra.mrb[0].mxu0 %v2478
      %v5086 = vpop.f32.mrb[0].mxu0
      %v5087 = vadd.f32 %v5024, %v5086
      %v5088 = vpop.f32.mrb[0].mxu0
      %v5089 = vadd.f32 %v5026, %v5088
      %v5090 = vpop.f32.mrb[0].mxu0
      %v5091 = vadd.f32 %v5028, %v5090
      %v5092 = vpop.f32.mrb[0].mxu0
      %v5093 = vadd.f32 %v5030, %v5092
      %5094 = vdwg.mxu0
      %5095 = vmatprep.subr.bf16.mxu0 %v4331
      %5096 = vmatpush1.bf16.msra.mxu0 %v4330
      %5097 = vmatprep.subr.bf16.mxu0 %v4334
      %5098 = vmatpush1.bf16.msra.mxu0 %v4333
      %5099 = vmatprep.subr.bf16.mxu0 %v4337
      %5100 = vmatpush1.bf16.msra.mxu0 %v4336
      %5101 = vmatprep.subr.bf16.mxu0 %v4340
      %5102 = vmatpush1.bf16.msra.mxu0 %v4339
      %5103 = vmatprep.subr.bf16.mxu0 %v4343
      %5104 = vmatpush1.bf16.msra.mxu0 %v4342
      %5105 = vmatprep.subr.bf16.mxu0 %v4346
      %5106 = vmatpush1.bf16.msra.mxu0 %v4345
      %5107 = vmatprep.subr.bf16.mxu0 %v4349
      %5108 = vmatpush1.bf16.msra.mxu0 %v4348
      %5109 = vmatprep.subr.bf16.mxu0 %v4352
      %5110 = vmatpush1.bf16.msra.mxu0 %v4351
      %5111 = vmatprep.subr.bf16.mxu0 %v4355
      %5112 = vmatpush1.bf16.msra.mxu0 %v4354
      %5113 = vmatprep.subr.bf16.mxu0 %v4358
      %5114 = vmatpush1.bf16.msra.mxu0 %v4357
      %5115 = vmatprep.subr.bf16.mxu0 %v4361
      %5116 = vmatpush1.bf16.msra.mxu0 %v4360
      %5117 = vmatprep.subr.bf16.mxu0 %v4364
      %5118 = vmatpush1.bf16.msra.mxu0 %v4363
      %5119 = vmatprep.subr.bf16.mxu0 %v4367
      %5120 = vmatpush1.bf16.msra.mxu0 %v4366
      %5121 = vmatprep.subr.bf16.mxu0 %v4370
      %5122 = vmatpush1.bf16.msra.mxu0 %v4369
      %5123 = vmatprep.subr.bf16.mxu0 %v4373
      %5124 = vmatpush1.bf16.msra.mxu0 %v4372
      %5125 = vmatprep.subr.bf16.mxu0 %v4376
      %5126 = vmatpush1.bf16.msra.mxu0 %v4375
      %5127 = vmatprep.mubr.bf16.mxu0 %v2451
      %5128 = vmatmul.mubr.bf16.gmra.mrb[0].mxu0 %v2450
      %v5129 = vpop.f32.mrb[0].mxu0
      %v5130 = vadd.f32 %v5067, %v5129
      %v5131 = vpop.f32.mrb[0].mxu0
      %v5132 = vadd.f32 %v5069, %v5131
      %v5133 = vpop.f32.mrb[0].mxu0
      %v5134 = vadd.f32 %v5071, %v5133
      %v5135 = vpop.f32.mrb[0].mxu0
      %v5136 = vadd.f32 %v5073, %v5135
      %5137 = vmatprep.mubr.bf16.mxu0 %v2466
      %5138 = vmatmul.mubr.bf16.gmra.mrb[0].mxu0 %v2465
      %v5139 = vpop.f32.mrb[0].mxu0
      %v5140 = vadd.f32 %v5077, %v5139
      %v5141 = vpop.f32.mrb[0].mxu0
      %v5142 = vadd.f32 %v5079, %v5141
      %v5143 = vpop.f32.mrb[0].mxu0
      %v5144 = vadd.f32 %v5081, %v5143
      %v5145 = vpop.f32.mrb[0].mxu0
      %v5146 = vadd.f32 %v5083, %v5145
      %5147 = vmatprep.mubr.bf16.mxu0 %v2481
      %5148 = vmatmul.mubr.bf16.gmra.mrb[0].mxu0 %v2480
      %v5149 = vpop.f32.mrb[0].mxu0
      %v5150 = vadd.f32 %v5087, %v5149
      %v5151 = vpop.f32.mrb[0].mxu0
      %v5152 = vadd.f32 %v5089, %v5151
      %v5153 = vpop.f32.mrb[0].mxu0
      %v5154 = vadd.f32 %v5091, %v5153
      %v5155 = vpop.f32.mrb[0].mxu0
      %v5156 = vadd.f32 %v5093, %v5155
      %5157 = vdwg.mxu0
      %5158 = vmatprep.subr.bf16.mxu0 %v4379
      %5159 = vmatpush1.bf16.msra.mxu0 %v4378
      %5160 = vmatprep.subr.bf16.mxu0 %v4382
      %5161 = vmatpush1.bf16.msra.mxu0 %v4381
      %5162 = vmatprep.subr.bf16.mxu0 %v4385
      %5163 = vmatpush1.bf16.msra.mxu0 %v4384
      %5164 = vmatprep.subr.bf16.mxu0 %v4388
      %5165 = vmatpush1.bf16.msra.mxu0 %v4387
      %5166 = vmatprep.subr.bf16.mxu0 %v4391
      %5167 = vmatpush1.bf16.msra.mxu0 %v4390
      %5168 = vmatprep.subr.bf16.mxu0 %v4394
      %5169 = vmatpush1.bf16.msra.mxu0 %v4393
      %5170 = vmatprep.subr.bf16.mxu0 %v4397
      %5171 = vmatpush1.bf16.msra.mxu0 %v4396
      %5172 = vmatprep.subr.bf16.mxu0 %v4400
      %5173 = vmatpush1.bf16.msra.mxu0 %v4399
      %5174 = vmatprep.subr.bf16.mxu0 %v4403
      %5175 = vmatpush1.bf16.msra.mxu0 %v4402
      %5176 = vmatprep.subr.bf16.mxu0 %v4406
      %5177 = vmatpush1.bf16.msra.mxu0 %v4405
      %5178 = vmatprep.subr.bf16.mxu0 %v4409
      %5179 = vmatpush1.bf16.msra.mxu0 %v4408
      %5180 = vmatprep.subr.bf16.mxu0 %v4412
      %5181 = vmatpush1.bf16.msra.mxu0 %v4411
      %5182 = vmatprep.subr.bf16.mxu0 %v4415
      %5183 = vmatpush1.bf16.msra.mxu0 %v4414
      %5184 = vmatprep.subr.bf16.mxu0 %v4418
      %5185 = vmatpush1.bf16.msra.mxu0 %v4417
      %5186 = vmatprep.subr.bf16.mxu0 %v4421
      %5187 = vmatpush1.bf16.msra.mxu0 %v4420
      %5188 = vmatprep.subr.bf16.mxu0 %v4424
      %5189 = vmatpush1.bf16.msra.mxu0 %v4423
      %5190 = vmatprep.mubr.bf16.mxu0 %v2453
      %5191 = vmatmul.mubr.bf16.gmra.mrb[0].mxu0 %v2452
      %v5192 = vpop.f32.mrb[0].mxu0
      %v5193 = vadd.f32 %v5130, %v5192
      %v5194 = vpop.f32.mrb[0].mxu0
      %v5195 = vadd.f32 %v5132, %v5194
      %v5196 = vpop.f32.mrb[0].mxu0
      %v5197 = vadd.f32 %v5134, %v5196
      %v5198 = vpop.f32.mrb[0].mxu0
      %v5199 = vadd.f32 %v5136, %v5198
      %5200 = vmatprep.mubr.bf16.mxu0 %v2468
      %5201 = vmatmul.mubr.bf16.gmra.mrb[0].mxu0 %v2467
      %v5202 = vpop.f32.mrb[0].mxu0
      %v5203 = vadd.f32 %v5140, %v5202
      %v5204 = vpop.f32.mrb[0].mxu0
      %v5205 = vadd.f32 %v5142, %v5204
      %v5206 = vpop.f32.mrb[0].mxu0
      %v5207 = vadd.f32 %v5144, %v5206
      %v5208 = vpop.f32.mrb[0].mxu0
      %v5209 = vadd.f32 %v5146, %v5208
      %5210 = vmatprep.mubr.bf16.mxu0 %v2483
      %5211 = vmatmul.mubr.bf16.gmra.mrb[0].mxu0 %v2482
      %v5212 = vpop.f32.mrb[0].mxu0
      %v5213 = vadd.f32 %v5150, %v5212
      %v5214 = vpop.f32.mrb[0].mxu0
      %v5215 = vadd.f32 %v5152, %v5214
      %v5216 = vpop.f32.mrb[0].mxu0
      %v5217 = vadd.f32 %v5154, %v5216
      %v5218 = vpop.f32.mrb[0].mxu0
      %v5219 = vadd.f32 %v5156, %v5218
      %5220 = vdwg.mxu0
      %5221 = vmatprep.subr.bf16.mxu0 %v4427
      %5222 = vmatpush1.bf16.msra.mxu0 %v4426
      %5223 = vmatprep.subr.bf16.mxu0 %v4430
      %5224 = vmatpush1.bf16.msra.mxu0 %v4429
      %5225 = vmatprep.subr.bf16.mxu0 %v4433
      %5226 = vmatpush1.bf16.msra.mxu0 %v4432
      %5227 = vmatprep.subr.bf16.mxu0 %v4436
      %5228 = vmatpush1.bf16.msra.mxu0 %v4435
      %5229 = vmatprep.subr.bf16.mxu0 %v4439
      %5230 = vmatpush1.bf16.msra.mxu0 %v4438
      %5231 = vmatprep.subr.bf16.mxu0 %v4442
      %5232 = vmatpush1.bf16.msra.mxu0 %v4441
      %5233 = vmatprep.subr.bf16.mxu0 %v4445
      %5234 = vmatpush1.bf16.msra.mxu0 %v4444
      %5235 = vmatprep.subr.bf16.mxu0 %v4448
      %5236 = vmatpush1.bf16.msra.mxu0 %v4447
      %5237 = vmatprep.subr.bf16.mxu0 %v4451
      %5238 = vmatpush1.bf16.msra.mxu0 %v4450
      %5239 = vmatprep.subr.bf16.mxu0 %v4454
      %5240 = vmatpush1.bf16.msra.mxu0 %v4453
      %5241 = vmatprep.subr.bf16.mxu0 %v4457
      %5242 = vmatpush1.bf16.msra.mxu0 %v4456
      %5243 = vmatprep.subr.bf16.mxu0 %v4460
      %5244 = vmatpush1.bf16.msra.mxu0 %v4459
      %5245 = vmatprep.subr.bf16.mxu0 %v4463
      %5246 = vmatpush1.bf16.msra.mxu0 %v4462
      %5247 = vmatprep.subr.bf16.mxu0 %v4466
      %5248 = vmatpush1.bf16.msra.mxu0 %v4465
      %5249 = vmatprep.subr.bf16.mxu0 %v4469
      %5250 = vmatpush1.bf16.msra.mxu0 %v4468
      %5251 = vmatprep.subr.bf16.mxu0 %v4472
      %5252 = vmatpush1.bf16.msra.mxu0 %v4471
      %5253 = vmatprep.mubr.bf16.mxu0 %v2455
      %5254 = vmatmul.mubr.bf16.gmra.mrb[0].mxu0 %v2454
      %v5255 = vpop.f32.mrb[0].mxu0
      %v5256 = vadd.f32 %v5193, %v5255
      %v5257 = vpop.f32.mrb[0].mxu0
      %v5258 = vadd.f32 %v5195, %v5257
      %v5259 = vpop.f32.mrb[0].mxu0
      %v5260 = vadd.f32 %v5197, %v5259
      %v5261 = vpop.f32.mrb[0].mxu0
      %v5262 = vadd.f32 %v5199, %v5261
      %5263 = vmatprep.mubr.bf16.mxu0 %v2470
      %5264 = vmatmul.mubr.bf16.gmra.mrb[0].mxu0 %v2469
      %v5265 = vpop.f32.mrb[0].mxu0
      %v5266 = vadd.f32 %v5203, %v5265
      %v5267 = vpop.f32.mrb[0].mxu0
      %v5268 = vadd.f32 %v5205, %v5267
      %v5269 = vpop.f32.mrb[0].mxu0
      %v5270 = vadd.f32 %v5207, %v5269
      %v5271 = vpop.f32.mrb[0].mxu0
      %v5272 = vadd.f32 %v5209, %v5271
      %5273 = vmatprep.mubr.bf16.mxu0 %v2485
      %5274 = vmatmul.mubr.bf16.gmra.mrb[0].mxu0 %v2484
      %v5275 = vpop.f32.mrb[0].mxu0
      %v5276 = vadd.f32 %v5213, %v5275
      %v5277 = vpop.f32.mrb[0].mxu0
      %v5278 = vadd.f32 %v5215, %v5277
      %v5279 = vpop.f32.mrb[0].mxu0
      %v5280 = vadd.f32 %v5217, %v5279
      %v5281 = vpop.f32.mrb[0].mxu0
      %v5282 = vadd.f32 %v5219, %v5281
      %5283 = vdwg.mxu0
      %5284 = vmatprep.subr.bf16.mxu0 %v4475
      %5285 = vmatpush1.bf16.msra.mxu0 %v4474
      %5286 = vmatprep.subr.bf16.mxu0 %v4478
      %5287 = vmatpush1.bf16.msra.mxu0 %v4477
      %5288 = vmatprep.subr.bf16.mxu0 %v4481
      %5289 = vmatpush1.bf16.msra.mxu0 %v4480
      %5290 = vmatprep.subr.bf16.mxu0 %v4484
      %5291 = vmatpush1.bf16.msra.mxu0 %v4483
      %5292 = vmatprep.subr.bf16.mxu0 %v4487
      %5293 = vmatpush1.bf16.msra.mxu0 %v4486
      %5294 = vmatprep.subr.bf16.mxu0 %v4490
      %5295 = vmatpush1.bf16.msra.mxu0 %v4489
      %5296 = vmatprep.subr.bf16.mxu0 %v4493
      %5297 = vmatpush1.bf16.msra.mxu0 %v4492
      %5298 = vmatprep.subr.bf16.mxu0 %v4496
      %5299 = vmatpush1.bf16.msra.mxu0 %v4495
      %5300 = vmatprep.subr.bf16.mxu0 %v4499
      %5301 = vmatpush1.bf16.msra.mxu0 %v4498
      %5302 = vmatprep.subr.bf16.mxu0 %v4502
      %5303 = vmatpush1.bf16.msra.mxu0 %v4501
      %5304 = vmatprep.subr.bf16.mxu0 %v4505
      %5305 = vmatpush1.bf16.msra.mxu0 %v4504
      %5306 = vmatprep.subr.bf16.mxu0 %v4508
      %5307 = vmatpush1.bf16.msra.mxu0 %v4507
      %5308 = vmatprep.subr.bf16.mxu0 %v4511
      %5309 = vmatpush1.bf16.msra.mxu0 %v4510
      %5310 = vmatprep.subr.bf16.mxu0 %v4514
      %5311 = vmatpush1.bf16.msra.mxu0 %v4513
      %5312 = vmatprep.subr.bf16.mxu0 %v4517
      %5313 = vmatpush1.bf16.msra.mxu0 %v4516
      %5314 = vmatprep.subr.bf16.mxu0 %v4520
      %5315 = vmatpush1.bf16.msra.mxu0 %v4519
      %5316 = vmatprep.mubr.bf16.mxu0 %v2457
      %5317 = vmatmul.mubr.bf16.gmra.mrb[0].mxu0 %v2456
      %v5318 = vpop.f32.mrb[0].mxu0
      %v5319 = vadd.f32 %v5256, %v5318
      %v5320 = vpop.f32.mrb[0].mxu0
      %v5321 = vadd.f32 %v5258, %v5320
      %v5322 = vpop.f32.mrb[0].mxu0
      %v5323 = vadd.f32 %v5260, %v5322
      %v5324 = vpop.f32.mrb[0].mxu0
      %v5325 = vadd.f32 %v5262, %v5324
      %5326 = vmatprep.mubr.bf16.mxu0 %v2472
      %5327 = vmatmul.mubr.bf16.gmra.mrb[0].mxu0 %v2471
      %v5328 = vpop.f32.mrb[0].mxu0
      %v5329 = vadd.f32 %v5266, %v5328
      %v5330 = vpop.f32.mrb[0].mxu0
      %v5331 = vadd.f32 %v5268, %v5330
      %v5332 = vpop.f32.mrb[0].mxu0
      %v5333 = vadd.f32 %v5270, %v5332
      %v5334 = vpop.f32.mrb[0].mxu0
      %v5335 = vadd.f32 %v5272, %v5334
      %5336 = vmatprep.mubr.bf16.mxu0 %v2487
      %5337 = vmatmul.mubr.bf16.gmra.mrb[0].mxu0 %v2486
      %v5338 = vpop.f32.mrb[0].mxu0
      %v5339 = vadd.f32 %v5276, %v5338
      %v5340 = vpop.f32.mrb[0].mxu0
      %v5341 = vadd.f32 %v5278, %v5340
      %v5342 = vpop.f32.mrb[0].mxu0
      %v5343 = vadd.f32 %v5280, %v5342
      %v5344 = vpop.f32.mrb[0].mxu0
      %v5345 = vadd.f32 %v5282, %v5344
      %5346 = vdwg.mxu0
      %5347 = vmatprep.subr.bf16.mxu0 %v4523
      %5348 = vmatpush1.bf16.msra.mxu0 %v4522
      %5349 = vmatprep.subr.bf16.mxu0 %v4526
      %5350 = vmatpush1.bf16.msra.mxu0 %v4525
      %5351 = vmatprep.subr.bf16.mxu0 %v4529
      %5352 = vmatpush1.bf16.msra.mxu0 %v4528
      %5353 = vmatprep.subr.bf16.mxu0 %v4532
      %5354 = vmatpush1.bf16.msra.mxu0 %v4531
      %5355 = vmatprep.subr.bf16.mxu0 %v4535
      %5356 = vmatpush1.bf16.msra.mxu0 %v4534
      %5357 = vmatprep.subr.bf16.mxu0 %v4538
      %5358 = vmatpush1.bf16.msra.mxu0 %v4537
      %5359 = vmatprep.subr.bf16.mxu0 %v4541
      %5360 = vmatpush1.bf16.msra.mxu0 %v4540
      %5361 = vmatprep.subr.bf16.mxu0 %v4544
      %5362 = vmatpush1.bf16.msra.mxu0 %v4543
      %5363 = vmatprep.subr.bf16.mxu0 0
      %5364 = vmatpush1.bf16.msra.mxu0 0
      %5365 = vmatprep.subr.bf16.mxu0 0
      %5366 = vmatpush1.bf16.msra.mxu0 0
      %5367 = vmatprep.subr.bf16.mxu0 0
      %5368 = vmatpush1.bf16.msra.mxu0 0
      %5369 = vmatprep.subr.bf16.mxu0 0
      %5370 = vmatpush1.bf16.msra.mxu0 0
      %5371 = vmatprep.subr.bf16.mxu0 0
      %5372 = vmatpush1.bf16.msra.mxu0 0
      %5373 = vmatprep.subr.bf16.mxu0 0
      %5374 = vmatpush1.bf16.msra.mxu0 0
      %5375 = vmatprep.subr.bf16.mxu0 0
      %5376 = vmatpush1.bf16.msra.mxu0 0
      %5377 = vmatprep.subr.bf16.mxu0 0
      %5378 = vmatpush1.bf16.msra.mxu0 0
      %5379 = vmatprep.mubr.bf16.mxu0 0
      %5380 = vmatmul.mubr.bf16.gmra.mrb[0].mxu0 %v2458
      %v5381 = vpop.f32.mrb[0].mxu0
      %v5382 = vadd.f32 %v5319, %v5381
      %v5383 = vpop.f32.mrb[0].mxu0
      %v5384 = vadd.f32 %v5321, %v5383
      %v5385 = vpop.f32.mrb[0].mxu0
      %v5386 = vadd.f32 %v5323, %v5385
      %v5387 = vpop.f32.mrb[0].mxu0
      %v5388 = vadd.f32 %v5325, %v5387
      %5389 = vmatprep.mubr.bf16.mxu0 0
      %5390 = vmatmul.mubr.bf16.gmra.mrb[0].mxu0 %v2473
      %v5391 = vpop.f32.mrb[0].mxu0
      %v5392 = vadd.f32 %v5329, %v5391
      %v5393 = vpop.f32.mrb[0].mxu0
      %v5394 = vadd.f32 %v5331, %v5393
      %v5395 = vpop.f32.mrb[0].mxu0
      %v5396 = vadd.f32 %v5333, %v5395
      %v5397 = vpop.f32.mrb[0].mxu0
      %v5398 = vadd.f32 %v5335, %v5397
      %5399 = vmatprep.mubr.bf16.mxu0 0
      %5400 = vmatmul.mubr.bf16.gmra.mrb[0].mxu0 %v2488
      %v5401 = vpop.f32.mrb[0].mxu0
      %v5402 = vadd.f32 %v5339, %v5401
      %v5403 = vpop.f32.mrb[0].mxu0
      %v5404 = vadd.f32 %v5341, %v5403
      %v5405 = vpop.f32.mrb[0].mxu0
      %v5406 = vadd.f32 %v5343, %v5405
      %v5407 = vpop.f32.mrb[0].mxu0
      %v5408 = vadd.f32 %v5345, %v5407
      %5409 = vdwg.mxu0
      %5410 = vmatprep.subr.bf16.mxu0 0
      %5411 = vmatpush1.bf16.msra.mxu0 %v4188
      %5412 = vmatprep.subr.bf16.mxu0 0
      %5413 = vmatpush1.bf16.msra.mxu0 %v4191
      %5414 = vmatprep.subr.bf16.mxu0 0
      %5415 = vmatpush1.bf16.msra.mxu0 %v4194
      %5416 = vmatprep.subr.bf16.mxu0 0
      %5417 = vmatpush1.bf16.msra.mxu0 %v4197
      %5418 = vmatprep.subr.bf16.mxu0 0
      %5419 = vmatpush1.bf16.msra.mxu0 %v4200
      %5420 = vmatprep.subr.bf16.mxu0 0
      %5421 = vmatpush1.bf16.msra.mxu0 %v4203
      %5422 = vmatprep.subr.bf16.mxu0 0
      %5423 = vmatpush1.bf16.msra.mxu0 %v4206
      %5424 = vmatprep.subr.bf16.mxu0 0
      %5425 = vmatpush1.bf16.msra.mxu0 %v4209
      %5426 = vmatprep.subr.bf16.mxu0 0
      %5427 = vmatpush1.bf16.msra.mxu0 %v4212
      %5428 = vmatprep.subr.bf16.mxu0 0
      %5429 = vmatpush1.bf16.msra.mxu0 %v4215
      %5430 = vmatprep.subr.bf16.mxu0 0
      %5431 = vmatpush1.bf16.msra.mxu0 %v4218
      %5432 = vmatprep.subr.bf16.mxu0 0
      %5433 = vmatpush1.bf16.msra.mxu0 %v4221
      %5434 = vmatprep.subr.bf16.mxu0 0
      %5435 = vmatpush1.bf16.msra.mxu0 %v4224
      %5436 = vmatprep.subr.bf16.mxu0 0
      %5437 = vmatpush1.bf16.msra.mxu0 %v4227
      %5438 = vmatprep.subr.bf16.mxu0 0
      %5439 = vmatpush1.bf16.msra.mxu0 %v4230
      %5440 = vmatprep.subr.bf16.mxu0 0
      %5441 = vmatpush1.bf16.msra.mxu0 %v4233
      %5442 = vmatprep.mubr.bf16.mxu0 %v2445
      %5443 = vmatmul.mubr.bf16.gmra.mrb[0].mxu0 %v2444
      %v5444 = vpop.f32.mrb[0].mxu0
      %v5445 = vadd.f32 %v2982, %v5444
      %v5446 = vpop.f32.mrb[0].mxu0
      %v5447 = vpop.f32.mrb[0].mxu0
      %v5448 = vadd.f32 %v2982, %v5447
      %v5449 = vpop.f32.mrb[0].mxu0
      %5450 = vmatprep.mubr.bf16.mxu0 %v2460
      %5451 = vmatmul.mubr.bf16.gmra.mrb[0].mxu0 %v2459
      %v5452 = vpop.f32.mrb[0].mxu0
      %v5453 = vadd.f32 %v2982, %v5452
      %v5454 = vpop.f32.mrb[0].mxu0
      %v5455 = vpop.f32.mrb[0].mxu0
      %v5456 = vadd.f32 %v2982, %v5455
      %v5457 = vpop.f32.mrb[0].mxu0
      %5458 = vmatprep.mubr.bf16.mxu0 %v2475
      %5459 = vmatmul.mubr.bf16.gmra.mrb[0].mxu0 %v2474
      %v5460 = vpop.f32.mrb[0].mxu0
      %v5461 = vadd.f32 %v2982, %v5460
      %v5462 = vpop.f32.mrb[0].mxu0
      %v5463 = vpop.f32.mrb[0].mxu0
      %v5464 = vadd.f32 %v2982, %v5463
      %v5465 = vpop.f32.mrb[0].mxu0
      %5466 = vdwg.mxu0
      %5467 = vmatprep.subr.bf16.mxu0 0
      %5468 = vmatpush1.bf16.msra.mxu0 %v4236
      %5469 = vmatprep.subr.bf16.mxu0 0
      %5470 = vmatpush1.bf16.msra.mxu0 %v4239
      %5471 = vmatprep.subr.bf16.mxu0 0
      %5472 = vmatpush1.bf16.msra.mxu0 %v4242
      %5473 = vmatprep.subr.bf16.mxu0 0
      %5474 = vmatpush1.bf16.msra.mxu0 %v4245
      %5475 = vmatprep.subr.bf16.mxu0 0
      %5476 = vmatpush1.bf16.msra.mxu0 %v4248
      %5477 = vmatprep.subr.bf16.mxu0 0
      %5478 = vmatpush1.bf16.msra.mxu0 %v4251
      %5479 = vmatprep.subr.bf16.mxu0 0
      %5480 = vmatpush1.bf16.msra.mxu0 %v4254
      %5481 = vmatprep.subr.bf16.mxu0 0
      %5482 = vmatpush1.bf16.msra.mxu0 %v4257
      %5483 = vmatprep.subr.bf16.mxu0 0
      %5484 = vmatpush1.bf16.msra.mxu0 %v4260
      %5485 = vmatprep.subr.bf16.mxu0 0
      %5486 = vmatpush1.bf16.msra.mxu0 %v4263
      %5487 = vmatprep.subr.bf16.mxu0 0
      %5488 = vmatpush1.bf16.msra.mxu0 %v4266
      %5489 = vmatprep.subr.bf16.mxu0 0
      %5490 = vmatpush1.bf16.msra.mxu0 %v4269
      %5491 = vmatprep.subr.bf16.mxu0 0
      %5492 = vmatpush1.bf16.msra.mxu0 %v4272
      %5493 = vmatprep.subr.bf16.mxu0 0
      %5494 = vmatpush1.bf16.msra.mxu0 %v4275
      %5495 = vmatprep.subr.bf16.mxu0 0
      %5496 = vmatpush1.bf16.msra.mxu0 %v4278
      %5497 = vmatprep.subr.bf16.mxu0 0
      %5498 = vmatpush1.bf16.msra.mxu0 %v4281
      %5499 = vmatprep.mubr.bf16.mxu0 %v2447
      %5500 = vmatmul.mubr.bf16.gmra.mrb[0].mxu0 %v2446
      %v5501 = vpop.f32.mrb[0].mxu0
      %v5502 = vadd.f32 %v5445, %v5501
      %v5503 = vpop.f32.mrb[0].mxu0
      %v5504 = vpop.f32.mrb[0].mxu0
      %v5505 = vadd.f32 %v5448, %v5504
      %v5506 = vpop.f32.mrb[0].mxu0
      %5507 = vmatprep.mubr.bf16.mxu0 %v2462
      %5508 = vmatmul.mubr.bf16.gmra.mrb[0].mxu0 %v2461
      %v5509 = vpop.f32.mrb[0].mxu0
      %v5510 = vadd.f32 %v5453, %v5509
      %v5511 = vpop.f32.mrb[0].mxu0
      %v5512 = vpop.f32.mrb[0].mxu0
      %v5513 = vadd.f32 %v5456, %v5512
      %v5514 = vpop.f32.mrb[0].mxu0
      %5515 = vmatprep.mubr.bf16.mxu0 %v2477
      %5516 = vmatmul.mubr.bf16.gmra.mrb[0].mxu0 %v2476
      %v5517 = vpop.f32.mrb[0].mxu0
      %v5518 = vadd.f32 %v5461, %v5517
      %v5519 = vpop.f32.mrb[0].mxu0
      %v5520 = vpop.f32.mrb[0].mxu0
      %v5521 = vadd.f32 %v5464, %v5520
      %v5522 = vpop.f32.mrb[0].mxu0
      %5523 = vdwg.mxu0
      %5524 = vmatprep.subr.bf16.mxu0 0
      %5525 = vmatpush1.bf16.msra.mxu0 %v4284
      %5526 = vmatprep.subr.bf16.mxu0 0
      %5527 = vmatpush1.bf16.msra.mxu0 %v4287
      %5528 = vmatprep.subr.bf16.mxu0 0
      %5529 = vmatpush1.bf16.msra.mxu0 %v4290
      %5530 = vmatprep.subr.bf16.mxu0 0
      %5531 = vmatpush1.bf16.msra.mxu0 %v4293
      %5532 = vmatprep.subr.bf16.mxu0 0
      %5533 = vmatpush1.bf16.msra.mxu0 %v4296
      %5534 = vmatprep.subr.bf16.mxu0 0
      %5535 = vmatpush1.bf16.msra.mxu0 %v4299
      %5536 = vmatprep.subr.bf16.mxu0 0
      %5537 = vmatpush1.bf16.msra.mxu0 %v4302
      %5538 = vmatprep.subr.bf16.mxu0 0
      %5539 = vmatpush1.bf16.msra.mxu0 %v4305
      %5540 = vmatprep.subr.bf16.mxu0 0
      %5541 = vmatpush1.bf16.msra.mxu0 %v4308
      %5542 = vmatprep.subr.bf16.mxu0 0
      %5543 = vmatpush1.bf16.msra.mxu0 %v4311
      %5544 = vmatprep.subr.bf16.mxu0 0
      %5545 = vmatpush1.bf16.msra.mxu0 %v4314
      %5546 = vmatprep.subr.bf16.mxu0 0
      %5547 = vmatpush1.bf16.msra.mxu0 %v4317
      %5548 = vmatprep.subr.bf16.mxu0 0
      %5549 = vmatpush1.bf16.msra.mxu0 %v4320
      %5550 = vmatprep.subr.bf16.mxu0 0
      %5551 = vmatpush1.bf16.msra.mxu0 %v4323
      %5552 = vmatprep.subr.bf16.mxu0 0
      %5553 = vmatpush1.bf16.msra.mxu0 %v4326
      %5554 = vmatprep.subr.bf16.mxu0 0
      %5555 = vmatpush1.bf16.msra.mxu0 %v4329
      %5556 = vmatprep.mubr.bf16.mxu0 %v2449
      %5557 = vmatmul.mubr.bf16.gmra.mrb[0].mxu0 %v2448
      %v5558 = vpop.f32.mrb[0].mxu0
      %v5559 = vadd.f32 %v5502, %v5558
      %v5560 = vpop.f32.mrb[0].mxu0
      %v5561 = vpop.f32.mrb[0].mxu0
      %v5562 = vadd.f32 %v5505, %v5561
      %v5563 = vpop.f32.mrb[0].mxu0
      %5564 = vmatprep.mubr.bf16.mxu0 %v2464
      %5565 = vmatmul.mubr.bf16.gmra.mrb[0].mxu0 %v2463
      %v5566 = vpop.f32.mrb[0].mxu0
      %v5567 = vadd.f32 %v5510, %v5566
      %v5568 = vpop.f32.mrb[0].mxu0
      %v5569 = vpop.f32.mrb[0].mxu0
      %v5570 = vadd.f32 %v5513, %v5569
      %v5571 = vpop.f32.mrb[0].mxu0
      %5572 = vmatprep.mubr.bf16.mxu0 %v2479
      %5573 = vmatmul.mubr.bf16.gmra.mrb[0].mxu0 %v2478
      %v5574 = vpop.f32.mrb[0].mxu0
      %v5575 = vadd.f32 %v5518, %v5574
      %v5576 = vpop.f32.mrb[0].mxu0
      %v5577 = vpop.f32.mrb[0].mxu0
      %v5578 = vadd.f32 %v5521, %v5577
      %v5579 = vpop.f32.mrb[0].mxu0
      %5580 = vdwg.mxu0
      %5581 = vmatprep.subr.bf16.mxu0 0
      %5582 = vmatpush1.bf16.msra.mxu0 %v4332
      %5583 = vmatprep.subr.bf16.mxu0 0
      %5584 = vmatpush1.bf16.msra.mxu0 %v4335
      %5585 = vmatprep.subr.bf16.mxu0 0
      %5586 = vmatpush1.bf16.msra.mxu0 %v4338
      %5587 = vmatprep.subr.bf16.mxu0 0
      %5588 = vmatpush1.bf16.msra.mxu0 %v4341
      %5589 = vmatprep.subr.bf16.mxu0 0
      %5590 = vmatpush1.bf16.msra.mxu0 %v4344
      %5591 = vmatprep.subr.bf16.mxu0 0
      %5592 = vmatpush1.bf16.msra.mxu0 %v4347
      %5593 = vmatprep.subr.bf16.mxu0 0
      %5594 = vmatpush1.bf16.msra.mxu0 %v4350
      %5595 = vmatprep.subr.bf16.mxu0 0
      %5596 = vmatpush1.bf16.msra.mxu0 %v4353
      %5597 = vmatprep.subr.bf16.mxu0 0
      %5598 = vmatpush1.bf16.msra.mxu0 %v4356
      %5599 = vmatprep.subr.bf16.mxu0 0
      %5600 = vmatpush1.bf16.msra.mxu0 %v4359
      %5601 = vmatprep.subr.bf16.mxu0 0
      %5602 = vmatpush1.bf16.msra.mxu0 %v4362
      %5603 = vmatprep.subr.bf16.mxu0 0
      %5604 = vmatpush1.bf16.msra.mxu0 %v4365
      %5605 = vmatprep.subr.bf16.mxu0 0
      %5606 = vmatpush1.bf16.msra.mxu0 %v4368
      %5607 = vmatprep.subr.bf16.mxu0 0
      %5608 = vmatpush1.bf16.msra.mxu0 %v4371
      %5609 = vmatprep.subr.bf16.mxu0 0
      %5610 = vmatpush1.bf16.msra.mxu0 %v4374
      %5611 = vmatprep.subr.bf16.mxu0 0
      %5612 = vmatpush1.bf16.msra.mxu0 %v4377
      %5613 = vmatprep.mubr.bf16.mxu0 %v2451
      %5614 = vmatmul.mubr.bf16.gmra.mrb[0].mxu0 %v2450
      %v5615 = vpop.f32.mrb[0].mxu0
      %v5616 = vadd.f32 %v5559, %v5615
      %v5617 = vpop.f32.mrb[0].mxu0
      %v5618 = vpop.f32.mrb[0].mxu0
      %v5619 = vadd.f32 %v5562, %v5618
      %v5620 = vpop.f32.mrb[0].mxu0
      %5621 = vmatprep.mubr.bf16.mxu0 %v2466
      %5622 = vmatmul.mubr.bf16.gmra.mrb[0].mxu0 %v2465
      %v5623 = vpop.f32.mrb[0].mxu0
      %v5624 = vadd.f32 %v5567, %v5623
      %v5625 = vpop.f32.mrb[0].mxu0
      %v5626 = vpop.f32.mrb[0].mxu0
      %v5627 = vadd.f32 %v5570, %v5626
      %v5628 = vpop.f32.mrb[0].mxu0
      %5629 = vmatprep.mubr.bf16.mxu0 %v2481
      %5630 = vmatmul.mubr.bf16.gmra.mrb[0].mxu0 %v2480
      %v5631 = vpop.f32.mrb[0].mxu0
      %v5632 = vadd.f32 %v5575, %v5631
      %v5633 = vpop.f32.mrb[0].mxu0
      %v5634 = vpop.f32.mrb[0].mxu0
      %v5635 = vadd.f32 %v5578, %v5634
      %v5636 = vpop.f32.mrb[0].mxu0
      %5637 = vdwg.mxu0
      %5638 = vmatprep.subr.bf16.mxu0 0
      %5639 = vmatpush1.bf16.msra.mxu0 %v4380
      %5640 = vmatprep.subr.bf16.mxu0 0
      %5641 = vmatpush1.bf16.msra.mxu0 %v4383
      %5642 = vmatprep.subr.bf16.mxu0 0
      %5643 = vmatpush1.bf16.msra.mxu0 %v4386
      %5644 = vmatprep.subr.bf16.mxu0 0
      %5645 = vmatpush1.bf16.msra.mxu0 %v4389
      %5646 = vmatprep.subr.bf16.mxu0 0
      %5647 = vmatpush1.bf16.msra.mxu0 %v4392
      %5648 = vmatprep.subr.bf16.mxu0 0
      %5649 = vmatpush1.bf16.msra.mxu0 %v4395
      %5650 = vmatprep.subr.bf16.mxu0 0
      %5651 = vmatpush1.bf16.msra.mxu0 %v4398
      %5652 = vmatprep.subr.bf16.mxu0 0
      %5653 = vmatpush1.bf16.msra.mxu0 %v4401
      %5654 = vmatprep.subr.bf16.mxu0 0
      %5655 = vmatpush1.bf16.msra.mxu0 %v4404
      %5656 = vmatprep.subr.bf16.mxu0 0
      %5657 = vmatpush1.bf16.msra.mxu0 %v4407
      %5658 = vmatprep.subr.bf16.mxu0 0
      %5659 = vmatpush1.bf16.msra.mxu0 %v4410
      %5660 = vmatprep.subr.bf16.mxu0 0
      %5661 = vmatpush1.bf16.msra.mxu0 %v4413
      %5662 = vmatprep.subr.bf16.mxu0 0
      %5663 = vmatpush1.bf16.msra.mxu0 %v4416
      %5664 = vmatprep.subr.bf16.mxu0 0
      %5665 = vmatpush1.bf16.msra.mxu0 %v4419
      %5666 = vmatprep.subr.bf16.mxu0 0
      %5667 = vmatpush1.bf16.msra.mxu0 %v4422
      %5668 = vmatprep.subr.bf16.mxu0 0
      %5669 = vmatpush1.bf16.msra.mxu0 %v4425
      %5670 = vmatprep.mubr.bf16.mxu0 %v2453
      %5671 = vmatmul.mubr.bf16.gmra.mrb[0].mxu0 %v2452
      %v5672 = vpop.f32.mrb[0].mxu0
      %v5673 = vadd.f32 %v5616, %v5672
      %v5674 = vpop.f32.mrb[0].mxu0
      %v5675 = vpop.f32.mrb[0].mxu0
      %v5676 = vadd.f32 %v5619, %v5675
      %v5677 = vpop.f32.mrb[0].mxu0
      %5678 = vmatprep.mubr.bf16.mxu0 %v2468
      %5679 = vmatmul.mubr.bf16.gmra.mrb[0].mxu0 %v2467
      %v5680 = vpop.f32.mrb[0].mxu0
      %v5681 = vadd.f32 %v5624, %v5680
      %v5682 = vpop.f32.mrb[0].mxu0
      %v5683 = vpop.f32.mrb[0].mxu0
      %v5684 = vadd.f32 %v5627, %v5683
      %v5685 = vpop.f32.mrb[0].mxu0
      %5686 = vmatprep.mubr.bf16.mxu0 %v2483
      %5687 = vmatmul.mubr.bf16.gmra.mrb[0].mxu0 %v2482
      %v5688 = vpop.f32.mrb[0].mxu0
      %v5689 = vadd.f32 %v5632, %v5688
      %v5690 = vpop.f32.mrb[0].mxu0
      %v5691 = vpop.f32.mrb[0].mxu0
      %v5692 = vadd.f32 %v5635, %v5691
      %v5693 = vpop.f32.mrb[0].mxu0
      %5694 = vdwg.mxu0
      %5695 = vmatprep.subr.bf16.mxu0 0
      %5696 = vmatpush1.bf16.msra.mxu0 %v4428
      %5697 = vmatprep.subr.bf16.mxu0 0
      %5698 = vmatpush1.bf16.msra.mxu0 %v4431
      %5699 = vmatprep.subr.bf16.mxu0 0
      %5700 = vmatpush1.bf16.msra.mxu0 %v4434
      %5701 = vmatprep.subr.bf16.mxu0 0
      %5702 = vmatpush1.bf16.msra.mxu0 %v4437
      %5703 = vmatprep.subr.bf16.mxu0 0
      %5704 = vmatpush1.bf16.msra.mxu0 %v4440
      %5705 = vmatprep.subr.bf16.mxu0 0
      %5706 = vmatpush1.bf16.msra.mxu0 %v4443
      %5707 = vmatprep.subr.bf16.mxu0 0
      %5708 = vmatpush1.bf16.msra.mxu0 %v4446
      %5709 = vmatprep.subr.bf16.mxu0 0
      %5710 = vmatpush1.bf16.msra.mxu0 %v4449
      %5711 = vmatprep.subr.bf16.mxu0 0
      %5712 = vmatpush1.bf16.msra.mxu0 %v4452
      %5713 = vmatprep.subr.bf16.mxu0 0
      %5714 = vmatpush1.bf16.msra.mxu0 %v4455
      %5715 = vmatprep.subr.bf16.mxu0 0
      %5716 = vmatpush1.bf16.msra.mxu0 %v4458
      %5717 = vmatprep.subr.bf16.mxu0 0
      %5718 = vmatpush1.bf16.msra.mxu0 %v4461
      %5719 = vmatprep.subr.bf16.mxu0 0
      %5720 = vmatpush1.bf16.msra.mxu0 %v4464
      %5721 = vmatprep.subr.bf16.mxu0 0
      %5722 = vmatpush1.bf16.msra.mxu0 %v4467
      %5723 = vmatprep.subr.bf16.mxu0 0
      %5724 = vmatpush1.bf16.msra.mxu0 %v4470
      %5725 = vmatprep.subr.bf16.mxu0 0
      %5726 = vmatpush1.bf16.msra.mxu0 %v4473
      %5727 = vmatprep.mubr.bf16.mxu0 %v2455
      %5728 = vmatmul.mubr.bf16.gmra.mrb[0].mxu0 %v2454
      %v5729 = vpop.f32.mrb[0].mxu0
      %v5730 = vadd.f32 %v5673, %v5729
      %v5731 = vpop.f32.mrb[0].mxu0
      %v5732 = vpop.f32.mrb[0].mxu0
      %v5733 = vadd.f32 %v5676, %v5732
      %v5734 = vpop.f32.mrb[0].mxu0
      %5735 = vmatprep.mubr.bf16.mxu0 %v2470
      %5736 = vmatmul.mubr.bf16.gmra.mrb[0].mxu0 %v2469
      %v5737 = vpop.f32.mrb[0].mxu0
      %v5738 = vadd.f32 %v5681, %v5737
      %v5739 = vpop.f32.mrb[0].mxu0
      %v5740 = vpop.f32.mrb[0].mxu0
      %v5741 = vadd.f32 %v5684, %v5740
      %v5742 = vpop.f32.mrb[0].mxu0
      %5743 = vmatprep.mubr.bf16.mxu0 %v2485
      %5744 = vmatmul.mubr.bf16.gmra.mrb[0].mxu0 %v2484
      %v5745 = vpop.f32.mrb[0].mxu0
      %v5746 = vadd.f32 %v5689, %v5745
      %v5747 = vpop.f32.mrb[0].mxu0
      %v5748 = vpop.f32.mrb[0].mxu0
      %v5749 = vadd.f32 %v5692, %v5748
      %v5750 = vpop.f32.mrb[0].mxu0
      %5751 = vdwg.mxu0
      %5752 = vmatprep.subr.bf16.mxu0 0
      %5753 = vmatpush1.bf16.msra.mxu0 %v4476
      %5754 = vmatprep.subr.bf16.mxu0 0
      %5755 = vmatpush1.bf16.msra.mxu0 %v4479
      %5756 = vmatprep.subr.bf16.mxu0 0
      %5757 = vmatpush1.bf16.msra.mxu0 %v4482
      %5758 = vmatprep.subr.bf16.mxu0 0
      %5759 = vmatpush1.bf16.msra.mxu0 %v4485
      %5760 = vmatprep.subr.bf16.mxu0 0
      %5761 = vmatpush1.bf16.msra.mxu0 %v4488
      %5762 = vmatprep.subr.bf16.mxu0 0
      %5763 = vmatpush1.bf16.msra.mxu0 %v4491
      %5764 = vmatprep.subr.bf16.mxu0 0
      %5765 = vmatpush1.bf16.msra.mxu0 %v4494
      %5766 = vmatprep.subr.bf16.mxu0 0
      %5767 = vmatpush1.bf16.msra.mxu0 %v4497
      %5768 = vmatprep.subr.bf16.mxu0 0
      %5769 = vmatpush1.bf16.msra.mxu0 %v4500
      %5770 = vmatprep.subr.bf16.mxu0 0
      %5771 = vmatpush1.bf16.msra.mxu0 %v4503
      %5772 = vmatprep.subr.bf16.mxu0 0
      %5773 = vmatpush1.bf16.msra.mxu0 %v4506
      %5774 = vmatprep.subr.bf16.mxu0 0
      %5775 = vmatpush1.bf16.msra.mxu0 %v4509
      %5776 = vmatprep.subr.bf16.mxu0 0
      %5777 = vmatpush1.bf16.msra.mxu0 %v4512
      %5778 = vmatprep.subr.bf16.mxu0 0
      %5779 = vmatpush1.bf16.msra.mxu0 %v4515
      %5780 = vmatprep.subr.bf16.mxu0 0
      %5781 = vmatpush1.bf16.msra.mxu0 %v4518
      %5782 = vmatprep.subr.bf16.mxu0 0
      %5783 = vmatpush1.bf16.msra.mxu0 %v4521
      %5784 = vmatprep.mubr.bf16.mxu0 %v2457
      %5785 = vmatmul.mubr.bf16.gmra.mrb[0].mxu0 %v2456
      %v5786 = vpop.f32.mrb[0].mxu0
      %v5787 = vadd.f32 %v5730, %v5786
      %v5788 = vpop.f32.mrb[0].mxu0
      %v5789 = vpop.f32.mrb[0].mxu0
      %v5790 = vadd.f32 %v5733, %v5789
      %v5791 = vpop.f32.mrb[0].mxu0
      %5792 = vmatprep.mubr.bf16.mxu0 %v2472
      %5793 = vmatmul.mubr.bf16.gmra.mrb[0].mxu0 %v2471
      %v5794 = vpop.f32.mrb[0].mxu0
      %v5795 = vadd.f32 %v5738, %v5794
      %v5796 = vpop.f32.mrb[0].mxu0
      %v5797 = vpop.f32.mrb[0].mxu0
      %v5798 = vadd.f32 %v5741, %v5797
      %v5799 = vpop.f32.mrb[0].mxu0
      %5800 = vmatprep.mubr.bf16.mxu0 %v2487
      %5801 = vmatmul.mubr.bf16.gmra.mrb[0].mxu0 %v2486
      %v5802 = vpop.f32.mrb[0].mxu0
      %v5803 = vadd.f32 %v5746, %v5802
      %v5804 = vpop.f32.mrb[0].mxu0
      %v5805 = vpop.f32.mrb[0].mxu0
      %v5806 = vadd.f32 %v5749, %v5805
      %v5807 = vpop.f32.mrb[0].mxu0
      %5808 = vdwg.mxu0
      %5809 = vmatprep.subr.bf16.mxu0 0
      %5810 = vmatpush1.bf16.msra.mxu0 %v4524
      %5811 = vmatprep.subr.bf16.mxu0 0
      %5812 = vmatpush1.bf16.msra.mxu0 %v4527
      %5813 = vmatprep.subr.bf16.mxu0 0
      %5814 = vmatpush1.bf16.msra.mxu0 %v4530
      %5815 = vmatprep.subr.bf16.mxu0 0
      %5816 = vmatpush1.bf16.msra.mxu0 %v4533
      %5817 = vmatprep.subr.bf16.mxu0 0
      %5818 = vmatpush1.bf16.msra.mxu0 %v4536
      %5819 = vmatprep.subr.bf16.mxu0 0
      %5820 = vmatpush1.bf16.msra.mxu0 %v4539
      %5821 = vmatprep.subr.bf16.mxu0 0
      %5822 = vmatpush1.bf16.msra.mxu0 %v4542
      %5823 = vmatprep.subr.bf16.mxu0 0
      %5824 = vmatpush1.bf16.msra.mxu0 %v4545
      %5825 = vmatprep.subr.bf16.mxu0 0
      %5826 = vmatpush1.bf16.msra.mxu0 0
      %5827 = vmatprep.subr.bf16.mxu0 0
      %5828 = vmatpush1.bf16.msra.mxu0 0
      %5829 = vmatprep.subr.bf16.mxu0 0
      %5830 = vmatpush1.bf16.msra.mxu0 0
      %5831 = vmatprep.subr.bf16.mxu0 0
      %5832 = vmatpush1.bf16.msra.mxu0 0
      %5833 = vmatprep.subr.bf16.mxu0 0
      %5834 = vmatpush1.bf16.msra.mxu0 0
      %5835 = vmatprep.subr.bf16.mxu0 0
      %5836 = vmatpush1.bf16.msra.mxu0 0
      %5837 = vmatprep.subr.bf16.mxu0 0
      %5838 = vmatpush1.bf16.msra.mxu0 0
      %5839 = vmatprep.subr.bf16.mxu0 0
      %5840 = vmatpush1.bf16.msra.mxu0 0
      %5841 = vmatprep.mubr.bf16.mxu0 0
      %5842 = vmatmul.mubr.bf16.gmra.mrb[0].mxu0 %v2458
      %v5843 = vpop.f32.mrb[0].mxu0
      %v5844 = vadd.f32 %v5787, %v5843
      %v5845 = vpop.f32.mrb[0].mxu0
      %v5846 = vpop.f32.mrb[0].mxu0
      %v5847 = vadd.f32 %v5790, %v5846
      %v5848 = vpop.f32.mrb[0].mxu0
      %5849 = vmatprep.mubr.bf16.mxu0 0
      %5850 = vmatmul.mubr.bf16.gmra.mrb[0].mxu0 %v2473
      %v5851 = vpop.f32.mrb[0].mxu0
      %v5852 = vadd.f32 %v5795, %v5851
      %v5853 = vpop.f32.mrb[0].mxu0
      %v5854 = vpop.f32.mrb[0].mxu0
      %v5855 = vadd.f32 %v5798, %v5854
      %v5856 = vpop.f32.mrb[0].mxu0
      %5857 = vmatprep.mubr.bf16.mxu0 0
      %5858 = vmatmul.mubr.bf16.gmra.mrb[0].mxu0 %v2488
      %v5859 = vpop.f32.mrb[0].mxu0
      %v5860 = vadd.f32 %v5803, %v5859
      %v5861 = vpop.f32.mrb[0].mxu0
      %v5862 = vpop.f32.mrb[0].mxu0
      %v5863 = vadd.f32 %v5806, %v5862
      %v5864 = vpop.f32.mrb[0].mxu0
      %5865 = vdwg.mxu0
      %vm5866 = vcmp.ge.f32.partialorder %v5382, 0.0
      %vm5867 = vcmp.ge.f32.partialorder %v5384, 0.0
      %vm5868 = vcmp.ge.f32.partialorder %v5844, 0.0
      %vm5869 = vcmp.ge.f32.partialorder %v5386, 0.0
      %vm5870 = vcmp.ge.f32.partialorder %v5388, 0.0
      %vm5871 = vcmp.ge.f32.partialorder %v5847, 0.0
      %vm5872 = vcmp.ge.f32.partialorder %v5392, 0.0
      %vm5873 = vcmp.ge.f32.partialorder %v5394, 0.0
      %vm5874 = vcmp.ge.f32.partialorder %v5852, 0.0
      %vm5875 = vcmp.ge.f32.partialorder %v5396, 0.0
      %vm5876 = vcmp.ge.f32.partialorder %v5398, 0.0
      %vm5877 = vcmp.ge.f32.partialorder %v5855, 0.0
      %vm5878 = vcmp.ge.f32.partialorder %v5402, 0.0
      %vm5879 = vcmp.ge.f32.partialorder %v5404, 0.0
      %vm5880 = vcmp.ge.f32.partialorder %v5860, 0.0
      %vm5881 = vcmp.ge.f32.partialorder %v5406, 0.0
      %vm5882 = vcmp.ge.f32.partialorder %v5408, 0.0
      %vm5883 = vcmp.ge.f32.partialorder %v5863, 0.0
      %v5884 = vmul.f32 %v5382, 0.2
      %v5885 = vmul.f32 %v5384, 0.2
      %v5886 = vmul.f32 %v5844, 0.2
      %v5887 = vmul.f32 %v5386, 0.2
      %v5888 = vmul.f32 %v5388, 0.2
      %v5889 = vmul.f32 %v5847, 0.2
      %v5890 = vmul.f32 %v5392, 0.2
      %v5891 = vmul.f32 %v5394, 0.2
      %v5892 = vmul.f32 %v5852, 0.2
      %v5893 = vmul.f32 %v5396, 0.2
      %v5894 = vmul.f32 %v5398, 0.2
      %v5895 = vmul.f32 %v5855, 0.2
      %v5896 = vmul.f32 %v5402, 0.2
      %v5897 = vmul.f32 %v5404, 0.2
      %v5898 = vmul.f32 %v5860, 0.2
      %v5899 = vmul.f32 %v5406, 0.2
      %v5900 = vmul.f32 %v5408, 0.2
      %v5901 = vmul.f32 %v5863, 0.2
      %v5902 = vsel %vm5866, %v5382, %v5884
      %v5903 = vsel %vm5867, %v5384, %v5885
      %v5904 = vsel %vm5868, %v5844, %v5886
      %v5905 = vsel %vm5869, %v5386, %v5887
      %v5906 = vsel %vm5870, %v5388, %v5888
      %v5907 = vsel %vm5871, %v5847, %v5889
      %v5908 = vsel %vm5872, %v5392, %v5890
      %v5909 = vsel %vm5873, %v5394, %v5891
      %v5910 = vsel %vm5874, %v5852, %v5892
      %v5911 = vsel %vm5875, %v5396, %v5893
      %v5912 = vsel %vm5876, %v5398, %v5894
      %v5913 = vsel %vm5877, %v5855, %v5895
      %v5914 = vsel %vm5878, %v5402, %v5896
      %v5915 = vsel %vm5879, %v5404, %v5897
      %v5916 = vsel %vm5880, %v5860, %v5898
      %v5917 = vsel %vm5881, %v5406, %v5899
      %v5918 = vsel %vm5882, %v5408, %v5900
      %v5919 = vsel %vm5883, %v5863, %v5901
      %v5920 = vmul.f32 %v5902, %v2147
      %v5921 = vmul.f32 %v5903, %v2147
      %v5922 = vmul.f32 %v5904, %v2147
      %v5923 = vmul.f32 %v5905, %v2152
      %v5924 = vmul.f32 %v5906, %v2152
      %v5925 = vmul.f32 %v5907, %v2152
      %v5926 = vmul.f32 %v5908, %v2157
      %v5927 = vmul.f32 %v5909, %v2157
      %v5928 = vmul.f32 %v5910, %v2157
      %v5929 = vmul.f32 %v5911, %v2162
      %v5930 = vmul.f32 %v5912, %v2162
      %v5931 = vmul.f32 %v5913, %v2162
      %v5932 = vmul.f32 %v5914, %v2167
      %v5933 = vmul.f32 %v5915, %v2167
      %v5934 = vmul.f32 %v5916, %v2167
      %v5935 = vmul.f32 %v5917, %v2172
      %v5936 = vmul.f32 %v5918, %v2172
      %v5937 = vmul.f32 %v5919, %v2172
      %5938 = vst [vmem:[%s678] sm:$0xff] %v5920
      %5939 = vst [vmem:[%s678 + $0x8] sm:$0xff] %v5921
      %5940 = vst [vmem:[%s678 + $0x10] sm:$0xff] %v5922
      %5941 = vst [vmem:[%s678 + $0x18] sm:$0xff] %v5923
      %5942 = vst [vmem:[%s678 + $0x20] sm:$0xff] %v5924
      %5943 = vst [vmem:[%s678 + $0x28] sm:$0xff] %v5925
      %5944 = vst [vmem:[%s678 + $0x30] sm:$0xff] %v5926
      %5945 = vst [vmem:[%s678 + $0x38] sm:$0xff] %v5927
      %5946 = vst [vmem:[%s678 + $0x40] sm:$0xff] %v5928
      %5947 = vst [vmem:[%s678 + $0x48] sm:$0xff] %v5929
      %5948 = vst [vmem:[%s678 + $0x50] sm:$0xff] %v5930
      %5949 = vst [vmem:[%s678 + $0x58] sm:$0xff] %v5931
      %5950 = vst [vmem:[%s678 + $0x60] sm:$0xff] %v5932
      %5951 = vst [vmem:[%s678 + $0x68] sm:$0xff] %v5933
      %5952 = vst [vmem:[%s678 + $0x70] sm:$0xff] %v5934
      %5953 = vst [vmem:[%s678 + $0x78] sm:$0xff] %v5935
      %5954 = vst [vmem:[%s678 + $0x80] sm:$0xff] %v5936
      %5955 = vst [vmem:[%s678 + $0x88] sm:$0xff] %v5937
      %vm5974 = vcmask 1041408
      %v5975 = vrot.slane %v5920, 6
      %v5976 = vrot.slane %v5921, 6
      %v5977 = vrot.slane %v5922, 6
      %v5978 = vrot.slane %v5923, 6
      %v5979 = vsel %vm5974, %v5975, %v5978
      %v5980 = vrot.slane %v5924, 6
      %v5981 = vsel %vm5974, %v5976, %v5980
      %v5982 = vrot.slane %v5925, 6
      %v5983 = vsel %vm5974, %v5977, %v5982
      %v5984 = vrot.slane %v5926, 6
      %v5985 = vsel %vm5974, %v5978, %v5984
      %v5986 = vrot.slane %v5927, 6
      %v5987 = vsel %vm5974, %v5980, %v5986
      %v5988 = vrot.slane %v5928, 6
      %v5989 = vsel %vm5974, %v5982, %v5988
      %v5990 = vrot.slane %v5929, 6
      %v5991 = vsel %vm5974, %v5984, %v5990
      %v5992 = vrot.slane %v5930, 6
      %v5993 = vsel %vm5974, %v5986, %v5992
      %v5994 = vrot.slane %v5931, 6
      %v5995 = vsel %vm5974, %v5988, %v5994
      %v5996 = vrot.slane %v5932, 6
      %v5997 = vsel %vm5974, %v5990, %v5996
      %v5998 = vrot.slane %v5933, 6
      %v5999 = vsel %vm5974, %v5992, %v5998
      %v6000 = vrot.slane %v5934, 6
      %v6001 = vsel %vm5974, %v5994, %v6000
      %v6002 = vrot.slane %v5935, 6
      %v6003 = vsel %vm5974, %v5996, %v6002
      %v6004 = vrot.slane %v5936, 6
      %v6005 = vsel %vm5974, %v5998, %v6004
      %v6006 = vrot.slane %v5937, 6
      %v6007 = vsel %vm5974, %v6000, %v6006
      %v6026 = vsel %vm5974, 0.0, %v5975
      %v6027 = vsel %vm5974, 0.0, %v5976
      %v6028 = vsel %vm5974, 0.0, %v5977
      %vm6029 = vcmask 1045504
      %v6030 = vrot.slane %v5920, 2
      %v6031 = vrot.slane %v5923, 2
      %v6032 = vsel %vm6029, %v6030, %v6031
      %v6033 = vrot.slane %v5921, 2
      %v6034 = vrot.slane %v5924, 2
      %v6035 = vsel %vm6029, %v6033, %v6034
      %v6036 = vrot.slane %v5922, 2
      %v6037 = vrot.slane %v5925, 2
      %v6038 = vsel %vm6029, %v6036, %v6037
      %v6039 = vrot.slane %v5926, 2
      %v6040 = vsel %vm6029, %v6031, %v6039
      %v6041 = vrot.slane %v5927, 2
      %v6042 = vsel %vm6029, %v6034, %v6041
      %v6043 = vrot.slane %v5928, 2
      %v6044 = vsel %vm6029, %v6037, %v6043
      %v6045 = vrot.slane %v5929, 2
      %v6046 = vsel %vm6029, %v6039, %v6045
      %v6047 = vrot.slane %v5930, 2
      %v6048 = vsel %vm6029, %v6041, %v6047
      %v6049 = vrot.slane %v5931, 2
      %v6050 = vsel %vm6029, %v6043, %v6049
      %v6051 = vrot.slane %v5932, 2
      %v6052 = vsel %vm6029, %v6045, %v6051
      %v6053 = vrot.slane %v5933, 2
      %v6054 = vsel %vm6029, %v6047, %v6053
      %v6055 = vrot.slane %v5934, 2
      %v6056 = vsel %vm6029, %v6049, %v6055
      %v6057 = vrot.slane %v5935, 2
      %v6058 = vsel %vm6029, %v6051, %v6057
      %v6059 = vrot.slane %v5936, 2
      %v6060 = vsel %vm6029, %v6053, %v6059
      %v6061 = vrot.slane %v5937, 2
      %v6062 = vsel %vm6029, %v6055, %v6061
      %v6081 = vsel %vm6029, %v6057, 0.0
      %v6082 = vsel %vm6029, %v6059, 0.0
      %v6083 = vsel %vm6029, %v6061, 0.0
      %v6084 = vpack.c.bf16 %v5979, %v6026
      %v6085 = vpack.c.bf16 %v5981, %v6027
      %v6086 = vpack.c.bf16 %v5983, %v6028
      %v6087 = vpack.c.bf16 %v5923, %v5920
      %v6088 = vpack.c.bf16 %v5924, %v5921
      %v6089 = vpack.c.bf16 %v5925, %v5922
      %v6090 = vpack.c.bf16 %v6040, %v6032
      %v6091 = vpack.c.bf16 %v6042, %v6035
      %v6092 = vpack.c.bf16 %v6044, %v6038
      %v6093 = vpack.c.bf16 %v5991, %v5985
      %v6094 = vpack.c.bf16 %v5993, %v5987
      %v6095 = vpack.c.bf16 %v5995, %v5989
      %v6096 = vpack.c.bf16 %v5929, %v5926
      %v6097 = vpack.c.bf16 %v5930, %v5927
      %v6098 = vpack.c.bf16 %v5931, %v5928
      %v6099 = vpack.c.bf16 %v6052, %v6046
      %v6100 = vpack.c.bf16 %v6054, %v6048
      %v6101 = vpack.c.bf16 %v6056, %v6050
      %v6102 = vpack.c.bf16 %v6003, %v5997
      %v6103 = vpack.c.bf16 %v6005, %v5999
      %v6104 = vpack.c.bf16 %v6007, %v6001
      %v6105 = vpack.c.bf16 %v5935, %v5932
      %v6106 = vpack.c.bf16 %v5936, %v5933
      %v6107 = vpack.c.bf16 %v5937, %v5934
      %v6108 = vpack.c.bf16 %v6081, %v6058
      %v6109 = vpack.c.bf16 %v6082, %v6060
      %v6110 = vpack.c.bf16 %v6083, %v6062
      %v6111 = vld [vmem:[%s7] sm:$0xff]
      %v6112 = vld [vmem:[%s7 + $0x8] sm:$0xff]
      %v6113 = vld [vmem:[%s7 + $0x10] sm:$0xff]
      %v6114 = vld [vmem:[%s7 + $0x18] sm:$0xff]
      %v6115 = vld [vmem:[%s7 + $0x20] sm:$0xff]
      %v6116 = vld [vmem:[%s7 + $0x28] sm:$0xff]
      %v6117 = vld [vmem:[%s7 + $0x30] sm:$0xff]
      %v6118 = vld [vmem:[%s7 + $0x38] sm:$0xff]
      %v6119 = vld [vmem:[%s7 + $0x40] sm:$0xff]
      %v6120 = vld [vmem:[%s7 + $0x48] sm:$0xff]
      %v6121 = vld [vmem:[%s7 + $0x50] sm:$0xff]
      %v6122 = vld [vmem:[%s7 + $0x58] sm:$0xff]
      %v6123 = vld [vmem:[%s7 + $0x60] sm:$0xff]
      %v6124 = vld [vmem:[%s7 + $0x68] sm:$0xff]
      %v6125 = vld [vmem:[%s7 + $0x70] sm:$0xff]
      %v6126 = vld [vmem:[%s7 + $0x78] sm:$0xff]
      %v6127 = vld [vmem:[%s7 + $0x80] sm:$0xff]
      %v6128 = vld [vmem:[%s7 + $0x88] sm:$0xff]
      %v6129 = vld [vmem:[%s7 + $0x90] sm:$0xff]
      %v6130 = vld [vmem:[%s7 + $0x98] sm:$0xff]
      %v6131 = vld [vmem:[%s7 + $0xa0] sm:$0xff]
      %v6132 = vld [vmem:[%s7 + $0xa8] sm:$0xff]
      %v6133 = vld [vmem:[%s7 + $0xb0] sm:$0xff]
      %v6134 = vld [vmem:[%s7 + $0xb8] sm:$0xff]
      %v6135 = vld [vmem:[%s7 + $0xc0] sm:$0xff]
      %v6136 = vld [vmem:[%s7 + $0xc8] sm:$0xff]
      %v6137 = vld [vmem:[%s7 + $0xd0] sm:$0xff]
      %v6138 = vld [vmem:[%s7 + $0xd8] sm:$0xff]
      %v6139 = vld [vmem:[%s7 + $0xe0] sm:$0xff]
      %v6140 = vld [vmem:[%s7 + $0xe8] sm:$0xff]
      %v6141 = vld [vmem:[%s7 + $0xf0] sm:$0xff]
      %v6142 = vld [vmem:[%s7 + $0xf8] sm:$0xff]
      %v6143 = vld [vmem:[%s7 + $0x100] sm:$0xff]
      %v6144 = vld [vmem:[%s7 + $0x108] sm:$0xff]
      %v6145 = vld [vmem:[%s7 + $0x110] sm:$0xff]
      %v6146 = vld [vmem:[%s7 + $0x118] sm:$0xff]
      %v6147 = vld [vmem:[%s7 + $0x120] sm:$0xff]
      %v6148 = vld [vmem:[%s7 + $0x128] sm:$0xff]
      %v6149 = vld [vmem:[%s7 + $0x130] sm:$0xff]
      %v6150 = vld [vmem:[%s7 + $0x138] sm:$0xff]
      %v6151 = vld [vmem:[%s7 + $0x140] sm:$0xff]
      %v6152 = vld [vmem:[%s7 + $0x148] sm:$0xff]
      %v6153 = vld [vmem:[%s7 + $0x150] sm:$0xff]
      %v6154 = vld [vmem:[%s7 + $0x158] sm:$0xff]
      %v6155 = vld [vmem:[%s7 + $0x160] sm:$0xff]
      %v6156 = vld [vmem:[%s7 + $0x168] sm:$0xff]
      %v6157 = vld [vmem:[%s7 + $0x170] sm:$0xff]
      %v6158 = vld [vmem:[%s7 + $0x178] sm:$0xff]
      %v6159 = vld [vmem:[%s7 + $0x180] sm:$0xff]
      %v6160 = vld [vmem:[%s7 + $0x188] sm:$0xff]
      %v6161 = vld [vmem:[%s7 + $0x190] sm:$0xff]
      %v6162 = vld [vmem:[%s7 + $0x198] sm:$0xff]
      %v6163 = vld [vmem:[%s7 + $0x1a0] sm:$0xff]
      %v6164 = vld [vmem:[%s7 + $0x1a8] sm:$0xff]
      %v6165 = vld [vmem:[%s7 + $0x1b0] sm:$0xff]
      %v6166 = vld [vmem:[%s7 + $0x1b8] sm:$0xff]
      %v6167 = vld [vmem:[%s7 + $0x1c0] sm:$0xff]
      %v6168 = vld [vmem:[%s7 + $0x1c8] sm:$0xff]
      %v6169 = vld [vmem:[%s7 + $0x1d0] sm:$0xff]
      %v6170 = vld [vmem:[%s7 + $0x1d8] sm:$0xff]
      %v6171 = vld [vmem:[%s7 + $0x1e0] sm:$0xff]
      %v6172 = vld [vmem:[%s7 + $0x1e8] sm:$0xff]
      %v6173 = vld [vmem:[%s7 + $0x1f0] sm:$0xff]
      %v6174 = vld [vmem:[%s7 + $0x1f8] sm:$0xff]
      %v6175 = vld [vmem:[%s7 + $0x200] sm:$0xff]
      %v6176 = vld [vmem:[%s7 + $0x208] sm:$0xff]
      %v6177 = vld [vmem:[%s7 + $0x210] sm:$0xff]
      %v6178 = vld [vmem:[%s7 + $0x218] sm:$0xff]
      %v6179 = vld [vmem:[%s7 + $0x220] sm:$0xff]
      %v6180 = vld [vmem:[%s7 + $0x228] sm:$0xff]
      %v6181 = vld [vmem:[%s7 + $0x230] sm:$0xff]
      %v6182 = vld [vmem:[%s7 + $0x238] sm:$0xff]
      %v6183 = vld [vmem:[%s7 + $0x240] sm:$0xff]
      %v6184 = vld [vmem:[%s7 + $0x248] sm:$0xff]
      %v6185 = vld [vmem:[%s7 + $0x250] sm:$0xff]
      %v6186 = vld [vmem:[%s7 + $0x258] sm:$0xff]
      %v6187 = vld [vmem:[%s7 + $0x260] sm:$0xff]
      %v6188 = vld [vmem:[%s7 + $0x268] sm:$0xff]
      %v6189 = vld [vmem:[%s7 + $0x270] sm:$0xff]
      %v6190 = vld [vmem:[%s7 + $0x278] sm:$0xff]
      %v6191 = vld [vmem:[%s7 + $0x280] sm:$0xff]
      %v6192 = vld [vmem:[%s7 + $0x288] sm:$0xff]
      %v6193 = vld [vmem:[%s7 + $0x290] sm:$0xff]
      %v6194 = vld [vmem:[%s7 + $0x298] sm:$0xff]
      %v6195 = vld [vmem:[%s7 + $0x2a0] sm:$0xff]
      %v6196 = vld [vmem:[%s7 + $0x2a8] sm:$0xff]
      %v6197 = vld [vmem:[%s7 + $0x2b0] sm:$0xff]
      %v6198 = vld [vmem:[%s7 + $0x2b8] sm:$0xff]
      %v6199 = vld [vmem:[%s7 + $0x2c0] sm:$0xff]
      %v6200 = vld [vmem:[%s7 + $0x2c8] sm:$0xff]
      %v6201 = vld [vmem:[%s7 + $0x2d0] sm:$0xff]
      %v6202 = vld [vmem:[%s7 + $0x2d8] sm:$0xff]
      %v6203 = vld [vmem:[%s7 + $0x2e0] sm:$0xff]
      %v6204 = vld [vmem:[%s7 + $0x2e8] sm:$0xff]
      %v6205 = vld [vmem:[%s7 + $0x2f0] sm:$0xff]
      %v6206 = vld [vmem:[%s7 + $0x2f8] sm:$0xff]
      %v6207 = vld [vmem:[%s7 + $0x300] sm:$0xff]
      %v6208 = vld [vmem:[%s7 + $0x308] sm:$0xff]
      %v6209 = vld [vmem:[%s7 + $0x310] sm:$0xff]
      %v6210 = vld [vmem:[%s7 + $0x318] sm:$0xff]
      %v6211 = vld [vmem:[%s7 + $0x320] sm:$0xff]
      %v6212 = vld [vmem:[%s7 + $0x328] sm:$0xff]
      %v6213 = vld [vmem:[%s7 + $0x330] sm:$0xff]
      %v6214 = vld [vmem:[%s7 + $0x338] sm:$0xff]
      %v6215 = vld [vmem:[%s7 + $0x340] sm:$0xff]
      %v6216 = vld [vmem:[%s7 + $0x348] sm:$0xff]
      %v6217 = vld [vmem:[%s7 + $0x350] sm:$0xff]
      %v6218 = vld [vmem:[%s7 + $0x358] sm:$0xff]
      %v6219 = vld [vmem:[%s7 + $0x360] sm:$0xff]
      %v6220 = vld [vmem:[%s7 + $0x368] sm:$0xff]
      %v6221 = vld [vmem:[%s7 + $0x370] sm:$0xff]
      %v6222 = vld [vmem:[%s7 + $0x378] sm:$0xff]
      %v6223 = vld [vmem:[%s7 + $0x380] sm:$0xff]
      %v6224 = vld [vmem:[%s7 + $0x388] sm:$0xff]
      %v6225 = vld [vmem:[%s7 + $0x390] sm:$0xff]
      %v6226 = vld [vmem:[%s7 + $0x398] sm:$0xff]
      %v6227 = vld [vmem:[%s7 + $0x3a0] sm:$0xff]
      %v6228 = vld [vmem:[%s7 + $0x3a8] sm:$0xff]
      %v6229 = vld [vmem:[%s7 + $0x3b0] sm:$0xff]
      %v6230 = vld [vmem:[%s7 + $0x3b8] sm:$0xff]
      %v6231 = vld [vmem:[%s7 + $0x3c0] sm:$0xff]
      %v6232 = vld [vmem:[%s7 + $0x3c8] sm:$0xff]
      %v6233 = vld [vmem:[%s7 + $0x3d0] sm:$0xff]
      %v6234 = vld [vmem:[%s7 + $0x3d8] sm:$0xff]
      %v6235 = vld [vmem:[%s7 + $0x3e0] sm:$0xff]
      %v6236 = vld [vmem:[%s7 + $0x3e8] sm:$0xff]
      %v6237 = vld [vmem:[%s7 + $0x3f0] sm:$0xff]
      %v6238 = vld [vmem:[%s7 + $0x3f8] sm:$0xff]
      %v6239 = vld [vmem:[%s7 + $0x400] sm:$0xff]
      %v6240 = vld [vmem:[%s7 + $0x408] sm:$0xff]
      %v6241 = vld [vmem:[%s7 + $0x410] sm:$0xff]
      %v6242 = vld [vmem:[%s7 + $0x418] sm:$0xff]
      %v6243 = vld [vmem:[%s7 + $0x420] sm:$0xff]
      %v6244 = vld [vmem:[%s7 + $0x428] sm:$0xff]
      %v6245 = vld [vmem:[%s7 + $0x430] sm:$0xff]
      %v6246 = vld [vmem:[%s7 + $0x438] sm:$0xff]
      %v6247 = vld [vmem:[%s7 + $0x440] sm:$0xff]
      %v6248 = vld [vmem:[%s7 + $0x448] sm:$0xff]
      %v6249 = vld [vmem:[%s7 + $0x450] sm:$0xff]
      %v6250 = vld [vmem:[%s7 + $0x458] sm:$0xff]
      %v6251 = vld [vmem:[%s7 + $0x460] sm:$0xff]
      %v6252 = vld [vmem:[%s7 + $0x468] sm:$0xff]
      %v6253 = vld [vmem:[%s7 + $0x470] sm:$0xff]
      %v6254 = vld [vmem:[%s7 + $0x478] sm:$0xff]
      %v6255 = vld [vmem:[%s8] sm:$0x3]
      %v6257 = vlaneseq
      %v6258 = vshrl.u32 %v6257, 7
      %v6259 = vsub.s32 0, %v6258
      %v6260 = vrot.slane %v6255, %v6259
      %v6261 = vlaneseq
      %v6262 = vshrl.u32 %v6261, 7
      %v6263 = vsub.s32 1, %v6262
      %v6264 = vrot.slane %v6255, %v6263
      %v6411 = vunpack.c.l.b16 %v6111
      %v6412 = vunpack.c.h.b16 %v6111
      %v6413 = vunpack.c.l.b16 %v6112
      %v6414 = vunpack.c.h.b16 %v6112
      %v6415 = vunpack.c.l.b16 %v6113
      %v6416 = vunpack.c.h.b16 %v6113
      %v6417 = vunpack.c.l.b16 %v6114
      %v6418 = vunpack.c.h.b16 %v6114
      %v6419 = vunpack.c.l.b16 %v6115
      %v6420 = vunpack.c.h.b16 %v6115
      %v6421 = vunpack.c.l.b16 %v6116
      %v6422 = vunpack.c.h.b16 %v6116
      %v6423 = vunpack.c.l.b16 %v6117
      %v6424 = vunpack.c.h.b16 %v6117
      %v6425 = vunpack.c.l.b16 %v6118
      %v6426 = vunpack.c.h.b16 %v6118
      %v6427 = vunpack.c.l.b16 %v6119
      %v6428 = vunpack.c.h.b16 %v6119
      %v6429 = vunpack.c.l.b16 %v6120
      %v6430 = vunpack.c.h.b16 %v6120
      %v6431 = vunpack.c.l.b16 %v6121
      %v6432 = vunpack.c.h.b16 %v6121
      %v6433 = vunpack.c.l.b16 %v6122
      %v6434 = vunpack.c.h.b16 %v6122
      %v6435 = vunpack.c.l.b16 %v6123
      %v6436 = vunpack.c.h.b16 %v6123
      %v6437 = vunpack.c.l.b16 %v6124
      %v6438 = vunpack.c.h.b16 %v6124
      %v6439 = vunpack.c.l.b16 %v6125
      %v6440 = vunpack.c.h.b16 %v6125
      %v6441 = vunpack.c.l.b16 %v6126
      %v6442 = vunpack.c.h.b16 %v6126
      %v6443 = vunpack.c.l.b16 %v6127
      %v6444 = vunpack.c.h.b16 %v6127
      %v6445 = vunpack.c.l.b16 %v6128
      %v6446 = vunpack.c.h.b16 %v6128
      %v6447 = vunpack.c.l.b16 %v6129
      %v6448 = vunpack.c.h.b16 %v6129
      %v6449 = vunpack.c.l.b16 %v6130
      %v6450 = vunpack.c.h.b16 %v6130
      %v6451 = vunpack.c.l.b16 %v6131
      %v6452 = vunpack.c.h.b16 %v6131
      %v6453 = vunpack.c.l.b16 %v6132
      %v6454 = vunpack.c.h.b16 %v6132
      %v6455 = vunpack.c.l.b16 %v6133
      %v6456 = vunpack.c.h.b16 %v6133
      %v6457 = vunpack.c.l.b16 %v6134
      %v6458 = vunpack.c.h.b16 %v6134
      %v6459 = vunpack.c.l.b16 %v6135
      %v6460 = vunpack.c.h.b16 %v6135
      %v6461 = vunpack.c.l.b16 %v6136
      %v6462 = vunpack.c.h.b16 %v6136
      %v6463 = vunpack.c.l.b16 %v6137
      %v6464 = vunpack.c.h.b16 %v6137
      %v6465 = vunpack.c.l.b16 %v6138
      %v6466 = vunpack.c.h.b16 %v6138
      %v6467 = vunpack.c.l.b16 %v6139
      %v6468 = vunpack.c.h.b16 %v6139
      %v6469 = vunpack.c.l.b16 %v6140
      %v6470 = vunpack.c.h.b16 %v6140
      %v6471 = vunpack.c.l.b16 %v6141
      %v6472 = vunpack.c.h.b16 %v6141
      %v6473 = vunpack.c.l.b16 %v6142
      %v6474 = vunpack.c.h.b16 %v6142
      %v6475 = vunpack.c.l.b16 %v6143
      %v6476 = vunpack.c.h.b16 %v6143
      %v6477 = vunpack.c.l.b16 %v6144
      %v6478 = vunpack.c.h.b16 %v6144
      %v6479 = vunpack.c.l.b16 %v6145
      %v6480 = vunpack.c.h.b16 %v6145
      %v6481 = vunpack.c.l.b16 %v6146
      %v6482 = vunpack.c.h.b16 %v6146
      %v6483 = vunpack.c.l.b16 %v6147
      %v6484 = vunpack.c.h.b16 %v6147
      %v6485 = vunpack.c.l.b16 %v6148
      %v6486 = vunpack.c.h.b16 %v6148
      %v6487 = vunpack.c.l.b16 %v6149
      %v6488 = vunpack.c.h.b16 %v6149
      %v6489 = vunpack.c.l.b16 %v6150
      %v6490 = vunpack.c.h.b16 %v6150
      %v6491 = vunpack.c.l.b16 %v6151
      %v6492 = vunpack.c.h.b16 %v6151
      %v6493 = vunpack.c.l.b16 %v6152
      %v6494 = vunpack.c.h.b16 %v6152
      %v6495 = vunpack.c.l.b16 %v6153
      %v6496 = vunpack.c.h.b16 %v6153
      %v6497 = vunpack.c.l.b16 %v6154
      %v6498 = vunpack.c.h.b16 %v6154
      %v6499 = vunpack.c.l.b16 %v6155
      %v6500 = vunpack.c.h.b16 %v6155
      %v6501 = vunpack.c.l.b16 %v6156
      %v6502 = vunpack.c.h.b16 %v6156
      %v6503 = vunpack.c.l.b16 %v6157
      %v6504 = vunpack.c.h.b16 %v6157
      %v6505 = vunpack.c.l.b16 %v6158
      %v6506 = vunpack.c.h.b16 %v6158
      %v6507 = vunpack.c.l.b16 %v6159
      %v6508 = vunpack.c.h.b16 %v6159
      %v6509 = vunpack.c.l.b16 %v6160
      %v6510 = vunpack.c.h.b16 %v6160
      %v6511 = vunpack.c.l.b16 %v6161
      %v6512 = vunpack.c.h.b16 %v6161
      %v6513 = vunpack.c.l.b16 %v6162
      %v6514 = vunpack.c.h.b16 %v6162
      %v6515 = vunpack.c.l.b16 %v6163
      %v6516 = vunpack.c.h.b16 %v6163
      %v6517 = vunpack.c.l.b16 %v6164
      %v6518 = vunpack.c.h.b16 %v6164
      %v6519 = vunpack.c.l.b16 %v6165
      %v6520 = vunpack.c.h.b16 %v6165
      %v6521 = vunpack.c.l.b16 %v6166
      %v6522 = vunpack.c.h.b16 %v6166
      %v6523 = vunpack.c.l.b16 %v6167
      %v6524 = vunpack.c.h.b16 %v6167
      %v6525 = vunpack.c.l.b16 %v6168
      %v6526 = vunpack.c.h.b16 %v6168
      %v6527 = vunpack.c.l.b16 %v6169
      %v6528 = vunpack.c.h.b16 %v6169
      %v6529 = vunpack.c.l.b16 %v6170
      %v6530 = vunpack.c.h.b16 %v6170
      %v6531 = vunpack.c.l.b16 %v6171
      %v6532 = vunpack.c.h.b16 %v6171
      %v6533 = vunpack.c.l.b16 %v6172
      %v6534 = vunpack.c.h.b16 %v6172
      %v6535 = vunpack.c.l.b16 %v6173
      %v6536 = vunpack.c.h.b16 %v6173
      %v6537 = vunpack.c.l.b16 %v6174
      %v6538 = vunpack.c.h.b16 %v6174
      %v6539 = vunpack.c.l.b16 %v6175
      %v6540 = vunpack.c.h.b16 %v6175
      %v6541 = vunpack.c.l.b16 %v6176
      %v6542 = vunpack.c.h.b16 %v6176
      %v6543 = vunpack.c.l.b16 %v6177
      %v6544 = vunpack.c.h.b16 %v6177
      %v6545 = vunpack.c.l.b16 %v6178
      %v6546 = vunpack.c.h.b16 %v6178
      %v6547 = vunpack.c.l.b16 %v6179
      %v6548 = vunpack.c.h.b16 %v6179
      %v6549 = vunpack.c.l.b16 %v6180
      %v6550 = vunpack.c.h.b16 %v6180
      %v6551 = vunpack.c.l.b16 %v6181
      %v6552 = vunpack.c.h.b16 %v6181
      %v6553 = vunpack.c.l.b16 %v6182
      %v6554 = vunpack.c.h.b16 %v6182
      %v6555 = vunpack.c.l.b16 %v6183
      %v6556 = vunpack.c.h.b16 %v6183
      %v6557 = vunpack.c.l.b16 %v6184
      %v6558 = vunpack.c.h.b16 %v6184
      %v6559 = vunpack.c.l.b16 %v6185
      %v6560 = vunpack.c.h.b16 %v6185
      %v6561 = vunpack.c.l.b16 %v6186
      %v6562 = vunpack.c.h.b16 %v6186
      %v6563 = vunpack.c.l.b16 %v6187
      %v6564 = vunpack.c.h.b16 %v6187
      %v6565 = vunpack.c.l.b16 %v6188
      %v6566 = vunpack.c.h.b16 %v6188
      %v6567 = vunpack.c.l.b16 %v6189
      %v6568 = vunpack.c.h.b16 %v6189
      %v6569 = vunpack.c.l.b16 %v6190
      %v6570 = vunpack.c.h.b16 %v6190
      %v6571 = vunpack.c.l.b16 %v6191
      %v6572 = vunpack.c.h.b16 %v6191
      %v6573 = vunpack.c.l.b16 %v6192
      %v6574 = vunpack.c.h.b16 %v6192
      %v6575 = vunpack.c.l.b16 %v6193
      %v6576 = vunpack.c.h.b16 %v6193
      %v6577 = vunpack.c.l.b16 %v6194
      %v6578 = vunpack.c.h.b16 %v6194
      %v6579 = vunpack.c.l.b16 %v6195
      %v6580 = vunpack.c.h.b16 %v6195
      %v6581 = vunpack.c.l.b16 %v6196
      %v6582 = vunpack.c.h.b16 %v6196
      %v6583 = vunpack.c.l.b16 %v6197
      %v6584 = vunpack.c.h.b16 %v6197
      %v6585 = vunpack.c.l.b16 %v6198
      %v6586 = vunpack.c.h.b16 %v6198
      %v6587 = vunpack.c.l.b16 %v6199
      %v6588 = vunpack.c.h.b16 %v6199
      %v6589 = vunpack.c.l.b16 %v6200
      %v6590 = vunpack.c.h.b16 %v6200
      %v6591 = vunpack.c.l.b16 %v6201
      %v6592 = vunpack.c.h.b16 %v6201
      %v6593 = vunpack.c.l.b16 %v6202
      %v6594 = vunpack.c.h.b16 %v6202
      %v6595 = vunpack.c.l.b16 %v6203
      %v6596 = vunpack.c.h.b16 %v6203
      %v6597 = vunpack.c.l.b16 %v6204
      %v6598 = vunpack.c.h.b16 %v6204
      %v6599 = vunpack.c.l.b16 %v6205
      %v6600 = vunpack.c.h.b16 %v6205
      %v6601 = vunpack.c.l.b16 %v6206
      %v6602 = vunpack.c.h.b16 %v6206
      %v6603 = vunpack.c.l.b16 %v6207
      %v6604 = vunpack.c.h.b16 %v6207
      %v6605 = vunpack.c.l.b16 %v6208
      %v6606 = vunpack.c.h.b16 %v6208
      %v6607 = vunpack.c.l.b16 %v6209
      %v6608 = vunpack.c.h.b16 %v6209
      %v6609 = vunpack.c.l.b16 %v6210
      %v6610 = vunpack.c.h.b16 %v6210
      %v6611 = vunpack.c.l.b16 %v6211
      %v6612 = vunpack.c.h.b16 %v6211
      %v6613 = vunpack.c.l.b16 %v6212
      %v6614 = vunpack.c.h.b16 %v6212
      %v6615 = vunpack.c.l.b16 %v6213
      %v6616 = vunpack.c.h.b16 %v6213
      %v6617 = vunpack.c.l.b16 %v6214
      %v6618 = vunpack.c.h.b16 %v6214
      %v6619 = vunpack.c.l.b16 %v6215
      %v6620 = vunpack.c.h.b16 %v6215
      %v6621 = vunpack.c.l.b16 %v6216
      %v6622 = vunpack.c.h.b16 %v6216
      %v6623 = vunpack.c.l.b16 %v6217
      %v6624 = vunpack.c.h.b16 %v6217
      %v6625 = vunpack.c.l.b16 %v6218
      %v6626 = vunpack.c.h.b16 %v6218
      %v6627 = vunpack.c.l.b16 %v6219
      %v6628 = vunpack.c.h.b16 %v6219
      %v6629 = vunpack.c.l.b16 %v6220
      %v6630 = vunpack.c.h.b16 %v6220
      %v6631 = vunpack.c.l.b16 %v6221
      %v6632 = vunpack.c.h.b16 %v6221
      %v6633 = vunpack.c.l.b16 %v6222
      %v6634 = vunpack.c.h.b16 %v6222
      %v6635 = vunpack.c.l.b16 %v6223
      %v6636 = vunpack.c.h.b16 %v6223
      %v6637 = vunpack.c.l.b16 %v6224
      %v6638 = vunpack.c.h.b16 %v6224
      %v6639 = vunpack.c.l.b16 %v6225
      %v6640 = vunpack.c.h.b16 %v6225
      %v6641 = vunpack.c.l.b16 %v6226
      %v6642 = vunpack.c.h.b16 %v6226
      %v6643 = vunpack.c.l.b16 %v6227
      %v6644 = vunpack.c.h.b16 %v6227
      %v6645 = vunpack.c.l.b16 %v6228
      %v6646 = vunpack.c.h.b16 %v6228
      %v6647 = vunpack.c.l.b16 %v6229
      %v6648 = vunpack.c.h.b16 %v6229
      %v6649 = vunpack.c.l.b16 %v6230
      %v6650 = vunpack.c.h.b16 %v6230
      %v6651 = vunpack.c.l.b16 %v6231
      %v6652 = vunpack.c.h.b16 %v6231
      %v6653 = vunpack.c.l.b16 %v6232
      %v6654 = vunpack.c.h.b16 %v6232
      %v6655 = vunpack.c.l.b16 %v6233
      %v6656 = vunpack.c.h.b16 %v6233
      %v6657 = vunpack.c.l.b16 %v6234
      %v6658 = vunpack.c.h.b16 %v6234
      %v6659 = vunpack.c.l.b16 %v6235
      %v6660 = vunpack.c.h.b16 %v6235
      %v6661 = vunpack.c.l.b16 %v6236
      %v6662 = vunpack.c.h.b16 %v6236
      %v6663 = vunpack.c.l.b16 %v6237
      %v6664 = vunpack.c.h.b16 %v6237
      %v6665 = vunpack.c.l.b16 %v6238
      %v6666 = vunpack.c.h.b16 %v6238
      %v6667 = vunpack.c.l.b16 %v6239
      %v6668 = vunpack.c.h.b16 %v6239
      %v6669 = vunpack.c.l.b16 %v6240
      %v6670 = vunpack.c.h.b16 %v6240
      %v6671 = vunpack.c.l.b16 %v6241
      %v6672 = vunpack.c.h.b16 %v6241
      %v6673 = vunpack.c.l.b16 %v6242
      %v6674 = vunpack.c.h.b16 %v6242
      %v6675 = vunpack.c.l.b16 %v6243
      %v6676 = vunpack.c.h.b16 %v6243
      %v6677 = vunpack.c.l.b16 %v6244
      %v6678 = vunpack.c.h.b16 %v6244
      %v6679 = vunpack.c.l.b16 %v6245
      %v6680 = vunpack.c.h.b16 %v6245
      %v6681 = vunpack.c.l.b16 %v6246
      %v6682 = vunpack.c.h.b16 %v6246
      %v6683 = vunpack.c.l.b16 %v6247
      %v6684 = vunpack.c.h.b16 %v6247
      %v6685 = vunpack.c.l.b16 %v6248
      %v6686 = vunpack.c.h.b16 %v6248
      %v6687 = vunpack.c.l.b16 %v6249
      %v6688 = vunpack.c.h.b16 %v6249
      %v6689 = vunpack.c.l.b16 %v6250
      %v6690 = vunpack.c.h.b16 %v6250
      %v6691 = vunpack.c.l.b16 %v6251
      %v6692 = vunpack.c.h.b16 %v6251
      %v6693 = vunpack.c.l.b16 %v6252
      %v6694 = vunpack.c.h.b16 %v6252
      %v6695 = vunpack.c.l.b16 %v6253
      %v6696 = vunpack.c.h.b16 %v6253
      %v6697 = vunpack.c.l.b16 %v6254
      %v6698 = vunpack.c.h.b16 %v6254
      %v6699 = vpack.c.b16 %v6413, %v6411
      %v6700 = vpack.c.b16 %v6414, %v6412
      %v6701 = vpack.c.b16 %v6417, %v6415
      %v6702 = vpack.c.b16 %v6418, %v6416
      %v6703 = vpack.c.b16 %v6421, %v6419
      %v6704 = vpack.c.b16 %v6422, %v6420
      %v6705 = vpack.c.b16 %v6425, %v6423
      %v6706 = vpack.c.b16 %v6426, %v6424
      %v6707 = vpack.c.b16 %v6429, %v6427
      %v6708 = vpack.c.b16 %v6430, %v6428
      %v6709 = vpack.c.b16 %v6433, %v6431
      %v6710 = vpack.c.b16 %v6434, %v6432
      %v6711 = vpack.c.b16 %v6437, %v6435
      %v6712 = vpack.c.b16 %v6438, %v6436
      %v6713 = vpack.c.b16 %v6441, %v6439
      %v6714 = vpack.c.b16 %v6442, %v6440
      %v6715 = vpack.c.b16 %v6445, %v6443
      %v6716 = vpack.c.b16 %v6446, %v6444
      %v6717 = vpack.c.b16 %v6449, %v6447
      %v6718 = vpack.c.b16 %v6450, %v6448
      %v6719 = vpack.c.b16 %v6453, %v6451
      %v6720 = vpack.c.b16 %v6454, %v6452
      %v6721 = vpack.c.b16 %v6457, %v6455
      %v6722 = vpack.c.b16 %v6458, %v6456
      %v6723 = vpack.c.b16 %v6461, %v6459
      %v6724 = vpack.c.b16 %v6462, %v6460
      %v6725 = vpack.c.b16 %v6465, %v6463
      %v6726 = vpack.c.b16 %v6466, %v6464
      %v6727 = vpack.c.b16 %v6469, %v6467
      %v6728 = vpack.c.b16 %v6470, %v6468
      %v6729 = vpack.c.b16 %v6473, %v6471
      %v6730 = vpack.c.b16 %v6474, %v6472
      %v6731 = vpack.c.b16 %v6477, %v6475
      %v6732 = vpack.c.b16 %v6478, %v6476
      %v6733 = vpack.c.b16 %v6481, %v6479
      %v6734 = vpack.c.b16 %v6482, %v6480
      %v6735 = vpack.c.b16 %v6485, %v6483
      %v6736 = vpack.c.b16 %v6486, %v6484
      %v6737 = vpack.c.b16 %v6489, %v6487
      %v6738 = vpack.c.b16 %v6490, %v6488
      %v6739 = vpack.c.b16 %v6493, %v6491
      %v6740 = vpack.c.b16 %v6494, %v6492
      %v6741 = vpack.c.b16 %v6497, %v6495
      %v6742 = vpack.c.b16 %v6498, %v6496
      %v6743 = vpack.c.b16 %v6501, %v6499
      %v6744 = vpack.c.b16 %v6502, %v6500
      %v6745 = vpack.c.b16 %v6505, %v6503
      %v6746 = vpack.c.b16 %v6506, %v6504
      %v6747 = vpack.c.b16 %v6509, %v6507
      %v6748 = vpack.c.b16 %v6510, %v6508
      %v6749 = vpack.c.b16 %v6513, %v6511
      %v6750 = vpack.c.b16 %v6514, %v6512
      %v6751 = vpack.c.b16 %v6517, %v6515
      %v6752 = vpack.c.b16 %v6518, %v6516
      %v6753 = vpack.c.b16 %v6521, %v6519
      %v6754 = vpack.c.b16 %v6522, %v6520
      %v6755 = vpack.c.b16 %v6525, %v6523
      %v6756 = vpack.c.b16 %v6526, %v6524
      %v6757 = vpack.c.b16 %v6529, %v6527
      %v6758 = vpack.c.b16 %v6530, %v6528
      %v6759 = vpack.c.b16 %v6533, %v6531
      %v6760 = vpack.c.b16 %v6534, %v6532
      %v6761 = vpack.c.b16 %v6537, %v6535
      %v6762 = vpack.c.b16 %v6538, %v6536
      %v6763 = vpack.c.b16 %v6541, %v6539
      %v6764 = vpack.c.b16 %v6542, %v6540
      %v6765 = vpack.c.b16 %v6545, %v6543
      %v6766 = vpack.c.b16 %v6546, %v6544
      %v6767 = vpack.c.b16 %v6549, %v6547
      %v6768 = vpack.c.b16 %v6550, %v6548
      %v6769 = vpack.c.b16 %v6553, %v6551
      %v6770 = vpack.c.b16 %v6554, %v6552
      %v6771 = vpack.c.b16 %v6557, %v6555
      %v6772 = vpack.c.b16 %v6558, %v6556
      %v6773 = vpack.c.b16 %v6561, %v6559
      %v6774 = vpack.c.b16 %v6562, %v6560
      %v6775 = vpack.c.b16 %v6565, %v6563
      %v6776 = vpack.c.b16 %v6566, %v6564
      %v6777 = vpack.c.b16 %v6569, %v6567
      %v6778 = vpack.c.b16 %v6570, %v6568
      %v6779 = vpack.c.b16 %v6573, %v6571
      %v6780 = vpack.c.b16 %v6574, %v6572
      %v6781 = vpack.c.b16 %v6577, %v6575
      %v6782 = vpack.c.b16 %v6578, %v6576
      %v6783 = vpack.c.b16 %v6581, %v6579
      %v6784 = vpack.c.b16 %v6582, %v6580
      %v6785 = vpack.c.b16 %v6585, %v6583
      %v6786 = vpack.c.b16 %v6586, %v6584
      %v6787 = vpack.c.b16 %v6589, %v6587
      %v6788 = vpack.c.b16 %v6590, %v6588
      %v6789 = vpack.c.b16 %v6593, %v6591
      %v6790 = vpack.c.b16 %v6594, %v6592
      %v6791 = vpack.c.b16 %v6597, %v6595
      %v6792 = vpack.c.b16 %v6598, %v6596
      %v6793 = vpack.c.b16 %v6601, %v6599
      %v6794 = vpack.c.b16 %v6602, %v6600
      %v6795 = vpack.c.b16 %v6605, %v6603
      %v6796 = vpack.c.b16 %v6606, %v6604
      %v6797 = vpack.c.b16 %v6609, %v6607
      %v6798 = vpack.c.b16 %v6610, %v6608
      %v6799 = vpack.c.b16 %v6613, %v6611
      %v6800 = vpack.c.b16 %v6614, %v6612
      %v6801 = vpack.c.b16 %v6617, %v6615
      %v6802 = vpack.c.b16 %v6618, %v6616
      %v6803 = vpack.c.b16 %v6621, %v6619
      %v6804 = vpack.c.b16 %v6622, %v6620
      %v6805 = vpack.c.b16 %v6625, %v6623
      %v6806 = vpack.c.b16 %v6626, %v6624
      %v6807 = vpack.c.b16 %v6629, %v6627
      %v6808 = vpack.c.b16 %v6630, %v6628
      %v6809 = vpack.c.b16 %v6633, %v6631
      %v6810 = vpack.c.b16 %v6634, %v6632
      %v6811 = vpack.c.b16 %v6637, %v6635
      %v6812 = vpack.c.b16 %v6638, %v6636
      %v6813 = vpack.c.b16 %v6641, %v6639
      %v6814 = vpack.c.b16 %v6642, %v6640
      %v6815 = vpack.c.b16 %v6645, %v6643
      %v6816 = vpack.c.b16 %v6646, %v6644
      %v6817 = vpack.c.b16 %v6649, %v6647
      %v6818 = vpack.c.b16 %v6650, %v6648
      %v6819 = vpack.c.b16 %v6653, %v6651
      %v6820 = vpack.c.b16 %v6654, %v6652
      %v6821 = vpack.c.b16 %v6657, %v6655
      %v6822 = vpack.c.b16 %v6658, %v6656
      %v6823 = vpack.c.b16 %v6661, %v6659
      %v6824 = vpack.c.b16 %v6662, %v6660
      %v6825 = vpack.c.b16 %v6665, %v6663
      %v6826 = vpack.c.b16 %v6666, %v6664
      %v6827 = vpack.c.b16 %v6669, %v6667
      %v6828 = vpack.c.b16 %v6670, %v6668
      %v6829 = vpack.c.b16 %v6673, %v6671
      %v6830 = vpack.c.b16 %v6674, %v6672
      %v6831 = vpack.c.b16 %v6677, %v6675
      %v6832 = vpack.c.b16 %v6678, %v6676
      %v6833 = vpack.c.b16 %v6681, %v6679
      %v6834 = vpack.c.b16 %v6682, %v6680
      %v6835 = vpack.c.b16 %v6685, %v6683
      %v6836 = vpack.c.b16 %v6686, %v6684
      %v6837 = vpack.c.b16 %v6689, %v6687
      %v6838 = vpack.c.b16 %v6690, %v6688
      %v6839 = vpack.c.b16 %v6693, %v6691
      %v6840 = vpack.c.b16 %v6694, %v6692
      %v6841 = vpack.c.b16 %v6697, %v6695
      %v6842 = vpack.c.b16 %v6698, %v6696
      %6987 = vmatprep.subr.bf16.mxu0 %v6700
      %6988 = vmatpush1.bf16.msra.mxu0 %v6699
      %6989 = vmatprep.subr.bf16.mxu0 %v6702
      %6990 = vmatpush1.bf16.msra.mxu0 %v6701
      %6991 = vmatprep.subr.bf16.mxu0 %v6704
      %6992 = vmatpush1.bf16.msra.mxu0 %v6703
      %6993 = vmatprep.subr.bf16.mxu0 %v6706
      %6994 = vmatpush1.bf16.msra.mxu0 %v6705
      %6995 = vmatprep.subr.bf16.mxu0 %v6708
      %6996 = vmatpush1.bf16.msra.mxu0 %v6707
      %6997 = vmatprep.subr.bf16.mxu0 %v6710
      %6998 = vmatpush1.bf16.msra.mxu0 %v6709
      %6999 = vmatprep.subr.bf16.mxu0 %v6712
      %7000 = vmatpush1.bf16.msra.mxu0 %v6711
      %7001 = vmatprep.subr.bf16.mxu0 %v6714
      %7002 = vmatpush1.bf16.msra.mxu0 %v6713
      %7003 = vmatprep.subr.bf16.mxu0 %v6716
      %7004 = vmatpush1.bf16.msra.mxu0 %v6715
      %7005 = vmatprep.subr.bf16.mxu0 %v6718
      %7006 = vmatpush1.bf16.msra.mxu0 %v6717
      %7007 = vmatprep.subr.bf16.mxu0 %v6720
      %7008 = vmatpush1.bf16.msra.mxu0 %v6719
      %7009 = vmatprep.subr.bf16.mxu0 %v6722
      %7010 = vmatpush1.bf16.msra.mxu0 %v6721
      %7011 = vmatprep.subr.bf16.mxu0 %v6724
      %7012 = vmatpush1.bf16.msra.mxu0 %v6723
      %7013 = vmatprep.subr.bf16.mxu0 %v6726
      %7014 = vmatpush1.bf16.msra.mxu0 %v6725
      %7015 = vmatprep.subr.bf16.mxu0 %v6728
      %7016 = vmatpush1.bf16.msra.mxu0 %v6727
      %7017 = vmatprep.subr.bf16.mxu0 %v6730
      %7018 = vmatpush1.bf16.msra.mxu0 %v6729
      %7019 = vmatprep.mubr.bf16.mxu0 %v6085
      %7020 = vmatmul.mubr.bf16.gmra.mrb[0].mxu0 %v6084
      %v7021 = vpop.f32.mrb[0].mxu0
      %v7022 = vadd.f32 %v6260, %v7021
      %v7023 = vpop.f32.mrb[0].mxu0
      %v7024 = vadd.f32 %v6264, %v7023
      %v7025 = vpop.f32.mrb[0].mxu0
      %v7026 = vadd.f32 %v6260, %v7025
      %v7027 = vpop.f32.mrb[0].mxu0
      %v7028 = vadd.f32 %v6264, %v7027
      %7029 = vmatprep.mubr.bf16.mxu0 %v6094
      %7030 = vmatmul.mubr.bf16.gmra.mrb[0].mxu0 %v6093
      %v7031 = vpop.f32.mrb[0].mxu0
      %v7032 = vadd.f32 %v6260, %v7031
      %v7033 = vpop.f32.mrb[0].mxu0
      %v7034 = vadd.f32 %v6264, %v7033
      %v7035 = vpop.f32.mrb[0].mxu0
      %v7036 = vadd.f32 %v6260, %v7035
      %v7037 = vpop.f32.mrb[0].mxu0
      %v7038 = vadd.f32 %v6264, %v7037
      %7039 = vmatprep.mubr.bf16.mxu0 %v6103
      %7040 = vmatmul.mubr.bf16.gmra.mrb[0].mxu0 %v6102
      %v7041 = vpop.f32.mrb[0].mxu0
      %v7042 = vadd.f32 %v6260, %v7041
      %v7043 = vpop.f32.mrb[0].mxu0
      %v7044 = vadd.f32 %v6264, %v7043
      %v7045 = vpop.f32.mrb[0].mxu0
      %v7046 = vadd.f32 %v6260, %v7045
      %v7047 = vpop.f32.mrb[0].mxu0
      %v7048 = vadd.f32 %v6264, %v7047
      %7049 = vdwg.mxu0
      %7050 = vmatprep.subr.bf16.mxu0 %v6732
      %7051 = vmatpush1.bf16.msra.mxu0 %v6731
      %7052 = vmatprep.subr.bf16.mxu0 %v6734
      %7053 = vmatpush1.bf16.msra.mxu0 %v6733
      %7054 = vmatprep.subr.bf16.mxu0 %v6736
      %7055 = vmatpush1.bf16.msra.mxu0 %v6735
      %7056 = vmatprep.subr.bf16.mxu0 %v6738
      %7057 = vmatpush1.bf16.msra.mxu0 %v6737
      %7058 = vmatprep.subr.bf16.mxu0 %v6740
      %7059 = vmatpush1.bf16.msra.mxu0 %v6739
      %7060 = vmatprep.subr.bf16.mxu0 %v6742
      %7061 = vmatpush1.bf16.msra.mxu0 %v6741
      %7062 = vmatprep.subr.bf16.mxu0 %v6744
      %7063 = vmatpush1.bf16.msra.mxu0 %v6743
      %7064 = vmatprep.subr.bf16.mxu0 %v6746
      %7065 = vmatpush1.bf16.msra.mxu0 %v6745
      %7066 = vmatprep.subr.bf16.mxu0 %v6748
      %7067 = vmatpush1.bf16.msra.mxu0 %v6747
      %7068 = vmatprep.subr.bf16.mxu0 %v6750
      %7069 = vmatpush1.bf16.msra.mxu0 %v6749
      %7070 = vmatprep.subr.bf16.mxu0 %v6752
      %7071 = vmatpush1.bf16.msra.mxu0 %v6751
      %7072 = vmatprep.subr.bf16.mxu0 %v6754
      %7073 = vmatpush1.bf16.msra.mxu0 %v6753
      %7074 = vmatprep.subr.bf16.mxu0 %v6756
      %7075 = vmatpush1.bf16.msra.mxu0 %v6755
      %7076 = vmatprep.subr.bf16.mxu0 %v6758
      %7077 = vmatpush1.bf16.msra.mxu0 %v6757
      %7078 = vmatprep.subr.bf16.mxu0 %v6760
      %7079 = vmatpush1.bf16.msra.mxu0 %v6759
      %7080 = vmatprep.subr.bf16.mxu0 %v6762
      %7081 = vmatpush1.bf16.msra.mxu0 %v6761
      %7082 = vmatprep.mubr.bf16.mxu0 %v6087
      %7083 = vmatmul.mubr.bf16.gmra.mrb[0].mxu0 %v6086
      %v7084 = vpop.f32.mrb[0].mxu0
      %v7085 = vadd.f32 %v7022, %v7084
      %v7086 = vpop.f32.mrb[0].mxu0
      %v7087 = vadd.f32 %v7024, %v7086
      %v7088 = vpop.f32.mrb[0].mxu0
      %v7089 = vadd.f32 %v7026, %v7088
      %v7090 = vpop.f32.mrb[0].mxu0
      %v7091 = vadd.f32 %v7028, %v7090
      %7092 = vmatprep.mubr.bf16.mxu0 %v6096
      %7093 = vmatmul.mubr.bf16.gmra.mrb[0].mxu0 %v6095
      %v7094 = vpop.f32.mrb[0].mxu0
      %v7095 = vadd.f32 %v7032, %v7094
      %v7096 = vpop.f32.mrb[0].mxu0
      %v7097 = vadd.f32 %v7034, %v7096
      %v7098 = vpop.f32.mrb[0].mxu0
      %v7099 = vadd.f32 %v7036, %v7098
      %v7100 = vpop.f32.mrb[0].mxu0
      %v7101 = vadd.f32 %v7038, %v7100
      %7102 = vmatprep.mubr.bf16.mxu0 %v6105
      %7103 = vmatmul.mubr.bf16.gmra.mrb[0].mxu0 %v6104
      %v7104 = vpop.f32.mrb[0].mxu0
      %v7105 = vadd.f32 %v7042, %v7104
      %v7106 = vpop.f32.mrb[0].mxu0
      %v7107 = vadd.f32 %v7044, %v7106
      %v7108 = vpop.f32.mrb[0].mxu0
      %v7109 = vadd.f32 %v7046, %v7108
      %v7110 = vpop.f32.mrb[0].mxu0
      %v7111 = vadd.f32 %v7048, %v7110
      %7112 = vdwg.mxu0
      %7113 = vmatprep.subr.bf16.mxu0 %v6764
      %7114 = vmatpush1.bf16.msra.mxu0 %v6763
      %7115 = vmatprep.subr.bf16.mxu0 %v6766
      %7116 = vmatpush1.bf16.msra.mxu0 %v6765
      %7117 = vmatprep.subr.bf16.mxu0 %v6768
      %7118 = vmatpush1.bf16.msra.mxu0 %v6767
      %7119 = vmatprep.subr.bf16.mxu0 %v6770
      %7120 = vmatpush1.bf16.msra.mxu0 %v6769
      %7121 = vmatprep.subr.bf16.mxu0 %v6772
      %7122 = vmatpush1.bf16.msra.mxu0 %v6771
      %7123 = vmatprep.subr.bf16.mxu0 %v6774
      %7124 = vmatpush1.bf16.msra.mxu0 %v6773
      %7125 = vmatprep.subr.bf16.mxu0 %v6776
      %7126 = vmatpush1.bf16.msra.mxu0 %v6775
      %7127 = vmatprep.subr.bf16.mxu0 %v6778
      %7128 = vmatpush1.bf16.msra.mxu0 %v6777
      %7129 = vmatprep.subr.bf16.mxu0 %v6780
      %7130 = vmatpush1.bf16.msra.mxu0 %v6779
      %7131 = vmatprep.subr.bf16.mxu0 %v6782
      %7132 = vmatpush1.bf16.msra.mxu0 %v6781
      %7133 = vmatprep.subr.bf16.mxu0 %v6784
      %7134 = vmatpush1.bf16.msra.mxu0 %v6783
      %7135 = vmatprep.subr.bf16.mxu0 %v6786
      %7136 = vmatpush1.bf16.msra.mxu0 %v6785
      %7137 = vmatprep.subr.bf16.mxu0 %v6788
      %7138 = vmatpush1.bf16.msra.mxu0 %v6787
      %7139 = vmatprep.subr.bf16.mxu0 %v6790
      %7140 = vmatpush1.bf16.msra.mxu0 %v6789
      %7141 = vmatprep.subr.bf16.mxu0 %v6792
      %7142 = vmatpush1.bf16.msra.mxu0 %v6791
      %7143 = vmatprep.subr.bf16.mxu0 %v6794
      %7144 = vmatpush1.bf16.msra.mxu0 %v6793
      %7145 = vmatprep.mubr.bf16.mxu0 %v6089
      %7146 = vmatmul.mubr.bf16.gmra.mrb[0].mxu0 %v6088
      %v7147 = vpop.f32.mrb[0].mxu0
      %v7148 = vadd.f32 %v7085, %v7147
      %v7149 = vpop.f32.mrb[0].mxu0
      %v7150 = vadd.f32 %v7087, %v7149
      %v7151 = vpop.f32.mrb[0].mxu0
      %v7152 = vadd.f32 %v7089, %v7151
      %v7153 = vpop.f32.mrb[0].mxu0
      %v7154 = vadd.f32 %v7091, %v7153
      %7155 = vmatprep.mubr.bf16.mxu0 %v6098
      %7156 = vmatmul.mubr.bf16.gmra.mrb[0].mxu0 %v6097
      %v7157 = vpop.f32.mrb[0].mxu0
      %v7158 = vadd.f32 %v7095, %v7157
      %v7159 = vpop.f32.mrb[0].mxu0
      %v7160 = vadd.f32 %v7097, %v7159
      %v7161 = vpop.f32.mrb[0].mxu0
      %v7162 = vadd.f32 %v7099, %v7161
      %v7163 = vpop.f32.mrb[0].mxu0
      %v7164 = vadd.f32 %v7101, %v7163
      %7165 = vmatprep.mubr.bf16.mxu0 %v6107
      %7166 = vmatmul.mubr.bf16.gmra.mrb[0].mxu0 %v6106
      %v7167 = vpop.f32.mrb[0].mxu0
      %v7168 = vadd.f32 %v7105, %v7167
      %v7169 = vpop.f32.mrb[0].mxu0
      %v7170 = vadd.f32 %v7107, %v7169
      %v7171 = vpop.f32.mrb[0].mxu0
      %v7172 = vadd.f32 %v7109, %v7171
      %v7173 = vpop.f32.mrb[0].mxu0
      %v7174 = vadd.f32 %v7111, %v7173
      %7175 = vdwg.mxu0
      %7176 = vmatprep.subr.bf16.mxu0 %v6796
      %7177 = vmatpush1.bf16.msra.mxu0 %v6795
      %7178 = vmatprep.subr.bf16.mxu0 %v6798
      %7179 = vmatpush1.bf16.msra.mxu0 %v6797
      %7180 = vmatprep.subr.bf16.mxu0 %v6800
      %7181 = vmatpush1.bf16.msra.mxu0 %v6799
      %7182 = vmatprep.subr.bf16.mxu0 %v6802
      %7183 = vmatpush1.bf16.msra.mxu0 %v6801
      %7184 = vmatprep.subr.bf16.mxu0 %v6804
      %7185 = vmatpush1.bf16.msra.mxu0 %v6803
      %7186 = vmatprep.subr.bf16.mxu0 %v6806
      %7187 = vmatpush1.bf16.msra.mxu0 %v6805
      %7188 = vmatprep.subr.bf16.mxu0 %v6808
      %7189 = vmatpush1.bf16.msra.mxu0 %v6807
      %7190 = vmatprep.subr.bf16.mxu0 %v6810
      %7191 = vmatpush1.bf16.msra.mxu0 %v6809
      %7192 = vmatprep.subr.bf16.mxu0 %v6812
      %7193 = vmatpush1.bf16.msra.mxu0 %v6811
      %7194 = vmatprep.subr.bf16.mxu0 %v6814
      %7195 = vmatpush1.bf16.msra.mxu0 %v6813
      %7196 = vmatprep.subr.bf16.mxu0 %v6816
      %7197 = vmatpush1.bf16.msra.mxu0 %v6815
      %7198 = vmatprep.subr.bf16.mxu0 %v6818
      %7199 = vmatpush1.bf16.msra.mxu0 %v6817
      %7200 = vmatprep.subr.bf16.mxu0 %v6820
      %7201 = vmatpush1.bf16.msra.mxu0 %v6819
      %7202 = vmatprep.subr.bf16.mxu0 %v6822
      %7203 = vmatpush1.bf16.msra.mxu0 %v6821
      %7204 = vmatprep.subr.bf16.mxu0 %v6824
      %7205 = vmatpush1.bf16.msra.mxu0 %v6823
      %7206 = vmatprep.subr.bf16.mxu0 %v6826
      %7207 = vmatpush1.bf16.msra.mxu0 %v6825
      %7208 = vmatprep.mubr.bf16.mxu0 %v6091
      %7209 = vmatmul.mubr.bf16.gmra.mrb[0].mxu0 %v6090
      %v7210 = vpop.f32.mrb[0].mxu0
      %v7211 = vadd.f32 %v7148, %v7210
      %v7212 = vpop.f32.mrb[0].mxu0
      %v7213 = vadd.f32 %v7150, %v7212
      %v7214 = vpop.f32.mrb[0].mxu0
      %v7215 = vadd.f32 %v7152, %v7214
      %v7216 = vpop.f32.mrb[0].mxu0
      %v7217 = vadd.f32 %v7154, %v7216
      %7218 = vmatprep.mubr.bf16.mxu0 %v6100
      %7219 = vmatmul.mubr.bf16.gmra.mrb[0].mxu0 %v6099
      %v7220 = vpop.f32.mrb[0].mxu0
      %v7221 = vadd.f32 %v7158, %v7220
      %v7222 = vpop.f32.mrb[0].mxu0
      %v7223 = vadd.f32 %v7160, %v7222
      %v7224 = vpop.f32.mrb[0].mxu0
      %v7225 = vadd.f32 %v7162, %v7224
      %v7226 = vpop.f32.mrb[0].mxu0
      %v7227 = vadd.f32 %v7164, %v7226
      %7228 = vmatprep.mubr.bf16.mxu0 %v6109
      %7229 = vmatmul.mubr.bf16.gmra.mrb[0].mxu0 %v6108
      %v7230 = vpop.f32.mrb[0].mxu0
      %v7231 = vadd.f32 %v7168, %v7230
      %v7232 = vpop.f32.mrb[0].mxu0
      %v7233 = vadd.f32 %v7170, %v7232
      %v7234 = vpop.f32.mrb[0].mxu0
      %v7235 = vadd.f32 %v7172, %v7234
      %v7236 = vpop.f32.mrb[0].mxu0
      %v7237 = vadd.f32 %v7174, %v7236
      %7238 = vdwg.mxu0
      %7239 = vmatprep.subr.bf16.mxu0 %v6828
      %7240 = vmatpush1.bf16.msra.mxu0 %v6827
      %7241 = vmatprep.subr.bf16.mxu0 %v6830
      %7242 = vmatpush1.bf16.msra.mxu0 %v6829
      %7243 = vmatprep.subr.bf16.mxu0 %v6832
      %7244 = vmatpush1.bf16.msra.mxu0 %v6831
      %7245 = vmatprep.subr.bf16.mxu0 %v6834
      %7246 = vmatpush1.bf16.msra.mxu0 %v6833
      %7247 = vmatprep.subr.bf16.mxu0 %v6836
      %7248 = vmatpush1.bf16.msra.mxu0 %v6835
      %7249 = vmatprep.subr.bf16.mxu0 %v6838
      %7250 = vmatpush1.bf16.msra.mxu0 %v6837
      %7251 = vmatprep.subr.bf16.mxu0 %v6840
      %7252 = vmatpush1.bf16.msra.mxu0 %v6839
      %7253 = vmatprep.subr.bf16.mxu0 %v6842
      %7254 = vmatpush1.bf16.msra.mxu0 %v6841
      %7255 = vmatprep.subr.bf16.mxu0 0
      %7256 = vmatpush1.bf16.msra.mxu0 0
      %7257 = vmatprep.subr.bf16.mxu0 0
      %7258 = vmatpush1.bf16.msra.mxu0 0
      %7259 = vmatprep.subr.bf16.mxu0 0
      %7260 = vmatpush1.bf16.msra.mxu0 0
      %7261 = vmatprep.subr.bf16.mxu0 0
      %7262 = vmatpush1.bf16.msra.mxu0 0
      %7263 = vmatprep.subr.bf16.mxu0 0
      %7264 = vmatpush1.bf16.msra.mxu0 0
      %7265 = vmatprep.subr.bf16.mxu0 0
      %7266 = vmatpush1.bf16.msra.mxu0 0
      %7267 = vmatprep.subr.bf16.mxu0 0
      %7268 = vmatpush1.bf16.msra.mxu0 0
      %7269 = vmatprep.subr.bf16.mxu0 0
      %7270 = vmatpush1.bf16.msra.mxu0 0
      %7271 = vmatprep.mubr.bf16.mxu0 0
      %7272 = vmatmul.mubr.bf16.gmra.mrb[0].mxu0 %v6092
      %v7273 = vpop.f32.mrb[0].mxu0
      %v7274 = vadd.f32 %v7211, %v7273
      %v7275 = vpop.f32.mrb[0].mxu0
      %v7276 = vadd.f32 %v7213, %v7275
      %v7277 = vpop.f32.mrb[0].mxu0
      %v7278 = vadd.f32 %v7215, %v7277
      %v7279 = vpop.f32.mrb[0].mxu0
      %v7280 = vadd.f32 %v7217, %v7279
      %7281 = vmatprep.mubr.bf16.mxu0 0
      %7282 = vmatmul.mubr.bf16.gmra.mrb[0].mxu0 %v6101
      %v7283 = vpop.f32.mrb[0].mxu0
      %v7284 = vadd.f32 %v7221, %v7283
      %v7285 = vpop.f32.mrb[0].mxu0
      %v7286 = vadd.f32 %v7223, %v7285
      %v7287 = vpop.f32.mrb[0].mxu0
      %v7288 = vadd.f32 %v7225, %v7287
      %v7289 = vpop.f32.mrb[0].mxu0
      %v7290 = vadd.f32 %v7227, %v7289
      %7291 = vmatprep.mubr.bf16.mxu0 0
      %7292 = vmatmul.mubr.bf16.gmra.mrb[0].mxu0 %v6110
      %v7293 = vpop.f32.mrb[0].mxu0
      %v7294 = vadd.f32 %v7231, %v7293
      %v7295 = vpop.f32.mrb[0].mxu0
      %v7296 = vadd.f32 %v7233, %v7295
      %v7297 = vpop.f32.mrb[0].mxu0
      %v7298 = vadd.f32 %v7235, %v7297
      %v7299 = vpop.f32.mrb[0].mxu0
      %v7300 = vadd.f32 %v7237, %v7299
      %7301 = vdwg.mxu0
      %vm7302 = vcmp.ge.f32.partialorder %v7274, 0.0
      %vm7303 = vcmp.ge.f32.partialorder %v7276, 0.0
      %vm7304 = vcmp.ge.f32.partialorder %v7278, 0.0
      %vm7305 = vcmp.ge.f32.partialorder %v7280, 0.0
      %vm7306 = vcmp.ge.f32.partialorder %v7284, 0.0
      %vm7307 = vcmp.ge.f32.partialorder %v7286, 0.0
      %vm7308 = vcmp.ge.f32.partialorder %v7288, 0.0
      %vm7309 = vcmp.ge.f32.partialorder %v7290, 0.0
      %vm7310 = vcmp.ge.f32.partialorder %v7294, 0.0
      %vm7311 = vcmp.ge.f32.partialorder %v7296, 0.0
      %vm7312 = vcmp.ge.f32.partialorder %v7298, 0.0
      %vm7313 = vcmp.ge.f32.partialorder %v7300, 0.0
      %v7314 = vmul.f32 %v7274, 0.2
      %v7315 = vmul.f32 %v7276, 0.2
      %v7316 = vmul.f32 %v7278, 0.2
      %v7317 = vmul.f32 %v7280, 0.2
      %v7318 = vmul.f32 %v7284, 0.2
      %v7319 = vmul.f32 %v7286, 0.2
      %v7320 = vmul.f32 %v7288, 0.2
      %v7321 = vmul.f32 %v7290, 0.2
      %v7322 = vmul.f32 %v7294, 0.2
      %v7323 = vmul.f32 %v7296, 0.2
      %v7324 = vmul.f32 %v7298, 0.2
      %v7325 = vmul.f32 %v7300, 0.2
      %v7326 = vsel %vm7302, %v7274, %v7314
      %v7327 = vsel %vm7303, %v7276, %v7315
      %v7328 = vsel %vm7304, %v7278, %v7316
      %v7329 = vsel %vm7305, %v7280, %v7317
      %v7330 = vsel %vm7306, %v7284, %v7318
      %v7331 = vsel %vm7307, %v7286, %v7319
      %v7332 = vsel %vm7308, %v7288, %v7320
      %v7333 = vsel %vm7309, %v7290, %v7321
      %v7334 = vsel %vm7310, %v7294, %v7322
      %v7335 = vsel %vm7311, %v7296, %v7323
      %v7336 = vsel %vm7312, %v7298, %v7324
      %v7337 = vsel %vm7313, %v7300, %v7325
      %v7338 = vmul.f32 %v7326, %v2147
      %v7339 = vmul.f32 %v7327, %v2147
      %v7340 = vmul.f32 %v7328, %v2152
      %v7341 = vmul.f32 %v7329, %v2152
      %v7342 = vmul.f32 %v7330, %v2157
      %v7343 = vmul.f32 %v7331, %v2157
      %v7344 = vmul.f32 %v7332, %v2162
      %v7345 = vmul.f32 %v7333, %v2162
      %v7346 = vmul.f32 %v7334, %v2167
      %v7347 = vmul.f32 %v7335, %v2167
      %v7348 = vmul.f32 %v7336, %v2172
      %v7349 = vmul.f32 %v7337, %v2172
      %7350 = vst [vmem:[%s685] sm:$0xff] %v7338
      %7351 = vst [vmem:[%s685 + $0x8] sm:$0xff] %v7339
      %7352 = vst [vmem:[%s685 + $0x10] sm:$0xff] %v7340
      %7353 = vst [vmem:[%s685 + $0x18] sm:$0xff] %v7341
      %7354 = vst [vmem:[%s685 + $0x20] sm:$0xff] %v7342
      %7355 = vst [vmem:[%s685 + $0x28] sm:$0xff] %v7343
      %7356 = vst [vmem:[%s685 + $0x30] sm:$0xff] %v7344
      %7357 = vst [vmem:[%s685 + $0x38] sm:$0xff] %v7345
      %7358 = vst [vmem:[%s685 + $0x40] sm:$0xff] %v7346
      %7359 = vst [vmem:[%s685 + $0x48] sm:$0xff] %v7347
      %7360 = vst [vmem:[%s685 + $0x50] sm:$0xff] %v7348
      %7361 = vst [vmem:[%s685 + $0x58] sm:$0xff] %v7349
      %vm7374 = vcmask 1043456
      %v7375 = vrot.slane %v7338, 4
      %v7376 = vrot.slane %v7339, 4
      %v7377 = vrot.slane %v7340, 4
      %v7378 = vsel %vm7374, %v7375, %v7377
      %v7379 = vrot.slane %v7341, 4
      %v7380 = vsel %vm7374, %v7376, %v7379
      %v7381 = vrot.slane %v7342, 4
      %v7382 = vsel %vm7374, %v7377, %v7381
      %v7383 = vrot.slane %v7343, 4
      %v7384 = vsel %vm7374, %v7379, %v7383
      %v7385 = vrot.slane %v7344, 4
      %v7386 = vsel %vm7374, %v7381, %v7385
      %v7387 = vrot.slane %v7345, 4
      %v7388 = vsel %vm7374, %v7383, %v7387
      %v7389 = vrot.slane %v7346, 4
      %v7390 = vsel %vm7374, %v7385, %v7389
      %v7391 = vrot.slane %v7347, 4
      %v7392 = vsel %vm7374, %v7387, %v7391
      %v7393 = vrot.slane %v7348, 4
      %v7394 = vsel %vm7374, %v7389, %v7393
      %v7395 = vrot.slane %v7349, 4
      %v7396 = vsel %vm7374, %v7391, %v7395
      %v7409 = vsel %vm7374, 0.0, %v7375
      %v7410 = vsel %vm7374, 0.0, %v7376
      %v7413 = vsel %vm7374, %v7393, 0.0
      %v7414 = vsel %vm7374, %v7395, 0.0
      %v7415 = vpack.c.bf16 %v7378, %v7409
      %v7416 = vpack.c.bf16 %v7380, %v7410
      %v7417 = vpack.c.bf16 %v7340, %v7338
      %v7418 = vpack.c.bf16 %v7341, %v7339
      %v7419 = vpack.c.bf16 %v7382, %v7378
      %v7420 = vpack.c.bf16 %v7384, %v7380
      %v7421 = vpack.c.bf16 %v7386, %v7382
      %v7422 = vpack.c.bf16 %v7388, %v7384
      %v7423 = vpack.c.bf16 %v7344, %v7342
      %v7424 = vpack.c.bf16 %v7345, %v7343
      %v7425 = vpack.c.bf16 %v7390, %v7386
      %v7426 = vpack.c.bf16 %v7392, %v7388
      %v7427 = vpack.c.bf16 %v7394, %v7390
      %v7428 = vpack.c.bf16 %v7396, %v7392
      %v7429 = vpack.c.bf16 %v7348, %v7346
      %v7430 = vpack.c.bf16 %v7349, %v7347
      %v7431 = vpack.c.bf16 %v7413, %v7394
      %v7432 = vpack.c.bf16 %v7414, %v7396
      %v7433 = vld [vmem:[%s9] sm:$0xf]
      %v7434 = vld [vmem:[%s9 + $0x4] sm:$0xf]
      %v7435 = vld [vmem:[%s9 + $0x8] sm:$0xf]
      %v7436 = vld [vmem:[%s9 + $0xc] sm:$0xf]
      %v7437 = vld [vmem:[%s9 + $0x10] sm:$0xf]
      %v7438 = vld [vmem:[%s9 + $0x14] sm:$0xf]
      %v7439 = vld [vmem:[%s9 + $0x18] sm:$0xf]
      %v7440 = vld [vmem:[%s9 + $0x1c] sm:$0xf]
      %v7441 = vld [vmem:[%s9 + $0x20] sm:$0xf]
      %v7442 = vld [vmem:[%s9 + $0x24] sm:$0xf]
      %v7443 = vld [vmem:[%s9 + $0x28] sm:$0xf]
      %v7444 = vld [vmem:[%s9 + $0x2c] sm:$0xf]
      %v7445 = vld [vmem:[%s9 + $0x30] sm:$0xf]
      %v7446 = vld [vmem:[%s9 + $0x34] sm:$0xf]
      %v7447 = vld [vmem:[%s9 + $0x38] sm:$0xf]
      %v7448 = vld [vmem:[%s9 + $0x3c] sm:$0xf]
      %v7449 = vld [vmem:[%s9 + $0x40] sm:$0xf]
      %v7450 = vld [vmem:[%s9 + $0x44] sm:$0xf]
      %v7451 = vld [vmem:[%s9 + $0x48] sm:$0xf]
      %v7452 = vld [vmem:[%s9 + $0x4c] sm:$0xf]
      %v7453 = vld [vmem:[%s9 + $0x50] sm:$0xf]
      %v7454 = vld [vmem:[%s9 + $0x54] sm:$0xf]
      %v7455 = vld [vmem:[%s9 + $0x58] sm:$0xf]
      %v7456 = vld [vmem:[%s9 + $0x5c] sm:$0xf]
      %v7457 = vld [vmem:[%s9 + $0x60] sm:$0xf]
      %v7458 = vld [vmem:[%s9 + $0x64] sm:$0xf]
      %v7459 = vld [vmem:[%s9 + $0x68] sm:$0xf]
      %v7460 = vld [vmem:[%s9 + $0x6c] sm:$0xf]
      %v7461 = vld [vmem:[%s9 + $0x70] sm:$0xf]
      %v7462 = vld [vmem:[%s9 + $0x74] sm:$0xf]
      %v7463 = vld [vmem:[%s9 + $0x78] sm:$0xf]
      %v7464 = vld [vmem:[%s9 + $0x7c] sm:$0xf]
      %v7465 = vld [vmem:[%s9 + $0x80] sm:$0xf]
      %v7466 = vld [vmem:[%s9 + $0x84] sm:$0xf]
      %v7467 = vld [vmem:[%s9 + $0x88] sm:$0xf]
      %v7468 = vld [vmem:[%s9 + $0x8c] sm:$0xf]
      %v7469 = vld [vmem:[%s9 + $0x90] sm:$0xf]
      %v7470 = vld [vmem:[%s9 + $0x94] sm:$0xf]
      %v7471 = vld [vmem:[%s9 + $0x98] sm:$0xf]
      %v7472 = vld [vmem:[%s9 + $0x9c] sm:$0xf]
      %v7473 = vld [vmem:[%s9 + $0xa0] sm:$0xf]
      %v7474 = vld [vmem:[%s9 + $0xa4] sm:$0xf]
      %v7475 = vld [vmem:[%s9 + $0xa8] sm:$0xf]
      %v7476 = vld [vmem:[%s9 + $0xac] sm:$0xf]
      %v7477 = vld [vmem:[%s9 + $0xb0] sm:$0xf]
      %v7478 = vld [vmem:[%s9 + $0xb4] sm:$0xf]
      %v7479 = vld [vmem:[%s9 + $0xb8] sm:$0xf]
      %v7480 = vld [vmem:[%s9 + $0xbc] sm:$0xf]
      %v7481 = vld [vmem:[%s9 + $0xc0] sm:$0xf]
      %v7482 = vld [vmem:[%s9 + $0xc4] sm:$0xf]
      %v7483 = vld [vmem:[%s9 + $0xc8] sm:$0xf]
      %v7484 = vld [vmem:[%s9 + $0xcc] sm:$0xf]
      %v7485 = vld [vmem:[%s9 + $0xd0] sm:$0xf]
      %v7486 = vld [vmem:[%s9 + $0xd4] sm:$0xf]
      %v7487 = vld [vmem:[%s9 + $0xd8] sm:$0xf]
      %v7488 = vld [vmem:[%s9 + $0xdc] sm:$0xf]
      %v7489 = vld [vmem:[%s9 + $0xe0] sm:$0xf]
      %v7490 = vld [vmem:[%s9 + $0xe4] sm:$0xf]
      %v7491 = vld [vmem:[%s9 + $0xe8] sm:$0xf]
      %v7492 = vld [vmem:[%s9 + $0xec] sm:$0xf]
      %v7493 = vld [vmem:[%s9 + $0xf0] sm:$0xf]
      %v7494 = vld [vmem:[%s9 + $0xf4] sm:$0xf]
      %v7495 = vld [vmem:[%s9 + $0xf8] sm:$0xf]
      %v7496 = vld [vmem:[%s9 + $0xfc] sm:$0xf]
      %v7497 = vld [vmem:[%s9 + $0x100] sm:$0xf]
      %v7498 = vld [vmem:[%s9 + $0x104] sm:$0xf]
      %v7499 = vld [vmem:[%s9 + $0x108] sm:$0xf]
      %v7500 = vld [vmem:[%s9 + $0x10c] sm:$0xf]
      %v7501 = vld [vmem:[%s9 + $0x110] sm:$0xf]
      %v7502 = vld [vmem:[%s9 + $0x114] sm:$0xf]
      %v7503 = vld [vmem:[%s9 + $0x118] sm:$0xf]
      %v7504 = vld [vmem:[%s9 + $0x11c] sm:$0xf]
      %v7505 = vld [vmem:[%s9 + $0x120] sm:$0xf]
      %v7506 = vld [vmem:[%s9 + $0x124] sm:$0xf]
      %v7507 = vld [vmem:[%s9 + $0x128] sm:$0xf]
      %v7508 = vld [vmem:[%s9 + $0x12c] sm:$0xf]
      %v7509 = vld [vmem:[%s9 + $0x130] sm:$0xf]
      %v7510 = vld [vmem:[%s9 + $0x134] sm:$0xf]
      %v7511 = vld [vmem:[%s9 + $0x138] sm:$0xf]
      %v7512 = vld [vmem:[%s9 + $0x13c] sm:$0xf]
      %v7513 = vld [vmem:[%s9 + $0x140] sm:$0xf]
      %v7514 = vld [vmem:[%s9 + $0x144] sm:$0xf]
      %v7515 = vld [vmem:[%s9 + $0x148] sm:$0xf]
      %v7516 = vld [vmem:[%s9 + $0x14c] sm:$0xf]
      %v7517 = vld [vmem:[%s9 + $0x150] sm:$0xf]
      %v7518 = vld [vmem:[%s9 + $0x154] sm:$0xf]
      %v7519 = vld [vmem:[%s9 + $0x158] sm:$0xf]
      %v7520 = vld [vmem:[%s9 + $0x15c] sm:$0xf]
      %v7521 = vld [vmem:[%s9 + $0x160] sm:$0xf]
      %v7522 = vld [vmem:[%s9 + $0x164] sm:$0xf]
      %v7523 = vld [vmem:[%s9 + $0x168] sm:$0xf]
      %v7524 = vld [vmem:[%s9 + $0x16c] sm:$0xf]
      %v7525 = vld [vmem:[%s9 + $0x170] sm:$0xf]
      %v7526 = vld [vmem:[%s9 + $0x174] sm:$0xf]
      %v7527 = vld [vmem:[%s9 + $0x178] sm:$0xf]
      %v7528 = vld [vmem:[%s9 + $0x17c] sm:$0xf]
      %v7529 = vld [vmem:[%s10] sm:$0x1]
      %v7531 = vlaneseq
      %v7532 = vshrl.u32 %v7531, 7
      %v7533 = vsub.s32 0, %v7532
      %v7534 = vrot.slane %v7529, %v7533
      %v7632 = vunpack.c.l.b16 %v7433
      %v7633 = vunpack.c.l.b16 %v7434
      %v7634 = vunpack.c.l.b16 %v7435
      %v7635 = vunpack.c.l.b16 %v7436
      %v7636 = vunpack.c.l.b16 %v7437
      %v7637 = vunpack.c.l.b16 %v7438
      %v7638 = vunpack.c.l.b16 %v7439
      %v7639 = vunpack.c.l.b16 %v7440
      %v7640 = vunpack.c.l.b16 %v7441
      %v7641 = vunpack.c.l.b16 %v7442
      %v7642 = vunpack.c.l.b16 %v7443
      %v7643 = vunpack.c.l.b16 %v7444
      %v7644 = vunpack.c.l.b16 %v7445
      %v7645 = vunpack.c.l.b16 %v7446
      %v7646 = vunpack.c.l.b16 %v7447
      %v7647 = vunpack.c.l.b16 %v7448
      %v7648 = vunpack.c.l.b16 %v7449
      %v7649 = vunpack.c.l.b16 %v7450
      %v7650 = vunpack.c.l.b16 %v7451
      %v7651 = vunpack.c.l.b16 %v7452
      %v7652 = vunpack.c.l.b16 %v7453
      %v7653 = vunpack.c.l.b16 %v7454
      %v7654 = vunpack.c.l.b16 %v7455
      %v7655 = vunpack.c.l.b16 %v7456
      %v7656 = vunpack.c.l.b16 %v7457
      %v7657 = vunpack.c.l.b16 %v7458
      %v7658 = vunpack.c.l.b16 %v7459
      %v7659 = vunpack.c.l.b16 %v7460
      %v7660 = vunpack.c.l.b16 %v7461
      %v7661 = vunpack.c.l.b16 %v7462
      %v7662 = vunpack.c.l.b16 %v7463
      %v7663 = vunpack.c.l.b16 %v7464
      %v7664 = vunpack.c.l.b16 %v7465
      %v7665 = vunpack.c.l.b16 %v7466
      %v7666 = vunpack.c.l.b16 %v7467
      %v7667 = vunpack.c.l.b16 %v7468
      %v7668 = vunpack.c.l.b16 %v7469
      %v7669 = vunpack.c.l.b16 %v7470
      %v7670 = vunpack.c.l.b16 %v7471
      %v7671 = vunpack.c.l.b16 %v7472
      %v7672 = vunpack.c.l.b16 %v7473
      %v7673 = vunpack.c.l.b16 %v7474
      %v7674 = vunpack.c.l.b16 %v7475
      %v7675 = vunpack.c.l.b16 %v7476
      %v7676 = vunpack.c.l.b16 %v7477
      %v7677 = vunpack.c.l.b16 %v7478
      %v7678 = vunpack.c.l.b16 %v7479
      %v7679 = vunpack.c.l.b16 %v7480
      %v7680 = vunpack.c.l.b16 %v7481
      %v7681 = vunpack.c.l.b16 %v7482
      %v7682 = vunpack.c.l.b16 %v7483
      %v7683 = vunpack.c.l.b16 %v7484
      %v7684 = vunpack.c.l.b16 %v7485
      %v7685 = vunpack.c.l.b16 %v7486
      %v7686 = vunpack.c.l.b16 %v7487
      %v7687 = vunpack.c.l.b16 %v7488
      %v7688 = vunpack.c.l.b16 %v7489
      %v7689 = vunpack.c.l.b16 %v7490
      %v7690 = vunpack.c.l.b16 %v7491
      %v7691 = vunpack.c.l.b16 %v7492
      %v7692 = vunpack.c.l.b16 %v7493
      %v7693 = vunpack.c.l.b16 %v7494
      %v7694 = vunpack.c.l.b16 %v7495
      %v7695 = vunpack.c.l.b16 %v7496
      %v7696 = vunpack.c.l.b16 %v7497
      %v7697 = vunpack.c.l.b16 %v7498
      %v7698 = vunpack.c.l.b16 %v7499
      %v7699 = vunpack.c.l.b16 %v7500
      %v7700 = vunpack.c.l.b16 %v7501
      %v7701 = vunpack.c.l.b16 %v7502
      %v7702 = vunpack.c.l.b16 %v7503
      %v7703 = vunpack.c.l.b16 %v7504
      %v7704 = vunpack.c.l.b16 %v7505
      %v7705 = vunpack.c.l.b16 %v7506
      %v7706 = vunpack.c.l.b16 %v7507
      %v7707 = vunpack.c.l.b16 %v7508
      %v7708 = vunpack.c.l.b16 %v7509
      %v7709 = vunpack.c.l.b16 %v7510
      %v7710 = vunpack.c.l.b16 %v7511
      %v7711 = vunpack.c.l.b16 %v7512
      %v7712 = vunpack.c.l.b16 %v7513
      %v7713 = vunpack.c.l.b16 %v7514
      %v7714 = vunpack.c.l.b16 %v7515
      %v7715 = vunpack.c.l.b16 %v7516
      %v7716 = vunpack.c.l.b16 %v7517
      %v7717 = vunpack.c.l.b16 %v7518
      %v7718 = vunpack.c.l.b16 %v7519
      %v7719 = vunpack.c.l.b16 %v7520
      %v7720 = vunpack.c.l.b16 %v7521
      %v7721 = vunpack.c.l.b16 %v7522
      %v7722 = vunpack.c.l.b16 %v7523
      %v7723 = vunpack.c.l.b16 %v7524
      %v7724 = vunpack.c.l.b16 %v7525
      %v7725 = vunpack.c.l.b16 %v7526
      %v7726 = vunpack.c.l.b16 %v7527
      %v7727 = vunpack.c.l.b16 %v7528
      %v7728 = vpack.c.b16 %v7633, %v7632
      %v7729 = vpack.c.b16 %v7635, %v7634
      %v7730 = vpack.c.b16 %v7637, %v7636
      %v7731 = vpack.c.b16 %v7639, %v7638
      %v7732 = vpack.c.b16 %v7641, %v7640
      %v7733 = vpack.c.b16 %v7643, %v7642
      %v7734 = vpack.c.b16 %v7645, %v7644
      %v7735 = vpack.c.b16 %v7647, %v7646
      %v7736 = vpack.c.b16 %v7649, %v7648
      %v7737 = vpack.c.b16 %v7651, %v7650
      %v7738 = vpack.c.b16 %v7653, %v7652
      %v7739 = vpack.c.b16 %v7655, %v7654
      %v7740 = vpack.c.b16 %v7657, %v7656
      %v7741 = vpack.c.b16 %v7659, %v7658
      %v7742 = vpack.c.b16 %v7661, %v7660
      %v7743 = vpack.c.b16 %v7663, %v7662
      %v7744 = vpack.c.b16 %v7665, %v7664
      %v7745 = vpack.c.b16 %v7667, %v7666
      %v7746 = vpack.c.b16 %v7669, %v7668
      %v7747 = vpack.c.b16 %v7671, %v7670
      %v7748 = vpack.c.b16 %v7673, %v7672
      %v7749 = vpack.c.b16 %v7675, %v7674
      %v7750 = vpack.c.b16 %v7677, %v7676
      %v7751 = vpack.c.b16 %v7679, %v7678
      %v7752 = vpack.c.b16 %v7681, %v7680
      %v7753 = vpack.c.b16 %v7683, %v7682
      %v7754 = vpack.c.b16 %v7685, %v7684
      %v7755 = vpack.c.b16 %v7687, %v7686
      %v7756 = vpack.c.b16 %v7689, %v7688
      %v7757 = vpack.c.b16 %v7691, %v7690
      %v7758 = vpack.c.b16 %v7693, %v7692
      %v7759 = vpack.c.b16 %v7695, %v7694
      %v7760 = vpack.c.b16 %v7697, %v7696
      %v7761 = vpack.c.b16 %v7699, %v7698
      %v7762 = vpack.c.b16 %v7701, %v7700
      %v7763 = vpack.c.b16 %v7703, %v7702
      %v7764 = vpack.c.b16 %v7705, %v7704
      %v7765 = vpack.c.b16 %v7707, %v7706
      %v7766 = vpack.c.b16 %v7709, %v7708
      %v7767 = vpack.c.b16 %v7711, %v7710
      %v7768 = vpack.c.b16 %v7713, %v7712
      %v7769 = vpack.c.b16 %v7715, %v7714
      %v7770 = vpack.c.b16 %v7717, %v7716
      %v7771 = vpack.c.b16 %v7719, %v7718
      %v7772 = vpack.c.b16 %v7721, %v7720
      %v7773 = vpack.c.b16 %v7723, %v7722
      %v7774 = vpack.c.b16 %v7725, %v7724
      %v7775 = vpack.c.b16 %v7727, %v7726
      %7824 = vmatprep.subr.bf16.mxu0 0
      %7825 = vmatpush1.bf16.msra.mxu0 %v7728
      %7826 = vmatprep.subr.bf16.mxu0 0
      %7827 = vmatpush1.bf16.msra.mxu0 %v7729
      %7828 = vmatprep.subr.bf16.mxu0 0
      %7829 = vmatpush1.bf16.msra.mxu0 %v7730
      %7830 = vmatprep.subr.bf16.mxu0 0
      %7831 = vmatpush1.bf16.msra.mxu0 %v7731
      %7832 = vmatprep.subr.bf16.mxu0 0
      %7833 = vmatpush1.bf16.msra.mxu0 %v7732
      %7834 = vmatprep.subr.bf16.mxu0 0
      %7835 = vmatpush1.bf16.msra.mxu0 %v7733
      %7836 = vmatprep.subr.bf16.mxu0 0
      %7837 = vmatpush1.bf16.msra.mxu0 %v7734
      %7838 = vmatprep.subr.bf16.mxu0 0
      %7839 = vmatpush1.bf16.msra.mxu0 %v7735
      %7840 = vmatprep.subr.bf16.mxu0 0
      %7841 = vmatpush1.bf16.msra.mxu0 %v7736
      %7842 = vmatprep.subr.bf16.mxu0 0
      %7843 = vmatpush1.bf16.msra.mxu0 %v7737
      %7844 = vmatprep.subr.bf16.mxu0 0
      %7845 = vmatpush1.bf16.msra.mxu0 %v7738
      %7846 = vmatprep.subr.bf16.mxu0 0
      %7847 = vmatpush1.bf16.msra.mxu0 %v7739
      %7848 = vmatprep.subr.bf16.mxu0 0
      %7849 = vmatpush1.bf16.msra.mxu0 %v7740
      %7850 = vmatprep.subr.bf16.mxu0 0
      %7851 = vmatpush1.bf16.msra.mxu0 %v7741
      %7852 = vmatprep.subr.bf16.mxu0 0
      %7853 = vmatpush1.bf16.msra.mxu0 %v7742
      %7854 = vmatprep.subr.bf16.mxu0 0
      %7855 = vmatpush1.bf16.msra.mxu0 %v7743
      %7856 = vmatprep.mubr.bf16.mxu0 %v7416
      %7857 = vmatmul.mubr.bf16.gmra.mrb[0].mxu0 %v7415
      %v7858 = vpop.f32.mrb[0].mxu0
      %v7859 = vadd.f32 %v7534, %v7858
      %v7860 = vpop.f32.mrb[0].mxu0
      %v7861 = vpop.f32.mrb[0].mxu0
      %v7862 = vadd.f32 %v7534, %v7861
      %v7863 = vpop.f32.mrb[0].mxu0
      %7864 = vmatprep.mubr.bf16.mxu0 %v7422
      %7865 = vmatmul.mubr.bf16.gmra.mrb[0].mxu0 %v7421
      %v7866 = vpop.f32.mrb[0].mxu0
      %v7867 = vadd.f32 %v7534, %v7866
      %v7868 = vpop.f32.mrb[0].mxu0
      %v7869 = vpop.f32.mrb[0].mxu0
      %v7870 = vadd.f32 %v7534, %v7869
      %v7871 = vpop.f32.mrb[0].mxu0
      %7872 = vmatprep.mubr.bf16.mxu0 %v7428
      %7873 = vmatmul.mubr.bf16.gmra.mrb[0].mxu0 %v7427
      %v7874 = vpop.f32.mrb[0].mxu0
      %v7875 = vadd.f32 %v7534, %v7874
      %v7876 = vpop.f32.mrb[0].mxu0
      %v7877 = vpop.f32.mrb[0].mxu0
      %v7878 = vadd.f32 %v7534, %v7877
      %v7879 = vpop.f32.mrb[0].mxu0
      %7880 = vdwg.mxu0
      %7881 = vmatprep.subr.bf16.mxu0 0
      %7882 = vmatpush1.bf16.msra.mxu0 %v7744
      %7883 = vmatprep.subr.bf16.mxu0 0
      %7884 = vmatpush1.bf16.msra.mxu0 %v7745
      %7885 = vmatprep.subr.bf16.mxu0 0
      %7886 = vmatpush1.bf16.msra.mxu0 %v7746
      %7887 = vmatprep.subr.bf16.mxu0 0
      %7888 = vmatpush1.bf16.msra.mxu0 %v7747
      %7889 = vmatprep.subr.bf16.mxu0 0
      %7890 = vmatpush1.bf16.msra.mxu0 %v7748
      %7891 = vmatprep.subr.bf16.mxu0 0
      %7892 = vmatpush1.bf16.msra.mxu0 %v7749
      %7893 = vmatprep.subr.bf16.mxu0 0
      %7894 = vmatpush1.bf16.msra.mxu0 %v7750
      %7895 = vmatprep.subr.bf16.mxu0 0
      %7896 = vmatpush1.bf16.msra.mxu0 %v7751
      %7897 = vmatprep.subr.bf16.mxu0 0
      %7898 = vmatpush1.bf16.msra.mxu0 %v7752
      %7899 = vmatprep.subr.bf16.mxu0 0
      %7900 = vmatpush1.bf16.msra.mxu0 %v7753
      %7901 = vmatprep.subr.bf16.mxu0 0
      %7902 = vmatpush1.bf16.msra.mxu0 %v7754
      %7903 = vmatprep.subr.bf16.mxu0 0
      %7904 = vmatpush1.bf16.msra.mxu0 %v7755
      %7905 = vmatprep.subr.bf16.mxu0 0
      %7906 = vmatpush1.bf16.msra.mxu0 %v7756
      %7907 = vmatprep.subr.bf16.mxu0 0
      %7908 = vmatpush1.bf16.msra.mxu0 %v7757
      %7909 = vmatprep.subr.bf16.mxu0 0
      %7910 = vmatpush1.bf16.msra.mxu0 %v7758
      %7911 = vmatprep.subr.bf16.mxu0 0
      %7912 = vmatpush1.bf16.msra.mxu0 %v7759
      %7913 = vmatprep.mubr.bf16.mxu0 %v7418
      %7914 = vmatmul.mubr.bf16.gmra.mrb[0].mxu0 %v7417
      %v7915 = vpop.f32.mrb[0].mxu0
      %v7916 = vadd.f32 %v7859, %v7915
      %v7917 = vpop.f32.mrb[0].mxu0
      %v7918 = vpop.f32.mrb[0].mxu0
      %v7919 = vadd.f32 %v7862, %v7918
      %v7920 = vpop.f32.mrb[0].mxu0
      %7921 = vmatprep.mubr.bf16.mxu0 %v7424
      %7922 = vmatmul.mubr.bf16.gmra.mrb[0].mxu0 %v7423
      %v7923 = vpop.f32.mrb[0].mxu0
      %v7924 = vadd.f32 %v7867, %v7923
      %v7925 = vpop.f32.mrb[0].mxu0
      %v7926 = vpop.f32.mrb[0].mxu0
      %v7927 = vadd.f32 %v7870, %v7926
      %v7928 = vpop.f32.mrb[0].mxu0
      %7929 = vmatprep.mubr.bf16.mxu0 %v7430
      %7930 = vmatmul.mubr.bf16.gmra.mrb[0].mxu0 %v7429
      %v7931 = vpop.f32.mrb[0].mxu0
      %v7932 = vadd.f32 %v7875, %v7931
      %v7933 = vpop.f32.mrb[0].mxu0
      %v7934 = vpop.f32.mrb[0].mxu0
      %v7935 = vadd.f32 %v7878, %v7934
      %v7936 = vpop.f32.mrb[0].mxu0
      %7937 = vdwg.mxu0
      %7938 = vmatprep.subr.bf16.mxu0 0
      %7939 = vmatpush1.bf16.msra.mxu0 %v7760
      %7940 = vmatprep.subr.bf16.mxu0 0
      %7941 = vmatpush1.bf16.msra.mxu0 %v7761
      %7942 = vmatprep.subr.bf16.mxu0 0
      %7943 = vmatpush1.bf16.msra.mxu0 %v7762
      %7944 = vmatprep.subr.bf16.mxu0 0
      %7945 = vmatpush1.bf16.msra.mxu0 %v7763
      %7946 = vmatprep.subr.bf16.mxu0 0
      %7947 = vmatpush1.bf16.msra.mxu0 %v7764
      %7948 = vmatprep.subr.bf16.mxu0 0
      %7949 = vmatpush1.bf16.msra.mxu0 %v7765
      %7950 = vmatprep.subr.bf16.mxu0 0
      %7951 = vmatpush1.bf16.msra.mxu0 %v7766
      %7952 = vmatprep.subr.bf16.mxu0 0
      %7953 = vmatpush1.bf16.msra.mxu0 %v7767
      %7954 = vmatprep.subr.bf16.mxu0 0
      %7955 = vmatpush1.bf16.msra.mxu0 %v7768
      %7956 = vmatprep.subr.bf16.mxu0 0
      %7957 = vmatpush1.bf16.msra.mxu0 %v7769
      %7958 = vmatprep.subr.bf16.mxu0 0
      %7959 = vmatpush1.bf16.msra.mxu0 %v7770
      %7960 = vmatprep.subr.bf16.mxu0 0
      %7961 = vmatpush1.bf16.msra.mxu0 %v7771
      %7962 = vmatprep.subr.bf16.mxu0 0
      %7963 = vmatpush1.bf16.msra.mxu0 %v7772
      %7964 = vmatprep.subr.bf16.mxu0 0
      %7965 = vmatpush1.bf16.msra.mxu0 %v7773
      %7966 = vmatprep.subr.bf16.mxu0 0
      %7967 = vmatpush1.bf16.msra.mxu0 %v7774
      %7968 = vmatprep.subr.bf16.mxu0 0
      %7969 = vmatpush1.bf16.msra.mxu0 %v7775
      %7970 = vmatprep.mubr.bf16.mxu0 %v7420
      %7971 = vmatmul.mubr.bf16.gmra.mrb[0].mxu0 %v7419
      %v7972 = vpop.f32.mrb[0].mxu0
      %v7973 = vadd.f32 %v7916, %v7972
      %v7974 = vpop.f32.mrb[0].mxu0
      %v7975 = vpop.f32.mrb[0].mxu0
      %v7976 = vadd.f32 %v7919, %v7975
      %v7977 = vpop.f32.mrb[0].mxu0
      %7978 = vmatprep.mubr.bf16.mxu0 %v7426
      %7979 = vmatmul.mubr.bf16.gmra.mrb[0].mxu0 %v7425
      %v7980 = vpop.f32.mrb[0].mxu0
      %v7981 = vadd.f32 %v7924, %v7980
      %v7982 = vpop.f32.mrb[0].mxu0
      %v7983 = vpop.f32.mrb[0].mxu0
      %v7984 = vadd.f32 %v7927, %v7983
      %v7985 = vpop.f32.mrb[0].mxu0
      %7986 = vmatprep.mubr.bf16.mxu0 %v7432
      %7987 = vmatmul.mubr.bf16.gmra.mrb[0].mxu0 %v7431
      %v7988 = vpop.f32.mrb[0].mxu0
      %v7989 = vadd.f32 %v7932, %v7988
      %v7990 = vpop.f32.mrb[0].mxu0
      %v7991 = vpop.f32.mrb[0].mxu0
      %v7992 = vadd.f32 %v7935, %v7991
      %v7993 = vpop.f32.mrb[0].mxu0
      %7994 = vdwg.mxu0
      %vm7995 = vcmp.ge.f32.partialorder %v7973, 0.0
      %vm7996 = vcmp.ge.f32.partialorder %v7976, 0.0
      %vm7997 = vcmp.ge.f32.partialorder %v7981, 0.0
      %vm7998 = vcmp.ge.f32.partialorder %v7984, 0.0
      %vm7999 = vcmp.ge.f32.partialorder %v7989, 0.0
      %vm8000 = vcmp.ge.f32.partialorder %v7992, 0.0
      %v8001 = vmul.f32 %v7973, 0.2
      %v8002 = vmul.f32 %v7976, 0.2
      %v8003 = vmul.f32 %v7981, 0.2
      %v8004 = vmul.f32 %v7984, 0.2
      %v8005 = vmul.f32 %v7989, 0.2
      %v8006 = vmul.f32 %v7992, 0.2
      %v8007 = vsel %vm7995, %v7973, %v8001
      %v8008 = vsel %vm7996, %v7976, %v8002
      %v8009 = vsel %vm7997, %v7981, %v8003
      %v8010 = vsel %vm7998, %v7984, %v8004
      %v8011 = vsel %vm7999, %v7989, %v8005
      %v8012 = vsel %vm8000, %v7992, %v8006
      %v8013 = vmul.f32 %v8007, %v2147
      %v8014 = vmul.f32 %v8008, %v2152
      %v8015 = vmul.f32 %v8009, %v2157
      %v8016 = vmul.f32 %v8010, %v2162
      %v8017 = vmul.f32 %v8011, %v2167
      %v8018 = vmul.f32 %v8012, %v2172
      %8019 = vst [vmem:[%s691] sm:$0xff] %v8013
      %8020 = vst [vmem:[%s691 + $0x8] sm:$0xff] %v8014
      %8021 = vst [vmem:[%s691 + $0x10] sm:$0xff] %v8015
      %8022 = vst [vmem:[%s691 + $0x18] sm:$0xff] %v8016
      %8023 = vst [vmem:[%s691 + $0x20] sm:$0xff] %v8017
      %8024 = vst [vmem:[%s691 + $0x28] sm:$0xff] %v8018
      %v8031 = vrot.slane %v8013, 7
      %v8032 = vrot.slane %v8014, 7
      %v8033 = vsel %vm846, %v8031, %v8032
      %v8034 = vrot.slane %v8015, 7
      %v8035 = vsel %vm846, %v8032, %v8034
      %v8036 = vrot.slane %v8016, 7
      %v8037 = vsel %vm846, %v8034, %v8036
      %v8038 = vrot.slane %v8017, 7
      %v8039 = vsel %vm846, %v8036, %v8038
      %v8040 = vrot.slane %v8018, 7
      %v8041 = vsel %vm846, %v8038, %v8040
      %v8048 = vsel %vm846, 0.0, %v8031
      %v8049 = vrot.slane %v8013, 1
      %v8050 = vrot.slane %v8014, 1
      %v8051 = vsel %vm865, %v8049, %v8050
      %v8052 = vrot.slane %v8015, 1
      %v8053 = vsel %vm865, %v8050, %v8052
      %v8054 = vrot.slane %v8016, 1
      %v8055 = vsel %vm865, %v8052, %v8054
      %v8056 = vrot.slane %v8017, 1
      %v8057 = vsel %vm865, %v8054, %v8056
      %v8058 = vrot.slane %v8018, 1
      %v8059 = vsel %vm865, %v8056, %v8058
      %v8066 = vsel %vm865, %v8058, 0.0
      %v8067 = vpack.c.bf16 %v8033, %v8048
      %v8068 = vpack.c.bf16 %v8014, %v8013
      %v8069 = vpack.c.bf16 %v8053, %v8051
      %v8070 = vpack.c.bf16 %v8037, %v8035
      %v8071 = vpack.c.bf16 %v8016, %v8015
      %v8072 = vpack.c.bf16 %v8057, %v8055
      %v8073 = vpack.c.bf16 %v8041, %v8039
      %v8074 = vpack.c.bf16 %v8018, %v8017
      %v8075 = vpack.c.bf16 %v8066, %v8059
      %v8076 = vld [vmem:[%s11] sm:$0xf]
      %v8077 = vld [vmem:[%s11 + $0x4] sm:$0xf]
      %v8078 = vld [vmem:[%s11 + $0x8] sm:$0xf]
      %v8079 = vld [vmem:[%s11 + $0xc] sm:$0xf]
      %v8080 = vld [vmem:[%s11 + $0x10] sm:$0xf]
      %v8081 = vld [vmem:[%s11 + $0x14] sm:$0xf]
      %v8082 = vld [vmem:[%s11 + $0x18] sm:$0xf]
      %v8083 = vld [vmem:[%s11 + $0x1c] sm:$0xf]
      %v8084 = vld [vmem:[%s11 + $0x20] sm:$0xf]
      %v8085 = vld [vmem:[%s11 + $0x24] sm:$0xf]
      %v8086 = vld [vmem:[%s11 + $0x28] sm:$0xf]
      %v8087 = vld [vmem:[%s11 + $0x2c] sm:$0xf]
      %v8088 = vld [vmem:[%s11 + $0x30] sm:$0xf]
      %v8089 = vld [vmem:[%s11 + $0x34] sm:$0xf]
      %v8090 = vld [vmem:[%s11 + $0x38] sm:$0xf]
      %v8091 = vld [vmem:[%s11 + $0x3c] sm:$0xf]
      %v8092 = vld [vmem:[%s11 + $0x40] sm:$0xf]
      %v8093 = vld [vmem:[%s11 + $0x44] sm:$0xf]
      %v8094 = vld [vmem:[%s11 + $0x48] sm:$0xf]
      %v8095 = vld [vmem:[%s11 + $0x4c] sm:$0xf]
      %v8096 = vld [vmem:[%s11 + $0x50] sm:$0xf]
      %v8097 = vld [vmem:[%s11 + $0x54] sm:$0xf]
      %v8098 = vld [vmem:[%s11 + $0x58] sm:$0xf]
      %v8099 = vld [vmem:[%s11 + $0x5c] sm:$0xf]
      %v8100 = vld [vmem:[%s11 + $0x60] sm:$0xf]
      %v8101 = vld [vmem:[%s11 + $0x64] sm:$0xf]
      %v8102 = vld [vmem:[%s11 + $0x68] sm:$0xf]
      %v8103 = vld [vmem:[%s11 + $0x6c] sm:$0xf]
      %v8104 = vld [vmem:[%s11 + $0x70] sm:$0xf]
      %v8105 = vld [vmem:[%s11 + $0x74] sm:$0xf]
      %v8106 = vld [vmem:[%s11 + $0x78] sm:$0xf]
      %v8107 = vld [vmem:[%s11 + $0x7c] sm:$0xf]
      %v8108 = vld [vmem:[%s11 + $0x80] sm:$0xf]
      %v8109 = vld [vmem:[%s11 + $0x84] sm:$0xf]
      %v8110 = vld [vmem:[%s11 + $0x88] sm:$0xf]
      %v8111 = vld [vmem:[%s11 + $0x8c] sm:$0xf]
      %v8112 = vld [vmem:[%s11 + $0x90] sm:$0xf]
      %v8113 = vld [vmem:[%s11 + $0x94] sm:$0xf]
      %v8114 = vld [vmem:[%s11 + $0x98] sm:$0xf]
      %v8115 = vld [vmem:[%s11 + $0x9c] sm:$0xf]
      %v8116 = vld [vmem:[%s11 + $0xa0] sm:$0xf]
      %v8117 = vld [vmem:[%s11 + $0xa4] sm:$0xf]
      %v8118 = vld [vmem:[%s11 + $0xa8] sm:$0xf]
      %v8119 = vld [vmem:[%s11 + $0xac] sm:$0xf]
      %v8120 = vld [vmem:[%s11 + $0xb0] sm:$0xf]
      %v8121 = vld [vmem:[%s11 + $0xb4] sm:$0xf]
      %v8122 = vld [vmem:[%s11 + $0xb8] sm:$0xf]
      %v8123 = vld [vmem:[%s11 + $0xbc] sm:$0xf]
      %v8124 = vld [vmem:[%s12] sm:$0x1]
      %v8126 = vlaneseq
      %v8127 = vshrl.u32 %v8126, 7
      %v8128 = vsub.s32 0, %v8127
      %v8129 = vrot.slane %v8124, %v8128
      %v8179 = vunpack.c.l.b16 %v8076
      %v8180 = vunpack.c.l.b16 %v8077
      %v8181 = vunpack.c.l.b16 %v8078
      %v8182 = vunpack.c.l.b16 %v8079
      %v8183 = vunpack.c.l.b16 %v8080
      %v8184 = vunpack.c.l.b16 %v8081
      %v8185 = vunpack.c.l.b16 %v8082
      %v8186 = vunpack.c.l.b16 %v8083
      %v8187 = vunpack.c.l.b16 %v8084
      %v8188 = vunpack.c.l.b16 %v8085
      %v8189 = vunpack.c.l.b16 %v8086
      %v8190 = vunpack.c.l.b16 %v8087
      %v8191 = vunpack.c.l.b16 %v8088
      %v8192 = vunpack.c.l.b16 %v8089
      %v8193 = vunpack.c.l.b16 %v8090
      %v8194 = vunpack.c.l.b16 %v8091
      %v8195 = vunpack.c.l.b16 %v8092
      %v8196 = vunpack.c.l.b16 %v8093
      %v8197 = vunpack.c.l.b16 %v8094
      %v8198 = vunpack.c.l.b16 %v8095
      %v8199 = vunpack.c.l.b16 %v8096
      %v8200 = vunpack.c.l.b16 %v8097
      %v8201 = vunpack.c.l.b16 %v8098
      %v8202 = vunpack.c.l.b16 %v8099
      %v8203 = vunpack.c.l.b16 %v8100
      %v8204 = vunpack.c.l.b16 %v8101
      %v8205 = vunpack.c.l.b16 %v8102
      %v8206 = vunpack.c.l.b16 %v8103
      %v8207 = vunpack.c.l.b16 %v8104
      %v8208 = vunpack.c.l.b16 %v8105
      %v8209 = vunpack.c.l.b16 %v8106
      %v8210 = vunpack.c.l.b16 %v8107
      %v8211 = vunpack.c.l.b16 %v8108
      %v8212 = vunpack.c.l.b16 %v8109
      %v8213 = vunpack.c.l.b16 %v8110
      %v8214 = vunpack.c.l.b16 %v8111
      %v8215 = vunpack.c.l.b16 %v8112
      %v8216 = vunpack.c.l.b16 %v8113
      %v8217 = vunpack.c.l.b16 %v8114
      %v8218 = vunpack.c.l.b16 %v8115
      %v8219 = vunpack.c.l.b16 %v8116
      %v8220 = vunpack.c.l.b16 %v8117
      %v8221 = vunpack.c.l.b16 %v8118
      %v8222 = vunpack.c.l.b16 %v8119
      %v8223 = vunpack.c.l.b16 %v8120
      %v8224 = vunpack.c.l.b16 %v8121
      %v8225 = vunpack.c.l.b16 %v8122
      %v8226 = vunpack.c.l.b16 %v8123
      %v8227 = vpack.c.b16 %v8180, %v8179
      %v8228 = vpack.c.b16 %v8182, %v8181
      %v8229 = vpack.c.b16 %v8184, %v8183
      %v8230 = vpack.c.b16 %v8186, %v8185
      %v8231 = vpack.c.b16 %v8188, %v8187
      %v8232 = vpack.c.b16 %v8190, %v8189
      %v8233 = vpack.c.b16 %v8192, %v8191
      %v8234 = vpack.c.b16 %v8194, %v8193
      %v8235 = vpack.c.b16 %v8196, %v8195
      %v8236 = vpack.c.b16 %v8198, %v8197
      %v8237 = vpack.c.b16 %v8200, %v8199
      %v8238 = vpack.c.b16 %v8202, %v8201
      %v8239 = vpack.c.b16 %v8204, %v8203
      %v8240 = vpack.c.b16 %v8206, %v8205
      %v8241 = vpack.c.b16 %v8208, %v8207
      %v8242 = vpack.c.b16 %v8210, %v8209
      %v8243 = vpack.c.b16 %v8212, %v8211
      %v8244 = vpack.c.b16 %v8214, %v8213
      %v8245 = vpack.c.b16 %v8216, %v8215
      %v8246 = vpack.c.b16 %v8218, %v8217
      %v8247 = vpack.c.b16 %v8220, %v8219
      %v8248 = vpack.c.b16 %v8222, %v8221
      %v8249 = vpack.c.b16 %v8224, %v8223
      %v8250 = vpack.c.b16 %v8226, %v8225
      %8275 = vmatprep.subr.bf16.mxu0 0
      %8276 = vmatpush1.bf16.msra.mxu0 %v8227
      %8277 = vmatprep.subr.bf16.mxu0 0
      %8278 = vmatpush1.bf16.msra.mxu0 %v8228
      %8279 = vmatprep.subr.bf16.mxu0 0
      %8280 = vmatpush1.bf16.msra.mxu0 %v8229
      %8281 = vmatprep.subr.bf16.mxu0 0
      %8282 = vmatpush1.bf16.msra.mxu0 %v8230
      %8283 = vmatprep.subr.bf16.mxu0 0
      %8284 = vmatpush1.bf16.msra.mxu0 %v8231
      %8285 = vmatprep.subr.bf16.mxu0 0
      %8286 = vmatpush1.bf16.msra.mxu0 %v8232
      %8287 = vmatprep.subr.bf16.mxu0 0
      %8288 = vmatpush1.bf16.msra.mxu0 %v8233
      %8289 = vmatprep.subr.bf16.mxu0 0
      %8290 = vmatpush1.bf16.msra.mxu0 %v8234
      %8291 = vmatprep.subr.bf16.mxu0 0
      %8292 = vmatpush1.bf16.msra.mxu0 %v8235
      %8293 = vmatprep.subr.bf16.mxu0 0
      %8294 = vmatpush1.bf16.msra.mxu0 %v8236
      %8295 = vmatprep.subr.bf16.mxu0 0
      %8296 = vmatpush1.bf16.msra.mxu0 %v8237
      %8297 = vmatprep.subr.bf16.mxu0 0
      %8298 = vmatpush1.bf16.msra.mxu0 %v8238
      %8299 = vmatprep.subr.bf16.mxu0 0
      %8300 = vmatpush1.bf16.msra.mxu0 %v8239
      %8301 = vmatprep.subr.bf16.mxu0 0
      %8302 = vmatpush1.bf16.msra.mxu0 %v8240
      %8303 = vmatprep.subr.bf16.mxu0 0
      %8304 = vmatpush1.bf16.msra.mxu0 %v8241
      %8305 = vmatprep.subr.bf16.mxu0 0
      %8306 = vmatpush1.bf16.msra.mxu0 %v8242
      %8307 = vmatprep.mubr.bf16.mxu0 %v8068
      %8308 = vmatmul.mubr.bf16.gmra.mrb[0].mxu0 %v8067
      %v8309 = vpop.f32.mrb[0].mxu0
      %v8310 = vadd.f32 %v8129, %v8309
      %v8311 = vpop.f32.mrb[0].mxu0
      %v8312 = vpop.f32.mrb[0].mxu0
      %v8313 = vadd.f32 %v8129, %v8312
      %v8314 = vpop.f32.mrb[0].mxu0
      %8315 = vmatprep.mubr.bf16.mxu0 %v8071
      %8316 = vmatmul.mubr.bf16.gmra.mrb[0].mxu0 %v8070
      %v8317 = vpop.f32.mrb[0].mxu0
      %v8318 = vadd.f32 %v8129, %v8317
      %v8319 = vpop.f32.mrb[0].mxu0
      %v8320 = vpop.f32.mrb[0].mxu0
      %v8321 = vadd.f32 %v8129, %v8320
      %v8322 = vpop.f32.mrb[0].mxu0
      %8323 = vmatprep.mubr.bf16.mxu0 %v8074
      %8324 = vmatmul.mubr.bf16.gmra.mrb[0].mxu0 %v8073
      %v8325 = vpop.f32.mrb[0].mxu0
      %v8326 = vadd.f32 %v8129, %v8325
      %v8327 = vpop.f32.mrb[0].mxu0
      %v8328 = vpop.f32.mrb[0].mxu0
      %v8329 = vadd.f32 %v8129, %v8328
      %v8330 = vpop.f32.mrb[0].mxu0
      %8331 = vdwg.mxu0
      %8332 = vmatprep.subr.bf16.mxu0 0
      %8333 = vmatpush1.bf16.msra.mxu0 %v8243
      %8334 = vmatprep.subr.bf16.mxu0 0
      %8335 = vmatpush1.bf16.msra.mxu0 %v8244
      %8336 = vmatprep.subr.bf16.mxu0 0
      %8337 = vmatpush1.bf16.msra.mxu0 %v8245
      %8338 = vmatprep.subr.bf16.mxu0 0
      %8339 = vmatpush1.bf16.msra.mxu0 %v8246
      %8340 = vmatprep.subr.bf16.mxu0 0
      %8341 = vmatpush1.bf16.msra.mxu0 %v8247
      %8342 = vmatprep.subr.bf16.mxu0 0
      %8343 = vmatpush1.bf16.msra.mxu0 %v8248
      %8344 = vmatprep.subr.bf16.mxu0 0
      %8345 = vmatpush1.bf16.msra.mxu0 %v8249
      %8346 = vmatprep.subr.bf16.mxu0 0
      %8347 = vmatpush1.bf16.msra.mxu0 %v8250
      %8348 = vmatprep.subr.bf16.mxu0 0
      %8349 = vmatpush1.bf16.msra.mxu0 0
      %8350 = vmatprep.subr.bf16.mxu0 0
      %8351 = vmatpush1.bf16.msra.mxu0 0
      %8352 = vmatprep.subr.bf16.mxu0 0
      %8353 = vmatpush1.bf16.msra.mxu0 0
      %8354 = vmatprep.subr.bf16.mxu0 0
      %8355 = vmatpush1.bf16.msra.mxu0 0
      %8356 = vmatprep.subr.bf16.mxu0 0
      %8357 = vmatpush1.bf16.msra.mxu0 0
      %8358 = vmatprep.subr.bf16.mxu0 0
      %8359 = vmatpush1.bf16.msra.mxu0 0
      %8360 = vmatprep.subr.bf16.mxu0 0
      %8361 = vmatpush1.bf16.msra.mxu0 0
      %8362 = vmatprep.subr.bf16.mxu0 0
      %8363 = vmatpush1.bf16.msra.mxu0 0
      %8364 = vmatprep.mubr.bf16.mxu0 0
      %8365 = vmatmul.mubr.bf16.gmra.mrb[0].mxu0 %v8069
      %v8366 = vpop.f32.mrb[0].mxu0
      %v8367 = vadd.f32 %v8310, %v8366
      %v8368 = vpop.f32.mrb[0].mxu0
      %v8369 = vpop.f32.mrb[0].mxu0
      %v8370 = vadd.f32 %v8313, %v8369
      %v8371 = vpop.f32.mrb[0].mxu0
      %8372 = vmatprep.mubr.bf16.mxu0 0
      %8373 = vmatmul.mubr.bf16.gmra.mrb[0].mxu0 %v8072
      %v8374 = vpop.f32.mrb[0].mxu0
      %v8375 = vadd.f32 %v8318, %v8374
      %v8376 = vpop.f32.mrb[0].mxu0
      %v8377 = vpop.f32.mrb[0].mxu0
      %v8378 = vadd.f32 %v8321, %v8377
      %v8379 = vpop.f32.mrb[0].mxu0
      %8380 = vmatprep.mubr.bf16.mxu0 0
      %8381 = vmatmul.mubr.bf16.gmra.mrb[0].mxu0 %v8075
      %v8382 = vpop.f32.mrb[0].mxu0
      %v8383 = vadd.f32 %v8326, %v8382
      %v8384 = vpop.f32.mrb[0].mxu0
      %v8385 = vpop.f32.mrb[0].mxu0
      %v8386 = vadd.f32 %v8329, %v8385
      %v8387 = vpop.f32.mrb[0].mxu0
      %8388 = vdwg.mxu0
      %vm8389 = vcmp.ge.f32.partialorder %v8367, 0.0
      %vm8390 = vcmp.ge.f32.partialorder %v8370, 0.0
      %vm8391 = vcmp.ge.f32.partialorder %v8375, 0.0
      %vm8392 = vcmp.ge.f32.partialorder %v8378, 0.0
      %vm8393 = vcmp.ge.f32.partialorder %v8383, 0.0
      %vm8394 = vcmp.ge.f32.partialorder %v8386, 0.0
      %v8395 = vmul.f32 %v8367, 0.2
      %v8396 = vmul.f32 %v8370, 0.2
      %v8397 = vmul.f32 %v8375, 0.2
      %v8398 = vmul.f32 %v8378, 0.2
      %v8399 = vmul.f32 %v8383, 0.2
      %v8400 = vmul.f32 %v8386, 0.2
      %v8401 = vsel %vm8389, %v8367, %v8395
      %v8402 = vsel %vm8390, %v8370, %v8396
      %v8403 = vsel %vm8391, %v8375, %v8397
      %v8404 = vsel %vm8392, %v8378, %v8398
      %v8405 = vsel %vm8393, %v8383, %v8399
      %v8406 = vsel %vm8394, %v8386, %v8400
      %v8407 = vmul.f32 %v8401, %v2147
      %v8408 = vmul.f32 %v8402, %v2152
      %v8409 = vmul.f32 %v8403, %v2157
      %v8410 = vmul.f32 %v8404, %v2162
      %v8411 = vmul.f32 %v8405, %v2167
      %v8412 = vmul.f32 %v8406, %v2172
      %8413 = vst [vmem:[%s697] sm:$0xff] %v8407
      %8414 = vst [vmem:[%s697 + $0x8] sm:$0xff] %v8408
      %8415 = vst [vmem:[%s697 + $0x10] sm:$0xff] %v8409
      %8416 = vst [vmem:[%s697 + $0x18] sm:$0xff] %v8410
      %8417 = vst [vmem:[%s697 + $0x20] sm:$0xff] %v8411
      %8418 = vst [vmem:[%s697 + $0x28] sm:$0xff] %v8412
      %v8425 = vrot.slane %v8407, 7
      %v8426 = vrot.slane %v8408, 7
      %v8427 = vsel %vm846, %v8425, %v8426
      %v8428 = vrot.slane %v8409, 7
      %v8429 = vsel %vm846, %v8426, %v8428
      %v8430 = vrot.slane %v8410, 7
      %v8431 = vsel %vm846, %v8428, %v8430
      %v8432 = vrot.slane %v8411, 7
      %v8433 = vsel %vm846, %v8430, %v8432
      %v8434 = vrot.slane %v8412, 7
      %v8435 = vsel %vm846, %v8432, %v8434
      %v8442 = vsel %vm846, 0.0, %v8425
      %v8443 = vrot.slane %v8407, 1
      %v8444 = vrot.slane %v8408, 1
      %v8445 = vsel %vm865, %v8443, %v8444
      %v8446 = vrot.slane %v8409, 1
      %v8447 = vsel %vm865, %v8444, %v8446
      %v8448 = vrot.slane %v8410, 1
      %v8449 = vsel %vm865, %v8446, %v8448
      %v8450 = vrot.slane %v8411, 1
      %v8451 = vsel %vm865, %v8448, %v8450
      %v8452 = vrot.slane %v8412, 1
      %v8453 = vsel %vm865, %v8450, %v8452
      %v8460 = vsel %vm865, %v8452, 0.0
      %v8461 = vpack.c.bf16 %v8427, %v8442
      %v8462 = vpack.c.bf16 %v8408, %v8407
      %v8463 = vpack.c.bf16 %v8447, %v8445
      %v8464 = vpack.c.bf16 %v8431, %v8429
      %v8465 = vpack.c.bf16 %v8410, %v8409
      %v8466 = vpack.c.bf16 %v8451, %v8449
      %v8467 = vpack.c.bf16 %v8435, %v8433
      %v8468 = vpack.c.bf16 %v8412, %v8411
      %v8469 = vpack.c.bf16 %v8460, %v8453
      %v8470 = vld [vmem:[%s13] sm:$0xf]
      %v8471 = vld [vmem:[%s13 + $0x4] sm:$0xf]
      %v8472 = vld [vmem:[%s13 + $0x8] sm:$0xf]
      %v8473 = vld [vmem:[%s13 + $0xc] sm:$0xf]
      %v8474 = vld [vmem:[%s13 + $0x10] sm:$0xf]
      %v8475 = vld [vmem:[%s13 + $0x14] sm:$0xf]
      %v8476 = vld [vmem:[%s13 + $0x18] sm:$0xf]
      %v8477 = vld [vmem:[%s13 + $0x1c] sm:$0xf]
      %v8478 = vld [vmem:[%s13 + $0x20] sm:$0xf]
      %v8479 = vld [vmem:[%s13 + $0x24] sm:$0xf]
      %v8480 = vld [vmem:[%s13 + $0x28] sm:$0xf]
      %v8481 = vld [vmem:[%s13 + $0x2c] sm:$0xf]
      %v8482 = vld [vmem:[%s13 + $0x30] sm:$0xf]
      %v8483 = vld [vmem:[%s13 + $0x34] sm:$0xf]
      %v8484 = vld [vmem:[%s13 + $0x38] sm:$0xf]
      %v8485 = vld [vmem:[%s13 + $0x3c] sm:$0xf]
      %v8486 = vld [vmem:[%s13 + $0x40] sm:$0xf]
      %v8487 = vld [vmem:[%s13 + $0x44] sm:$0xf]
      %v8488 = vld [vmem:[%s13 + $0x48] sm:$0xf]
      %v8489 = vld [vmem:[%s13 + $0x4c] sm:$0xf]
      %v8490 = vld [vmem:[%s13 + $0x50] sm:$0xf]
      %v8491 = vld [vmem:[%s13 + $0x54] sm:$0xf]
      %v8492 = vld [vmem:[%s13 + $0x58] sm:$0xf]
      %v8493 = vld [vmem:[%s13 + $0x5c] sm:$0xf]
      %v8494 = vld [vmem:[%s13 + $0x60] sm:$0xf]
      %v8495 = vld [vmem:[%s13 + $0x64] sm:$0xf]
      %v8496 = vld [vmem:[%s13 + $0x68] sm:$0xf]
      %v8497 = vld [vmem:[%s13 + $0x6c] sm:$0xf]
      %v8498 = vld [vmem:[%s13 + $0x70] sm:$0xf]
      %v8499 = vld [vmem:[%s13 + $0x74] sm:$0xf]
      %v8500 = vld [vmem:[%s13 + $0x78] sm:$0xf]
      %v8501 = vld [vmem:[%s13 + $0x7c] sm:$0xf]
      %v8502 = vld [vmem:[%s13 + $0x80] sm:$0xf]
      %v8503 = vld [vmem:[%s13 + $0x84] sm:$0xf]
      %v8504 = vld [vmem:[%s13 + $0x88] sm:$0xf]
      %v8505 = vld [vmem:[%s13 + $0x8c] sm:$0xf]
      %v8506 = vld [vmem:[%s13 + $0x90] sm:$0xf]
      %v8507 = vld [vmem:[%s13 + $0x94] sm:$0xf]
      %v8508 = vld [vmem:[%s13 + $0x98] sm:$0xf]
      %v8509 = vld [vmem:[%s13 + $0x9c] sm:$0xf]
      %v8510 = vld [vmem:[%s13 + $0xa0] sm:$0xf]
      %v8511 = vld [vmem:[%s13 + $0xa4] sm:$0xf]
      %v8512 = vld [vmem:[%s13 + $0xa8] sm:$0xf]
      %v8513 = vld [vmem:[%s13 + $0xac] sm:$0xf]
      %v8514 = vld [vmem:[%s13 + $0xb0] sm:$0xf]
      %v8515 = vld [vmem:[%s13 + $0xb4] sm:$0xf]
      %v8516 = vld [vmem:[%s13 + $0xb8] sm:$0xf]
      %v8517 = vld [vmem:[%s13 + $0xbc] sm:$0xf]
      %v8518 = vld [vmem:[%s14] sm:$0x1]
      %v8520 = vlaneseq
      %v8521 = vshrl.u32 %v8520, 7
      %v8522 = vsub.s32 0, %v8521
      %v8523 = vrot.slane %v8518, %v8522
      %v8573 = vunpack.c.l.b16 %v8470
      %v8574 = vunpack.c.l.b16 %v8471
      %v8575 = vunpack.c.l.b16 %v8472
      %v8576 = vunpack.c.l.b16 %v8473
      %v8577 = vunpack.c.l.b16 %v8474
      %v8578 = vunpack.c.l.b16 %v8475
      %v8579 = vunpack.c.l.b16 %v8476
      %v8580 = vunpack.c.l.b16 %v8477
      %v8581 = vunpack.c.l.b16 %v8478
      %v8582 = vunpack.c.l.b16 %v8479
      %v8583 = vunpack.c.l.b16 %v8480
      %v8584 = vunpack.c.l.b16 %v8481
      %v8585 = vunpack.c.l.b16 %v8482
      %v8586 = vunpack.c.l.b16 %v8483
      %v8587 = vunpack.c.l.b16 %v8484
      %v8588 = vunpack.c.l.b16 %v8485
      %v8589 = vunpack.c.l.b16 %v8486
      %v8590 = vunpack.c.l.b16 %v8487
      %v8591 = vunpack.c.l.b16 %v8488
      %v8592 = vunpack.c.l.b16 %v8489
      %v8593 = vunpack.c.l.b16 %v8490
      %v8594 = vunpack.c.l.b16 %v8491
      %v8595 = vunpack.c.l.b16 %v8492
      %v8596 = vunpack.c.l.b16 %v8493
      %v8597 = vunpack.c.l.b16 %v8494
      %v8598 = vunpack.c.l.b16 %v8495
      %v8599 = vunpack.c.l.b16 %v8496
      %v8600 = vunpack.c.l.b16 %v8497
      %v8601 = vunpack.c.l.b16 %v8498
      %v8602 = vunpack.c.l.b16 %v8499
      %v8603 = vunpack.c.l.b16 %v8500
      %v8604 = vunpack.c.l.b16 %v8501
      %v8605 = vunpack.c.l.b16 %v8502
      %v8606 = vunpack.c.l.b16 %v8503
      %v8607 = vunpack.c.l.b16 %v8504
      %v8608 = vunpack.c.l.b16 %v8505
      %v8609 = vunpack.c.l.b16 %v8506
      %v8610 = vunpack.c.l.b16 %v8507
      %v8611 = vunpack.c.l.b16 %v8508
      %v8612 = vunpack.c.l.b16 %v8509
      %v8613 = vunpack.c.l.b16 %v8510
      %v8614 = vunpack.c.l.b16 %v8511
      %v8615 = vunpack.c.l.b16 %v8512
      %v8616 = vunpack.c.l.b16 %v8513
      %v8617 = vunpack.c.l.b16 %v8514
      %v8618 = vunpack.c.l.b16 %v8515
      %v8619 = vunpack.c.l.b16 %v8516
      %v8620 = vunpack.c.l.b16 %v8517
      %v8621 = vpack.c.b16 %v8574, %v8573
      %v8622 = vpack.c.b16 %v8576, %v8575
      %v8623 = vpack.c.b16 %v8578, %v8577
      %v8624 = vpack.c.b16 %v8580, %v8579
      %v8625 = vpack.c.b16 %v8582, %v8581
      %v8626 = vpack.c.b16 %v8584, %v8583
      %v8627 = vpack.c.b16 %v8586, %v8585
      %v8628 = vpack.c.b16 %v8588, %v8587
      %v8629 = vpack.c.b16 %v8590, %v8589
      %v8630 = vpack.c.b16 %v8592, %v8591
      %v8631 = vpack.c.b16 %v8594, %v8593
      %v8632 = vpack.c.b16 %v8596, %v8595
      %v8633 = vpack.c.b16 %v8598, %v8597
      %v8634 = vpack.c.b16 %v8600, %v8599
      %v8635 = vpack.c.b16 %v8602, %v8601
      %v8636 = vpack.c.b16 %v8604, %v8603
      %v8637 = vpack.c.b16 %v8606, %v8605
      %v8638 = vpack.c.b16 %v8608, %v8607
      %v8639 = vpack.c.b16 %v8610, %v8609
      %v8640 = vpack.c.b16 %v8612, %v8611
      %v8641 = vpack.c.b16 %v8614, %v8613
      %v8642 = vpack.c.b16 %v8616, %v8615
      %v8643 = vpack.c.b16 %v8618, %v8617
      %v8644 = vpack.c.b16 %v8620, %v8619
      %8669 = vmatprep.subr.bf16.mxu0 0
      %8670 = vmatpush1.bf16.msra.mxu0 %v8621
      %8671 = vmatprep.subr.bf16.mxu0 0
      %8672 = vmatpush1.bf16.msra.mxu0 %v8622
      %8673 = vmatprep.subr.bf16.mxu0 0
      %8674 = vmatpush1.bf16.msra.mxu0 %v8623
      %8675 = vmatprep.subr.bf16.mxu0 0
      %8676 = vmatpush1.bf16.msra.mxu0 %v8624
      %8677 = vmatprep.subr.bf16.mxu0 0
      %8678 = vmatpush1.bf16.msra.mxu0 %v8625
      %8679 = vmatprep.subr.bf16.mxu0 0
      %8680 = vmatpush1.bf16.msra.mxu0 %v8626
      %8681 = vmatprep.subr.bf16.mxu0 0
      %8682 = vmatpush1.bf16.msra.mxu0 %v8627
      %8683 = vmatprep.subr.bf16.mxu0 0
      %8684 = vmatpush1.bf16.msra.mxu0 %v8628
      %8685 = vmatprep.subr.bf16.mxu0 0
      %8686 = vmatpush1.bf16.msra.mxu0 %v8629
      %8687 = vmatprep.subr.bf16.mxu0 0
      %8688 = vmatpush1.bf16.msra.mxu0 %v8630
      %8689 = vmatprep.subr.bf16.mxu0 0
      %8690 = vmatpush1.bf16.msra.mxu0 %v8631
      %8691 = vmatprep.subr.bf16.mxu0 0
      %8692 = vmatpush1.bf16.msra.mxu0 %v8632
      %8693 = vmatprep.subr.bf16.mxu0 0
      %8694 = vmatpush1.bf16.msra.mxu0 %v8633
      %8695 = vmatprep.subr.bf16.mxu0 0
      %8696 = vmatpush1.bf16.msra.mxu0 %v8634
      %8697 = vmatprep.subr.bf16.mxu0 0
      %8698 = vmatpush1.bf16.msra.mxu0 %v8635
      %8699 = vmatprep.subr.bf16.mxu0 0
      %8700 = vmatpush1.bf16.msra.mxu0 %v8636
      %8701 = vmatprep.mubr.bf16.mxu0 %v8462
      %8702 = vmatmul.mubr.bf16.gmra.mrb[0].mxu0 %v8461
      %v8703 = vpop.f32.mrb[0].mxu0
      %v8704 = vadd.f32 %v8523, %v8703
      %v8705 = vpop.f32.mrb[0].mxu0
      %v8706 = vpop.f32.mrb[0].mxu0
      %v8707 = vadd.f32 %v8523, %v8706
      %v8708 = vpop.f32.mrb[0].mxu0
      %8709 = vmatprep.mubr.bf16.mxu0 %v8465
      %8710 = vmatmul.mubr.bf16.gmra.mrb[0].mxu0 %v8464
      %v8711 = vpop.f32.mrb[0].mxu0
      %v8712 = vadd.f32 %v8523, %v8711
      %v8713 = vpop.f32.mrb[0].mxu0
      %v8714 = vpop.f32.mrb[0].mxu0
      %v8715 = vadd.f32 %v8523, %v8714
      %v8716 = vpop.f32.mrb[0].mxu0
      %8717 = vmatprep.mubr.bf16.mxu0 %v8468
      %8718 = vmatmul.mubr.bf16.gmra.mrb[0].mxu0 %v8467
      %v8719 = vpop.f32.mrb[0].mxu0
      %v8720 = vadd.f32 %v8523, %v8719
      %v8721 = vpop.f32.mrb[0].mxu0
      %v8722 = vpop.f32.mrb[0].mxu0
      %v8723 = vadd.f32 %v8523, %v8722
      %v8724 = vpop.f32.mrb[0].mxu0
      %8725 = vdwg.mxu0
      %8726 = vmatprep.subr.bf16.mxu0 0
      %8727 = vmatpush1.bf16.msra.mxu0 %v8637
      %8728 = vmatprep.subr.bf16.mxu0 0
      %8729 = vmatpush1.bf16.msra.mxu0 %v8638
      %8730 = vmatprep.subr.bf16.mxu0 0
      %8731 = vmatpush1.bf16.msra.mxu0 %v8639
      %8732 = vmatprep.subr.bf16.mxu0 0
      %8733 = vmatpush1.bf16.msra.mxu0 %v8640
      %8734 = vmatprep.subr.bf16.mxu0 0
      %8735 = vmatpush1.bf16.msra.mxu0 %v8641
      %8736 = vmatprep.subr.bf16.mxu0 0
      %8737 = vmatpush1.bf16.msra.mxu0 %v8642
      %8738 = vmatprep.subr.bf16.mxu0 0
      %8739 = vmatpush1.bf16.msra.mxu0 %v8643
      %8740 = vmatprep.subr.bf16.mxu0 0
      %8741 = vmatpush1.bf16.msra.mxu0 %v8644
      %8742 = vmatprep.subr.bf16.mxu0 0
      %8743 = vmatpush1.bf16.msra.mxu0 0
      %8744 = vmatprep.subr.bf16.mxu0 0
      %8745 = vmatpush1.bf16.msra.mxu0 0
      %8746 = vmatprep.subr.bf16.mxu0 0
      %8747 = vmatpush1.bf16.msra.mxu0 0
      %8748 = vmatprep.subr.bf16.mxu0 0
      %8749 = vmatpush1.bf16.msra.mxu0 0
      %8750 = vmatprep.subr.bf16.mxu0 0
      %8751 = vmatpush1.bf16.msra.mxu0 0
      %8752 = vmatprep.subr.bf16.mxu0 0
      %8753 = vmatpush1.bf16.msra.mxu0 0
      %8754 = vmatprep.subr.bf16.mxu0 0
      %8755 = vmatpush1.bf16.msra.mxu0 0
      %8756 = vmatprep.subr.bf16.mxu0 0
      %8757 = vmatpush1.bf16.msra.mxu0 0
      %8758 = vmatprep.mubr.bf16.mxu0 0
      %8759 = vmatmul.mubr.bf16.gmra.mrb[0].mxu0 %v8463
      %v8760 = vpop.f32.mrb[0].mxu0
      %v8761 = vadd.f32 %v8704, %v8760
      %v8762 = vpop.f32.mrb[0].mxu0
      %v8763 = vpop.f32.mrb[0].mxu0
      %v8764 = vadd.f32 %v8707, %v8763
      %v8765 = vpop.f32.mrb[0].mxu0
      %8766 = vmatprep.mubr.bf16.mxu0 0
      %8767 = vmatmul.mubr.bf16.gmra.mrb[0].mxu0 %v8466
      %v8768 = vpop.f32.mrb[0].mxu0
      %v8769 = vadd.f32 %v8712, %v8768
      %v8770 = vpop.f32.mrb[0].mxu0
      %v8771 = vpop.f32.mrb[0].mxu0
      %v8772 = vadd.f32 %v8715, %v8771
      %v8773 = vpop.f32.mrb[0].mxu0
      %8774 = vmatprep.mubr.bf16.mxu0 0
      %8775 = vmatmul.mubr.bf16.gmra.mrb[0].mxu0 %v8469
      %v8776 = vpop.f32.mrb[0].mxu0
      %v8777 = vadd.f32 %v8720, %v8776
      %v8778 = vpop.f32.mrb[0].mxu0
      %v8779 = vpop.f32.mrb[0].mxu0
      %v8780 = vadd.f32 %v8723, %v8779
      %v8781 = vpop.f32.mrb[0].mxu0
      %8782 = vdwg.mxu0
      %v8783 = vmul.f32 %v8761, %v2147
      %v8784 = vmul.f32 %v8764, %v2152
      %v8785 = vmul.f32 %v8769, %v2157
      %v8786 = vmul.f32 %v8772, %v2162
      %v8787 = vmul.f32 %v8777, %v2167
      %v8788 = vmul.f32 %v8780, %v2172
      %8789 = vst [vmem:[%s703] sm:$0xff] %v8783
      %8790 = vst [vmem:[%s703 + $0x8] sm:$0xff] %v8784
      %8791 = vst [vmem:[%s703 + $0x10] sm:$0xff] %v8785
      %8792 = vst [vmem:[%s703 + $0x18] sm:$0xff] %v8786
      %8793 = vst [vmem:[%s703 + $0x20] sm:$0xff] %v8787
      %8794 = vst [vmem:[%s703 + $0x28] sm:$0xff] %v8788
      %s8795 = smul.u32 6, %s32
      %p8796 = scmp.lt.s32.totalorder %s8795, 11
      %s8797 = scalar_select %p8796, %s8795, 11
      %s8798 = smul.addr %s8797, 5
      %s8799 = smul.addr %s8798, 8
      %s8800 = scalar_lea.vmem %s15, %s8799
      %s8801 = smul.u32 6, %s32
      %p8802 = scmp.lt.s32.totalorder %s8801, 11
      %s8803 = scalar_select %p8802, %s8801, 11
      %s8804 = smul.addr %s8803, 3
      %s8805 = smul.addr %s8804, 8
      %s8806 = scalar_lea.vmem %s16, %s8805
      %s8807 = smul.u32 6, %s32
      %p8808 = scmp.lt.s32.totalorder %s8807, 11
      %s8809 = scalar_select %p8808, %s8807, 11
      %s8810 = smul.addr %s8809, 2
      %s8811 = smul.addr %s8810, 8
      %s8812 = scalar_lea.vmem %s17, %s8811
      %s8813 = smul.u32 6, %s32
      %p8814 = scmp.lt.s32.totalorder %s8813, 11
      %s8815 = scalar_select %p8814, %s8813, 11
      %s8816 = smul.addr %s8815, 8
      %s8817 = scalar_lea.vmem %s18, %s8816
      %s8818 = smul.u32 6, %s32
      %p8819 = scmp.lt.s32.totalorder %s8818, 11
      %s8820 = scalar_select %p8819, %s8818, 11
      %s8821 = smul.addr %s8820, 8
      %s8822 = scalar_lea.vmem %s19, %s8821
      %s8823 = smul.u32 6, %s32
      %p8824 = scmp.lt.s32.totalorder %s8823, 11
      %s8825 = scalar_select %p8824, %s8823, 11
      %s8826 = smul.addr %s8825, 8
      %s8827 = scalar_lea.vmem %s20, %s8826
      // Predicated region
      $region81: #{forward.1} parent=79 // pred_check
        %p8828 = pneg %p370
      $region82: #{forward.1} parent=79 // pred_check_branch
        %8830 = sbr.rel (%p8828) target = $region84
      $region83: #{forward.1} parent=79 // pred_region
        %s8831 = smul.u32 6, %s32
      $region84: #{forward.1} parent=79 // pred_fallthru
        _
      // Predicated region
      $region85: #{forward.1} parent=79 // pred_check
        %p8832 = pneg %p396
      $region86: #{forward.1} parent=79 // pred_check_branch
        %8834 = sbr.rel (%p8832) target = $region88
      $region87: #{forward.1} parent=79 // pred_region
        %s8835 = smul.u32 6, %s32
      $region88: #{forward.1} parent=79 // pred_fallthru
        _
      // Predicated region
      $region89: #{forward.1} parent=79 // pred_check
        %p8836 = pneg %p422
      $region90: #{forward.1} parent=79 // pred_check_branch
        %8838 = sbr.rel (%p8836) target = $region92
      $region91: #{forward.1} parent=79 // pred_region
        %s8839 = smul.u32 6, %s32
      $region92: #{forward.1} parent=79 // pred_fallthru
        _
      // Predicated region
      $region93: #{forward.1} parent=79 // pred_check
        %p8840 = pneg %p448
      $region94: #{forward.1} parent=79 // pred_check_branch
        %8842 = sbr.rel (%p8840) target = $region96
      $region95: #{forward.1} parent=79 // pred_region
        %s8843 = smul.u32 6, %s32
      $region96: #{forward.1} parent=79 // pred_fallthru
        _
      // Predicated region
      $region97: #{forward.1} parent=79 // pred_check
        %p8844 = pneg %p474
      $region98: #{forward.1} parent=79 // pred_check_branch
        %8846 = sbr.rel (%p8844) target = $region100
      $region99: #{forward.1} parent=79 // pred_region
        %s8847 = smul.u32 6, %s32
      $region100: #{forward.1} parent=79 // pred_fallthru
        _
      // Predicated region
      $region101: #{forward.1} parent=79 // pred_check
        %p8848 = pneg %p500
      $region102: #{forward.1} parent=79 // pred_check_branch
        %8850 = sbr.rel (%p8848) target = $region104
      $region103: #{forward.1} parent=79 // pred_region
        %s8851 = smul.u32 6, %s32
      $region104: #{forward.1} parent=79 // pred_fallthru
        _
    $region80: #{forward.1} parent=5 // pred_fallthru
      _
    %p8852 = scmp.le.s32.totalorder 2, %s27
    // Predicated region
    $region105: #{forward.1} parent=5 // pred_check
      %p8853 = pneg %p8852
    $region106: #{forward.1} parent=5 // pred_check_branch
      %8855 = sbr.rel (%p8853) target = $region108
    $region107: #{forward.1} parent=5 // pred_region
      %s8856 = ssub.s32 %s27, 2
      // Predicated region
      $region109: #{forward.1} parent=107 // pred_check
        %p8857 = pneg %p376
      $region110: #{forward.1} parent=107 // pred_check_branch
        %8859 = sbr.rel (%p8857) target = $region112
      $region111: #{forward.1} parent=107 // pred_region
        %s8860 = smul.u32 6, %s33
        %p8861 = scmp.lt.s32.totalorder %s8860, 11
        %s8862 = scalar_select %p8861, %s8860, 11
        %s8863 = smul.addr %s8862, 5
        %s8864 = smul.addr %s8863, 8
        %s8865 = scalar_lea.vmem %s15, %s8864
      $region112: #{forward.1} parent=107 // pred_fallthru
        _
      // Predicated region
      $region113: #{forward.1} parent=107 // pred_check
        %p8866 = pneg %p402
      $region114: #{forward.1} parent=107 // pred_check_branch
        %8868 = sbr.rel (%p8866) target = $region116
      $region115: #{forward.1} parent=107 // pred_region
        %s8869 = smul.u32 6, %s33
        %p8870 = scmp.lt.s32.totalorder %s8869, 11
        %s8871 = scalar_select %p8870, %s8869, 11
        %s8872 = smul.addr %s8871, 3
        %s8873 = smul.addr %s8872, 8
        %s8874 = scalar_lea.vmem %s16, %s8873
      $region116: #{forward.1} parent=107 // pred_fallthru
        _
      // Predicated region
      $region117: #{forward.1} parent=107 // pred_check
        %p8875 = pneg %p428
      $region118: #{forward.1} parent=107 // pred_check_branch
        %8877 = sbr.rel (%p8875) target = $region120
      $region119: #{forward.1} parent=107 // pred_region
        %s8878 = smul.u32 6, %s33
        %p8879 = scmp.lt.s32.totalorder %s8878, 11
        %s8880 = scalar_select %p8879, %s8878, 11
        %s8881 = smul.addr %s8880, 2
        %s8882 = smul.addr %s8881, 8
        %s8883 = scalar_lea.vmem %s17, %s8882
      $region120: #{forward.1} parent=107 // pred_fallthru
        _
      // Predicated region
      $region121: #{forward.1} parent=107 // pred_check
        %p8884 = pneg %p454
      $region122: #{forward.1} parent=107 // pred_check_branch
        %8886 = sbr.rel (%p8884) target = $region124
      $region123: #{forward.1} parent=107 // pred_region
        %s8887 = smul.u32 6, %s33
        %p8888 = scmp.lt.s32.totalorder %s8887, 11
        %s8889 = scalar_select %p8888, %s8887, 11
        %s8890 = smul.addr %s8889, 8
        %s8891 = scalar_lea.vmem %s18, %s8890
      $region124: #{forward.1} parent=107 // pred_fallthru
        _
      // Predicated region
      $region125: #{forward.1} parent=107 // pred_check
        %p8892 = pneg %p480
      $region126: #{forward.1} parent=107 // pred_check_branch
        %8894 = sbr.rel (%p8892) target = $region128
      $region127: #{forward.1} parent=107 // pred_region
        %s8895 = smul.u32 6, %s33
        %p8896 = scmp.lt.s32.totalorder %s8895, 11
        %s8897 = scalar_select %p8896, %s8895, 11
        %s8898 = smul.addr %s8897, 8
        %s8899 = scalar_lea.vmem %s19, %s8898
      $region128: #{forward.1} parent=107 // pred_fallthru
        _
      // Predicated region
      $region129: #{forward.1} parent=107 // pred_check
        %p8900 = pneg %p506
      $region130: #{forward.1} parent=107 // pred_check_branch
        %8902 = sbr.rel (%p8900) target = $region132
      $region131: #{forward.1} parent=107 // pred_region
        %s8903 = smul.u32 6, %s33
        %p8904 = scmp.lt.s32.totalorder %s8903, 11
        %s8905 = scalar_select %p8904, %s8903, 11
        %s8906 = smul.addr %s8905, 8
        %s8907 = scalar_lea.vmem %s20, %s8906
      $region132: #{forward.1} parent=107 // pred_fallthru
        _
    $region108: #{forward.1} parent=5 // pred_fallthru
      _
  $region6: #{forward.1} parent=0 // loop_footer
    %s31 = sadd.s32 1, %s27
  $region7: #{forward.1} parent=0 // loop_footer_branch
    %26 = sbr.rel target = $region3
  $region8: #{forward.1} parent=0 // loop_exit
    _

</llo_original>
